<compile_context>
chip_gen: v5e
topology: v5e:2x2
jax: 0.10.0
libtpu: 0.0.40
codegen_flags: <defaults>
</compile_context>

<pallas_src>
import functools

import jax
import jax.numpy as jnp
from jax.experimental import pallas as pl
from jax.experimental.pallas import tpu as pltpu


S_IMG = 28 * 28          # real pixels per image
S_STRIDE = 896           # per-image lane stride = 7*128 (lane aligned)
PAD_TAIL = 128           # >= 58 = max tap offset (2*28 + 2), keeps shifted reads in-bounds
HEAD_LEN = 22 * 28       # lanes of the conv3 output actually used by the head (rows 0..21)
TAPS = [(dy, dx) for dy in range(3) for dx in range(3)]


# ------------------------------ fused forward kernel ------------------------------

def _make_fused_kernel(bt):
    LANES = bt * S_STRIDE

    def kernel(x_ref, w1_ref, b1_ref, w2_ref, b2_ref, w3_ref, b3_ref,
               w4_ref, b4_ref, out_ref, col_ref, h1_ref, h2_ref, h3_ref):
        f32 = jnp.float32

        # Keep the read-ahead tails finite: scrap outputs are masked by zero head
        # weights, but NaN/Inf * 0 = NaN, so the tails must never hold garbage.
        # Two tiny stores per step; safe under megacore (each core owns its scratch).
        h1_ref[:, LANES:LANES + PAD_TAIL] = jnp.zeros((32, PAD_TAIL), h1_ref.dtype)
        h2_ref[:, LANES:LANES + PAD_TAIL] = jnp.zeros((64, PAD_TAIL), h2_ref.dtype)

        # ---- conv1 (Cin=1): im2col by sublane-concatenating 9 shifted lane slices,
        #      then a single (32, 9) @ (9, LANES) MXU matmul.
        col1 = jnp.concatenate(
            [x_ref[0, :, dy * 28 + dx: dy * 28 + dx + LANES] for dy, dx in TAPS],
            axis=0)                                                   # (9, LANES) bf16
        a1 = jnp.dot(w1_ref[...], col1, preferred_element_type=f32)   # (32, LANES) f32
        h1_ref[:, 0:LANES] = jnp.maximum(a1 + b1_ref[...], 0.0).astype(h1_ref.dtype)

        # ---- conv2: build (288, LANES) im2col in shared VMEM scratch, one deep-K matmul
        for t, (dy, dx) in enumerate(TAPS):
            off = dy * 28 + dx
            col_ref[t * 32:(t + 1) * 32, :] = h1_ref[:, off:off + LANES]
        a2 = jnp.dot(w2_ref[...], col_ref[0:288, :], preferred_element_type=f32)
        h2_ref[:, 0:LANES] = jnp.maximum(a2 + b2_ref[...], 0.0).astype(h2_ref.dtype)

        # ---- conv3: (576, LANES) im2col, one matmul; output kept f32 (feeds the head)
        for t, (dy, dx) in enumerate(TAPS):
            off = dy * 28 + dx
            col_ref[t * 64:(t + 1) * 64, :] = h2_ref[:, off:off + LANES]
        a3 = jnp.dot(w3_ref[...], col_ref[...], preferred_element_type=f32)
        h3_ref[...] = jnp.maximum(a3 + b3_ref[...], 0.0)              # (64, LANES) f32

        # ---- linear head: logits[o, b] = sum_{c, q<616} w4r[o,c,q] * h3[c, b*896 + q]
        # Weight already zero over scrap columns -> no in-kernel slicing/flatten.
        # Per-image columns are concatenated and written with ONE (10, bt) store.
        w4 = w4_ref[...]                                              # (10, 64, 616) f32
        cols = []
        for b in range(bt):
            hb = h3_ref[:, b * S_STRIDE: b * S_STRIDE + HEAD_LEN]     # (64, 616), aligned
            prod = w4 * hb[None, :, :]                                # (10, 64, 616)
            s = jnp.sum(prod, axis=2)                                 # (10, 64)
            cols.append(jnp.sum(s, axis=1, keepdims=True))            # (10, 1)
        out_ref[0, :, :] = jnp.concatenate(cols, axis=1) + b4_ref[...]

    return kernel


def _pick_batch_tile(n, target=8):
    # Keep >=2 grid steps when possible (v7x has 2 TensorCores), cap tile at `target`.
    if n >= 2 * target:
        return target
    return max(1, -(-n // 2))


@functools.partial(jax.jit, static_argnames=("batch_tile",))
def image_classifier_forward(params, x, batch_tile=8):
    """x: (N, 1, 28, 28) float32 NCHW -> logits (N, 10) float32."""
    N = x.shape[0]
    bt = _pick_batch_tile(N, batch_tile)
    G = -(-N // bt)
    Np = G * bt
    LANES = bt * S_STRIDE
    W_TOT = LANES + PAD_TAIL

    # ---- tiny host glue: (N,1,28,28) -> (G, 1, bt*896 + PAD) bf16, images at stride 896
    xf = x.reshape(N, S_IMG).astype(jnp.bfloat16)
    xf = jnp.pad(xf, ((0, Np - N), (0, S_STRIDE - S_IMG)))            # (Np, 896), zeros
    xf = xf.reshape(G, 1, LANES)
    xf = jnp.pad(xf, ((0, 0), (0, 0), (0, PAD_TAIL)))                 # (G, 1, W_TOT)

    # ---- conv weights -> lane-dense im2col layout (Cout, 9*Cin), bf16
    def conv_w(w):  # (Cout, Cin, 3, 3) -> (Cout, KH*KW*Cin), tap-major (dy, dx, cin)
        co, ci, kh, kw = w.shape
        return jnp.transpose(w, (0, 2, 3, 1)).reshape(co, kh * kw * ci).astype(jnp.bfloat16)

    w1 = conv_w(params["w1"]); b1 = params["b1"].reshape(-1, 1).astype(jnp.float32)
    w2 = conv_w(params["w2"]); b2 = params["b2"].reshape(-1, 1).astype(jnp.float32)
    w3 = conv_w(params["w3"]); b3 = params["b3"].reshape(-1, 1).astype(jnp.float32)

    # ---- linear weight rebuilt to the kernel's (c, y, x-in-28-wide-rows) layout,
    #      zeros over scrap columns (x>=22); stays lane-dense (616) — never (K,10).
    w4 = params["w4"].reshape(10, 64, 22, 22).astype(jnp.float32)
    w4r = jnp.zeros((10, 64, 22, 28), jnp.float32).at[:, :, :, :22].set(w4)
    w4r = w4r.reshape(10, 64, HEAD_LEN)
    b4 = params["b4"].reshape(-1, 1).astype(jnp.float32)

    # ---- advisory cost estimate (whole call) for the XLA scheduler
    conv_macs_per_lane = 32 * 9 + 64 * 288 + 64 * 576
    flops = G * (2 * LANES * conv_macs_per_lane + 2 * bt * 10 * 64 * HEAD_LEN)
    bytes_accessed = (G * W_TOT * 2 + G * 10 * bt * 4                       # x in, logits out
                      + (32 * 9 + 64 * 288 + 64 * 576) * 2                  # conv weights
                      + (32 + 64 + 64 + 10) * 4 + 10 * 64 * HEAD_LEN * 4)   # biases + head

    out = pl.pallas_call(
        _make_fused_kernel(bt),
        out_shape=jax.ShapeDtypeStruct((G, 10, bt), jnp.float32),
        grid=(G,),
        in_specs=[
            pl.BlockSpec((1, 1, W_TOT), lambda g: (g, 0, 0)),          # input batch tile
            pl.BlockSpec((32, 9), lambda g: (0, 0)),                   # weights: constant
            pl.BlockSpec((32, 1), lambda g: (0, 0)),                   #  index_maps =>
            pl.BlockSpec((64, 288), lambda g: (0, 0)),                 #  fetched once,
            pl.BlockSpec((64, 1), lambda g: (0, 0)),                   #  VMEM-resident
            pl.BlockSpec((64, 576), lambda g: (0, 0)),
            pl.BlockSpec((64, 1), lambda g: (0, 0)),
            pl.BlockSpec((10, 64, HEAD_LEN), lambda g: (0, 0, 0)),
            pl.BlockSpec((10, 1), lambda g: (0, 0)),
        ],
        out_specs=pl.BlockSpec((1, 10, bt), lambda g: (g, 0, 0)),
        scratch_shapes=[
            pltpu.VMEM((576, LANES), jnp.bfloat16),                    # shared im2col buffer
            pltpu.VMEM((32, LANES + PAD_TAIL), jnp.bfloat16),          # h1
            pltpu.VMEM((64, LANES + PAD_TAIL), jnp.bfloat16),          # h2
            pltpu.VMEM((64, LANES), jnp.float32),                      # h3 (feeds head)
        ],
        compiler_params=pltpu.CompilerParams(
            dimension_semantics=("parallel",),
            vmem_limit_bytes=48 * 1024 * 1024,
        ),
        cost_estimate=pl.CostEstimate(flops=int(flops), transcendentals=0,
                                      bytes_accessed=int(bytes_accessed)),
    )(xf, w1, b1, w2, b2, w3, b3, w4r, b4)

    # (G, 10, bt) -> (Np, 10) -> drop batch padding
    return jnp.transpose(out, (0, 2, 1)).reshape(Np, 10)[:N]


# ------------------------------ params & pure-JAX reference -----------------------

def init_params(key):
    ks = jax.random.split(key, 8)

    def u(k, shape, fan_in):
        bound = 1.0 / jnp.sqrt(jnp.float32(fan_in))
        return jax.random.uniform(k, shape, jnp.float32, -bound, bound)

    lin_in = 64 * (28 - 6) * (28 - 6)
    return {
        "w1": u(ks[0], (32, 1, 3, 3), 1 * 9),   "b1": u(ks[1], (32,), 1 * 9),
        "w2": u(ks[2], (64, 32, 3, 3), 32 * 9), "b2": u(ks[3], (64,), 32 * 9),
        "w3": u(ks[4], (64, 64, 3, 3), 64 * 9), "b3": u(ks[5], (64,), 64 * 9),
        "w4": u(ks[6], (10, lin_in), lin_in),   "b4": u(ks[7], (10,), lin_in),
    }


def reference_forward(params, x):
    def conv(x, w, b):
        y = jax.lax.conv_general_dilated(
            x, w, (1, 1), "VALID", dimension_numbers=("NCHW", "OIHW", "NCHW"))
        return jax.nn.relu(y + b[None, :, None, None])

    h = conv(x, params["w1"], params["b1"])
    h = conv(h, params["w2"], params["b2"])
    h = conv(h, params["w3"], params["b3"])
    h = h.reshape(h.shape[0], -1)
    return h @ params["w4"].T + params["b4"]


if __name__ == "__main__":
    key = jax.random.PRNGKey(0)
    pkey, xkey = jax.random.split(key)
    params = init_params(pkey)

    # Small primary test (bt=1, 2 grid steps) ...
    x_small = jax.random.normal(xkey, (2, 1, 28, 28), dtype=jnp.float32)
    out_small = jax.block_until_ready(image_classifier_forward(params, x_small))
    ref_small = reference_forward(params, x_small)
    assert out_small.shape == (2, 10)
    assert bool(jnp.all(jnp.isfinite(out_small)))
    assert bool(jnp.allclose(out_small, ref_small, rtol=2e-2, atol=2e-2))

    # ... plus a batched run exercising the 8-image batch tile + batch padding path.
    x_big = jax.random.normal(jax.random.fold_in(xkey, 1), (19, 1, 28, 28), jnp.float32)
    out_big = jax.block_until_ready(image_classifier_forward(params, x_big))
    ref_big = reference_forward(params, x_big)
    assert out_big.shape == (19, 10)
    assert bool(jnp.all(jnp.isfinite(out_big)))
    assert bool(jnp.allclose(out_big, ref_big, rtol=2e-2, atol=2e-2))

    print("KERNEL_OK")
</pallas_src>

<mosaic_0001>
module attributes {stable_mosaic.version = 11 : i64} {
  func.func @kernel(%arg0: i32, %arg1: memref<1x1x1024xbf16, #tpu.memory_space<vmem>>, %arg2: memref<32x9xbf16, #tpu.memory_space<vmem>>, %arg3: memref<32x1xf32, #tpu.memory_space<vmem>>, %arg4: memref<64x288xbf16, #tpu.memory_space<vmem>>, %arg5: memref<64x1xf32, #tpu.memory_space<vmem>>, %arg6: memref<64x576xbf16, #tpu.memory_space<vmem>>, %arg7: memref<64x1xf32, #tpu.memory_space<vmem>>, %arg8: memref<10x64x616xf32, #tpu.memory_space<vmem>>, %arg9: memref<10x1xf32, #tpu.memory_space<vmem>>, %arg10: memref<1x10x1xf32, #tpu.memory_space<vmem>>, %arg11: memref<576x896xbf16, #tpu.memory_space<vmem>>, %arg12: memref<32x1024xbf16, #tpu.memory_space<vmem>>, %arg13: memref<64x1024xbf16, #tpu.memory_space<vmem>>, %arg14: memref<64x896xf32, #tpu.memory_space<vmem>>) attributes {dimension_semantics = [#tpu.dimension_semantics<parallel>], iteration_bounds = array<i64: 2>, scalar_prefetch = 0 : i64, scratch_operands = 4 : i64, tpu.core_type = #tpu.core_type<tc>, window_params = [{transform_indices = @transform_0, window_bounds = array<i64: 1, 1, 1024>}, {pipeline_mode = #tpu.pipeline_mode<synchronous>, transform_indices = @transform_1, window_bounds = array<i64: 32, 9>}, {pipeline_mode = #tpu.pipeline_mode<synchronous>, transform_indices = @transform_2, window_bounds = array<i64: 32, 1>}, {pipeline_mode = #tpu.pipeline_mode<synchronous>, transform_indices = @transform_3, window_bounds = array<i64: 64, 288>}, {pipeline_mode = #tpu.pipeline_mode<synchronous>, transform_indices = @transform_4, window_bounds = array<i64: 64, 1>}, {pipeline_mode = #tpu.pipeline_mode<synchronous>, transform_indices = @transform_5, window_bounds = array<i64: 64, 576>}, {pipeline_mode = #tpu.pipeline_mode<synchronous>, transform_indices = @transform_6, window_bounds = array<i64: 64, 1>}, {pipeline_mode = #tpu.pipeline_mode<synchronous>, transform_indices = @transform_7, window_bounds = array<i64: 10, 64, 616>}, {pipeline_mode = #tpu.pipeline_mode<synchronous>, transform_indices = @transform_8, window_bounds = array<i64: 10, 1>}, {transform_indices = @transform_9, window_bounds = array<i64: 1, 10, 1>}]} {
    %cst = arith.constant 0.000000e+00 : bf16
    %0 = vector.broadcast %cst : bf16 to vector<32x128xbf16>
    %c0 = arith.constant 0 : index
    %c896 = arith.constant 896 : index
    %1 = vector.load %arg12[%c0, %c896] : memref<32x1024xbf16, #tpu.memory_space<vmem>>, vector<32x128xbf16>
    tpu.vector_store %arg12[%c0, %c896], %0 {strides = array<i32>} : memref<32x1024xbf16, #tpu.memory_space<vmem>>, vector<32x128xbf16>,
    %cst_0 = arith.constant 0.000000e+00 : bf16
    %2 = vector.broadcast %cst_0 : bf16 to vector<64x128xbf16>
    %c0_1 = arith.constant 0 : index
    %c896_2 = arith.constant 896 : index
    %3 = vector.load %arg13[%c0_1, %c896_2] : memref<64x1024xbf16, #tpu.memory_space<vmem>>, vector<64x128xbf16>
    tpu.vector_store %arg13[%c0_1, %c896_2], %2 {strides = array<i32>} : memref<64x1024xbf16, #tpu.memory_space<vmem>>, vector<64x128xbf16>,
    %c0_3 = arith.constant 0 : index
    %c0_4 = arith.constant 0 : index
    %c0_5 = arith.constant 0 : index
    %4 = vector.load %arg1[%c0_3, %c0_4, %c0_5] : memref<1x1x1024xbf16, #tpu.memory_space<vmem>>, vector<1x1x896xbf16>
    %5 = vector.shape_cast %4 : vector<1x1x896xbf16> to vector<1x896xbf16>
    %c0_6 = arith.constant 0 : index
    %c0_7 = arith.constant 0 : index
    %c1 = arith.constant 1 : index
    %6 = vector.load %arg1[%c0_6, %c0_7, %c1] : memref<1x1x1024xbf16, #tpu.memory_space<vmem>>, vector<1x1x896xbf16>
    %7 = vector.shape_cast %6 : vector<1x1x896xbf16> to vector<1x896xbf16>
    %c0_8 = arith.constant 0 : index
    %c0_9 = arith.constant 0 : index
    %c2 = arith.constant 2 : index
    %8 = vector.load %arg1[%c0_8, %c0_9, %c2] : memref<1x1x1024xbf16, #tpu.memory_space<vmem>>, vector<1x1x896xbf16>
    %9 = vector.shape_cast %8 : vector<1x1x896xbf16> to vector<1x896xbf16>
    %c0_10 = arith.constant 0 : index
    %c0_11 = arith.constant 0 : index
    %c28 = arith.constant 28 : index
    %10 = vector.load %arg1[%c0_10, %c0_11, %c28] : memref<1x1x1024xbf16, #tpu.memory_space<vmem>>, vector<1x1x896xbf16>
    %11 = vector.shape_cast %10 : vector<1x1x896xbf16> to vector<1x896xbf16>
    %c0_12 = arith.constant 0 : index
    %c0_13 = arith.constant 0 : index
    %c29 = arith.constant 29 : index
    %12 = vector.load %arg1[%c0_12, %c0_13, %c29] : memref<1x1x1024xbf16, #tpu.memory_space<vmem>>, vector<1x1x896xbf16>
    %13 = vector.shape_cast %12 : vector<1x1x896xbf16> to vector<1x896xbf16>
    %c0_14 = arith.constant 0 : index
    %c0_15 = arith.constant 0 : index
    %c30 = arith.constant 30 : index
    %14 = vector.load %arg1[%c0_14, %c0_15, %c30] : memref<1x1x1024xbf16, #tpu.memory_space<vmem>>, vector<1x1x896xbf16>
    %15 = vector.shape_cast %14 : vector<1x1x896xbf16> to vector<1x896xbf16>
    %c0_16 = arith.constant 0 : index
    %c0_17 = arith.constant 0 : index
    %c56 = arith.constant 56 : index
    %16 = vector.load %arg1[%c0_16, %c0_17, %c56] : memref<1x1x1024xbf16, #tpu.memory_space<vmem>>, vector<1x1x896xbf16>
    %17 = vector.shape_cast %16 : vector<1x1x896xbf16> to vector<1x896xbf16>
    %c0_18 = arith.constant 0 : index
    %c0_19 = arith.constant 0 : index
    %c57 = arith.constant 57 : index
    %18 = vector.load %arg1[%c0_18, %c0_19, %c57] : memref<1x1x1024xbf16, #tpu.memory_space<vmem>>, vector<1x1x896xbf16>
    %19 = vector.shape_cast %18 : vector<1x1x896xbf16> to vector<1x896xbf16>
    %c0_20 = arith.constant 0 : index
    %c0_21 = arith.constant 0 : index
    %c58 = arith.constant 58 : index
    %20 = vector.load %arg1[%c0_20, %c0_21, %c58] : memref<1x1x1024xbf16, #tpu.memory_space<vmem>>, vector<1x1x896xbf16>
    %21 = vector.shape_cast %20 : vector<1x1x896xbf16> to vector<1x896xbf16>
    %22 = tpu.concatenate %5, %7, %9, %11, %13, %15, %17, %19, %21 in 0 : vector<1x896xbf16>, vector<1x896xbf16>, vector<1x896xbf16>, vector<1x896xbf16>, vector<1x896xbf16>, vector<1x896xbf16>, vector<1x896xbf16>, vector<1x896xbf16>, vector<1x896xbf16> -> vector<9x896xbf16>
    %c0_22 = arith.constant 0 : index
    %c0_23 = arith.constant 0 : index
    %23 = vector.load %arg2[%c0_22, %c0_23] : memref<32x9xbf16, #tpu.memory_space<vmem>>, vector<32x9xbf16>
    %cst_24 = arith.constant dense<0.000000e+00> : vector<32x896xf32>
    %24 = tpu.matmul %23, %22, %cst_24 {dimension_numbers = #tpu.dot_dimension_numbers<[1], [0], [0], [1], [0, 0, 1, 1], [], []>} : vector<32x9xbf16>, vector<9x896xbf16>, vector<32x896xf32> -> vector<32x896xf32>
    %c0_25 = arith.constant 0 : index
    %c0_26 = arith.constant 0 : index
    %25 = vector.load %arg3[%c0_25, %c0_26] : memref<32x1xf32, #tpu.memory_space<vmem>>, vector<32x1xf32>
    %26 = vector.broadcast %25 : vector<32x1xf32> to vector<32x896xf32>
    %27 = arith.addf %24, %26 : vector<32x896xf32>
    %cst_27 = arith.constant 0.000000e+00 : f32
    %28 = vector.broadcast %cst_27 : f32 to vector<32x896xf32>
    %29 = arith.maximumf %27, %28 : vector<32x896xf32>
    %30 = arith.truncf %29 : vector<32x896xf32> to vector<32x896xbf16>
    %c0_28 = arith.constant 0 : index
    %c0_29 = arith.constant 0 : index
    %31 = vector.load %arg12[%c0_28, %c0_29] : memref<32x1024xbf16, #tpu.memory_space<vmem>>, vector<32x896xbf16>
    tpu.vector_store %arg12[%c0_28, %c0_29], %30 {strides = array<i32>} : memref<32x1024xbf16, #tpu.memory_space<vmem>>, vector<32x896xbf16>,
    %c0_30 = arith.constant 0 : index
    %c0_31 = arith.constant 0 : index
    %32 = vector.load %arg12[%c0_30, %c0_31] : memref<32x1024xbf16, #tpu.memory_space<vmem>>, vector<32x896xbf16>
    %c0_32 = arith.constant 0 : index
    %c0_33 = arith.constant 0 : index
    %33 = vector.load %arg11[%c0_32, %c0_33] : memref<576x896xbf16, #tpu.memory_space<vmem>>, vector<32x896xbf16>
    tpu.vector_store %arg11[%c0_32, %c0_33], %32 {strides = array<i32>} : memref<576x896xbf16, #tpu.memory_space<vmem>>, vector<32x896xbf16>,
    %c0_34 = arith.constant 0 : index
    %c1_35 = arith.constant 1 : index
    %34 = vector.load %arg12[%c0_34, %c1_35] : memref<32x1024xbf16, #tpu.memory_space<vmem>>, vector<32x896xbf16>
    %c32 = arith.constant 32 : index
    %c0_36 = arith.constant 0 : index
    %35 = vector.load %arg11[%c32, %c0_36] : memref<576x896xbf16, #tpu.memory_space<vmem>>, vector<32x896xbf16>
    tpu.vector_store %arg11[%c32, %c0_36], %34 {strides = array<i32>} : memref<576x896xbf16, #tpu.memory_space<vmem>>, vector<32x896xbf16>,
    %c0_37 = arith.constant 0 : index
    %c2_38 = arith.constant 2 : index
    %36 = vector.load %arg12[%c0_37, %c2_38] : memref<32x1024xbf16, #tpu.memory_space<vmem>>, vector<32x896xbf16>
    %c64 = arith.constant 64 : index
    %c0_39 = arith.constant 0 : index
    %37 = vector.load %arg11[%c64, %c0_39] : memref<576x896xbf16, #tpu.memory_space<vmem>>, vector<32x896xbf16>
    tpu.vector_store %arg11[%c64, %c0_39], %36 {strides = array<i32>} : memref<576x896xbf16, #tpu.memory_space<vmem>>, vector<32x896xbf16>,
    %c0_40 = arith.constant 0 : index
    %c28_41 = arith.constant 28 : index
    %38 = vector.load %arg12[%c0_40, %c28_41] : memref<32x1024xbf16, #tpu.memory_space<vmem>>, vector<32x896xbf16>
    %c96 = arith.constant 96 : index
    %c0_42 = arith.constant 0 : index
    %39 = vector.load %arg11[%c96, %c0_42] : memref<576x896xbf16, #tpu.memory_space<vmem>>, vector<32x896xbf16>
    tpu.vector_store %arg11[%c96, %c0_42], %38 {strides = array<i32>} : memref<576x896xbf16, #tpu.memory_space<vmem>>, vector<32x896xbf16>,
    %c0_43 = arith.constant 0 : index
    %c29_44 = arith.constant 29 : index
    %40 = vector.load %arg12[%c0_43, %c29_44] : memref<32x1024xbf16, #tpu.memory_space<vmem>>, vector<32x896xbf16>
    %c128 = arith.constant 128 : index
    %c0_45 = arith.constant 0 : index
    %41 = vector.load %arg11[%c128, %c0_45] : memref<576x896xbf16, #tpu.memory_space<vmem>>, vector<32x896xbf16>
    tpu.vector_store %arg11[%c128, %c0_45], %40 {strides = array<i32>} : memref<576x896xbf16, #tpu.memory_space<vmem>>, vector<32x896xbf16>,
    %c0_46 = arith.constant 0 : index
    %c30_47 = arith.constant 30 : index
    %42 = vector.load %arg12[%c0_46, %c30_47] : memref<32x1024xbf16, #tpu.memory_space<vmem>>, vector<32x896xbf16>
    %c160 = arith.constant 160 : index
    %c0_48 = arith.constant 0 : index
    %43 = vector.load %arg11[%c160, %c0_48] : memref<576x896xbf16, #tpu.memory_space<vmem>>, vector<32x896xbf16>
    tpu.vector_store %arg11[%c160, %c0_48], %42 {strides = array<i32>} : memref<576x896xbf16, #tpu.memory_space<vmem>>, vector<32x896xbf16>,
    %c0_49 = arith.constant 0 : index
    %c56_50 = arith.constant 56 : index
    %44 = vector.load %arg12[%c0_49, %c56_50] : memref<32x1024xbf16, #tpu.memory_space<vmem>>, vector<32x896xbf16>
    %c192 = arith.constant 192 : index
    %c0_51 = arith.constant 0 : index
    %45 = vector.load %arg11[%c192, %c0_51] : memref<576x896xbf16, #tpu.memory_space<vmem>>, vector<32x896xbf16>
    tpu.vector_store %arg11[%c192, %c0_51], %44 {strides = array<i32>} : memref<576x896xbf16, #tpu.memory_space<vmem>>, vector<32x896xbf16>,
    %c0_52 = arith.constant 0 : index
    %c57_53 = arith.constant 57 : index
    %46 = vector.load %arg12[%c0_52, %c57_53] : memref<32x1024xbf16, #tpu.memory_space<vmem>>, vector<32x896xbf16>
    %c224 = arith.constant 224 : index
    %c0_54 = arith.constant 0 : index
    %47 = vector.load %arg11[%c224, %c0_54] : memref<576x896xbf16, #tpu.memory_space<vmem>>, vector<32x896xbf16>
    tpu.vector_store %arg11[%c224, %c0_54], %46 {strides = array<i32>} : memref<576x896xbf16, #tpu.memory_space<vmem>>, vector<32x896xbf16>,
    %c0_55 = arith.constant 0 : index
    %c58_56 = arith.constant 58 : index
    %48 = vector.load %arg12[%c0_55, %c58_56] : memref<32x1024xbf16, #tpu.memory_space<vmem>>, vector<32x896xbf16>
    %c256 = arith.constant 256 : index
    %c0_57 = arith.constant 0 : index
    %49 = vector.load %arg11[%c256, %c0_57] : memref<576x896xbf16, #tpu.memory_space<vmem>>, vector<32x896xbf16>
    tpu.vector_store %arg11[%c256, %c0_57], %48 {strides = array<i32>} : memref<576x896xbf16, #tpu.memory_space<vmem>>, vector<32x896xbf16>,
    %c0_58 = arith.constant 0 : index
    %c0_59 = arith.constant 0 : index
    %50 = vector.load %arg4[%c0_58, %c0_59] : memref<64x288xbf16, #tpu.memory_space<vmem>>, vector<64x288xbf16>
    %c0_60 = arith.constant 0 : index
    %c0_61 = arith.constant 0 : index
    %51 = vector.load %arg11[%c0_60, %c0_61] : memref<576x896xbf16, #tpu.memory_space<vmem>>, vector<288x896xbf16>
    %cst_62 = arith.constant dense<0.000000e+00> : vector<64x896xf32>
    %52 = tpu.matmul %50, %51, %cst_62 {dimension_numbers = #tpu.dot_dimension_numbers<[1], [0], [0], [1], [0, 0, 1, 1], [], []>} : vector<64x288xbf16>, vector<288x896xbf16>, vector<64x896xf32> -> vector<64x896xf32>
    %c0_63 = arith.constant 0 : index
    %c0_64 = arith.constant 0 : index
    %53 = vector.load %arg5[%c0_63, %c0_64] : memref<64x1xf32, #tpu.memory_space<vmem>>, vector<64x1xf32>
    %54 = vector.broadcast %53 : vector<64x1xf32> to vector<64x896xf32>
    %55 = arith.addf %52, %54 : vector<64x896xf32>
    %cst_65 = arith.constant 0.000000e+00 : f32
    %56 = vector.broadcast %cst_65 : f32 to vector<64x896xf32>
    %57 = arith.maximumf %55, %56 : vector<64x896xf32>
    %58 = arith.truncf %57 : vector<64x896xf32> to vector<64x896xbf16>
    %c0_66 = arith.constant 0 : index
    %c0_67 = arith.constant 0 : index
    %59 = vector.load %arg13[%c0_66, %c0_67] : memref<64x1024xbf16, #tpu.memory_space<vmem>>, vector<64x896xbf16>
    tpu.vector_store %arg13[%c0_66, %c0_67], %58 {strides = array<i32>} : memref<64x1024xbf16, #tpu.memory_space<vmem>>, vector<64x896xbf16>,
    %c0_68 = arith.constant 0 : index
    %c0_69 = arith.constant 0 : index
    %60 = vector.load %arg13[%c0_68, %c0_69] : memref<64x1024xbf16, #tpu.memory_space<vmem>>, vector<64x896xbf16>
    %c0_70 = arith.constant 0 : index
    %c0_71 = arith.constant 0 : index
    %61 = vector.load %arg11[%c0_70, %c0_71] : memref<576x896xbf16, #tpu.memory_space<vmem>>, vector<64x896xbf16>
    tpu.vector_store %arg11[%c0_70, %c0_71], %60 {strides = array<i32>} : memref<576x896xbf16, #tpu.memory_space<vmem>>, vector<64x896xbf16>,
    %c0_72 = arith.constant 0 : index
    %c1_73 = arith.constant 1 : index
    %62 = vector.load %arg13[%c0_72, %c1_73] : memref<64x1024xbf16, #tpu.memory_space<vmem>>, vector<64x896xbf16>
    %c64_74 = arith.constant 64 : index
    %c0_75 = arith.constant 0 : index
    %63 = vector.load %arg11[%c64_74, %c0_75] : memref<576x896xbf16, #tpu.memory_space<vmem>>, vector<64x896xbf16>
    tpu.vector_store %arg11[%c64_74, %c0_75], %62 {strides = array<i32>} : memref<576x896xbf16, #tpu.memory_space<vmem>>, vector<64x896xbf16>,
    %c0_76 = arith.constant 0 : index
    %c2_77 = arith.constant 2 : index
    %64 = vector.load %arg13[%c0_76, %c2_77] : memref<64x1024xbf16, #tpu.memory_space<vmem>>, vector<64x896xbf16>
    %c128_78 = arith.constant 128 : index
    %c0_79 = arith.constant 0 : index
    %65 = vector.load %arg11[%c128_78, %c0_79] : memref<576x896xbf16, #tpu.memory_space<vmem>>, vector<64x896xbf16>
    tpu.vector_store %arg11[%c128_78, %c0_79], %64 {strides = array<i32>} : memref<576x896xbf16, #tpu.memory_space<vmem>>, vector<64x896xbf16>,
    %c0_80 = arith.constant 0 : index
    %c28_81 = arith.constant 28 : index
    %66 = vector.load %arg13[%c0_80, %c28_81] : memref<64x1024xbf16, #tpu.memory_space<vmem>>, vector<64x896xbf16>
    %c192_82 = arith.constant 192 : index
    %c0_83 = arith.constant 0 : index
    %67 = vector.load %arg11[%c192_82, %c0_83] : memref<576x896xbf16, #tpu.memory_space<vmem>>, vector<64x896xbf16>
    tpu.vector_store %arg11[%c192_82, %c0_83], %66 {strides = array<i32>} : memref<576x896xbf16, #tpu.memory_space<vmem>>, vector<64x896xbf16>,
    %c0_84 = arith.constant 0 : index
    %c29_85 = arith.constant 29 : index
    %68 = vector.load %arg13[%c0_84, %c29_85] : memref<64x1024xbf16, #tpu.memory_space<vmem>>, vector<64x896xbf16>
    %c256_86 = arith.constant 256 : index
    %c0_87 = arith.constant 0 : index
    %69 = vector.load %arg11[%c256_86, %c0_87] : memref<576x896xbf16, #tpu.memory_space<vmem>>, vector<64x896xbf16>
    tpu.vector_store %arg11[%c256_86, %c0_87], %68 {strides = array<i32>} : memref<576x896xbf16, #tpu.memory_space<vmem>>, vector<64x896xbf16>,
    %c0_88 = arith.constant 0 : index
    %c30_89 = arith.constant 30 : index
    %70 = vector.load %arg13[%c0_88, %c30_89] : memref<64x1024xbf16, #tpu.memory_space<vmem>>, vector<64x896xbf16>
    %c320 = arith.constant 320 : index
    %c0_90 = arith.constant 0 : index
    %71 = vector.load %arg11[%c320, %c0_90] : memref<576x896xbf16, #tpu.memory_space<vmem>>, vector<64x896xbf16>
    tpu.vector_store %arg11[%c320, %c0_90], %70 {strides = array<i32>} : memref<576x896xbf16, #tpu.memory_space<vmem>>, vector<64x896xbf16>,
    %c0_91 = arith.constant 0 : index
    %c56_92 = arith.constant 56 : index
    %72 = vector.load %arg13[%c0_91, %c56_92] : memref<64x1024xbf16, #tpu.memory_space<vmem>>, vector<64x896xbf16>
    %c384 = arith.constant 384 : index
    %c0_93 = arith.constant 0 : index
    %73 = vector.load %arg11[%c384, %c0_93] : memref<576x896xbf16, #tpu.memory_space<vmem>>, vector<64x896xbf16>
    tpu.vector_store %arg11[%c384, %c0_93], %72 {strides = array<i32>} : memref<576x896xbf16, #tpu.memory_space<vmem>>, vector<64x896xbf16>,
    %c0_94 = arith.constant 0 : index
    %c57_95 = arith.constant 57 : index
    %74 = vector.load %arg13[%c0_94, %c57_95] : memref<64x1024xbf16, #tpu.memory_space<vmem>>, vector<64x896xbf16>
    %c448 = arith.constant 448 : index
    %c0_96 = arith.constant 0 : index
    %75 = vector.load %arg11[%c448, %c0_96] : memref<576x896xbf16, #tpu.memory_space<vmem>>, vector<64x896xbf16>
    tpu.vector_store %arg11[%c448, %c0_96], %74 {strides = array<i32>} : memref<576x896xbf16, #tpu.memory_space<vmem>>, vector<64x896xbf16>,
    %c0_97 = arith.constant 0 : index
    %c58_98 = arith.constant 58 : index
    %76 = vector.load %arg13[%c0_97, %c58_98] : memref<64x1024xbf16, #tpu.memory_space<vmem>>, vector<64x896xbf16>
    %c512 = arith.constant 512 : index
    %c0_99 = arith.constant 0 : index
    %77 = vector.load %arg11[%c512, %c0_99] : memref<576x896xbf16, #tpu.memory_space<vmem>>, vector<64x896xbf16>
    tpu.vector_store %arg11[%c512, %c0_99], %76 {strides = array<i32>} : memref<576x896xbf16, #tpu.memory_space<vmem>>, vector<64x896xbf16>,
    %c0_100 = arith.constant 0 : index
    %c0_101 = arith.constant 0 : index
    %78 = vector.load %arg6[%c0_100, %c0_101] : memref<64x576xbf16, #tpu.memory_space<vmem>>, vector<64x576xbf16>
    %c0_102 = arith.constant 0 : index
    %c0_103 = arith.constant 0 : index
    %79 = vector.load %arg11[%c0_102, %c0_103] : memref<576x896xbf16, #tpu.memory_space<vmem>>, vector<576x896xbf16>
    %cst_104 = arith.constant dense<0.000000e+00> : vector<64x896xf32>
    %80 = tpu.matmul %78, %79, %cst_104 {dimension_numbers = #tpu.dot_dimension_numbers<[1], [0], [0], [1], [0, 0, 1, 1], [], []>} : vector<64x576xbf16>, vector<576x896xbf16>, vector<64x896xf32> -> vector<64x896xf32>
    %c0_105 = arith.constant 0 : index
    %c0_106 = arith.constant 0 : index
    %81 = vector.load %arg7[%c0_105, %c0_106] : memref<64x1xf32, #tpu.memory_space<vmem>>, vector<64x1xf32>
    %82 = vector.broadcast %81 : vector<64x1xf32> to vector<64x896xf32>
    %83 = arith.addf %80, %82 : vector<64x896xf32>
    %cst_107 = arith.constant 0.000000e+00 : f32
    %84 = vector.broadcast %cst_107 : f32 to vector<64x896xf32>
    %85 = arith.maximumf %83, %84 : vector<64x896xf32>
    %c0_108 = arith.constant 0 : index
    %c0_109 = arith.constant 0 : index
    %86 = vector.load %arg14[%c0_108, %c0_109] : memref<64x896xf32, #tpu.memory_space<vmem>>, vector<64x896xf32>
    tpu.vector_store %arg14[%c0_108, %c0_109], %85 {strides = array<i32>} : memref<64x896xf32, #tpu.memory_space<vmem>>, vector<64x896xf32>,
    %c0_110 = arith.constant 0 : index
    %c0_111 = arith.constant 0 : index
    %c0_112 = arith.constant 0 : index
    %87 = vector.load %arg8[%c0_110, %c0_111, %c0_112] : memref<10x64x616xf32, #tpu.memory_space<vmem>>, vector<10x64x616xf32>
    %c0_113 = arith.constant 0 : index
    %c0_114 = arith.constant 0 : index
    %88 = vector.load %arg14[%c0_113, %c0_114] : memref<64x896xf32, #tpu.memory_space<vmem>>, vector<64x616xf32>
    %89 = vector.shape_cast %88 : vector<64x616xf32> to vector<1x64x616xf32>
    %90 = vector.broadcast %89 : vector<1x64x616xf32> to vector<10x64x616xf32>
    %91 = arith.mulf %87, %90 : vector<10x64x616xf32>
    %cst_115 = arith.constant dense<0.000000e+00> : vector<10x64xf32>
    %92 = vector.multi_reduction <add>, %91, %cst_115 [2] : vector<10x64x616xf32> to vector<10x64xf32>
    %cst_116 = arith.constant dense<0.000000e+00> : vector<10xf32>
    %93 = vector.multi_reduction <add>, %92, %cst_116 [1] : vector<10x64xf32> to vector<10xf32>
    %94 = vector.shape_cast %93 : vector<10xf32> to vector<10x1xf32>
    %c0_117 = arith.constant 0 : index
    %c0_118 = arith.constant 0 : index
    %95 = vector.load %arg9[%c0_117, %c0_118] : memref<10x1xf32, #tpu.memory_space<vmem>>, vector<10x1xf32>
    %96 = arith.addf %94, %95 : vector<10x1xf32>
    %c0_119 = arith.constant 0 : index
    %c0_120 = arith.constant 0 : index
    %c0_121 = arith.constant 0 : index
    %97 = vector.load %arg10[%c0_119, %c0_120, %c0_121] : memref<1x10x1xf32, #tpu.memory_space<vmem>>, vector<1x10x1xf32>
    %98 = vector.shape_cast %97 : vector<1x10x1xf32> to vector<10x1xf32>
    %99 = vector.shape_cast %96 : vector<10x1xf32> to vector<1x10x1xf32>
    tpu.vector_store %arg10[%c0_119, %c0_120, %c0_121], %99 {strides = array<i32>} : memref<1x10x1xf32, #tpu.memory_space<vmem>>, vector<1x10x1xf32>,
    return
  }
  func.func @transform_0(%arg0: i32) -> (i32, i32, i32) {
    %c0_i32 = arith.constant 0 : i32
    %c0_i32_0 = arith.constant 0 : i32
    %c0_i32_1 = arith.constant 0 : i32
    return %arg0, %c0_i32, %c0_i32_0 : i32, i32, i32
  }
  func.func @transform_1(%arg0: i32) -> (i32, i32) {
    %c0_i32 = arith.constant 0 : i32
    %c0_i32_0 = arith.constant 0 : i32
    %c0_i32_1 = arith.constant 0 : i32
    return %c0_i32, %c0_i32_0 : i32, i32
  }
  func.func @transform_2(%arg0: i32) -> (i32, i32) {
    %c0_i32 = arith.constant 0 : i32
    %c0_i32_0 = arith.constant 0 : i32
    %c0_i32_1 = arith.constant 0 : i32
    return %c0_i32, %c0_i32_0 : i32, i32
  }
  func.func @transform_3(%arg0: i32) -> (i32, i32) {
    %c0_i32 = arith.constant 0 : i32
    %c0_i32_0 = arith.constant 0 : i32
    %c0_i32_1 = arith.constant 0 : i32
    return %c0_i32, %c0_i32_0 : i32, i32
  }
  func.func @transform_4(%arg0: i32) -> (i32, i32) {
    %c0_i32 = arith.constant 0 : i32
    %c0_i32_0 = arith.constant 0 : i32
    %c0_i32_1 = arith.constant 0 : i32
    return %c0_i32, %c0_i32_0 : i32, i32
  }
  func.func @transform_5(%arg0: i32) -> (i32, i32) {
    %c0_i32 = arith.constant 0 : i32
    %c0_i32_0 = arith.constant 0 : i32
    %c0_i32_1 = arith.constant 0 : i32
    return %c0_i32, %c0_i32_0 : i32, i32
  }
  func.func @transform_6(%arg0: i32) -> (i32, i32) {
    %c0_i32 = arith.constant 0 : i32
    %c0_i32_0 = arith.constant 0 : i32
    %c0_i32_1 = arith.constant 0 : i32
    return %c0_i32, %c0_i32_0 : i32, i32
  }
  func.func @transform_7(%arg0: i32) -> (i32, i32, i32) {
    %c0_i32 = arith.constant 0 : i32
    %c0_i32_0 = arith.constant 0 : i32
    %c0_i32_1 = arith.constant 0 : i32
    %c0_i32_2 = arith.constant 0 : i32
    return %c0_i32, %c0_i32_0, %c0_i32_1 : i32, i32, i32
  }
  func.func @transform_8(%arg0: i32) -> (i32, i32) {
    %c0_i32 = arith.constant 0 : i32
    %c0_i32_0 = arith.constant 0 : i32
    %c0_i32_1 = arith.constant 0 : i32
    return %c0_i32, %c0_i32_0 : i32, i32
  }
  func.func @transform_9(%arg0: i32) -> (i32, i32, i32) {
    %c0_i32 = arith.constant 0 : i32
    %c0_i32_0 = arith.constant 0 : i32
    %c0_i32_1 = arith.constant 0 : i32
    return %arg0, %c0_i32, %c0_i32_0 : i32, i32, i32
  }
}

</mosaic_0001>

<llo_original>
// kernel: image_classifier_forward.1
$region0: #{image_classifier_forward.1}
  #allocation0 [shape = 'u32[]', space=smem, size = 0x4, offset = 0x4, fixed_abs, tag = 'smem constant byte address 0x4 - core index']
  #allocation1 [shape = 'u32[72,128]{1,0:T(1,128)}', space=vmem, size = 0x9000, scoped, tag = 'internal scratch']
  #allocation2 [shape = 'bf16[576,896]{1,0:T(8,128)(2,1)}', space=vmem, size = 0xfc000, scoped, tag = 'scratch operand']
  #allocation3 [shape = 'bf16[32,1024]{1,0:T(8,128)(2,1)}', space=vmem, size = 0x10000, scoped, tag = 'scratch operand']
  #allocation4 [shape = 'bf16[64,1024]{1,0:T(8,128)(2,1)}', space=vmem, size = 0x20000, scoped, tag = 'scratch operand']
  #allocation5 [shape = 'f32[64,896]{1,0:T(8,128)}', space=vmem, size = 0x38000, scoped, tag = 'scratch operand']
  %s0 = inlined_call_operand.vmem [shape: bf16[2,1,1024], index: 0, kind: input, shape index: {}]
  %s1 = inlined_call_operand.vmem [shape: bf16[32,9], index: 1, kind: input, shape index: {}]
  %s2 = inlined_call_operand.vmem [shape: f32[32,1], index: 2, kind: input, shape index: {}]
  %s3 = inlined_call_operand.vmem [shape: bf16[64,288], index: 3, kind: input, shape index: {}]
  %s4 = inlined_call_operand.vmem [shape: f32[64,1], index: 4, kind: input, shape index: {}]
  %s5 = inlined_call_operand.vmem [shape: bf16[64,576], index: 5, kind: input, shape index: {}]
  %s6 = inlined_call_operand.vmem [shape: f32[64,1], index: 6, kind: input, shape index: {}]
  %s7 = inlined_call_operand.vmem [shape: f32[10,64,616], index: 7, kind: input, shape index: {}]
  %s8 = inlined_call_operand.vmem [shape: f32[10,1], index: 8, kind: input, shape index: {}]
  %s9 = inlined_call_operand.vmem [shape: f32[2,10,1], index: 9, kind: output, shape index: {}]
  %s10 = sld [smem:[#allocation0]]
  $region69: #{image_classifier_forward.1} parent=0
    _
  %s12 = ssub.s32 1, %s10
  %s13 = scalar_select 0, %s12, %s10
  loop: start=0, step=1, limit=4
  $region2: #{image_classifier_forward.1} parent=0 // loop_pre_header
    _
  $region3: #{image_classifier_forward.1} parent=0 // loop_header
    %s15 = sphi 0, %s19
    %p16 = scmp.ge.s32.totalorder %s15, 4
    %s25 = sphi 0, %s27
    %s28 = sphi 0, %s25
    %s29 = sphi 0, %s28
    %s45 = sphi 0, %s29
    %s49 = sphi 0, %s49
    %s51 = sphi 0, %s49
    %s52 = sphi 0, %s51
    %s66 = sphi 0, %s52
    %s70 = sphi 0, %s70
    %s72 = sphi 0, %s70
    %s73 = sphi 0, %s72
    %s87 = sphi 0, %s73
    %s91 = sphi 0, %s91
    %s93 = sphi 0, %s91
    %s94 = sphi 0, %s93
    %s108 = sphi 0, %s94
    %s112 = sphi 0, %s112
    %s114 = sphi 0, %s112
    %s115 = sphi 0, %s114
    %s129 = sphi 0, %s115
    %s133 = sphi 0, %s133
    %s135 = sphi 0, %s133
    %s136 = sphi 0, %s135
    %s150 = sphi 0, %s136
    %s154 = sphi 0, %s154
    %s156 = sphi 0, %s154
    %s157 = sphi 0, %s156
    %s171 = sphi 0, %s157
    %s175 = sphi 0, %s175
    %s177 = sphi 0, %s175
    %s178 = sphi 0, %s177
    %s192 = sphi 0, %s178
    %s196 = sphi 0, %s196
    %s198 = sphi 0, %s196
    %s199 = sphi 0, %s198
    %s213 = sphi 0, %s199
    %s219 = sphi 0, %s221
    %s222 = sphi 0, %s219
    %s223 = sphi 0, %s222
    %s239 = sphi 0, %s223
  $region4: #{image_classifier_forward.1} parent=0 // loop_header_branch
    %18 = sbr.rel (%p16) target = $region8
  $region5: #{image_classifier_forward.1} parent=0 // loop_body
    %s20 = ssub.s32 %s15, 1
    %s21 = ssub.s32 %s15, 2
    %s22 = sadd.s32 %s15, 1
    %s23 = ssub.s32 %s15, %s22
    %p24 = scmp.eq.s32.totalorder %s23, 0
    %s26 = sadd.s32 %s25, 1
    %s27 = scalar_select %p24, %s25, %s26
    %p30 = pneg %p24
    %p31 = scmp.eq.s32.totalorder %s15, 1
    %p32 = por %p30, %p31
    %p33 = scmp.ne.s32.totalorder %s25, %s28
    %p34 = scmp.eq.s32.totalorder %s15, 0
    %p35 = por %p33, %p34
    %p36 = scmp.ne.s32.totalorder %s25, %s28
    %p37 = scmp.eq.s32.totalorder %s20, 1
    %p38 = por %p36, %p37
    %p39 = scmp.ne.s32.totalorder %s28, %s29
    %p40 = scmp.eq.s32.totalorder %s20, 0
    %p41 = por %p39, %p40
    %p42 = scmp.ne.s32.totalorder %s28, %s29
    %p43 = scmp.eq.s32.totalorder %s21, 1
    %p44 = por %p42, %p43
    %p46 = scmp.ne.s32.totalorder %s29, %s45
    %p47 = scmp.eq.s32.totalorder %s21, 0
    %p48 = por %p46, %p47
    %s50 = sadd.s32 %s49, 1
    %p53 = scmp.eq.s32.totalorder %s15, 1
    %p54 = scmp.ne.s32.totalorder %s49, %s51
    %p55 = scmp.eq.s32.totalorder %s15, 0
    %p56 = por %p54, %p55
    %p57 = scmp.ne.s32.totalorder %s49, %s51
    %p58 = scmp.eq.s32.totalorder %s20, 1
    %p59 = por %p57, %p58
    %p60 = scmp.ne.s32.totalorder %s51, %s52
    %p61 = scmp.eq.s32.totalorder %s20, 0
    %p62 = por %p60, %p61
    %p63 = scmp.ne.s32.totalorder %s51, %s52
    %p64 = scmp.eq.s32.totalorder %s21, 1
    %p65 = por %p63, %p64
    %p67 = scmp.ne.s32.totalorder %s52, %s66
    %p68 = scmp.eq.s32.totalorder %s21, 0
    %p69 = por %p67, %p68
    %s71 = sadd.s32 %s70, 1
    %p74 = scmp.eq.s32.totalorder %s15, 1
    %p75 = scmp.ne.s32.totalorder %s70, %s72
    %p76 = scmp.eq.s32.totalorder %s15, 0
    %p77 = por %p75, %p76
    %p78 = scmp.ne.s32.totalorder %s70, %s72
    %p79 = scmp.eq.s32.totalorder %s20, 1
    %p80 = por %p78, %p79
    %p81 = scmp.ne.s32.totalorder %s72, %s73
    %p82 = scmp.eq.s32.totalorder %s20, 0
    %p83 = por %p81, %p82
    %p84 = scmp.ne.s32.totalorder %s72, %s73
    %p85 = scmp.eq.s32.totalorder %s21, 1
    %p86 = por %p84, %p85
    %p88 = scmp.ne.s32.totalorder %s73, %s87
    %p89 = scmp.eq.s32.totalorder %s21, 0
    %p90 = por %p88, %p89
    %s92 = sadd.s32 %s91, 1
    %p95 = scmp.eq.s32.totalorder %s15, 1
    %p96 = scmp.ne.s32.totalorder %s91, %s93
    %p97 = scmp.eq.s32.totalorder %s15, 0
    %p98 = por %p96, %p97
    %p99 = scmp.ne.s32.totalorder %s91, %s93
    %p100 = scmp.eq.s32.totalorder %s20, 1
    %p101 = por %p99, %p100
    %p102 = scmp.ne.s32.totalorder %s93, %s94
    %p103 = scmp.eq.s32.totalorder %s20, 0
    %p104 = por %p102, %p103
    %p105 = scmp.ne.s32.totalorder %s93, %s94
    %p106 = scmp.eq.s32.totalorder %s21, 1
    %p107 = por %p105, %p106
    %p109 = scmp.ne.s32.totalorder %s94, %s108
    %p110 = scmp.eq.s32.totalorder %s21, 0
    %p111 = por %p109, %p110
    %s113 = sadd.s32 %s112, 1
    %p116 = scmp.eq.s32.totalorder %s15, 1
    %p117 = scmp.ne.s32.totalorder %s112, %s114
    %p118 = scmp.eq.s32.totalorder %s15, 0
    %p119 = por %p117, %p118
    %p120 = scmp.ne.s32.totalorder %s112, %s114
    %p121 = scmp.eq.s32.totalorder %s20, 1
    %p122 = por %p120, %p121
    %p123 = scmp.ne.s32.totalorder %s114, %s115
    %p124 = scmp.eq.s32.totalorder %s20, 0
    %p125 = por %p123, %p124
    %p126 = scmp.ne.s32.totalorder %s114, %s115
    %p127 = scmp.eq.s32.totalorder %s21, 1
    %p128 = por %p126, %p127
    %p130 = scmp.ne.s32.totalorder %s115, %s129
    %p131 = scmp.eq.s32.totalorder %s21, 0
    %p132 = por %p130, %p131
    %s134 = sadd.s32 %s133, 1
    %p137 = scmp.eq.s32.totalorder %s15, 1
    %p138 = scmp.ne.s32.totalorder %s133, %s135
    %p139 = scmp.eq.s32.totalorder %s15, 0
    %p140 = por %p138, %p139
    %p141 = scmp.ne.s32.totalorder %s133, %s135
    %p142 = scmp.eq.s32.totalorder %s20, 1
    %p143 = por %p141, %p142
    %p144 = scmp.ne.s32.totalorder %s135, %s136
    %p145 = scmp.eq.s32.totalorder %s20, 0
    %p146 = por %p144, %p145
    %p147 = scmp.ne.s32.totalorder %s135, %s136
    %p148 = scmp.eq.s32.totalorder %s21, 1
    %p149 = por %p147, %p148
    %p151 = scmp.ne.s32.totalorder %s136, %s150
    %p152 = scmp.eq.s32.totalorder %s21, 0
    %p153 = por %p151, %p152
    %s155 = sadd.s32 %s154, 1
    %p158 = scmp.eq.s32.totalorder %s15, 1
    %p159 = scmp.ne.s32.totalorder %s154, %s156
    %p160 = scmp.eq.s32.totalorder %s15, 0
    %p161 = por %p159, %p160
    %p162 = scmp.ne.s32.totalorder %s154, %s156
    %p163 = scmp.eq.s32.totalorder %s20, 1
    %p164 = por %p162, %p163
    %p165 = scmp.ne.s32.totalorder %s156, %s157
    %p166 = scmp.eq.s32.totalorder %s20, 0
    %p167 = por %p165, %p166
    %p168 = scmp.ne.s32.totalorder %s156, %s157
    %p169 = scmp.eq.s32.totalorder %s21, 1
    %p170 = por %p168, %p169
    %p172 = scmp.ne.s32.totalorder %s157, %s171
    %p173 = scmp.eq.s32.totalorder %s21, 0
    %p174 = por %p172, %p173
    %s176 = sadd.s32 %s175, 1
    %p179 = scmp.eq.s32.totalorder %s15, 1
    %p180 = scmp.ne.s32.totalorder %s175, %s177
    %p181 = scmp.eq.s32.totalorder %s15, 0
    %p182 = por %p180, %p181
    %p183 = scmp.ne.s32.totalorder %s175, %s177
    %p184 = scmp.eq.s32.totalorder %s20, 1
    %p185 = por %p183, %p184
    %p186 = scmp.ne.s32.totalorder %s177, %s178
    %p187 = scmp.eq.s32.totalorder %s20, 0
    %p188 = por %p186, %p187
    %p189 = scmp.ne.s32.totalorder %s177, %s178
    %p190 = scmp.eq.s32.totalorder %s21, 1
    %p191 = por %p189, %p190
    %p193 = scmp.ne.s32.totalorder %s178, %s192
    %p194 = scmp.eq.s32.totalorder %s21, 0
    %p195 = por %p193, %p194
    %s197 = sadd.s32 %s196, 1
    %p200 = scmp.eq.s32.totalorder %s15, 1
    %p201 = scmp.ne.s32.totalorder %s196, %s198
    %p202 = scmp.eq.s32.totalorder %s15, 0
    %p203 = por %p201, %p202
    %p204 = scmp.ne.s32.totalorder %s196, %s198
    %p205 = scmp.eq.s32.totalorder %s20, 1
    %p206 = por %p204, %p205
    %p207 = scmp.ne.s32.totalorder %s198, %s199
    %p208 = scmp.eq.s32.totalorder %s20, 0
    %p209 = por %p207, %p208
    %p210 = scmp.ne.s32.totalorder %s198, %s199
    %p211 = scmp.eq.s32.totalorder %s21, 1
    %p212 = por %p210, %p211
    %p214 = scmp.ne.s32.totalorder %s199, %s213
    %p215 = scmp.eq.s32.totalorder %s21, 0
    %p216 = por %p214, %p215
    %s217 = ssub.s32 %s15, %s22
    %p218 = scmp.eq.s32.totalorder %s217, 0
    %s220 = sadd.s32 %s219, 1
    %s221 = scalar_select %p218, %s219, %s220
    %p224 = pneg %p218
    %p225 = scmp.eq.s32.totalorder %s15, 1
    %p226 = por %p224, %p225
    %p227 = scmp.ne.s32.totalorder %s219, %s222
    %p228 = scmp.eq.s32.totalorder %s15, 0
    %p229 = por %p227, %p228
    %p230 = scmp.ne.s32.totalorder %s219, %s222
    %p231 = scmp.eq.s32.totalorder %s20, 1
    %p232 = por %p230, %p231
    %p233 = scmp.ne.s32.totalorder %s222, %s223
    %p234 = scmp.eq.s32.totalorder %s20, 0
    %p235 = por %p233, %p234
    %p236 = scmp.ne.s32.totalorder %s222, %s223
    %p237 = scmp.eq.s32.totalorder %s21, 1
    %p238 = por %p236, %p237
    %p240 = scmp.ne.s32.totalorder %s223, %s239
    %p241 = scmp.eq.s32.totalorder %s21, 0
    %p242 = por %p240, %p241
    %p243 = scmp.le.s32.totalorder 1, %s15
    %p244 = scmp.lt.s32.totalorder %s15, 3
    %p245 = pnand %p243, %p244
    %p246 = pneg %p245
    // Predicated region
    $region9: #{image_classifier_forward.1} parent=5 // pred_check
      _
    $region10: #{image_classifier_forward.1} parent=5 // pred_check_branch
      %248 = sbr.rel (%p245) target = $region12
    $region11: #{image_classifier_forward.1} parent=5 // pred_region
      %s249 = ssub.s32 %s15, 1
      // Predicated region
      $region13: #{image_classifier_forward.1} parent=11 // pred_check
        %p250 = pneg %p62
      $region14: #{image_classifier_forward.1} parent=11 // pred_check_branch
        %252 = sbr.rel (%p250) target = $region16
      $region15: #{image_classifier_forward.1} parent=11 // pred_region
        _
      $region16: #{image_classifier_forward.1} parent=11 // pred_fallthru
        _
      // Predicated region
      $region17: #{image_classifier_forward.1} parent=11 // pred_check
        %p253 = pneg %p83
      $region18: #{image_classifier_forward.1} parent=11 // pred_check_branch
        %255 = sbr.rel (%p253) target = $region20
      $region19: #{image_classifier_forward.1} parent=11 // pred_region
        _
      $region20: #{image_classifier_forward.1} parent=11 // pred_fallthru
        _
      // Predicated region
      $region21: #{image_classifier_forward.1} parent=11 // pred_check
        %p256 = pneg %p104
      $region22: #{image_classifier_forward.1} parent=11 // pred_check_branch
        %258 = sbr.rel (%p256) target = $region24
      $region23: #{image_classifier_forward.1} parent=11 // pred_region
        _
      $region24: #{image_classifier_forward.1} parent=11 // pred_fallthru
        _
      // Predicated region
      $region25: #{image_classifier_forward.1} parent=11 // pred_check
        %p259 = pneg %p125
      $region26: #{image_classifier_forward.1} parent=11 // pred_check_branch
        %261 = sbr.rel (%p259) target = $region28
      $region27: #{image_classifier_forward.1} parent=11 // pred_region
        _
      $region28: #{image_classifier_forward.1} parent=11 // pred_fallthru
        _
      // Predicated region
      $region29: #{image_classifier_forward.1} parent=11 // pred_check
        %p262 = pneg %p146
      $region30: #{image_classifier_forward.1} parent=11 // pred_check_branch
        %264 = sbr.rel (%p262) target = $region32
      $region31: #{image_classifier_forward.1} parent=11 // pred_region
        _
      $region32: #{image_classifier_forward.1} parent=11 // pred_fallthru
        _
      // Predicated region
      $region33: #{image_classifier_forward.1} parent=11 // pred_check
        %p265 = pneg %p167
      $region34: #{image_classifier_forward.1} parent=11 // pred_check_branch
        %267 = sbr.rel (%p265) target = $region36
      $region35: #{image_classifier_forward.1} parent=11 // pred_region
        _
      $region36: #{image_classifier_forward.1} parent=11 // pred_fallthru
        _
      // Predicated region
      $region37: #{image_classifier_forward.1} parent=11 // pred_check
        %p268 = pneg %p188
      $region38: #{image_classifier_forward.1} parent=11 // pred_check_branch
        %270 = sbr.rel (%p268) target = $region40
      $region39: #{image_classifier_forward.1} parent=11 // pred_region
        _
      $region40: #{image_classifier_forward.1} parent=11 // pred_fallthru
        _
      // Predicated region
      $region41: #{image_classifier_forward.1} parent=11 // pred_check
        %p271 = pneg %p209
      $region42: #{image_classifier_forward.1} parent=11 // pred_check_branch
        %273 = sbr.rel (%p271) target = $region44
      $region43: #{image_classifier_forward.1} parent=11 // pred_region
        _
      $region44: #{image_classifier_forward.1} parent=11 // pred_fallthru
        _
    $region12: #{image_classifier_forward.1} parent=5 // pred_fallthru
      _
    %p274 = scmp.lt.s32.totalorder %s15, 2
    // Predicated region
    $region45: #{image_classifier_forward.1} parent=5 // pred_check
      %p275 = pneg %p274
    $region46: #{image_classifier_forward.1} parent=5 // pred_check_branch
      %277 = sbr.rel (%p275) target = $region48
    $region47: #{image_classifier_forward.1} parent=5 // pred_region
      // Predicated region
      $region49: #{image_classifier_forward.1} parent=47 // pred_check
        %p278 = pneg %p35
      $region50: #{image_classifier_forward.1} parent=47 // pred_check_branch
        %280 = sbr.rel (%p278) target = $region52
      $region51: #{image_classifier_forward.1} parent=47 // pred_region
        %p281 = scmp.lt.s32.totalorder %s15, 1
        %s282 = scalar_select %p281, %s15, 1
        %s283 = smul.addr %s282, 8
        %s284 = scalar_lea.vmem %s0, %s283
      $region52: #{image_classifier_forward.1} parent=47 // pred_fallthru
        _
    $region48: #{image_classifier_forward.1} parent=5 // pred_fallthru
      _
    %p285 = scmp.le.s32.totalorder 1, %s15
    %p286 = scmp.lt.s32.totalorder %s15, 3
    %p287 = pnand %p285, %p286
    %p288 = pneg %p287
    // Predicated region
    $region53: #{image_classifier_forward.1} parent=5 // pred_check
      _
    $region54: #{image_classifier_forward.1} parent=5 // pred_check_branch
      %290 = sbr.rel (%p287) target = $region56
    $region55: #{image_classifier_forward.1} parent=5 // pred_region
      %s291 = ssub.s32 %s15, 1
      %p292 = scmp.lt.s32.totalorder %s20, 1
      %s293 = scalar_select %p292, %s20, 1
      %s294 = smul.addr %s293, 8
      %s295 = scalar_lea.vmem %s0, %s294
      %p296 = pneg %p41
      %p297 = pneg %p38
      %p298 = pneg %p62
      %p299 = pneg %p59
      %p300 = pneg %p83
      %p301 = pneg %p80
      %p302 = pneg %p104
      %p303 = pneg %p101
      %p304 = pneg %p125
      %p305 = pneg %p122
      %p306 = pneg %p146
      %p307 = pneg %p143
      %p308 = pneg %p167
      %p309 = pneg %p164
      %p310 = pneg %p188
      %p311 = pneg %p185
      %p312 = pneg %p209
      %p313 = pneg %p206
      %p314 = pneg %p235
      %p315 = pneg %p232
      %p316 = scmp.lt.s32.totalorder %s20, 1
      %s317 = scalar_select %p316, %s20, 1
      %s318 = smul.addr %s317, 2
      %s319 = smul.addr %s318, 8
      %s320 = scalar_lea.vmem %s9, %s319
      %p321 = scmp.lt.s32.totalorder %s20, 1
      %s322 = scalar_select %p321, %s20, 1
      %s323 = smul.addr %s322, 8
      %s324 = scalar_lea.vmem %s0, %s323
      %p325 = scmp.lt.s32.totalorder %s20, 1
      %s326 = scalar_select %p325, %s20, 1
      %s327 = smul.addr %s326, 2
      %s328 = smul.addr %s327, 8
      %s329 = scalar_lea.vmem %s9, %s328
      %331 = vst [vmem:[#allocation3 + $0x1c] sm:$0xf] 0
      %332 = vst [vmem:[#allocation3 + $0x3c] sm:$0xf] 0
      %333 = vst [vmem:[#allocation3 + $0x5c] sm:$0xf] 0
      %334 = vst [vmem:[#allocation3 + $0x7c] sm:$0xf] 0
      %335 = vst [vmem:[#allocation4 + $0x1c] sm:$0xf] 0
      %336 = vst [vmem:[#allocation4 + $0x3c] sm:$0xf] 0
      %337 = vst [vmem:[#allocation4 + $0x5c] sm:$0xf] 0
      %338 = vst [vmem:[#allocation4 + $0x7c] sm:$0xf] 0
      %339 = vst [vmem:[#allocation4 + $0x9c] sm:$0xf] 0
      %340 = vst [vmem:[#allocation4 + $0xbc] sm:$0xf] 0
      %341 = vst [vmem:[#allocation4 + $0xdc] sm:$0xf] 0
      %342 = vst [vmem:[#allocation4 + $0xfc] sm:$0xf] 0
      %v343 = vld [vmem:[%s324] sm:$0x7f]
      %v344 = vld [vmem:[%s324] sm:$0xff]
      %346 = vst [vmem:[#allocation1] ss:$9 sm:$0xff] %v343
      %v347 = vld [vmem:[#allocation1] sm:$0xff]
      %v348 = vld [vmem:[#allocation1 + $0x9] sm:$0xff]
      %v349 = vld [vmem:[#allocation1 + $0x12] sm:$0xff]
      %v350 = vld [vmem:[#allocation1 + $0x1b] sm:$0xff]
      %v351 = vld [vmem:[#allocation1 + $0x24] sm:$0xff]
      %v352 = vld [vmem:[#allocation1 + $0x2d] sm:$0xff]
      %v353 = vld [vmem:[#allocation1 + $0x36] sm:$0xff]
      %362 = vst [vmem:[#allocation1] ss:$9 sm:$0xff] %v344
      %v363 = vld [vmem:[#allocation1] sm:$0xff]
      %v364 = vld [vmem:[#allocation1 + $0x9] sm:$0xff]
      %v365 = vld [vmem:[#allocation1 + $0x12] sm:$0xff]
      %v366 = vld [vmem:[#allocation1 + $0x1b] sm:$0xff]
      %v367 = vld [vmem:[#allocation1 + $0x24] sm:$0xff]
      %v368 = vld [vmem:[#allocation1 + $0x2d] sm:$0xff]
      %v369 = vld [vmem:[#allocation1 + $0x36] sm:$0xff]
      %v370 = vld [vmem:[#allocation1 + $0x3f] sm:$0xff]
      %v371 = vshll.u32 %v363, 16
      %v373 = vshll.u32 %v364, 16
      %v375 = vshll.u32 %v365, 16
      %v377 = vshll.u32 %v366, 16
      %v379 = vshll.u32 %v367, 16
      %v381 = vshll.u32 %v368, 16
      %v383 = vshll.u32 %v369, 16
      %v385 = vshll.u32 %v370, 16
      %387 = vrot.lane.b32.xlu0 %v371, 127
      %v388 = vpop.permute.xlu0 %387
      %389 = vrot.lane.b32.xlu0 %v373, 127
      %v390 = vpop.permute.xlu0 %389
      %391 = vrot.lane.b32.xlu0 %v375, 127
      %v392 = vpop.permute.xlu0 %391
      %393 = vrot.lane.b32.xlu0 %v377, 127
      %v394 = vpop.permute.xlu0 %393
      %395 = vrot.lane.b32.xlu0 %v379, 127
      %v396 = vpop.permute.xlu0 %395
      %397 = vrot.lane.b32.xlu0 %v381, 127
      %v398 = vpop.permute.xlu0 %397
      %399 = vrot.lane.b32.xlu0 %v383, 127
      %v400 = vpop.permute.xlu0 %399
      %401 = vrot.lane.b32.xlu0 %v385, 127
      %v402 = vpop.permute.xlu0 %401
      %vm403 = vcmask 1039360
      %v404 = vsel %vm403, %v388, %v390
      %v405 = vsel %vm403, %v390, %v392
      %v406 = vsel %vm403, %v392, %v394
      %v407 = vsel %vm403, %v394, %v396
      %v408 = vsel %vm403, %v396, %v398
      %v409 = vsel %vm403, %v398, %v400
      %v410 = vsel %vm403, %v400, %v402
      %s418 = scalar_lea.vmem [#allocation1], 1
      %419 = vst [vmem:[%s418] ss:$9 sm:$0xff] %v344
      %v420 = vld [vmem:[#allocation1] sm:$0xff]
      %v422 = vld [vmem:[#allocation1 + $0x9] sm:$0xff]
      %v424 = vld [vmem:[#allocation1 + $0x12] sm:$0xff]
      %v426 = vld [vmem:[#allocation1 + $0x1b] sm:$0xff]
      %v428 = vld [vmem:[#allocation1 + $0x24] sm:$0xff]
      %v430 = vld [vmem:[#allocation1 + $0x2d] sm:$0xff]
      %v432 = vld [vmem:[#allocation1 + $0x36] sm:$0xff]
      %v434 = vld [vmem:[#allocation1 + $0x3f] sm:$0xff]
      %436 = vrot.lane.b32.xlu0 %v420, 126
      %v437 = vpop.permute.xlu0 %436
      %438 = vrot.lane.b32.xlu0 %v422, 126
      %v439 = vpop.permute.xlu0 %438
      %440 = vrot.lane.b32.xlu0 %v424, 126
      %v441 = vpop.permute.xlu0 %440
      %442 = vrot.lane.b32.xlu0 %v426, 126
      %v443 = vpop.permute.xlu0 %442
      %444 = vrot.lane.b32.xlu0 %v428, 126
      %v445 = vpop.permute.xlu0 %444
      %446 = vrot.lane.b32.xlu0 %v430, 126
      %v447 = vpop.permute.xlu0 %446
      %448 = vrot.lane.b32.xlu0 %v432, 126
      %v449 = vpop.permute.xlu0 %448
      %450 = vrot.lane.b32.xlu0 %v434, 126
      %v451 = vpop.permute.xlu0 %450
      %vm452 = vcmask 1031168
      %v453 = vsel %vm452, %v437, %v439
      %v454 = vsel %vm452, %v439, %v441
      %v455 = vsel %vm452, %v441, %v443
      %v456 = vsel %vm452, %v443, %v445
      %v457 = vsel %vm452, %v445, %v447
      %v458 = vsel %vm452, %v447, %v449
      %v459 = vsel %vm452, %v449, %v451
      %460 = vst [vmem:[#allocation1] ss:$9 sm:$0xff] %v344
      %v461 = vld [vmem:[#allocation1] sm:$0xff]
      %v462 = vld [vmem:[#allocation1 + $0x9] sm:$0xff]
      %v463 = vld [vmem:[#allocation1 + $0x12] sm:$0xff]
      %v464 = vld [vmem:[#allocation1 + $0x1b] sm:$0xff]
      %v465 = vld [vmem:[#allocation1 + $0x24] sm:$0xff]
      %v466 = vld [vmem:[#allocation1 + $0x2d] sm:$0xff]
      %v467 = vld [vmem:[#allocation1 + $0x36] sm:$0xff]
      %v468 = vld [vmem:[#allocation1 + $0x3f] sm:$0xff]
      %v469 = vshll.u32 %v461, 16
      %v471 = vrot.slane %v469, 7
      %v472 = vshll.u32 %v462, 16
      %v474 = vrot.slane %v472, 7
      %v475 = vshll.u32 %v463, 16
      %v477 = vrot.slane %v475, 7
      %v478 = vshll.u32 %v464, 16
      %v480 = vrot.slane %v478, 7
      %v481 = vshll.u32 %v465, 16
      %v483 = vrot.slane %v481, 7
      %v484 = vshll.u32 %v466, 16
      %v486 = vrot.slane %v484, 7
      %v487 = vshll.u32 %v467, 16
      %v489 = vrot.slane %v487, 7
      %v490 = vshll.u32 %v468, 16
      %v492 = vrot.slane %v490, 7
      %493 = vrot.lane.b32.xlu0 %v471, 100
      %v494 = vpop.permute.xlu0 %493
      %495 = vrot.lane.b32.xlu0 %v474, 100
      %v496 = vpop.permute.xlu0 %495
      %497 = vrot.lane.b32.xlu0 %v477, 100
      %v498 = vpop.permute.xlu0 %497
      %499 = vrot.lane.b32.xlu0 %v480, 100
      %v500 = vpop.permute.xlu0 %499
      %501 = vrot.lane.b32.xlu0 %v483, 100
      %v502 = vpop.permute.xlu0 %501
      %503 = vrot.lane.b32.xlu0 %v486, 100
      %v504 = vpop.permute.xlu0 %503
      %505 = vrot.lane.b32.xlu0 %v489, 100
      %v506 = vpop.permute.xlu0 %505
      %507 = vrot.lane.b32.xlu0 %v492, 100
      %v508 = vpop.permute.xlu0 %507
      %vm509 = vcmask 818176
      %v510 = vsel %vm509, %v494, %v496
      %v511 = vsel %vm509, %v496, %v498
      %v512 = vsel %vm509, %v498, %v500
      %v513 = vsel %vm509, %v500, %v502
      %v514 = vsel %vm509, %v502, %v504
      %v515 = vsel %vm509, %v504, %v506
      %v516 = vsel %vm509, %v506, %v508
      %s524 = scalar_lea.vmem [#allocation1], 2
      %525 = vst [vmem:[%s524] ss:$9 sm:$0xff] %v344
      %v526 = vld [vmem:[#allocation1] sm:$0xff]
      %v528 = vld [vmem:[#allocation1 + $0x9] sm:$0xff]
      %v530 = vld [vmem:[#allocation1 + $0x12] sm:$0xff]
      %v532 = vld [vmem:[#allocation1 + $0x1b] sm:$0xff]
      %v534 = vld [vmem:[#allocation1 + $0x24] sm:$0xff]
      %v536 = vld [vmem:[#allocation1 + $0x2d] sm:$0xff]
      %v538 = vld [vmem:[#allocation1 + $0x36] sm:$0xff]
      %v540 = vld [vmem:[#allocation1 + $0x3f] sm:$0xff]
      %542 = vrot.lane.b32.xlu0 %v526, 99
      %v543 = vpop.permute.xlu0 %542
      %544 = vrot.lane.b32.xlu0 %v528, 99
      %v545 = vpop.permute.xlu0 %544
      %546 = vrot.lane.b32.xlu0 %v530, 99
      %v547 = vpop.permute.xlu0 %546
      %548 = vrot.lane.b32.xlu0 %v532, 99
      %v549 = vpop.permute.xlu0 %548
      %550 = vrot.lane.b32.xlu0 %v534, 99
      %v551 = vpop.permute.xlu0 %550
      %552 = vrot.lane.b32.xlu0 %v536, 99
      %v553 = vpop.permute.xlu0 %552
      %554 = vrot.lane.b32.xlu0 %v538, 99
      %v555 = vpop.permute.xlu0 %554
      %556 = vrot.lane.b32.xlu0 %v540, 99
      %v557 = vpop.permute.xlu0 %556
      %vm558 = vcmask 809984
      %v559 = vsel %vm558, %v543, %v545
      %v560 = vsel %vm558, %v545, %v547
      %v561 = vsel %vm558, %v547, %v549
      %v562 = vsel %vm558, %v549, %v551
      %v563 = vsel %vm558, %v551, %v553
      %v564 = vsel %vm558, %v553, %v555
      %v565 = vsel %vm558, %v555, %v557
      %566 = vst [vmem:[#allocation1] ss:$9 sm:$0xff] %v344
      %v567 = vld [vmem:[#allocation1] sm:$0xff]
      %v568 = vld [vmem:[#allocation1 + $0x9] sm:$0xff]
      %v569 = vld [vmem:[#allocation1 + $0x12] sm:$0xff]
      %v570 = vld [vmem:[#allocation1 + $0x1b] sm:$0xff]
      %v571 = vld [vmem:[#allocation1 + $0x24] sm:$0xff]
      %v572 = vld [vmem:[#allocation1 + $0x2d] sm:$0xff]
      %v573 = vld [vmem:[#allocation1 + $0x36] sm:$0xff]
      %v574 = vld [vmem:[#allocation1 + $0x3f] sm:$0xff]
      %v575 = vshll.u32 %v567, 16
      %v577 = vrot.slane %v575, 6
      %v578 = vshll.u32 %v568, 16
      %v580 = vrot.slane %v578, 6
      %v581 = vshll.u32 %v569, 16
      %v583 = vrot.slane %v581, 6
      %v584 = vshll.u32 %v570, 16
      %v586 = vrot.slane %v584, 6
      %v587 = vshll.u32 %v571, 16
      %v589 = vrot.slane %v587, 6
      %v590 = vshll.u32 %v572, 16
      %v592 = vrot.slane %v590, 6
      %v593 = vshll.u32 %v573, 16
      %v595 = vrot.slane %v593, 6
      %v596 = vshll.u32 %v574, 16
      %v598 = vrot.slane %v596, 6
      %599 = vrot.lane.b32.xlu0 %v577, 98
      %v600 = vpop.permute.xlu0 %599
      %601 = vrot.lane.b32.xlu0 %v580, 98
      %v602 = vpop.permute.xlu0 %601
      %603 = vrot.lane.b32.xlu0 %v583, 98
      %v604 = vpop.permute.xlu0 %603
      %605 = vrot.lane.b32.xlu0 %v586, 98
      %v606 = vpop.permute.xlu0 %605
      %607 = vrot.lane.b32.xlu0 %v589, 98
      %v608 = vpop.permute.xlu0 %607
      %609 = vrot.lane.b32.xlu0 %v592, 98
      %v610 = vpop.permute.xlu0 %609
      %611 = vrot.lane.b32.xlu0 %v595, 98
      %v612 = vpop.permute.xlu0 %611
      %613 = vrot.lane.b32.xlu0 %v598, 98
      %v614 = vpop.permute.xlu0 %613
      %vm615 = vcmask 801792
      %v616 = vsel %vm615, %v600, %v602
      %v617 = vsel %vm615, %v602, %v604
      %v618 = vsel %vm615, %v604, %v606
      %v619 = vsel %vm615, %v606, %v608
      %v620 = vsel %vm615, %v608, %v610
      %v621 = vsel %vm615, %v610, %v612
      %v622 = vsel %vm615, %v612, %v614
      %s630 = scalar_lea.vmem [#allocation1], 3
      %631 = vst [vmem:[%s630] ss:$9 sm:$0xff] %v344
      %v632 = vld [vmem:[#allocation1] sm:$0xff]
      %v634 = vld [vmem:[#allocation1 + $0x9] sm:$0xff]
      %v636 = vld [vmem:[#allocation1 + $0x12] sm:$0xff]
      %v638 = vld [vmem:[#allocation1 + $0x1b] sm:$0xff]
      %v640 = vld [vmem:[#allocation1 + $0x24] sm:$0xff]
      %v642 = vld [vmem:[#allocation1 + $0x2d] sm:$0xff]
      %v644 = vld [vmem:[#allocation1 + $0x36] sm:$0xff]
      %v646 = vld [vmem:[#allocation1 + $0x3f] sm:$0xff]
      %648 = vrot.lane.b32.xlu0 %v632, 72
      %v649 = vpop.permute.xlu0 %648
      %650 = vrot.lane.b32.xlu0 %v634, 72
      %v651 = vpop.permute.xlu0 %650
      %652 = vrot.lane.b32.xlu0 %v636, 72
      %v653 = vpop.permute.xlu0 %652
      %654 = vrot.lane.b32.xlu0 %v638, 72
      %v655 = vpop.permute.xlu0 %654
      %656 = vrot.lane.b32.xlu0 %v640, 72
      %v657 = vpop.permute.xlu0 %656
      %658 = vrot.lane.b32.xlu0 %v642, 72
      %v659 = vpop.permute.xlu0 %658
      %660 = vrot.lane.b32.xlu0 %v644, 72
      %v661 = vpop.permute.xlu0 %660
      %662 = vrot.lane.b32.xlu0 %v646, 72
      %v663 = vpop.permute.xlu0 %662
      %vm664 = vcmask 588800
      %v665 = vsel %vm664, %v649, %v651
      %v666 = vsel %vm664, %v651, %v653
      %v667 = vsel %vm664, %v653, %v655
      %v668 = vsel %vm664, %v655, %v657
      %v669 = vsel %vm664, %v657, %v659
      %v670 = vsel %vm664, %v659, %v661
      %v671 = vsel %vm664, %v661, %v663
      %672 = vst [vmem:[#allocation1] ss:$9 sm:$0xff] %v344
      %v673 = vld [vmem:[#allocation1] sm:$0xff]
      %v674 = vld [vmem:[#allocation1 + $0x9] sm:$0xff]
      %v675 = vld [vmem:[#allocation1 + $0x12] sm:$0xff]
      %v676 = vld [vmem:[#allocation1 + $0x1b] sm:$0xff]
      %v677 = vld [vmem:[#allocation1 + $0x24] sm:$0xff]
      %v678 = vld [vmem:[#allocation1 + $0x2d] sm:$0xff]
      %v679 = vld [vmem:[#allocation1 + $0x36] sm:$0xff]
      %v680 = vld [vmem:[#allocation1 + $0x3f] sm:$0xff]
      %v681 = vshll.u32 %v673, 16
      %v683 = vrot.slane %v681, 5
      %v684 = vshll.u32 %v674, 16
      %v686 = vrot.slane %v684, 5
      %v687 = vshll.u32 %v675, 16
      %v689 = vrot.slane %v687, 5
      %v690 = vshll.u32 %v676, 16
      %v692 = vrot.slane %v690, 5
      %v693 = vshll.u32 %v677, 16
      %v695 = vrot.slane %v693, 5
      %v696 = vshll.u32 %v678, 16
      %v698 = vrot.slane %v696, 5
      %v699 = vshll.u32 %v679, 16
      %v701 = vrot.slane %v699, 5
      %v702 = vshll.u32 %v680, 16
      %v704 = vrot.slane %v702, 5
      %705 = vrot.lane.b32.xlu0 %v683, 71
      %v706 = vpop.permute.xlu0 %705
      %707 = vrot.lane.b32.xlu0 %v686, 71
      %v708 = vpop.permute.xlu0 %707
      %709 = vrot.lane.b32.xlu0 %v689, 71
      %v710 = vpop.permute.xlu0 %709
      %711 = vrot.lane.b32.xlu0 %v692, 71
      %v712 = vpop.permute.xlu0 %711
      %713 = vrot.lane.b32.xlu0 %v695, 71
      %v714 = vpop.permute.xlu0 %713
      %715 = vrot.lane.b32.xlu0 %v698, 71
      %v716 = vpop.permute.xlu0 %715
      %717 = vrot.lane.b32.xlu0 %v701, 71
      %v718 = vpop.permute.xlu0 %717
      %719 = vrot.lane.b32.xlu0 %v704, 71
      %v720 = vpop.permute.xlu0 %719
      %vm721 = vcmask 580608
      %v722 = vsel %vm721, %v706, %v708
      %v723 = vsel %vm721, %v708, %v710
      %v724 = vsel %vm721, %v710, %v712
      %v725 = vsel %vm721, %v712, %v714
      %v726 = vsel %vm721, %v714, %v716
      %v727 = vsel %vm721, %v716, %v718
      %v728 = vsel %vm721, %v718, %v720
      %s736 = scalar_lea.vmem [#allocation1], 4
      %737 = vst [vmem:[%s736] ss:$9 sm:$0xff] %v344
      %v738 = vld [vmem:[#allocation1] sm:$0xff]
      %v740 = vld [vmem:[#allocation1 + $0x9] sm:$0xff]
      %v742 = vld [vmem:[#allocation1 + $0x12] sm:$0xff]
      %v744 = vld [vmem:[#allocation1 + $0x1b] sm:$0xff]
      %v746 = vld [vmem:[#allocation1 + $0x24] sm:$0xff]
      %v748 = vld [vmem:[#allocation1 + $0x2d] sm:$0xff]
      %v750 = vld [vmem:[#allocation1 + $0x36] sm:$0xff]
      %v752 = vld [vmem:[#allocation1 + $0x3f] sm:$0xff]
      %754 = vrot.lane.b32.xlu0 %v738, 70
      %v755 = vpop.permute.xlu0 %754
      %756 = vrot.lane.b32.xlu0 %v740, 70
      %v757 = vpop.permute.xlu0 %756
      %758 = vrot.lane.b32.xlu0 %v742, 70
      %v759 = vpop.permute.xlu0 %758
      %760 = vrot.lane.b32.xlu0 %v744, 70
      %v761 = vpop.permute.xlu0 %760
      %762 = vrot.lane.b32.xlu0 %v746, 70
      %v763 = vpop.permute.xlu0 %762
      %764 = vrot.lane.b32.xlu0 %v748, 70
      %v765 = vpop.permute.xlu0 %764
      %766 = vrot.lane.b32.xlu0 %v750, 70
      %v767 = vpop.permute.xlu0 %766
      %768 = vrot.lane.b32.xlu0 %v752, 70
      %v769 = vpop.permute.xlu0 %768
      %vm770 = vcmask 572416
      %v771 = vsel %vm770, %v755, %v757
      %v772 = vsel %vm770, %v757, %v759
      %v773 = vsel %vm770, %v759, %v761
      %v774 = vsel %vm770, %v761, %v763
      %v775 = vsel %vm770, %v763, %v765
      %v776 = vsel %vm770, %v765, %v767
      %v777 = vsel %vm770, %v767, %v769
      %vm778 = vcmask 1040384
      %vm779 = vsmask.f32 256
      %vm780 = vmand %vm778, %vm779
      %v781 = vsel %vm780, %v347, %v404
      %v782 = vsel %vm780, %v348, %v405
      %v783 = vsel %vm780, %v349, %v406
      %v784 = vsel %vm780, %v350, %v407
      %v785 = vsel %vm780, %v351, %v408
      %v786 = vsel %vm780, %v352, %v409
      %v787 = vsel %vm780, %v353, %v410
      %vm788 = vcmask 1040384
      %v791 = vsel %vm788, %v781, %v453
      %v795 = vsel %vm788, %v782, %v454
      %v799 = vsel %vm788, %v783, %v455
      %v803 = vsel %vm788, %v784, %v456
      %v807 = vsel %vm788, %v785, %v457
      %v811 = vsel %vm788, %v786, %v458
      %v815 = vsel %vm788, %v787, %v459
      %vm817 = vcmask 1041408
      %vm818 = vsmask.f32 1280
      %vm819 = vmand %vm817, %vm818
      %v820 = vsel %vm819, %v791, %v510
      %v821 = vsel %vm819, %v795, %v511
      %v822 = vsel %vm819, %v799, %v512
      %v823 = vsel %vm819, %v803, %v513
      %v824 = vsel %vm819, %v807, %v514
      %v825 = vsel %vm819, %v811, %v515
      %v826 = vsel %vm819, %v815, %v516
      %vm827 = vcmask 1041408
      %v830 = vsel %vm827, %v820, %v559
      %v834 = vsel %vm827, %v821, %v560
      %v838 = vsel %vm827, %v822, %v561
      %v842 = vsel %vm827, %v823, %v562
      %v846 = vsel %vm827, %v824, %v563
      %v850 = vsel %vm827, %v825, %v564
      %v854 = vsel %vm827, %v826, %v565
      %vm856 = vcmask 1042432
      %vm857 = vsmask.f32 2304
      %vm858 = vmand %vm856, %vm857
      %v859 = vsel %vm858, %v830, %v616
      %v860 = vsel %vm858, %v834, %v617
      %v861 = vsel %vm858, %v838, %v618
      %v862 = vsel %vm858, %v842, %v619
      %v863 = vsel %vm858, %v846, %v620
      %v864 = vsel %vm858, %v850, %v621
      %v865 = vsel %vm858, %v854, %v622
      %vm866 = vcmask 1042432
      %v869 = vsel %vm866, %v859, %v665
      %v873 = vsel %vm866, %v860, %v666
      %v877 = vsel %vm866, %v861, %v667
      %v881 = vsel %vm866, %v862, %v668
      %v885 = vsel %vm866, %v863, %v669
      %v889 = vsel %vm866, %v864, %v670
      %v893 = vsel %vm866, %v865, %v671
      %vm895 = vcmask 1043456
      %vm896 = vsmask.f32 3328
      %vm897 = vmand %vm895, %vm896
      %v898 = vsel %vm897, %v869, %v722
      %v899 = vsel %vm897, %v873, %v723
      %v900 = vsel %vm897, %v877, %v724
      %v901 = vsel %vm897, %v881, %v725
      %v902 = vsel %vm897, %v885, %v726
      %v903 = vsel %vm897, %v889, %v727
      %v904 = vsel %vm897, %v893, %v728
      %vm905 = vcmask 1043456
      %v908 = vsel %vm905, %v898, %v771
      %v911 = vsel %vm905, %v899, %v772
      %v914 = vsel %vm905, %v900, %v773
      %v917 = vsel %vm905, %v901, %v774
      %v920 = vsel %vm905, %v902, %v775
      %v923 = vsel %vm905, %v903, %v776
      %v926 = vsel %vm905, %v904, %v777
      %v927 = vld [vmem:[%s1] sm:$0xf]
      %v928 = vld [vmem:[%s1 + $0x4] sm:$0xf]
      %v929 = vld [vmem:[%s1 + $0x8] sm:$0xf]
      %v930 = vld [vmem:[%s1 + $0xc] sm:$0xf]
      %v931 = vld [vmem:[%s2] sm:$0xff]
      %v932 = vld [vmem:[%s2 + $0x8] sm:$0xff]
      %v933 = vld [vmem:[%s2 + $0x10] sm:$0xff]
      %v934 = vld [vmem:[%s2 + $0x18] sm:$0xff]
      %936 = vset.pattern.permute.xlu0 0
      %937 = vperm.xlu0 %936, %v931
      %v938 = vpop.permute.xlu0 %937
      %941 = vset.pattern.permute.xlu0 0
      %942 = vperm.xlu0 %941, %v932
      %v943 = vpop.permute.xlu0 %942
      %946 = vset.pattern.permute.xlu0 0
      %947 = vperm.xlu0 %946, %v933
      %v948 = vpop.permute.xlu0 %947
      %951 = vset.pattern.permute.xlu0 0
      %952 = vperm.xlu0 %951, %v934
      %v953 = vpop.permute.xlu0 %952
      %v959 = vunpack.c.l.b16 %v927
      %v960 = vunpack.c.l.b16 %v928
      %v961 = vunpack.c.l.b16 %v929
      %v962 = vunpack.c.l.b16 %v930
      %v963 = vpack.c.b16 %v960, %v959
      %v964 = vpack.c.b16 %v962, %v961
      %vm965 = vcmask 72704
      %v967 = vsel %vm965, %v963, 0
      %v970 = vsel %vm965, %v964, 0
      %vm972 = vcmask 1044480
      %v973 = vsel %vm905, 4294967295, 65535
      %v974 = vsel %vm972, %v973, 0
      %v975 = vand.u32 %v908, %v974
      %v977 = vand.u32 %v911, %v974
      %v979 = vand.u32 %v914, %v974
      %v981 = vand.u32 %v917, %v974
      %v983 = vand.u32 %v920, %v974
      %v985 = vand.u32 %v923, %v974
      %v987 = vand.u32 %v926, %v974
      %989 = vmatpush.bf16.msra.mxu0 0
      %990 = vmatpush.bf16.msra.mxu0 0
      %991 = vmatpush.bf16.msra.mxu0 0
      %992 = vmatpush.bf16.msra.mxu0 0
      %993 = vmatpush.bf16.msra.mxu0 0
      %994 = vmatpush.bf16.msra.mxu0 0
      %995 = vmatpush.bf16.msra.mxu0 0
      %996 = vmatpush.bf16.msra.mxu0 %v975
      %997 = vmatmul.bf16.gmra.mxu0 %v967
      %v998 = vpop.f32.mrf.mxu0
      %v999 = vadd.f32 %v938, %v998
      %v1000 = vpop.f32.mrf.mxu0
      %v1001 = vadd.f32 %v943, %v1000
      %1002 = vmatmul.bf16.gmra.mxu0 %v970
      %v1003 = vpop.f32.mrf.mxu0
      %v1004 = vadd.f32 %v948, %v1003
      %v1005 = vpop.f32.mrf.mxu0
      %v1006 = vadd.f32 %v953, %v1005
      %1007 = vdwg.mxu0
      %1008 = vmatpush.bf16.msra.mxu0 0
      %1009 = vmatpush.bf16.msra.mxu0 0
      %1010 = vmatpush.bf16.msra.mxu0 0
      %1011 = vmatpush.bf16.msra.mxu0 0
      %1012 = vmatpush.bf16.msra.mxu0 0
      %1013 = vmatpush.bf16.msra.mxu0 0
      %1014 = vmatpush.bf16.msra.mxu0 0
      %1015 = vmatpush.bf16.msra.mxu0 %v977
      %1016 = vmatmul.bf16.gmra.mxu0 %v967
      %v1017 = vpop.f32.mrf.mxu0
      %v1018 = vadd.f32 %v938, %v1017
      %v1019 = vpop.f32.mrf.mxu0
      %v1020 = vadd.f32 %v943, %v1019
      %1021 = vmatmul.bf16.gmra.mxu0 %v970
      %v1022 = vpop.f32.mrf.mxu0
      %v1023 = vadd.f32 %v948, %v1022
      %v1024 = vpop.f32.mrf.mxu0
      %v1025 = vadd.f32 %v953, %v1024
      %1026 = vdwg.mxu0
      %1027 = vmatpush.bf16.msra.mxu0 0
      %1028 = vmatpush.bf16.msra.mxu0 0
      %1029 = vmatpush.bf16.msra.mxu0 0
      %1030 = vmatpush.bf16.msra.mxu0 0
      %1031 = vmatpush.bf16.msra.mxu0 0
      %1032 = vmatpush.bf16.msra.mxu0 0
      %1033 = vmatpush.bf16.msra.mxu0 0
      %1034 = vmatpush.bf16.msra.mxu0 %v979
      %1035 = vmatmul.bf16.gmra.mxu0 %v967
      %v1036 = vpop.f32.mrf.mxu0
      %v1037 = vadd.f32 %v938, %v1036
      %v1038 = vpop.f32.mrf.mxu0
      %v1039 = vadd.f32 %v943, %v1038
      %1040 = vmatmul.bf16.gmra.mxu0 %v970
      %v1041 = vpop.f32.mrf.mxu0
      %v1042 = vadd.f32 %v948, %v1041
      %v1043 = vpop.f32.mrf.mxu0
      %v1044 = vadd.f32 %v953, %v1043
      %1045 = vdwg.mxu0
      %1046 = vmatpush.bf16.msra.mxu0 0
      %1047 = vmatpush.bf16.msra.mxu0 0
      %1048 = vmatpush.bf16.msra.mxu0 0
      %1049 = vmatpush.bf16.msra.mxu0 0
      %1050 = vmatpush.bf16.msra.mxu0 0
      %1051 = vmatpush.bf16.msra.mxu0 0
      %1052 = vmatpush.bf16.msra.mxu0 0
      %1053 = vmatpush.bf16.msra.mxu0 %v981
      %1054 = vmatmul.bf16.gmra.mxu0 %v967
      %v1055 = vpop.f32.mrf.mxu0
      %v1056 = vadd.f32 %v938, %v1055
      %v1057 = vpop.f32.mrf.mxu0
      %v1058 = vadd.f32 %v943, %v1057
      %1059 = vmatmul.bf16.gmra.mxu0 %v970
      %v1060 = vpop.f32.mrf.mxu0
      %v1061 = vadd.f32 %v948, %v1060
      %v1062 = vpop.f32.mrf.mxu0
      %v1063 = vadd.f32 %v953, %v1062
      %1064 = vdwg.mxu0
      %1065 = vmatpush.bf16.msra.mxu0 0
      %1066 = vmatpush.bf16.msra.mxu0 0
      %1067 = vmatpush.bf16.msra.mxu0 0
      %1068 = vmatpush.bf16.msra.mxu0 0
      %1069 = vmatpush.bf16.msra.mxu0 0
      %1070 = vmatpush.bf16.msra.mxu0 0
      %1071 = vmatpush.bf16.msra.mxu0 0
      %1072 = vmatpush.bf16.msra.mxu0 %v983
      %1073 = vmatmul.bf16.gmra.mxu0 %v967
      %v1074 = vpop.f32.mrf.mxu0
      %v1075 = vadd.f32 %v938, %v1074
      %v1076 = vpop.f32.mrf.mxu0
      %v1077 = vadd.f32 %v943, %v1076
      %1078 = vmatmul.bf16.gmra.mxu0 %v970
      %v1079 = vpop.f32.mrf.mxu0
      %v1080 = vadd.f32 %v948, %v1079
      %v1081 = vpop.f32.mrf.mxu0
      %v1082 = vadd.f32 %v953, %v1081
      %1083 = vdwg.mxu0
      %1084 = vmatpush.bf16.msra.mxu0 0
      %1085 = vmatpush.bf16.msra.mxu0 0
      %1086 = vmatpush.bf16.msra.mxu0 0
      %1087 = vmatpush.bf16.msra.mxu0 0
      %1088 = vmatpush.bf16.msra.mxu0 0
      %1089 = vmatpush.bf16.msra.mxu0 0
      %1090 = vmatpush.bf16.msra.mxu0 0
      %1091 = vmatpush.bf16.msra.mxu0 %v985
      %1092 = vmatmul.bf16.gmra.mxu0 %v967
      %v1093 = vpop.f32.mrf.mxu0
      %v1094 = vadd.f32 %v938, %v1093
      %v1095 = vpop.f32.mrf.mxu0
      %v1096 = vadd.f32 %v943, %v1095
      %1097 = vmatmul.bf16.gmra.mxu0 %v970
      %v1098 = vpop.f32.mrf.mxu0
      %v1099 = vadd.f32 %v948, %v1098
      %v1100 = vpop.f32.mrf.mxu0
      %v1101 = vadd.f32 %v953, %v1100
      %1102 = vdwg.mxu0
      %1103 = vmatpush.bf16.msra.mxu0 0
      %1104 = vmatpush.bf16.msra.mxu0 0
      %1105 = vmatpush.bf16.msra.mxu0 0
      %1106 = vmatpush.bf16.msra.mxu0 0
      %1107 = vmatpush.bf16.msra.mxu0 0
      %1108 = vmatpush.bf16.msra.mxu0 0
      %1109 = vmatpush.bf16.msra.mxu0 0
      %1110 = vmatpush.bf16.msra.mxu0 %v987
      %1111 = vmatmul.bf16.gmra.mxu0 %v967
      %v1112 = vpop.f32.mrf.mxu0
      %v1113 = vadd.f32 %v938, %v1112
      %v1114 = vpop.f32.mrf.mxu0
      %v1115 = vadd.f32 %v943, %v1114
      %1116 = vmatmul.bf16.gmra.mxu0 %v970
      %v1117 = vpop.f32.mrf.mxu0
      %v1118 = vadd.f32 %v948, %v1117
      %v1119 = vpop.f32.mrf.mxu0
      %v1120 = vadd.f32 %v953, %v1119
      %1121 = vdwg.mxu0
      %v1122 = vmax.f32 %v999, 0.0
      %v1123 = vmax.f32 %v1018, 0.0
      %v1124 = vmax.f32 %v1037, 0.0
      %v1125 = vmax.f32 %v1056, 0.0
      %v1126 = vmax.f32 %v1075, 0.0
      %v1127 = vmax.f32 %v1094, 0.0
      %v1128 = vmax.f32 %v1113, 0.0
      %v1129 = vmax.f32 %v1001, 0.0
      %v1130 = vmax.f32 %v1020, 0.0
      %v1131 = vmax.f32 %v1039, 0.0
      %v1132 = vmax.f32 %v1058, 0.0
      %v1133 = vmax.f32 %v1077, 0.0
      %v1134 = vmax.f32 %v1096, 0.0
      %v1135 = vmax.f32 %v1115, 0.0
      %v1136 = vmax.f32 %v1004, 0.0
      %v1137 = vmax.f32 %v1023, 0.0
      %v1138 = vmax.f32 %v1042, 0.0
      %v1139 = vmax.f32 %v1061, 0.0
      %v1140 = vmax.f32 %v1080, 0.0
      %v1141 = vmax.f32 %v1099, 0.0
      %v1142 = vmax.f32 %v1118, 0.0
      %v1143 = vmax.f32 %v1006, 0.0
      %v1144 = vmax.f32 %v1025, 0.0
      %v1145 = vmax.f32 %v1044, 0.0
      %v1146 = vmax.f32 %v1063, 0.0
      %v1147 = vmax.f32 %v1082, 0.0
      %v1148 = vmax.f32 %v1101, 0.0
      %v1149 = vmax.f32 %v1120, 0.0
      %v1150 = vpack.c.bf16 %v1123, %v1122
      %v1151 = vpack.c.bf16 %v1125, %v1124
      %v1152 = vpack.c.bf16 %v1127, %v1126
      %v1153 = vpack.c.bf16 %v1128, %v1128
      %v1154 = vpack.c.bf16 %v1130, %v1129
      %v1155 = vpack.c.bf16 %v1132, %v1131
      %v1156 = vpack.c.bf16 %v1134, %v1133
      %v1157 = vpack.c.bf16 %v1135, %v1135
      %v1158 = vpack.c.bf16 %v1137, %v1136
      %v1159 = vpack.c.bf16 %v1139, %v1138
      %v1160 = vpack.c.bf16 %v1141, %v1140
      %v1161 = vpack.c.bf16 %v1142, %v1142
      %v1162 = vpack.c.bf16 %v1144, %v1143
      %v1163 = vpack.c.bf16 %v1146, %v1145
      %v1164 = vpack.c.bf16 %v1148, %v1147
      %v1165 = vpack.c.bf16 %v1149, %v1149
      %1166 = vst [vmem:[#allocation3] sm:$0xff] %v1150
      %1167 = vst [vmem:[#allocation3 + $0x8] sm:$0xff] %v1151
      %1168 = vst [vmem:[#allocation3 + $0x10] sm:$0xff] %v1152
      %1169 = vst [vmem:[#allocation3 + $0x18] sm:$0xf] %v1153
      %1170 = vst [vmem:[#allocation3 + $0x20] sm:$0xff] %v1154
      %1171 = vst [vmem:[#allocation3 + $0x28] sm:$0xff] %v1155
      %1172 = vst [vmem:[#allocation3 + $0x30] sm:$0xff] %v1156
      %1173 = vst [vmem:[#allocation3 + $0x38] sm:$0xf] %v1157
      %1174 = vst [vmem:[#allocation3 + $0x40] sm:$0xff] %v1158
      %1175 = vst [vmem:[#allocation3 + $0x48] sm:$0xff] %v1159
      %1176 = vst [vmem:[#allocation3 + $0x50] sm:$0xff] %v1160
      %1177 = vst [vmem:[#allocation3 + $0x58] sm:$0xf] %v1161
      %1178 = vst [vmem:[#allocation3 + $0x60] sm:$0xff] %v1162
      %1179 = vst [vmem:[#allocation3 + $0x68] sm:$0xff] %v1163
      %1180 = vst [vmem:[#allocation3 + $0x70] sm:$0xff] %v1164
      %1181 = vst [vmem:[#allocation3 + $0x78] sm:$0xf] %v1165
      %v1182 = vld [vmem:[#allocation3] sm:$0xff]
      %v1183 = vld [vmem:[#allocation3 + $0x8] sm:$0xff]
      %v1184 = vld [vmem:[#allocation3 + $0x10] sm:$0xff]
      %v1185 = vld [vmem:[#allocation3 + $0x18] sm:$0xf]
      %v1186 = vld [vmem:[#allocation3 + $0x20] sm:$0xff]
      %v1187 = vld [vmem:[#allocation3 + $0x28] sm:$0xff]
      %v1188 = vld [vmem:[#allocation3 + $0x30] sm:$0xff]
      %v1189 = vld [vmem:[#allocation3 + $0x38] sm:$0xf]
      %v1190 = vld [vmem:[#allocation3 + $0x40] sm:$0xff]
      %v1191 = vld [vmem:[#allocation3 + $0x48] sm:$0xff]
      %v1192 = vld [vmem:[#allocation3 + $0x50] sm:$0xff]
      %v1193 = vld [vmem:[#allocation3 + $0x58] sm:$0xf]
      %v1194 = vld [vmem:[#allocation3 + $0x60] sm:$0xff]
      %v1195 = vld [vmem:[#allocation3 + $0x68] sm:$0xff]
      %v1196 = vld [vmem:[#allocation3 + $0x70] sm:$0xff]
      %v1197 = vld [vmem:[#allocation3 + $0x78] sm:$0xf]
      %1198 = vst [vmem:[#allocation2] sm:$0xff] %v1182
      %1199 = vst [vmem:[#allocation2 + $0x8] sm:$0xff] %v1183
      %1200 = vst [vmem:[#allocation2 + $0x10] sm:$0xff] %v1184
      %1201 = vst [vmem:[#allocation2 + $0x18] sm:$0xf] %v1185
      %1202 = vst [vmem:[#allocation2 + $0x1c] sm:$0xff] %v1186
      %1203 = vst [vmem:[#allocation2 + $0x24] sm:$0xff] %v1187
      %1204 = vst [vmem:[#allocation2 + $0x2c] sm:$0xff] %v1188
      %1205 = vst [vmem:[#allocation2 + $0x34] sm:$0xf] %v1189
      %1206 = vst [vmem:[#allocation2 + $0x38] sm:$0xff] %v1190
      %1207 = vst [vmem:[#allocation2 + $0x40] sm:$0xff] %v1191
      %1208 = vst [vmem:[#allocation2 + $0x48] sm:$0xff] %v1192
      %1209 = vst [vmem:[#allocation2 + $0x50] sm:$0xf] %v1193
      %1210 = vst [vmem:[#allocation2 + $0x54] sm:$0xff] %v1194
      %1211 = vst [vmem:[#allocation2 + $0x5c] sm:$0xff] %v1195
      %1212 = vst [vmem:[#allocation2 + $0x64] sm:$0xff] %v1196
      %1213 = vst [vmem:[#allocation2 + $0x6c] sm:$0xf] %v1197
      %v1214 = vld [vmem:[#allocation3] sm:$0xff]
      %v1215 = vld [vmem:[#allocation3 + $0x8] sm:$0xff]
      %v1216 = vld [vmem:[#allocation3 + $0x10] sm:$0xff]
      %v1217 = vld [vmem:[#allocation3 + $0x18] sm:$0xff]
      %v1218 = vld [vmem:[#allocation3 + $0x20] sm:$0xff]
      %v1219 = vld [vmem:[#allocation3 + $0x28] sm:$0xff]
      %v1220 = vld [vmem:[#allocation3 + $0x30] sm:$0xff]
      %v1221 = vld [vmem:[#allocation3 + $0x38] sm:$0xff]
      %v1222 = vld [vmem:[#allocation3 + $0x40] sm:$0xff]
      %v1223 = vld [vmem:[#allocation3 + $0x48] sm:$0xff]
      %v1224 = vld [vmem:[#allocation3 + $0x50] sm:$0xff]
      %v1225 = vld [vmem:[#allocation3 + $0x58] sm:$0xff]
      %v1226 = vld [vmem:[#allocation3 + $0x60] sm:$0xff]
      %v1227 = vld [vmem:[#allocation3 + $0x68] sm:$0xff]
      %v1228 = vld [vmem:[#allocation3 + $0x70] sm:$0xff]
      %v1229 = vld [vmem:[#allocation3 + $0x78] sm:$0xff]
      %1246 = vrot.lane.b32.xlu0 %v1214, 127
      %v1247 = vpop.permute.xlu0 %1246
      %1248 = vrot.lane.b32.xlu0 %v1215, 127
      %v1249 = vpop.permute.xlu0 %1248
      %1250 = vrot.lane.b32.xlu0 %v1216, 127
      %v1251 = vpop.permute.xlu0 %1250
      %1252 = vrot.lane.b32.xlu0 %v1217, 127
      %v1253 = vpop.permute.xlu0 %1252
      %1254 = vrot.lane.b32.xlu0 %v1218, 127
      %v1255 = vpop.permute.xlu0 %1254
      %1256 = vrot.lane.b32.xlu0 %v1219, 127
      %v1257 = vpop.permute.xlu0 %1256
      %1258 = vrot.lane.b32.xlu0 %v1220, 127
      %v1259 = vpop.permute.xlu0 %1258
      %1260 = vrot.lane.b32.xlu0 %v1221, 127
      %v1261 = vpop.permute.xlu0 %1260
      %1262 = vrot.lane.b32.xlu0 %v1222, 127
      %v1263 = vpop.permute.xlu0 %1262
      %1264 = vrot.lane.b32.xlu0 %v1223, 127
      %v1265 = vpop.permute.xlu0 %1264
      %1266 = vrot.lane.b32.xlu0 %v1224, 127
      %v1267 = vpop.permute.xlu0 %1266
      %1268 = vrot.lane.b32.xlu0 %v1225, 127
      %v1269 = vpop.permute.xlu0 %1268
      %1270 = vrot.lane.b32.xlu0 %v1226, 127
      %v1271 = vpop.permute.xlu0 %1270
      %1272 = vrot.lane.b32.xlu0 %v1227, 127
      %v1273 = vpop.permute.xlu0 %1272
      %1274 = vrot.lane.b32.xlu0 %v1228, 127
      %v1275 = vpop.permute.xlu0 %1274
      %1276 = vrot.lane.b32.xlu0 %v1229, 127
      %v1277 = vpop.permute.xlu0 %1276
      %v1278 = vrot.slane %v1247, 4
      %v1279 = vrot.slane %v1249, 4
      %v1280 = vrot.slane %v1251, 4
      %v1281 = vrot.slane %v1253, 4
      %v1282 = vrot.slane %v1255, 4
      %v1283 = vrot.slane %v1257, 4
      %v1284 = vrot.slane %v1259, 4
      %v1285 = vrot.slane %v1261, 4
      %v1286 = vrot.slane %v1263, 4
      %v1287 = vrot.slane %v1265, 4
      %v1288 = vrot.slane %v1267, 4
      %v1289 = vrot.slane %v1269, 4
      %v1290 = vrot.slane %v1271, 4
      %v1291 = vrot.slane %v1273, 4
      %v1292 = vrot.slane %v1275, 4
      %v1293 = vrot.slane %v1277, 4
      %v1294 = vsel %vm895, %v1278, %v1279
      %v1295 = vsel %vm403, %v1247, %v1294
      %v1296 = vsel %vm895, %v1279, %v1280
      %v1297 = vsel %vm403, %v1249, %v1296
      %v1298 = vsel %vm895, %v1280, %v1281
      %v1299 = vsel %vm403, %v1251, %v1298
      %v1300 = vsel %vm403, %v1253, %v1281
      %v1301 = vsel %vm895, %v1282, %v1283
      %v1302 = vsel %vm403, %v1255, %v1301
      %v1303 = vsel %vm895, %v1283, %v1284
      %v1304 = vsel %vm403, %v1257, %v1303
      %v1305 = vsel %vm895, %v1284, %v1285
      %v1306 = vsel %vm403, %v1259, %v1305
      %v1307 = vsel %vm403, %v1261, %v1285
      %v1308 = vsel %vm895, %v1286, %v1287
      %v1309 = vsel %vm403, %v1263, %v1308
      %v1310 = vsel %vm895, %v1287, %v1288
      %v1311 = vsel %vm403, %v1265, %v1310
      %v1312 = vsel %vm895, %v1288, %v1289
      %v1313 = vsel %vm403, %v1267, %v1312
      %v1314 = vsel %vm403, %v1269, %v1289
      %v1315 = vsel %vm895, %v1290, %v1291
      %v1316 = vsel %vm403, %v1271, %v1315
      %v1317 = vsel %vm895, %v1291, %v1292
      %v1318 = vsel %vm403, %v1273, %v1317
      %v1319 = vsel %vm895, %v1292, %v1293
      %v1320 = vsel %vm403, %v1275, %v1319
      %v1321 = vsel %vm403, %v1277, %v1293
      %1338 = vst [vmem:[#allocation2 + $0x70] sm:$0xff] %v1295
      %1339 = vst [vmem:[#allocation2 + $0x78] sm:$0xff] %v1297
      %1340 = vst [vmem:[#allocation2 + $0x80] sm:$0xff] %v1299
      %1341 = vst [vmem:[#allocation2 + $0x88] sm:$0xf] %v1300
      %1342 = vst [vmem:[#allocation2 + $0x8c] sm:$0xff] %v1302
      %1343 = vst [vmem:[#allocation2 + $0x94] sm:$0xff] %v1304
      %1344 = vst [vmem:[#allocation2 + $0x9c] sm:$0xff] %v1306
      %1345 = vst [vmem:[#allocation2 + $0xa4] sm:$0xf] %v1307
      %1346 = vst [vmem:[#allocation2 + $0xa8] sm:$0xff] %v1309
      %1347 = vst [vmem:[#allocation2 + $0xb0] sm:$0xff] %v1311
      %1348 = vst [vmem:[#allocation2 + $0xb8] sm:$0xff] %v1313
      %1349 = vst [vmem:[#allocation2 + $0xc0] sm:$0xf] %v1314
      %1350 = vst [vmem:[#allocation2 + $0xc4] sm:$0xff] %v1316
      %1351 = vst [vmem:[#allocation2 + $0xcc] sm:$0xff] %v1318
      %1352 = vst [vmem:[#allocation2 + $0xd4] sm:$0xff] %v1320
      %1353 = vst [vmem:[#allocation2 + $0xdc] sm:$0xf] %v1321
      %v1354 = vld [vmem:[#allocation3] sm:$0xff]
      %v1355 = vld [vmem:[#allocation3 + $0x8] sm:$0xff]
      %v1356 = vld [vmem:[#allocation3 + $0x10] sm:$0xff]
      %v1357 = vld [vmem:[#allocation3 + $0x18] sm:$0xff]
      %v1358 = vld [vmem:[#allocation3 + $0x20] sm:$0xff]
      %v1359 = vld [vmem:[#allocation3 + $0x28] sm:$0xff]
      %v1360 = vld [vmem:[#allocation3 + $0x30] sm:$0xff]
      %v1361 = vld [vmem:[#allocation3 + $0x38] sm:$0xff]
      %v1362 = vld [vmem:[#allocation3 + $0x40] sm:$0xff]
      %v1363 = vld [vmem:[#allocation3 + $0x48] sm:$0xff]
      %v1364 = vld [vmem:[#allocation3 + $0x50] sm:$0xff]
      %v1365 = vld [vmem:[#allocation3 + $0x58] sm:$0xff]
      %v1366 = vld [vmem:[#allocation3 + $0x60] sm:$0xff]
      %v1367 = vld [vmem:[#allocation3 + $0x68] sm:$0xff]
      %v1368 = vld [vmem:[#allocation3 + $0x70] sm:$0xff]
      %v1369 = vld [vmem:[#allocation3 + $0x78] sm:$0xff]
      %1386 = vrot.lane.b32.xlu0 %v1354, 126
      %v1387 = vpop.permute.xlu0 %1386
      %1388 = vrot.lane.b32.xlu0 %v1355, 126
      %v1389 = vpop.permute.xlu0 %1388
      %1390 = vrot.lane.b32.xlu0 %v1356, 126
      %v1391 = vpop.permute.xlu0 %1390
      %1392 = vrot.lane.b32.xlu0 %v1357, 126
      %v1393 = vpop.permute.xlu0 %1392
      %1394 = vrot.lane.b32.xlu0 %v1358, 126
      %v1395 = vpop.permute.xlu0 %1394
      %1396 = vrot.lane.b32.xlu0 %v1359, 126
      %v1397 = vpop.permute.xlu0 %1396
      %1398 = vrot.lane.b32.xlu0 %v1360, 126
      %v1399 = vpop.permute.xlu0 %1398
      %1400 = vrot.lane.b32.xlu0 %v1361, 126
      %v1401 = vpop.permute.xlu0 %1400
      %1402 = vrot.lane.b32.xlu0 %v1362, 126
      %v1403 = vpop.permute.xlu0 %1402
      %1404 = vrot.lane.b32.xlu0 %v1363, 126
      %v1405 = vpop.permute.xlu0 %1404
      %1406 = vrot.lane.b32.xlu0 %v1364, 126
      %v1407 = vpop.permute.xlu0 %1406
      %1408 = vrot.lane.b32.xlu0 %v1365, 126
      %v1409 = vpop.permute.xlu0 %1408
      %1410 = vrot.lane.b32.xlu0 %v1366, 126
      %v1411 = vpop.permute.xlu0 %1410
      %1412 = vrot.lane.b32.xlu0 %v1367, 126
      %v1413 = vpop.permute.xlu0 %1412
      %1414 = vrot.lane.b32.xlu0 %v1368, 126
      %v1415 = vpop.permute.xlu0 %1414
      %1416 = vrot.lane.b32.xlu0 %v1369, 126
      %v1417 = vpop.permute.xlu0 %1416
      %v1418 = vrot.slane %v1387, 4
      %v1419 = vrot.slane %v1389, 4
      %v1420 = vrot.slane %v1391, 4
      %v1421 = vrot.slane %v1393, 4
      %v1422 = vrot.slane %v1395, 4
      %v1423 = vrot.slane %v1397, 4
      %v1424 = vrot.slane %v1399, 4
      %v1425 = vrot.slane %v1401, 4
      %v1426 = vrot.slane %v1403, 4
      %v1427 = vrot.slane %v1405, 4
      %v1428 = vrot.slane %v1407, 4
      %v1429 = vrot.slane %v1409, 4
      %v1430 = vrot.slane %v1411, 4
      %v1431 = vrot.slane %v1413, 4
      %v1432 = vrot.slane %v1415, 4
      %v1433 = vrot.slane %v1417, 4
      %v1434 = vsel %vm895, %v1418, %v1419
      %v1435 = vsel %vm452, %v1387, %v1434
      %v1436 = vsel %vm895, %v1419, %v1420
      %v1437 = vsel %vm452, %v1389, %v1436
      %v1438 = vsel %vm895, %v1420, %v1421
      %v1439 = vsel %vm452, %v1391, %v1438
      %v1440 = vsel %vm452, %v1393, %v1421
      %v1441 = vsel %vm895, %v1422, %v1423
      %v1442 = vsel %vm452, %v1395, %v1441
      %v1443 = vsel %vm895, %v1423, %v1424
      %v1444 = vsel %vm452, %v1397, %v1443
      %v1445 = vsel %vm895, %v1424, %v1425
      %v1446 = vsel %vm452, %v1399, %v1445
      %v1447 = vsel %vm452, %v1401, %v1425
      %v1448 = vsel %vm895, %v1426, %v1427
      %v1449 = vsel %vm452, %v1403, %v1448
      %v1450 = vsel %vm895, %v1427, %v1428
      %v1451 = vsel %vm452, %v1405, %v1450
      %v1452 = vsel %vm895, %v1428, %v1429
      %v1453 = vsel %vm452, %v1407, %v1452
      %v1454 = vsel %vm452, %v1409, %v1429
      %v1455 = vsel %vm895, %v1430, %v1431
      %v1456 = vsel %vm452, %v1411, %v1455
      %v1457 = vsel %vm895, %v1431, %v1432
      %v1458 = vsel %vm452, %v1413, %v1457
      %v1459 = vsel %vm895, %v1432, %v1433
      %v1460 = vsel %vm452, %v1415, %v1459
      %v1461 = vsel %vm452, %v1417, %v1433
      %1478 = vst [vmem:[#allocation2 + $0xe0] sm:$0xff] %v1435
      %1479 = vst [vmem:[#allocation2 + $0xe8] sm:$0xff] %v1437
      %1480 = vst [vmem:[#allocation2 + $0xf0] sm:$0xff] %v1439
      %1481 = vst [vmem:[#allocation2 + $0xf8] sm:$0xf] %v1440
      %1482 = vst [vmem:[#allocation2 + $0xfc] sm:$0xff] %v1442
      %1483 = vst [vmem:[#allocation2 + $0x104] sm:$0xff] %v1444
      %1484 = vst [vmem:[#allocation2 + $0x10c] sm:$0xff] %v1446
      %1485 = vst [vmem:[#allocation2 + $0x114] sm:$0xf] %v1447
      %1486 = vst [vmem:[#allocation2 + $0x118] sm:$0xff] %v1449
      %1487 = vst [vmem:[#allocation2 + $0x120] sm:$0xff] %v1451
      %1488 = vst [vmem:[#allocation2 + $0x128] sm:$0xff] %v1453
      %1489 = vst [vmem:[#allocation2 + $0x130] sm:$0xf] %v1454
      %1490 = vst [vmem:[#allocation2 + $0x134] sm:$0xff] %v1456
      %1491 = vst [vmem:[#allocation2 + $0x13c] sm:$0xff] %v1458
      %1492 = vst [vmem:[#allocation2 + $0x144] sm:$0xff] %v1460
      %1493 = vst [vmem:[#allocation2 + $0x14c] sm:$0xf] %v1461
      %v1494 = vld [vmem:[#allocation3] sm:$0xff]
      %v1495 = vld [vmem:[#allocation3 + $0x8] sm:$0xff]
      %v1496 = vld [vmem:[#allocation3 + $0x10] sm:$0xff]
      %v1497 = vld [vmem:[#allocation3 + $0x18] sm:$0xff]
      %v1498 = vld [vmem:[#allocation3 + $0x20] sm:$0xff]
      %v1499 = vld [vmem:[#allocation3 + $0x28] sm:$0xff]
      %v1500 = vld [vmem:[#allocation3 + $0x30] sm:$0xff]
      %v1501 = vld [vmem:[#allocation3 + $0x38] sm:$0xff]
      %v1502 = vld [vmem:[#allocation3 + $0x40] sm:$0xff]
      %v1503 = vld [vmem:[#allocation3 + $0x48] sm:$0xff]
      %v1504 = vld [vmem:[#allocation3 + $0x50] sm:$0xff]
      %v1505 = vld [vmem:[#allocation3 + $0x58] sm:$0xff]
      %v1506 = vld [vmem:[#allocation3 + $0x60] sm:$0xff]
      %v1507 = vld [vmem:[#allocation3 + $0x68] sm:$0xff]
      %v1508 = vld [vmem:[#allocation3 + $0x70] sm:$0xff]
      %v1509 = vld [vmem:[#allocation3 + $0x78] sm:$0xff]
      %1526 = vrot.lane.b32.xlu0 %v1494, 100
      %v1527 = vpop.permute.xlu0 %1526
      %1528 = vrot.lane.b32.xlu0 %v1495, 100
      %v1529 = vpop.permute.xlu0 %1528
      %1530 = vrot.lane.b32.xlu0 %v1496, 100
      %v1531 = vpop.permute.xlu0 %1530
      %1532 = vrot.lane.b32.xlu0 %v1497, 100
      %v1533 = vpop.permute.xlu0 %1532
      %1534 = vrot.lane.b32.xlu0 %v1498, 100
      %v1535 = vpop.permute.xlu0 %1534
      %1536 = vrot.lane.b32.xlu0 %v1499, 100
      %v1537 = vpop.permute.xlu0 %1536
      %1538 = vrot.lane.b32.xlu0 %v1500, 100
      %v1539 = vpop.permute.xlu0 %1538
      %1540 = vrot.lane.b32.xlu0 %v1501, 100
      %v1541 = vpop.permute.xlu0 %1540
      %1542 = vrot.lane.b32.xlu0 %v1502, 100
      %v1543 = vpop.permute.xlu0 %1542
      %1544 = vrot.lane.b32.xlu0 %v1503, 100
      %v1545 = vpop.permute.xlu0 %1544
      %1546 = vrot.lane.b32.xlu0 %v1504, 100
      %v1547 = vpop.permute.xlu0 %1546
      %1548 = vrot.lane.b32.xlu0 %v1505, 100
      %v1549 = vpop.permute.xlu0 %1548
      %1550 = vrot.lane.b32.xlu0 %v1506, 100
      %v1551 = vpop.permute.xlu0 %1550
      %1552 = vrot.lane.b32.xlu0 %v1507, 100
      %v1553 = vpop.permute.xlu0 %1552
      %1554 = vrot.lane.b32.xlu0 %v1508, 100
      %v1555 = vpop.permute.xlu0 %1554
      %1556 = vrot.lane.b32.xlu0 %v1509, 100
      %v1557 = vpop.permute.xlu0 %1556
      %v1558 = vrot.slane %v1527, 4
      %v1559 = vrot.slane %v1529, 4
      %v1560 = vrot.slane %v1531, 4
      %v1561 = vrot.slane %v1533, 4
      %v1562 = vrot.slane %v1535, 4
      %v1563 = vrot.slane %v1537, 4
      %v1564 = vrot.slane %v1539, 4
      %v1565 = vrot.slane %v1541, 4
      %v1566 = vrot.slane %v1543, 4
      %v1567 = vrot.slane %v1545, 4
      %v1568 = vrot.slane %v1547, 4
      %v1569 = vrot.slane %v1549, 4
      %v1570 = vrot.slane %v1551, 4
      %v1571 = vrot.slane %v1553, 4
      %v1572 = vrot.slane %v1555, 4
      %v1573 = vrot.slane %v1557, 4
      %v1574 = vsel %vm895, %v1558, %v1559
      %v1575 = vsel %vm509, %v1527, %v1574
      %v1576 = vsel %vm895, %v1559, %v1560
      %v1577 = vsel %vm509, %v1529, %v1576
      %v1578 = vsel %vm895, %v1560, %v1561
      %v1579 = vsel %vm509, %v1531, %v1578
      %v1580 = vsel %vm509, %v1533, %v1561
      %v1581 = vsel %vm895, %v1562, %v1563
      %v1582 = vsel %vm509, %v1535, %v1581
      %v1583 = vsel %vm895, %v1563, %v1564
      %v1584 = vsel %vm509, %v1537, %v1583
      %v1585 = vsel %vm895, %v1564, %v1565
      %v1586 = vsel %vm509, %v1539, %v1585
      %v1587 = vsel %vm509, %v1541, %v1565
      %v1588 = vsel %vm895, %v1566, %v1567
      %v1589 = vsel %vm509, %v1543, %v1588
      %v1590 = vsel %vm895, %v1567, %v1568
      %v1591 = vsel %vm509, %v1545, %v1590
      %v1592 = vsel %vm895, %v1568, %v1569
      %v1593 = vsel %vm509, %v1547, %v1592
      %v1594 = vsel %vm509, %v1549, %v1569
      %v1595 = vsel %vm895, %v1570, %v1571
      %v1596 = vsel %vm509, %v1551, %v1595
      %v1597 = vsel %vm895, %v1571, %v1572
      %v1598 = vsel %vm509, %v1553, %v1597
      %v1599 = vsel %vm895, %v1572, %v1573
      %v1600 = vsel %vm509, %v1555, %v1599
      %v1601 = vsel %vm509, %v1557, %v1573
      %1618 = vst [vmem:[#allocation2 + $0x150] sm:$0xff] %v1575
      %1619 = vst [vmem:[#allocation2 + $0x158] sm:$0xff] %v1577
      %1620 = vst [vmem:[#allocation2 + $0x160] sm:$0xff] %v1579
      %1621 = vst [vmem:[#allocation2 + $0x168] sm:$0xf] %v1580
      %1622 = vst [vmem:[#allocation2 + $0x16c] sm:$0xff] %v1582
      %1623 = vst [vmem:[#allocation2 + $0x174] sm:$0xff] %v1584
      %1624 = vst [vmem:[#allocation2 + $0x17c] sm:$0xff] %v1586
      %1625 = vst [vmem:[#allocation2 + $0x184] sm:$0xf] %v1587
      %1626 = vst [vmem:[#allocation2 + $0x188] sm:$0xff] %v1589
      %1627 = vst [vmem:[#allocation2 + $0x190] sm:$0xff] %v1591
      %1628 = vst [vmem:[#allocation2 + $0x198] sm:$0xff] %v1593
      %1629 = vst [vmem:[#allocation2 + $0x1a0] sm:$0xf] %v1594
      %1630 = vst [vmem:[#allocation2 + $0x1a4] sm:$0xff] %v1596
      %1631 = vst [vmem:[#allocation2 + $0x1ac] sm:$0xff] %v1598
      %1632 = vst [vmem:[#allocation2 + $0x1b4] sm:$0xff] %v1600
      %1633 = vst [vmem:[#allocation2 + $0x1bc] sm:$0xf] %v1601
      %v1634 = vld [vmem:[#allocation3] sm:$0xff]
      %v1635 = vld [vmem:[#allocation3 + $0x8] sm:$0xff]
      %v1636 = vld [vmem:[#allocation3 + $0x10] sm:$0xff]
      %v1637 = vld [vmem:[#allocation3 + $0x18] sm:$0xff]
      %v1638 = vld [vmem:[#allocation3 + $0x20] sm:$0xff]
      %v1639 = vld [vmem:[#allocation3 + $0x28] sm:$0xff]
      %v1640 = vld [vmem:[#allocation3 + $0x30] sm:$0xff]
      %v1641 = vld [vmem:[#allocation3 + $0x38] sm:$0xff]
      %v1642 = vld [vmem:[#allocation3 + $0x40] sm:$0xff]
      %v1643 = vld [vmem:[#allocation3 + $0x48] sm:$0xff]
      %v1644 = vld [vmem:[#allocation3 + $0x50] sm:$0xff]
      %v1645 = vld [vmem:[#allocation3 + $0x58] sm:$0xff]
      %v1646 = vld [vmem:[#allocation3 + $0x60] sm:$0xff]
      %v1647 = vld [vmem:[#allocation3 + $0x68] sm:$0xff]
      %v1648 = vld [vmem:[#allocation3 + $0x70] sm:$0xff]
      %v1649 = vld [vmem:[#allocation3 + $0x78] sm:$0xff]
      %1666 = vrot.lane.b32.xlu0 %v1634, 99
      %v1667 = vpop.permute.xlu0 %1666
      %1668 = vrot.lane.b32.xlu0 %v1635, 99
      %v1669 = vpop.permute.xlu0 %1668
      %1670 = vrot.lane.b32.xlu0 %v1636, 99
      %v1671 = vpop.permute.xlu0 %1670
      %1672 = vrot.lane.b32.xlu0 %v1637, 99
      %v1673 = vpop.permute.xlu0 %1672
      %1674 = vrot.lane.b32.xlu0 %v1638, 99
      %v1675 = vpop.permute.xlu0 %1674
      %1676 = vrot.lane.b32.xlu0 %v1639, 99
      %v1677 = vpop.permute.xlu0 %1676
      %1678 = vrot.lane.b32.xlu0 %v1640, 99
      %v1679 = vpop.permute.xlu0 %1678
      %1680 = vrot.lane.b32.xlu0 %v1641, 99
      %v1681 = vpop.permute.xlu0 %1680
      %1682 = vrot.lane.b32.xlu0 %v1642, 99
      %v1683 = vpop.permute.xlu0 %1682
      %1684 = vrot.lane.b32.xlu0 %v1643, 99
      %v1685 = vpop.permute.xlu0 %1684
      %1686 = vrot.lane.b32.xlu0 %v1644, 99
      %v1687 = vpop.permute.xlu0 %1686
      %1688 = vrot.lane.b32.xlu0 %v1645, 99
      %v1689 = vpop.permute.xlu0 %1688
      %1690 = vrot.lane.b32.xlu0 %v1646, 99
      %v1691 = vpop.permute.xlu0 %1690
      %1692 = vrot.lane.b32.xlu0 %v1647, 99
      %v1693 = vpop.permute.xlu0 %1692
      %1694 = vrot.lane.b32.xlu0 %v1648, 99
      %v1695 = vpop.permute.xlu0 %1694
      %1696 = vrot.lane.b32.xlu0 %v1649, 99
      %v1697 = vpop.permute.xlu0 %1696
      %v1698 = vrot.slane %v1667, 4
      %v1699 = vrot.slane %v1669, 4
      %v1700 = vrot.slane %v1671, 4
      %v1701 = vrot.slane %v1673, 4
      %v1702 = vrot.slane %v1675, 4
      %v1703 = vrot.slane %v1677, 4
      %v1704 = vrot.slane %v1679, 4
      %v1705 = vrot.slane %v1681, 4
      %v1706 = vrot.slane %v1683, 4
      %v1707 = vrot.slane %v1685, 4
      %v1708 = vrot.slane %v1687, 4
      %v1709 = vrot.slane %v1689, 4
      %v1710 = vrot.slane %v1691, 4
      %v1711 = vrot.slane %v1693, 4
      %v1712 = vrot.slane %v1695, 4
      %v1713 = vrot.slane %v1697, 4
      %v1714 = vsel %vm895, %v1698, %v1699
      %v1715 = vsel %vm558, %v1667, %v1714
      %v1716 = vsel %vm895, %v1699, %v1700
      %v1717 = vsel %vm558, %v1669, %v1716
      %v1718 = vsel %vm895, %v1700, %v1701
      %v1719 = vsel %vm558, %v1671, %v1718
      %v1720 = vsel %vm558, %v1673, %v1701
      %v1721 = vsel %vm895, %v1702, %v1703
      %v1722 = vsel %vm558, %v1675, %v1721
      %v1723 = vsel %vm895, %v1703, %v1704
      %v1724 = vsel %vm558, %v1677, %v1723
      %v1725 = vsel %vm895, %v1704, %v1705
      %v1726 = vsel %vm558, %v1679, %v1725
      %v1727 = vsel %vm558, %v1681, %v1705
      %v1728 = vsel %vm895, %v1706, %v1707
      %v1729 = vsel %vm558, %v1683, %v1728
      %v1730 = vsel %vm895, %v1707, %v1708
      %v1731 = vsel %vm558, %v1685, %v1730
      %v1732 = vsel %vm895, %v1708, %v1709
      %v1733 = vsel %vm558, %v1687, %v1732
      %v1734 = vsel %vm558, %v1689, %v1709
      %v1735 = vsel %vm895, %v1710, %v1711
      %v1736 = vsel %vm558, %v1691, %v1735
      %v1737 = vsel %vm895, %v1711, %v1712
      %v1738 = vsel %vm558, %v1693, %v1737
      %v1739 = vsel %vm895, %v1712, %v1713
      %v1740 = vsel %vm558, %v1695, %v1739
      %v1741 = vsel %vm558, %v1697, %v1713
      %1758 = vst [vmem:[#allocation2 + $0x1c0] sm:$0xff] %v1715
      %1759 = vst [vmem:[#allocation2 + $0x1c8] sm:$0xff] %v1717
      %1760 = vst [vmem:[#allocation2 + $0x1d0] sm:$0xff] %v1719
      %1761 = vst [vmem:[#allocation2 + $0x1d8] sm:$0xf] %v1720
      %1762 = vst [vmem:[#allocation2 + $0x1dc] sm:$0xff] %v1722
      %1763 = vst [vmem:[#allocation2 + $0x1e4] sm:$0xff] %v1724
      %1764 = vst [vmem:[#allocation2 + $0x1ec] sm:$0xff] %v1726
      %1765 = vst [vmem:[#allocation2 + $0x1f4] sm:$0xf] %v1727
      %1766 = vst [vmem:[#allocation2 + $0x1f8] sm:$0xff] %v1729
      %1767 = vst [vmem:[#allocation2 + $0x200] sm:$0xff] %v1731
      %1768 = vst [vmem:[#allocation2 + $0x208] sm:$0xff] %v1733
      %1769 = vst [vmem:[#allocation2 + $0x210] sm:$0xf] %v1734
      %1770 = vst [vmem:[#allocation2 + $0x214] sm:$0xff] %v1736
      %1771 = vst [vmem:[#allocation2 + $0x21c] sm:$0xff] %v1738
      %1772 = vst [vmem:[#allocation2 + $0x224] sm:$0xff] %v1740
      %1773 = vst [vmem:[#allocation2 + $0x22c] sm:$0xf] %v1741
      %v1774 = vld [vmem:[#allocation3] sm:$0xff]
      %v1775 = vld [vmem:[#allocation3 + $0x8] sm:$0xff]
      %v1776 = vld [vmem:[#allocation3 + $0x10] sm:$0xff]
      %v1777 = vld [vmem:[#allocation3 + $0x18] sm:$0xff]
      %v1778 = vld [vmem:[#allocation3 + $0x20] sm:$0xff]
      %v1779 = vld [vmem:[#allocation3 + $0x28] sm:$0xff]
      %v1780 = vld [vmem:[#allocation3 + $0x30] sm:$0xff]
      %v1781 = vld [vmem:[#allocation3 + $0x38] sm:$0xff]
      %v1782 = vld [vmem:[#allocation3 + $0x40] sm:$0xff]
      %v1783 = vld [vmem:[#allocation3 + $0x48] sm:$0xff]
      %v1784 = vld [vmem:[#allocation3 + $0x50] sm:$0xff]
      %v1785 = vld [vmem:[#allocation3 + $0x58] sm:$0xff]
      %v1786 = vld [vmem:[#allocation3 + $0x60] sm:$0xff]
      %v1787 = vld [vmem:[#allocation3 + $0x68] sm:$0xff]
      %v1788 = vld [vmem:[#allocation3 + $0x70] sm:$0xff]
      %v1789 = vld [vmem:[#allocation3 + $0x78] sm:$0xff]
      %1806 = vrot.lane.b32.xlu0 %v1774, 98
      %v1807 = vpop.permute.xlu0 %1806
      %1808 = vrot.lane.b32.xlu0 %v1775, 98
      %v1809 = vpop.permute.xlu0 %1808
      %1810 = vrot.lane.b32.xlu0 %v1776, 98
      %v1811 = vpop.permute.xlu0 %1810
      %1812 = vrot.lane.b32.xlu0 %v1777, 98
      %v1813 = vpop.permute.xlu0 %1812
      %1814 = vrot.lane.b32.xlu0 %v1778, 98
      %v1815 = vpop.permute.xlu0 %1814
      %1816 = vrot.lane.b32.xlu0 %v1779, 98
      %v1817 = vpop.permute.xlu0 %1816
      %1818 = vrot.lane.b32.xlu0 %v1780, 98
      %v1819 = vpop.permute.xlu0 %1818
      %1820 = vrot.lane.b32.xlu0 %v1781, 98
      %v1821 = vpop.permute.xlu0 %1820
      %1822 = vrot.lane.b32.xlu0 %v1782, 98
      %v1823 = vpop.permute.xlu0 %1822
      %1824 = vrot.lane.b32.xlu0 %v1783, 98
      %v1825 = vpop.permute.xlu0 %1824
      %1826 = vrot.lane.b32.xlu0 %v1784, 98
      %v1827 = vpop.permute.xlu0 %1826
      %1828 = vrot.lane.b32.xlu0 %v1785, 98
      %v1829 = vpop.permute.xlu0 %1828
      %1830 = vrot.lane.b32.xlu0 %v1786, 98
      %v1831 = vpop.permute.xlu0 %1830
      %1832 = vrot.lane.b32.xlu0 %v1787, 98
      %v1833 = vpop.permute.xlu0 %1832
      %1834 = vrot.lane.b32.xlu0 %v1788, 98
      %v1835 = vpop.permute.xlu0 %1834
      %1836 = vrot.lane.b32.xlu0 %v1789, 98
      %v1837 = vpop.permute.xlu0 %1836
      %v1838 = vrot.slane %v1807, 4
      %v1839 = vrot.slane %v1809, 4
      %v1840 = vrot.slane %v1811, 4
      %v1841 = vrot.slane %v1813, 4
      %v1842 = vrot.slane %v1815, 4
      %v1843 = vrot.slane %v1817, 4
      %v1844 = vrot.slane %v1819, 4
      %v1845 = vrot.slane %v1821, 4
      %v1846 = vrot.slane %v1823, 4
      %v1847 = vrot.slane %v1825, 4
      %v1848 = vrot.slane %v1827, 4
      %v1849 = vrot.slane %v1829, 4
      %v1850 = vrot.slane %v1831, 4
      %v1851 = vrot.slane %v1833, 4
      %v1852 = vrot.slane %v1835, 4
      %v1853 = vrot.slane %v1837, 4
      %v1854 = vsel %vm895, %v1838, %v1839
      %v1855 = vsel %vm615, %v1807, %v1854
      %v1856 = vsel %vm895, %v1839, %v1840
      %v1857 = vsel %vm615, %v1809, %v1856
      %v1858 = vsel %vm895, %v1840, %v1841
      %v1859 = vsel %vm615, %v1811, %v1858
      %v1860 = vsel %vm615, %v1813, %v1841
      %v1861 = vsel %vm895, %v1842, %v1843
      %v1862 = vsel %vm615, %v1815, %v1861
      %v1863 = vsel %vm895, %v1843, %v1844
      %v1864 = vsel %vm615, %v1817, %v1863
      %v1865 = vsel %vm895, %v1844, %v1845
      %v1866 = vsel %vm615, %v1819, %v1865
      %v1867 = vsel %vm615, %v1821, %v1845
      %v1868 = vsel %vm895, %v1846, %v1847
      %v1869 = vsel %vm615, %v1823, %v1868
      %v1870 = vsel %vm895, %v1847, %v1848
      %v1871 = vsel %vm615, %v1825, %v1870
      %v1872 = vsel %vm895, %v1848, %v1849
      %v1873 = vsel %vm615, %v1827, %v1872
      %v1874 = vsel %vm615, %v1829, %v1849
      %v1875 = vsel %vm895, %v1850, %v1851
      %v1876 = vsel %vm615, %v1831, %v1875
      %v1877 = vsel %vm895, %v1851, %v1852
      %v1878 = vsel %vm615, %v1833, %v1877
      %v1879 = vsel %vm895, %v1852, %v1853
      %v1880 = vsel %vm615, %v1835, %v1879
      %v1881 = vsel %vm615, %v1837, %v1853
      %1898 = vst [vmem:[#allocation2 + $0x230] sm:$0xff] %v1855
      %1899 = vst [vmem:[#allocation2 + $0x238] sm:$0xff] %v1857
      %1900 = vst [vmem:[#allocation2 + $0x240] sm:$0xff] %v1859
      %1901 = vst [vmem:[#allocation2 + $0x248] sm:$0xf] %v1860
      %1902 = vst [vmem:[#allocation2 + $0x24c] sm:$0xff] %v1862
      %1903 = vst [vmem:[#allocation2 + $0x254] sm:$0xff] %v1864
      %1904 = vst [vmem:[#allocation2 + $0x25c] sm:$0xff] %v1866
      %1905 = vst [vmem:[#allocation2 + $0x264] sm:$0xf] %v1867
      %1906 = vst [vmem:[#allocation2 + $0x268] sm:$0xff] %v1869
      %1907 = vst [vmem:[#allocation2 + $0x270] sm:$0xff] %v1871
      %1908 = vst [vmem:[#allocation2 + $0x278] sm:$0xff] %v1873
      %1909 = vst [vmem:[#allocation2 + $0x280] sm:$0xf] %v1874
      %1910 = vst [vmem:[#allocation2 + $0x284] sm:$0xff] %v1876
      %1911 = vst [vmem:[#allocation2 + $0x28c] sm:$0xff] %v1878
      %1912 = vst [vmem:[#allocation2 + $0x294] sm:$0xff] %v1880
      %1913 = vst [vmem:[#allocation2 + $0x29c] sm:$0xf] %v1881
      %v1914 = vld [vmem:[#allocation3] sm:$0xff]
      %v1915 = vld [vmem:[#allocation3 + $0x8] sm:$0xff]
      %v1916 = vld [vmem:[#allocation3 + $0x10] sm:$0xff]
      %v1917 = vld [vmem:[#allocation3 + $0x18] sm:$0xff]
      %v1918 = vld [vmem:[#allocation3 + $0x20] sm:$0xff]
      %v1919 = vld [vmem:[#allocation3 + $0x28] sm:$0xff]
      %v1920 = vld [vmem:[#allocation3 + $0x30] sm:$0xff]
      %v1921 = vld [vmem:[#allocation3 + $0x38] sm:$0xff]
      %v1922 = vld [vmem:[#allocation3 + $0x40] sm:$0xff]
      %v1923 = vld [vmem:[#allocation3 + $0x48] sm:$0xff]
      %v1924 = vld [vmem:[#allocation3 + $0x50] sm:$0xff]
      %v1925 = vld [vmem:[#allocation3 + $0x58] sm:$0xff]
      %v1926 = vld [vmem:[#allocation3 + $0x60] sm:$0xff]
      %v1927 = vld [vmem:[#allocation3 + $0x68] sm:$0xff]
      %v1928 = vld [vmem:[#allocation3 + $0x70] sm:$0xff]
      %v1929 = vld [vmem:[#allocation3 + $0x78] sm:$0xff]
      %1946 = vrot.lane.b32.xlu0 %v1914, 72
      %v1947 = vpop.permute.xlu0 %1946
      %1948 = vrot.lane.b32.xlu0 %v1915, 72
      %v1949 = vpop.permute.xlu0 %1948
      %1950 = vrot.lane.b32.xlu0 %v1916, 72
      %v1951 = vpop.permute.xlu0 %1950
      %1952 = vrot.lane.b32.xlu0 %v1917, 72
      %v1953 = vpop.permute.xlu0 %1952
      %1954 = vrot.lane.b32.xlu0 %v1918, 72
      %v1955 = vpop.permute.xlu0 %1954
      %1956 = vrot.lane.b32.xlu0 %v1919, 72
      %v1957 = vpop.permute.xlu0 %1956
      %1958 = vrot.lane.b32.xlu0 %v1920, 72
      %v1959 = vpop.permute.xlu0 %1958
      %1960 = vrot.lane.b32.xlu0 %v1921, 72
      %v1961 = vpop.permute.xlu0 %1960
      %1962 = vrot.lane.b32.xlu0 %v1922, 72
      %v1963 = vpop.permute.xlu0 %1962
      %1964 = vrot.lane.b32.xlu0 %v1923, 72
      %v1965 = vpop.permute.xlu0 %1964
      %1966 = vrot.lane.b32.xlu0 %v1924, 72
      %v1967 = vpop.permute.xlu0 %1966
      %1968 = vrot.lane.b32.xlu0 %v1925, 72
      %v1969 = vpop.permute.xlu0 %1968
      %1970 = vrot.lane.b32.xlu0 %v1926, 72
      %v1971 = vpop.permute.xlu0 %1970
      %1972 = vrot.lane.b32.xlu0 %v1927, 72
      %v1973 = vpop.permute.xlu0 %1972
      %1974 = vrot.lane.b32.xlu0 %v1928, 72
      %v1975 = vpop.permute.xlu0 %1974
      %1976 = vrot.lane.b32.xlu0 %v1929, 72
      %v1977 = vpop.permute.xlu0 %1976
      %v1978 = vrot.slane %v1947, 4
      %v1979 = vrot.slane %v1949, 4
      %v1980 = vrot.slane %v1951, 4
      %v1981 = vrot.slane %v1953, 4
      %v1982 = vrot.slane %v1955, 4
      %v1983 = vrot.slane %v1957, 4
      %v1984 = vrot.slane %v1959, 4
      %v1985 = vrot.slane %v1961, 4
      %v1986 = vrot.slane %v1963, 4
      %v1987 = vrot.slane %v1965, 4
      %v1988 = vrot.slane %v1967, 4
      %v1989 = vrot.slane %v1969, 4
      %v1990 = vrot.slane %v1971, 4
      %v1991 = vrot.slane %v1973, 4
      %v1992 = vrot.slane %v1975, 4
      %v1993 = vrot.slane %v1977, 4
      %v1994 = vsel %vm895, %v1978, %v1979
      %v1995 = vsel %vm664, %v1947, %v1994
      %v1996 = vsel %vm895, %v1979, %v1980
      %v1997 = vsel %vm664, %v1949, %v1996
      %v1998 = vsel %vm895, %v1980, %v1981
      %v1999 = vsel %vm664, %v1951, %v1998
      %v2000 = vsel %vm664, %v1953, %v1981
      %v2001 = vsel %vm895, %v1982, %v1983
      %v2002 = vsel %vm664, %v1955, %v2001
      %v2003 = vsel %vm895, %v1983, %v1984
      %v2004 = vsel %vm664, %v1957, %v2003
      %v2005 = vsel %vm895, %v1984, %v1985
      %v2006 = vsel %vm664, %v1959, %v2005
      %v2007 = vsel %vm664, %v1961, %v1985
      %v2008 = vsel %vm895, %v1986, %v1987
      %v2009 = vsel %vm664, %v1963, %v2008
      %v2010 = vsel %vm895, %v1987, %v1988
      %v2011 = vsel %vm664, %v1965, %v2010
      %v2012 = vsel %vm895, %v1988, %v1989
      %v2013 = vsel %vm664, %v1967, %v2012
      %v2014 = vsel %vm664, %v1969, %v1989
      %v2015 = vsel %vm895, %v1990, %v1991
      %v2016 = vsel %vm664, %v1971, %v2015
      %v2017 = vsel %vm895, %v1991, %v1992
      %v2018 = vsel %vm664, %v1973, %v2017
      %v2019 = vsel %vm895, %v1992, %v1993
      %v2020 = vsel %vm664, %v1975, %v2019
      %v2021 = vsel %vm664, %v1977, %v1993
      %2038 = vst [vmem:[#allocation2 + $0x2a0] sm:$0xff] %v1995
      %2039 = vst [vmem:[#allocation2 + $0x2a8] sm:$0xff] %v1997
      %2040 = vst [vmem:[#allocation2 + $0x2b0] sm:$0xff] %v1999
      %2041 = vst [vmem:[#allocation2 + $0x2b8] sm:$0xf] %v2000
      %2042 = vst [vmem:[#allocation2 + $0x2bc] sm:$0xff] %v2002
      %2043 = vst [vmem:[#allocation2 + $0x2c4] sm:$0xff] %v2004
      %2044 = vst [vmem:[#allocation2 + $0x2cc] sm:$0xff] %v2006
      %2045 = vst [vmem:[#allocation2 + $0x2d4] sm:$0xf] %v2007
      %2046 = vst [vmem:[#allocation2 + $0x2d8] sm:$0xff] %v2009
      %2047 = vst [vmem:[#allocation2 + $0x2e0] sm:$0xff] %v2011
      %2048 = vst [vmem:[#allocation2 + $0x2e8] sm:$0xff] %v2013
      %2049 = vst [vmem:[#allocation2 + $0x2f0] sm:$0xf] %v2014
      %2050 = vst [vmem:[#allocation2 + $0x2f4] sm:$0xff] %v2016
      %2051 = vst [vmem:[#allocation2 + $0x2fc] sm:$0xff] %v2018
      %2052 = vst [vmem:[#allocation2 + $0x304] sm:$0xff] %v2020
      %2053 = vst [vmem:[#allocation2 + $0x30c] sm:$0xf] %v2021
      %v2054 = vld [vmem:[#allocation3] sm:$0xff]
      %v2055 = vld [vmem:[#allocation3 + $0x8] sm:$0xff]
      %v2056 = vld [vmem:[#allocation3 + $0x10] sm:$0xff]
      %v2057 = vld [vmem:[#allocation3 + $0x18] sm:$0xff]
      %v2058 = vld [vmem:[#allocation3 + $0x20] sm:$0xff]
      %v2059 = vld [vmem:[#allocation3 + $0x28] sm:$0xff]
      %v2060 = vld [vmem:[#allocation3 + $0x30] sm:$0xff]
      %v2061 = vld [vmem:[#allocation3 + $0x38] sm:$0xff]
      %v2062 = vld [vmem:[#allocation3 + $0x40] sm:$0xff]
      %v2063 = vld [vmem:[#allocation3 + $0x48] sm:$0xff]
      %v2064 = vld [vmem:[#allocation3 + $0x50] sm:$0xff]
      %v2065 = vld [vmem:[#allocation3 + $0x58] sm:$0xff]
      %v2066 = vld [vmem:[#allocation3 + $0x60] sm:$0xff]
      %v2067 = vld [vmem:[#allocation3 + $0x68] sm:$0xff]
      %v2068 = vld [vmem:[#allocation3 + $0x70] sm:$0xff]
      %v2069 = vld [vmem:[#allocation3 + $0x78] sm:$0xff]
      %2086 = vrot.lane.b32.xlu0 %v2054, 71
      %v2087 = vpop.permute.xlu0 %2086
      %2088 = vrot.lane.b32.xlu0 %v2055, 71
      %v2089 = vpop.permute.xlu0 %2088
      %2090 = vrot.lane.b32.xlu0 %v2056, 71
      %v2091 = vpop.permute.xlu0 %2090
      %2092 = vrot.lane.b32.xlu0 %v2057, 71
      %v2093 = vpop.permute.xlu0 %2092
      %2094 = vrot.lane.b32.xlu0 %v2058, 71
      %v2095 = vpop.permute.xlu0 %2094
      %2096 = vrot.lane.b32.xlu0 %v2059, 71
      %v2097 = vpop.permute.xlu0 %2096
      %2098 = vrot.lane.b32.xlu0 %v2060, 71
      %v2099 = vpop.permute.xlu0 %2098
      %2100 = vrot.lane.b32.xlu0 %v2061, 71
      %v2101 = vpop.permute.xlu0 %2100
      %2102 = vrot.lane.b32.xlu0 %v2062, 71
      %v2103 = vpop.permute.xlu0 %2102
      %2104 = vrot.lane.b32.xlu0 %v2063, 71
      %v2105 = vpop.permute.xlu0 %2104
      %2106 = vrot.lane.b32.xlu0 %v2064, 71
      %v2107 = vpop.permute.xlu0 %2106
      %2108 = vrot.lane.b32.xlu0 %v2065, 71
      %v2109 = vpop.permute.xlu0 %2108
      %2110 = vrot.lane.b32.xlu0 %v2066, 71
      %v2111 = vpop.permute.xlu0 %2110
      %2112 = vrot.lane.b32.xlu0 %v2067, 71
      %v2113 = vpop.permute.xlu0 %2112
      %2114 = vrot.lane.b32.xlu0 %v2068, 71
      %v2115 = vpop.permute.xlu0 %2114
      %2116 = vrot.lane.b32.xlu0 %v2069, 71
      %v2117 = vpop.permute.xlu0 %2116
      %v2118 = vrot.slane %v2087, 4
      %v2119 = vrot.slane %v2089, 4
      %v2120 = vrot.slane %v2091, 4
      %v2121 = vrot.slane %v2093, 4
      %v2122 = vrot.slane %v2095, 4
      %v2123 = vrot.slane %v2097, 4
      %v2124 = vrot.slane %v2099, 4
      %v2125 = vrot.slane %v2101, 4
      %v2126 = vrot.slane %v2103, 4
      %v2127 = vrot.slane %v2105, 4
      %v2128 = vrot.slane %v2107, 4
      %v2129 = vrot.slane %v2109, 4
      %v2130 = vrot.slane %v2111, 4
      %v2131 = vrot.slane %v2113, 4
      %v2132 = vrot.slane %v2115, 4
      %v2133 = vrot.slane %v2117, 4
      %v2134 = vsel %vm895, %v2118, %v2119
      %v2135 = vsel %vm721, %v2087, %v2134
      %v2136 = vsel %vm895, %v2119, %v2120
      %v2137 = vsel %vm721, %v2089, %v2136
      %v2138 = vsel %vm895, %v2120, %v2121
      %v2139 = vsel %vm721, %v2091, %v2138
      %v2140 = vsel %vm721, %v2093, %v2121
      %v2141 = vsel %vm895, %v2122, %v2123
      %v2142 = vsel %vm721, %v2095, %v2141
      %v2143 = vsel %vm895, %v2123, %v2124
      %v2144 = vsel %vm721, %v2097, %v2143
      %v2145 = vsel %vm895, %v2124, %v2125
      %v2146 = vsel %vm721, %v2099, %v2145
      %v2147 = vsel %vm721, %v2101, %v2125
      %v2148 = vsel %vm895, %v2126, %v2127
      %v2149 = vsel %vm721, %v2103, %v2148
      %v2150 = vsel %vm895, %v2127, %v2128
      %v2151 = vsel %vm721, %v2105, %v2150
      %v2152 = vsel %vm895, %v2128, %v2129
      %v2153 = vsel %vm721, %v2107, %v2152
      %v2154 = vsel %vm721, %v2109, %v2129
      %v2155 = vsel %vm895, %v2130, %v2131
      %v2156 = vsel %vm721, %v2111, %v2155
      %v2157 = vsel %vm895, %v2131, %v2132
      %v2158 = vsel %vm721, %v2113, %v2157
      %v2159 = vsel %vm895, %v2132, %v2133
      %v2160 = vsel %vm721, %v2115, %v2159
      %v2161 = vsel %vm721, %v2117, %v2133
      %2178 = vst [vmem:[#allocation2 + $0x310] sm:$0xff] %v2135
      %2179 = vst [vmem:[#allocation2 + $0x318] sm:$0xff] %v2137
      %2180 = vst [vmem:[#allocation2 + $0x320] sm:$0xff] %v2139
      %2181 = vst [vmem:[#allocation2 + $0x328] sm:$0xf] %v2140
      %2182 = vst [vmem:[#allocation2 + $0x32c] sm:$0xff] %v2142
      %2183 = vst [vmem:[#allocation2 + $0x334] sm:$0xff] %v2144
      %2184 = vst [vmem:[#allocation2 + $0x33c] sm:$0xff] %v2146
      %2185 = vst [vmem:[#allocation2 + $0x344] sm:$0xf] %v2147
      %2186 = vst [vmem:[#allocation2 + $0x348] sm:$0xff] %v2149
      %2187 = vst [vmem:[#allocation2 + $0x350] sm:$0xff] %v2151
      %2188 = vst [vmem:[#allocation2 + $0x358] sm:$0xff] %v2153
      %2189 = vst [vmem:[#allocation2 + $0x360] sm:$0xf] %v2154
      %2190 = vst [vmem:[#allocation2 + $0x364] sm:$0xff] %v2156
      %2191 = vst [vmem:[#allocation2 + $0x36c] sm:$0xff] %v2158
      %2192 = vst [vmem:[#allocation2 + $0x374] sm:$0xff] %v2160
      %2193 = vst [vmem:[#allocation2 + $0x37c] sm:$0xf] %v2161
      %v2194 = vld [vmem:[#allocation3] sm:$0xff]
      %v2195 = vld [vmem:[#allocation3 + $0x8] sm:$0xff]
      %v2196 = vld [vmem:[#allocation3 + $0x10] sm:$0xff]
      %v2197 = vld [vmem:[#allocation3 + $0x18] sm:$0xff]
      %v2198 = vld [vmem:[#allocation3 + $0x20] sm:$0xff]
      %v2199 = vld [vmem:[#allocation3 + $0x28] sm:$0xff]
      %v2200 = vld [vmem:[#allocation3 + $0x30] sm:$0xff]
      %v2201 = vld [vmem:[#allocation3 + $0x38] sm:$0xff]
      %v2202 = vld [vmem:[#allocation3 + $0x40] sm:$0xff]
      %v2203 = vld [vmem:[#allocation3 + $0x48] sm:$0xff]
      %v2204 = vld [vmem:[#allocation3 + $0x50] sm:$0xff]
      %v2205 = vld [vmem:[#allocation3 + $0x58] sm:$0xff]
      %v2206 = vld [vmem:[#allocation3 + $0x60] sm:$0xff]
      %v2207 = vld [vmem:[#allocation3 + $0x68] sm:$0xff]
      %v2208 = vld [vmem:[#allocation3 + $0x70] sm:$0xff]
      %v2209 = vld [vmem:[#allocation3 + $0x78] sm:$0xff]
      %2226 = vrot.lane.b32.xlu0 %v2194, 70
      %v2227 = vpop.permute.xlu0 %2226
      %2228 = vrot.lane.b32.xlu0 %v2195, 70
      %v2229 = vpop.permute.xlu0 %2228
      %2230 = vrot.lane.b32.xlu0 %v2196, 70
      %v2231 = vpop.permute.xlu0 %2230
      %2232 = vrot.lane.b32.xlu0 %v2197, 70
      %v2233 = vpop.permute.xlu0 %2232
      %2234 = vrot.lane.b32.xlu0 %v2198, 70
      %v2235 = vpop.permute.xlu0 %2234
      %2236 = vrot.lane.b32.xlu0 %v2199, 70
      %v2237 = vpop.permute.xlu0 %2236
      %2238 = vrot.lane.b32.xlu0 %v2200, 70
      %v2239 = vpop.permute.xlu0 %2238
      %2240 = vrot.lane.b32.xlu0 %v2201, 70
      %v2241 = vpop.permute.xlu0 %2240
      %2242 = vrot.lane.b32.xlu0 %v2202, 70
      %v2243 = vpop.permute.xlu0 %2242
      %2244 = vrot.lane.b32.xlu0 %v2203, 70
      %v2245 = vpop.permute.xlu0 %2244
      %2246 = vrot.lane.b32.xlu0 %v2204, 70
      %v2247 = vpop.permute.xlu0 %2246
      %2248 = vrot.lane.b32.xlu0 %v2205, 70
      %v2249 = vpop.permute.xlu0 %2248
      %2250 = vrot.lane.b32.xlu0 %v2206, 70
      %v2251 = vpop.permute.xlu0 %2250
      %2252 = vrot.lane.b32.xlu0 %v2207, 70
      %v2253 = vpop.permute.xlu0 %2252
      %2254 = vrot.lane.b32.xlu0 %v2208, 70
      %v2255 = vpop.permute.xlu0 %2254
      %2256 = vrot.lane.b32.xlu0 %v2209, 70
      %v2257 = vpop.permute.xlu0 %2256
      %v2258 = vrot.slane %v2227, 4
      %v2259 = vrot.slane %v2229, 4
      %v2260 = vrot.slane %v2231, 4
      %v2261 = vrot.slane %v2233, 4
      %v2262 = vrot.slane %v2235, 4
      %v2263 = vrot.slane %v2237, 4
      %v2264 = vrot.slane %v2239, 4
      %v2265 = vrot.slane %v2241, 4
      %v2266 = vrot.slane %v2243, 4
      %v2267 = vrot.slane %v2245, 4
      %v2268 = vrot.slane %v2247, 4
      %v2269 = vrot.slane %v2249, 4
      %v2270 = vrot.slane %v2251, 4
      %v2271 = vrot.slane %v2253, 4
      %v2272 = vrot.slane %v2255, 4
      %v2273 = vrot.slane %v2257, 4
      %v2274 = vsel %vm895, %v2258, %v2259
      %v2275 = vsel %vm770, %v2227, %v2274
      %v2276 = vsel %vm895, %v2259, %v2260
      %v2277 = vsel %vm770, %v2229, %v2276
      %v2278 = vsel %vm895, %v2260, %v2261
      %v2279 = vsel %vm770, %v2231, %v2278
      %v2280 = vsel %vm770, %v2233, %v2261
      %v2281 = vsel %vm895, %v2262, %v2263
      %v2282 = vsel %vm770, %v2235, %v2281
      %v2283 = vsel %vm895, %v2263, %v2264
      %v2284 = vsel %vm770, %v2237, %v2283
      %v2285 = vsel %vm895, %v2264, %v2265
      %v2286 = vsel %vm770, %v2239, %v2285
      %v2287 = vsel %vm770, %v2241, %v2265
      %v2288 = vsel %vm895, %v2266, %v2267
      %v2289 = vsel %vm770, %v2243, %v2288
      %v2290 = vsel %vm895, %v2267, %v2268
      %v2291 = vsel %vm770, %v2245, %v2290
      %v2292 = vsel %vm895, %v2268, %v2269
      %v2293 = vsel %vm770, %v2247, %v2292
      %v2294 = vsel %vm770, %v2249, %v2269
      %v2295 = vsel %vm895, %v2270, %v2271
      %v2296 = vsel %vm770, %v2251, %v2295
      %v2297 = vsel %vm895, %v2271, %v2272
      %v2298 = vsel %vm770, %v2253, %v2297
      %v2299 = vsel %vm895, %v2272, %v2273
      %v2300 = vsel %vm770, %v2255, %v2299
      %v2301 = vsel %vm770, %v2257, %v2273
      %2318 = vst [vmem:[#allocation2 + $0x380] sm:$0xff] %v2275
      %2319 = vst [vmem:[#allocation2 + $0x388] sm:$0xff] %v2277
      %2320 = vst [vmem:[#allocation2 + $0x390] sm:$0xff] %v2279
      %2321 = vst [vmem:[#allocation2 + $0x398] sm:$0xf] %v2280
      %2322 = vst [vmem:[#allocation2 + $0x39c] sm:$0xff] %v2282
      %2323 = vst [vmem:[#allocation2 + $0x3a4] sm:$0xff] %v2284
      %2324 = vst [vmem:[#allocation2 + $0x3ac] sm:$0xff] %v2286
      %2325 = vst [vmem:[#allocation2 + $0x3b4] sm:$0xf] %v2287
      %2326 = vst [vmem:[#allocation2 + $0x3b8] sm:$0xff] %v2289
      %2327 = vst [vmem:[#allocation2 + $0x3c0] sm:$0xff] %v2291
      %2328 = vst [vmem:[#allocation2 + $0x3c8] sm:$0xff] %v2293
      %2329 = vst [vmem:[#allocation2 + $0x3d0] sm:$0xf] %v2294
      %2330 = vst [vmem:[#allocation2 + $0x3d4] sm:$0xff] %v2296
      %2331 = vst [vmem:[#allocation2 + $0x3dc] sm:$0xff] %v2298
      %2332 = vst [vmem:[#allocation2 + $0x3e4] sm:$0xff] %v2300
      %2333 = vst [vmem:[#allocation2 + $0x3ec] sm:$0xf] %v2301
      %v2334 = vld [vmem:[%s3] sm:$0xff]
      %v2335 = vld [vmem:[%s3 + $0x8] sm:$0xf]
      %v2336 = vld [vmem:[%s3 + $0xc] sm:$0xff]
      %v2337 = vld [vmem:[%s3 + $0x14] sm:$0xf]
      %v2338 = vld [vmem:[%s3 + $0x18] sm:$0xff]
      %v2339 = vld [vmem:[%s3 + $0x20] sm:$0xf]
      %v2340 = vld [vmem:[%s3 + $0x24] sm:$0xff]
      %v2341 = vld [vmem:[%s3 + $0x2c] sm:$0xf]
      %v2342 = vld [vmem:[%s3 + $0x30] sm:$0xff]
      %v2343 = vld [vmem:[%s3 + $0x38] sm:$0xf]
      %v2344 = vld [vmem:[%s3 + $0x3c] sm:$0xff]
      %v2345 = vld [vmem:[%s3 + $0x44] sm:$0xf]
      %v2346 = vld [vmem:[%s3 + $0x48] sm:$0xff]
      %v2347 = vld [vmem:[%s3 + $0x50] sm:$0xf]
      %v2348 = vld [vmem:[%s3 + $0x54] sm:$0xff]
      %v2349 = vld [vmem:[%s3 + $0x5c] sm:$0xf]
      %v2350 = vld [vmem:[#allocation2] sm:$0xff]
      %v2351 = vld [vmem:[#allocation2 + $0x8] sm:$0xff]
      %v2352 = vld [vmem:[#allocation2 + $0x10] sm:$0xff]
      %v2353 = vld [vmem:[#allocation2 + $0x18] sm:$0xf]
      %v2354 = vld [vmem:[#allocation2 + $0x1c] sm:$0xff]
      %v2355 = vld [vmem:[#allocation2 + $0x24] sm:$0xff]
      %v2356 = vld [vmem:[#allocation2 + $0x2c] sm:$0xff]
      %v2357 = vld [vmem:[#allocation2 + $0x34] sm:$0xf]
      %v2358 = vld [vmem:[#allocation2 + $0x38] sm:$0xff]
      %v2359 = vld [vmem:[#allocation2 + $0x40] sm:$0xff]
      %v2360 = vld [vmem:[#allocation2 + $0x48] sm:$0xff]
      %v2361 = vld [vmem:[#allocation2 + $0x50] sm:$0xf]
      %v2362 = vld [vmem:[#allocation2 + $0x54] sm:$0xff]
      %v2363 = vld [vmem:[#allocation2 + $0x5c] sm:$0xff]
      %v2364 = vld [vmem:[#allocation2 + $0x64] sm:$0xff]
      %v2365 = vld [vmem:[#allocation2 + $0x6c] sm:$0xf]
      %v2366 = vld [vmem:[#allocation2 + $0x70] sm:$0xff]
      %v2367 = vld [vmem:[#allocation2 + $0x78] sm:$0xff]
      %v2368 = vld [vmem:[#allocation2 + $0x80] sm:$0xff]
      %v2369 = vld [vmem:[#allocation2 + $0x88] sm:$0xf]
      %v2370 = vld [vmem:[#allocation2 + $0x8c] sm:$0xff]
      %v2371 = vld [vmem:[#allocation2 + $0x94] sm:$0xff]
      %v2372 = vld [vmem:[#allocation2 + $0x9c] sm:$0xff]
      %v2373 = vld [vmem:[#allocation2 + $0xa4] sm:$0xf]
      %v2374 = vld [vmem:[#allocation2 + $0xa8] sm:$0xff]
      %v2375 = vld [vmem:[#allocation2 + $0xb0] sm:$0xff]
      %v2376 = vld [vmem:[#allocation2 + $0xb8] sm:$0xff]
      %v2377 = vld [vmem:[#allocation2 + $0xc0] sm:$0xf]
      %v2378 = vld [vmem:[#allocation2 + $0xc4] sm:$0xff]
      %v2379 = vld [vmem:[#allocation2 + $0xcc] sm:$0xff]
      %v2380 = vld [vmem:[#allocation2 + $0xd4] sm:$0xff]
      %v2381 = vld [vmem:[#allocation2 + $0xdc] sm:$0xf]
      %v2382 = vld [vmem:[#allocation2 + $0xe0] sm:$0xff]
      %v2383 = vld [vmem:[#allocation2 + $0xe8] sm:$0xff]
      %v2384 = vld [vmem:[#allocation2 + $0xf0] sm:$0xff]
      %v2385 = vld [vmem:[#allocation2 + $0xf8] sm:$0xf]
      %v2386 = vld [vmem:[#allocation2 + $0xfc] sm:$0xff]
      %v2387 = vld [vmem:[#allocation2 + $0x104] sm:$0xff]
      %v2388 = vld [vmem:[#allocation2 + $0x10c] sm:$0xff]
      %v2389 = vld [vmem:[#allocation2 + $0x114] sm:$0xf]
      %v2390 = vld [vmem:[#allocation2 + $0x118] sm:$0xff]
      %v2391 = vld [vmem:[#allocation2 + $0x120] sm:$0xff]
      %v2392 = vld [vmem:[#allocation2 + $0x128] sm:$0xff]
      %v2393 = vld [vmem:[#allocation2 + $0x130] sm:$0xf]
      %v2394 = vld [vmem:[#allocation2 + $0x134] sm:$0xff]
      %v2395 = vld [vmem:[#allocation2 + $0x13c] sm:$0xff]
      %v2396 = vld [vmem:[#allocation2 + $0x144] sm:$0xff]
      %v2397 = vld [vmem:[#allocation2 + $0x14c] sm:$0xf]
      %v2398 = vld [vmem:[#allocation2 + $0x150] sm:$0xff]
      %v2399 = vld [vmem:[#allocation2 + $0x158] sm:$0xff]
      %v2400 = vld [vmem:[#allocation2 + $0x160] sm:$0xff]
      %v2401 = vld [vmem:[#allocation2 + $0x168] sm:$0xf]
      %v2402 = vld [vmem:[#allocation2 + $0x16c] sm:$0xff]
      %v2403 = vld [vmem:[#allocation2 + $0x174] sm:$0xff]
      %v2404 = vld [vmem:[#allocation2 + $0x17c] sm:$0xff]
      %v2405 = vld [vmem:[#allocation2 + $0x184] sm:$0xf]
      %v2406 = vld [vmem:[#allocation2 + $0x188] sm:$0xff]
      %v2407 = vld [vmem:[#allocation2 + $0x190] sm:$0xff]
      %v2408 = vld [vmem:[#allocation2 + $0x198] sm:$0xff]
      %v2409 = vld [vmem:[#allocation2 + $0x1a0] sm:$0xf]
      %v2410 = vld [vmem:[#allocation2 + $0x1a4] sm:$0xff]
      %v2411 = vld [vmem:[#allocation2 + $0x1ac] sm:$0xff]
      %v2412 = vld [vmem:[#allocation2 + $0x1b4] sm:$0xff]
      %v2413 = vld [vmem:[#allocation2 + $0x1bc] sm:$0xf]
      %v2414 = vld [vmem:[#allocation2 + $0x1c0] sm:$0xff]
      %v2415 = vld [vmem:[#allocation2 + $0x1c8] sm:$0xff]
      %v2416 = vld [vmem:[#allocation2 + $0x1d0] sm:$0xff]
      %v2417 = vld [vmem:[#allocation2 + $0x1d8] sm:$0xf]
      %v2418 = vld [vmem:[#allocation2 + $0x1dc] sm:$0xff]
      %v2419 = vld [vmem:[#allocation2 + $0x1e4] sm:$0xff]
      %v2420 = vld [vmem:[#allocation2 + $0x1ec] sm:$0xff]
      %v2421 = vld [vmem:[#allocation2 + $0x1f4] sm:$0xf]
      %v2422 = vld [vmem:[#allocation2 + $0x1f8] sm:$0xff]
      %v2423 = vld [vmem:[#allocation2 + $0x200] sm:$0xff]
      %v2424 = vld [vmem:[#allocation2 + $0x208] sm:$0xff]
      %v2425 = vld [vmem:[#allocation2 + $0x210] sm:$0xf]
      %v2426 = vld [vmem:[#allocation2 + $0x214] sm:$0xff]
      %v2427 = vld [vmem:[#allocation2 + $0x21c] sm:$0xff]
      %v2428 = vld [vmem:[#allocation2 + $0x224] sm:$0xff]
      %v2429 = vld [vmem:[#allocation2 + $0x22c] sm:$0xf]
      %v2430 = vld [vmem:[#allocation2 + $0x230] sm:$0xff]
      %v2431 = vld [vmem:[#allocation2 + $0x238] sm:$0xff]
      %v2432 = vld [vmem:[#allocation2 + $0x240] sm:$0xff]
      %v2433 = vld [vmem:[#allocation2 + $0x248] sm:$0xf]
      %v2434 = vld [vmem:[#allocation2 + $0x24c] sm:$0xff]
      %v2435 = vld [vmem:[#allocation2 + $0x254] sm:$0xff]
      %v2436 = vld [vmem:[#allocation2 + $0x25c] sm:$0xff]
      %v2437 = vld [vmem:[#allocation2 + $0x264] sm:$0xf]
      %v2438 = vld [vmem:[#allocation2 + $0x268] sm:$0xff]
      %v2439 = vld [vmem:[#allocation2 + $0x270] sm:$0xff]
      %v2440 = vld [vmem:[#allocation2 + $0x278] sm:$0xff]
      %v2441 = vld [vmem:[#allocation2 + $0x280] sm:$0xf]
      %v2442 = vld [vmem:[#allocation2 + $0x284] sm:$0xff]
      %v2443 = vld [vmem:[#allocation2 + $0x28c] sm:$0xff]
      %v2444 = vld [vmem:[#allocation2 + $0x294] sm:$0xff]
      %v2445 = vld [vmem:[#allocation2 + $0x29c] sm:$0xf]
      %v2446 = vld [vmem:[#allocation2 + $0x2a0] sm:$0xff]
      %v2447 = vld [vmem:[#allocation2 + $0x2a8] sm:$0xff]
      %v2448 = vld [vmem:[#allocation2 + $0x2b0] sm:$0xff]
      %v2449 = vld [vmem:[#allocation2 + $0x2b8] sm:$0xf]
      %v2450 = vld [vmem:[#allocation2 + $0x2bc] sm:$0xff]
      %v2451 = vld [vmem:[#allocation2 + $0x2c4] sm:$0xff]
      %v2452 = vld [vmem:[#allocation2 + $0x2cc] sm:$0xff]
      %v2453 = vld [vmem:[#allocation2 + $0x2d4] sm:$0xf]
      %v2454 = vld [vmem:[#allocation2 + $0x2d8] sm:$0xff]
      %v2455 = vld [vmem:[#allocation2 + $0x2e0] sm:$0xff]
      %v2456 = vld [vmem:[#allocation2 + $0x2e8] sm:$0xff]
      %v2457 = vld [vmem:[#allocation2 + $0x2f0] sm:$0xf]
      %v2458 = vld [vmem:[#allocation2 + $0x2f4] sm:$0xff]
      %v2459 = vld [vmem:[#allocation2 + $0x2fc] sm:$0xff]
      %v2460 = vld [vmem:[#allocation2 + $0x304] sm:$0xff]
      %v2461 = vld [vmem:[#allocation2 + $0x30c] sm:$0xf]
      %v2462 = vld [vmem:[#allocation2 + $0x310] sm:$0xff]
      %v2463 = vld [vmem:[#allocation2 + $0x318] sm:$0xff]
      %v2464 = vld [vmem:[#allocation2 + $0x320] sm:$0xff]
      %v2465 = vld [vmem:[#allocation2 + $0x328] sm:$0xf]
      %v2466 = vld [vmem:[#allocation2 + $0x32c] sm:$0xff]
      %v2467 = vld [vmem:[#allocation2 + $0x334] sm:$0xff]
      %v2468 = vld [vmem:[#allocation2 + $0x33c] sm:$0xff]
      %v2469 = vld [vmem:[#allocation2 + $0x344] sm:$0xf]
      %v2470 = vld [vmem:[#allocation2 + $0x348] sm:$0xff]
      %v2471 = vld [vmem:[#allocation2 + $0x350] sm:$0xff]
      %v2472 = vld [vmem:[#allocation2 + $0x358] sm:$0xff]
      %v2473 = vld [vmem:[#allocation2 + $0x360] sm:$0xf]
      %v2474 = vld [vmem:[#allocation2 + $0x364] sm:$0xff]
      %v2475 = vld [vmem:[#allocation2 + $0x36c] sm:$0xff]
      %v2476 = vld [vmem:[#allocation2 + $0x374] sm:$0xff]
      %v2477 = vld [vmem:[#allocation2 + $0x37c] sm:$0xf]
      %v2478 = vld [vmem:[#allocation2 + $0x380] sm:$0xff]
      %v2479 = vld [vmem:[#allocation2 + $0x388] sm:$0xff]
      %v2480 = vld [vmem:[#allocation2 + $0x390] sm:$0xff]
      %v2481 = vld [vmem:[#allocation2 + $0x398] sm:$0xf]
      %v2482 = vld [vmem:[#allocation2 + $0x39c] sm:$0xff]
      %v2483 = vld [vmem:[#allocation2 + $0x3a4] sm:$0xff]
      %v2484 = vld [vmem:[#allocation2 + $0x3ac] sm:$0xff]
      %v2485 = vld [vmem:[#allocation2 + $0x3b4] sm:$0xf]
      %v2486 = vld [vmem:[#allocation2 + $0x3b8] sm:$0xff]
      %v2487 = vld [vmem:[#allocation2 + $0x3c0] sm:$0xff]
      %v2488 = vld [vmem:[#allocation2 + $0x3c8] sm:$0xff]
      %v2489 = vld [vmem:[#allocation2 + $0x3d0] sm:$0xf]
      %v2490 = vld [vmem:[#allocation2 + $0x3d4] sm:$0xff]
      %v2491 = vld [vmem:[#allocation2 + $0x3dc] sm:$0xff]
      %v2492 = vld [vmem:[#allocation2 + $0x3e4] sm:$0xff]
      %v2493 = vld [vmem:[#allocation2 + $0x3ec] sm:$0xf]
      %v2494 = vld [vmem:[%s4] sm:$0xff]
      %v2495 = vld [vmem:[%s4 + $0x8] sm:$0xff]
      %v2496 = vld [vmem:[%s4 + $0x10] sm:$0xff]
      %v2497 = vld [vmem:[%s4 + $0x18] sm:$0xff]
      %v2498 = vld [vmem:[%s4 + $0x20] sm:$0xff]
      %v2499 = vld [vmem:[%s4 + $0x28] sm:$0xff]
      %v2500 = vld [vmem:[%s4 + $0x30] sm:$0xff]
      %v2501 = vld [vmem:[%s4 + $0x38] sm:$0xff]
      %2503 = vset.pattern.permute.xlu0 0
      %2504 = vperm.xlu0 %2503, %v2494
      %v2505 = vpop.permute.xlu0 %2504
      %2508 = vset.pattern.permute.xlu0 0
      %2509 = vperm.xlu0 %2508, %v2495
      %v2510 = vpop.permute.xlu0 %2509
      %2513 = vset.pattern.permute.xlu0 0
      %2514 = vperm.xlu0 %2513, %v2496
      %v2515 = vpop.permute.xlu0 %2514
      %2518 = vset.pattern.permute.xlu0 0
      %2519 = vperm.xlu0 %2518, %v2497
      %v2520 = vpop.permute.xlu0 %2519
      %2523 = vset.pattern.permute.xlu0 0
      %2524 = vperm.xlu0 %2523, %v2498
      %v2525 = vpop.permute.xlu0 %2524
      %2528 = vset.pattern.permute.xlu0 0
      %2529 = vperm.xlu0 %2528, %v2499
      %v2530 = vpop.permute.xlu0 %2529
      %2533 = vset.pattern.permute.xlu0 0
      %2534 = vperm.xlu0 %2533, %v2500
      %v2535 = vpop.permute.xlu0 %2534
      %2538 = vset.pattern.permute.xlu0 0
      %2539 = vperm.xlu0 %2538, %v2501
      %v2540 = vpop.permute.xlu0 %2539
      %v2558 = vunpack.c.l.b16 %v2334
      %v2559 = vunpack.c.h.b16 %v2334
      %v2560 = vunpack.c.l.b16 %v2335
      %v2561 = vunpack.c.l.b16 %v2336
      %v2562 = vunpack.c.h.b16 %v2336
      %v2563 = vunpack.c.l.b16 %v2337
      %v2564 = vunpack.c.l.b16 %v2338
      %v2565 = vunpack.c.h.b16 %v2338
      %v2566 = vunpack.c.l.b16 %v2339
      %v2567 = vunpack.c.l.b16 %v2340
      %v2568 = vunpack.c.h.b16 %v2340
      %v2569 = vunpack.c.l.b16 %v2341
      %v2570 = vunpack.c.l.b16 %v2342
      %v2571 = vunpack.c.h.b16 %v2342
      %v2572 = vunpack.c.l.b16 %v2343
      %v2573 = vunpack.c.l.b16 %v2344
      %v2574 = vunpack.c.h.b16 %v2344
      %v2575 = vunpack.c.l.b16 %v2345
      %v2576 = vunpack.c.l.b16 %v2346
      %v2577 = vunpack.c.h.b16 %v2346
      %v2578 = vunpack.c.l.b16 %v2347
      %v2579 = vunpack.c.l.b16 %v2348
      %v2580 = vunpack.c.h.b16 %v2348
      %v2581 = vunpack.c.l.b16 %v2349
      %v2582 = vpack.c.b16 %v2561, %v2558
      %v2583 = vpack.c.b16 %v2562, %v2559
      %v2584 = vpack.c.b16 %v2563, %v2560
      %v2585 = vpack.c.b16 %v2567, %v2564
      %v2586 = vpack.c.b16 %v2568, %v2565
      %v2587 = vpack.c.b16 %v2569, %v2566
      %v2588 = vpack.c.b16 %v2573, %v2570
      %v2589 = vpack.c.b16 %v2574, %v2571
      %v2590 = vpack.c.b16 %v2575, %v2572
      %v2591 = vpack.c.b16 %v2579, %v2576
      %v2592 = vpack.c.b16 %v2580, %v2577
      %v2593 = vpack.c.b16 %v2581, %v2578
      %v2746 = vunpack.c.l.b16 %v2350
      %v2747 = vunpack.c.h.b16 %v2350
      %v2748 = vunpack.c.l.b16 %v2351
      %v2749 = vunpack.c.h.b16 %v2351
      %v2750 = vunpack.c.l.b16 %v2352
      %v2751 = vunpack.c.h.b16 %v2352
      %v2752 = vunpack.c.l.b16 %v2353
      %v2753 = vunpack.c.l.b16 %v2354
      %v2754 = vunpack.c.h.b16 %v2354
      %v2755 = vunpack.c.l.b16 %v2355
      %v2756 = vunpack.c.h.b16 %v2355
      %v2757 = vunpack.c.l.b16 %v2356
      %v2758 = vunpack.c.h.b16 %v2356
      %v2759 = vunpack.c.l.b16 %v2357
      %v2760 = vunpack.c.l.b16 %v2358
      %v2761 = vunpack.c.h.b16 %v2358
      %v2762 = vunpack.c.l.b16 %v2359
      %v2763 = vunpack.c.h.b16 %v2359
      %v2764 = vunpack.c.l.b16 %v2360
      %v2765 = vunpack.c.h.b16 %v2360
      %v2766 = vunpack.c.l.b16 %v2361
      %v2767 = vunpack.c.l.b16 %v2362
      %v2768 = vunpack.c.h.b16 %v2362
      %v2769 = vunpack.c.l.b16 %v2363
      %v2770 = vunpack.c.h.b16 %v2363
      %v2771 = vunpack.c.l.b16 %v2364
      %v2772 = vunpack.c.h.b16 %v2364
      %v2773 = vunpack.c.l.b16 %v2365
      %v2774 = vunpack.c.l.b16 %v2366
      %v2775 = vunpack.c.h.b16 %v2366
      %v2776 = vunpack.c.l.b16 %v2367
      %v2777 = vunpack.c.h.b16 %v2367
      %v2778 = vunpack.c.l.b16 %v2368
      %v2779 = vunpack.c.h.b16 %v2368
      %v2780 = vunpack.c.l.b16 %v2369
      %v2781 = vunpack.c.l.b16 %v2370
      %v2782 = vunpack.c.h.b16 %v2370
      %v2783 = vunpack.c.l.b16 %v2371
      %v2784 = vunpack.c.h.b16 %v2371
      %v2785 = vunpack.c.l.b16 %v2372
      %v2786 = vunpack.c.h.b16 %v2372
      %v2787 = vunpack.c.l.b16 %v2373
      %v2788 = vunpack.c.l.b16 %v2374
      %v2789 = vunpack.c.h.b16 %v2374
      %v2790 = vunpack.c.l.b16 %v2375
      %v2791 = vunpack.c.h.b16 %v2375
      %v2792 = vunpack.c.l.b16 %v2376
      %v2793 = vunpack.c.h.b16 %v2376
      %v2794 = vunpack.c.l.b16 %v2377
      %v2795 = vunpack.c.l.b16 %v2378
      %v2796 = vunpack.c.h.b16 %v2378
      %v2797 = vunpack.c.l.b16 %v2379
      %v2798 = vunpack.c.h.b16 %v2379
      %v2799 = vunpack.c.l.b16 %v2380
      %v2800 = vunpack.c.h.b16 %v2380
      %v2801 = vunpack.c.l.b16 %v2381
      %v2802 = vunpack.c.l.b16 %v2382
      %v2803 = vunpack.c.h.b16 %v2382
      %v2804 = vunpack.c.l.b16 %v2383
      %v2805 = vunpack.c.h.b16 %v2383
      %v2806 = vunpack.c.l.b16 %v2384
      %v2807 = vunpack.c.h.b16 %v2384
      %v2808 = vunpack.c.l.b16 %v2385
      %v2809 = vunpack.c.l.b16 %v2386
      %v2810 = vunpack.c.h.b16 %v2386
      %v2811 = vunpack.c.l.b16 %v2387
      %v2812 = vunpack.c.h.b16 %v2387
      %v2813 = vunpack.c.l.b16 %v2388
      %v2814 = vunpack.c.h.b16 %v2388
      %v2815 = vunpack.c.l.b16 %v2389
      %v2816 = vunpack.c.l.b16 %v2390
      %v2817 = vunpack.c.h.b16 %v2390
      %v2818 = vunpack.c.l.b16 %v2391
      %v2819 = vunpack.c.h.b16 %v2391
      %v2820 = vunpack.c.l.b16 %v2392
      %v2821 = vunpack.c.h.b16 %v2392
      %v2822 = vunpack.c.l.b16 %v2393
      %v2823 = vunpack.c.l.b16 %v2394
      %v2824 = vunpack.c.h.b16 %v2394
      %v2825 = vunpack.c.l.b16 %v2395
      %v2826 = vunpack.c.h.b16 %v2395
      %v2827 = vunpack.c.l.b16 %v2396
      %v2828 = vunpack.c.h.b16 %v2396
      %v2829 = vunpack.c.l.b16 %v2397
      %v2830 = vunpack.c.l.b16 %v2398
      %v2831 = vunpack.c.h.b16 %v2398
      %v2832 = vunpack.c.l.b16 %v2399
      %v2833 = vunpack.c.h.b16 %v2399
      %v2834 = vunpack.c.l.b16 %v2400
      %v2835 = vunpack.c.h.b16 %v2400
      %v2836 = vunpack.c.l.b16 %v2401
      %v2837 = vunpack.c.l.b16 %v2402
      %v2838 = vunpack.c.h.b16 %v2402
      %v2839 = vunpack.c.l.b16 %v2403
      %v2840 = vunpack.c.h.b16 %v2403
      %v2841 = vunpack.c.l.b16 %v2404
      %v2842 = vunpack.c.h.b16 %v2404
      %v2843 = vunpack.c.l.b16 %v2405
      %v2844 = vunpack.c.l.b16 %v2406
      %v2845 = vunpack.c.h.b16 %v2406
      %v2846 = vunpack.c.l.b16 %v2407
      %v2847 = vunpack.c.h.b16 %v2407
      %v2848 = vunpack.c.l.b16 %v2408
      %v2849 = vunpack.c.h.b16 %v2408
      %v2850 = vunpack.c.l.b16 %v2409
      %v2851 = vunpack.c.l.b16 %v2410
      %v2852 = vunpack.c.h.b16 %v2410
      %v2853 = vunpack.c.l.b16 %v2411
      %v2854 = vunpack.c.h.b16 %v2411
      %v2855 = vunpack.c.l.b16 %v2412
      %v2856 = vunpack.c.h.b16 %v2412
      %v2857 = vunpack.c.l.b16 %v2413
      %v2858 = vunpack.c.l.b16 %v2414
      %v2859 = vunpack.c.h.b16 %v2414
      %v2860 = vunpack.c.l.b16 %v2415
      %v2861 = vunpack.c.h.b16 %v2415
      %v2862 = vunpack.c.l.b16 %v2416
      %v2863 = vunpack.c.h.b16 %v2416
      %v2864 = vunpack.c.l.b16 %v2417
      %v2865 = vunpack.c.l.b16 %v2418
      %v2866 = vunpack.c.h.b16 %v2418
      %v2867 = vunpack.c.l.b16 %v2419
      %v2868 = vunpack.c.h.b16 %v2419
      %v2869 = vunpack.c.l.b16 %v2420
      %v2870 = vunpack.c.h.b16 %v2420
      %v2871 = vunpack.c.l.b16 %v2421
      %v2872 = vunpack.c.l.b16 %v2422
      %v2873 = vunpack.c.h.b16 %v2422
      %v2874 = vunpack.c.l.b16 %v2423
      %v2875 = vunpack.c.h.b16 %v2423
      %v2876 = vunpack.c.l.b16 %v2424
      %v2877 = vunpack.c.h.b16 %v2424
      %v2878 = vunpack.c.l.b16 %v2425
      %v2879 = vunpack.c.l.b16 %v2426
      %v2880 = vunpack.c.h.b16 %v2426
      %v2881 = vunpack.c.l.b16 %v2427
      %v2882 = vunpack.c.h.b16 %v2427
      %v2883 = vunpack.c.l.b16 %v2428
      %v2884 = vunpack.c.h.b16 %v2428
      %v2885 = vunpack.c.l.b16 %v2429
      %v2886 = vunpack.c.l.b16 %v2430
      %v2887 = vunpack.c.h.b16 %v2430
      %v2888 = vunpack.c.l.b16 %v2431
      %v2889 = vunpack.c.h.b16 %v2431
      %v2890 = vunpack.c.l.b16 %v2432
      %v2891 = vunpack.c.h.b16 %v2432
      %v2892 = vunpack.c.l.b16 %v2433
      %v2893 = vunpack.c.l.b16 %v2434
      %v2894 = vunpack.c.h.b16 %v2434
      %v2895 = vunpack.c.l.b16 %v2435
      %v2896 = vunpack.c.h.b16 %v2435
      %v2897 = vunpack.c.l.b16 %v2436
      %v2898 = vunpack.c.h.b16 %v2436
      %v2899 = vunpack.c.l.b16 %v2437
      %v2900 = vunpack.c.l.b16 %v2438
      %v2901 = vunpack.c.h.b16 %v2438
      %v2902 = vunpack.c.l.b16 %v2439
      %v2903 = vunpack.c.h.b16 %v2439
      %v2904 = vunpack.c.l.b16 %v2440
      %v2905 = vunpack.c.h.b16 %v2440
      %v2906 = vunpack.c.l.b16 %v2441
      %v2907 = vunpack.c.l.b16 %v2442
      %v2908 = vunpack.c.h.b16 %v2442
      %v2909 = vunpack.c.l.b16 %v2443
      %v2910 = vunpack.c.h.b16 %v2443
      %v2911 = vunpack.c.l.b16 %v2444
      %v2912 = vunpack.c.h.b16 %v2444
      %v2913 = vunpack.c.l.b16 %v2445
      %v2914 = vunpack.c.l.b16 %v2446
      %v2915 = vunpack.c.h.b16 %v2446
      %v2916 = vunpack.c.l.b16 %v2447
      %v2917 = vunpack.c.h.b16 %v2447
      %v2918 = vunpack.c.l.b16 %v2448
      %v2919 = vunpack.c.h.b16 %v2448
      %v2920 = vunpack.c.l.b16 %v2449
      %v2921 = vunpack.c.l.b16 %v2450
      %v2922 = vunpack.c.h.b16 %v2450
      %v2923 = vunpack.c.l.b16 %v2451
      %v2924 = vunpack.c.h.b16 %v2451
      %v2925 = vunpack.c.l.b16 %v2452
      %v2926 = vunpack.c.h.b16 %v2452
      %v2927 = vunpack.c.l.b16 %v2453
      %v2928 = vunpack.c.l.b16 %v2454
      %v2929 = vunpack.c.h.b16 %v2454
      %v2930 = vunpack.c.l.b16 %v2455
      %v2931 = vunpack.c.h.b16 %v2455
      %v2932 = vunpack.c.l.b16 %v2456
      %v2933 = vunpack.c.h.b16 %v2456
      %v2934 = vunpack.c.l.b16 %v2457
      %v2935 = vunpack.c.l.b16 %v2458
      %v2936 = vunpack.c.h.b16 %v2458
      %v2937 = vunpack.c.l.b16 %v2459
      %v2938 = vunpack.c.h.b16 %v2459
      %v2939 = vunpack.c.l.b16 %v2460
      %v2940 = vunpack.c.h.b16 %v2460
      %v2941 = vunpack.c.l.b16 %v2461
      %v2942 = vunpack.c.l.b16 %v2462
      %v2943 = vunpack.c.h.b16 %v2462
      %v2944 = vunpack.c.l.b16 %v2463
      %v2945 = vunpack.c.h.b16 %v2463
      %v2946 = vunpack.c.l.b16 %v2464
      %v2947 = vunpack.c.h.b16 %v2464
      %v2948 = vunpack.c.l.b16 %v2465
      %v2949 = vunpack.c.l.b16 %v2466
      %v2950 = vunpack.c.h.b16 %v2466
      %v2951 = vunpack.c.l.b16 %v2467
      %v2952 = vunpack.c.h.b16 %v2467
      %v2953 = vunpack.c.l.b16 %v2468
      %v2954 = vunpack.c.h.b16 %v2468
      %v2955 = vunpack.c.l.b16 %v2469
      %v2956 = vunpack.c.l.b16 %v2470
      %v2957 = vunpack.c.h.b16 %v2470
      %v2958 = vunpack.c.l.b16 %v2471
      %v2959 = vunpack.c.h.b16 %v2471
      %v2960 = vunpack.c.l.b16 %v2472
      %v2961 = vunpack.c.h.b16 %v2472
      %v2962 = vunpack.c.l.b16 %v2473
      %v2963 = vunpack.c.l.b16 %v2474
      %v2964 = vunpack.c.h.b16 %v2474
      %v2965 = vunpack.c.l.b16 %v2475
      %v2966 = vunpack.c.h.b16 %v2475
      %v2967 = vunpack.c.l.b16 %v2476
      %v2968 = vunpack.c.h.b16 %v2476
      %v2969 = vunpack.c.l.b16 %v2477
      %v2970 = vunpack.c.l.b16 %v2478
      %v2971 = vunpack.c.h.b16 %v2478
      %v2972 = vunpack.c.l.b16 %v2479
      %v2973 = vunpack.c.h.b16 %v2479
      %v2974 = vunpack.c.l.b16 %v2480
      %v2975 = vunpack.c.h.b16 %v2480
      %v2976 = vunpack.c.l.b16 %v2481
      %v2977 = vunpack.c.l.b16 %v2482
      %v2978 = vunpack.c.h.b16 %v2482
      %v2979 = vunpack.c.l.b16 %v2483
      %v2980 = vunpack.c.h.b16 %v2483
      %v2981 = vunpack.c.l.b16 %v2484
      %v2982 = vunpack.c.h.b16 %v2484
      %v2983 = vunpack.c.l.b16 %v2485
      %v2984 = vunpack.c.l.b16 %v2486
      %v2985 = vunpack.c.h.b16 %v2486
      %v2986 = vunpack.c.l.b16 %v2487
      %v2987 = vunpack.c.h.b16 %v2487
      %v2988 = vunpack.c.l.b16 %v2488
      %v2989 = vunpack.c.h.b16 %v2488
      %v2990 = vunpack.c.l.b16 %v2489
      %v2991 = vunpack.c.l.b16 %v2490
      %v2992 = vunpack.c.h.b16 %v2490
      %v2993 = vunpack.c.l.b16 %v2491
      %v2994 = vunpack.c.h.b16 %v2491
      %v2995 = vunpack.c.l.b16 %v2492
      %v2996 = vunpack.c.h.b16 %v2492
      %v2997 = vunpack.c.l.b16 %v2493
      %v2998 = vpack.c.b16 %v2753, %v2746
      %v2999 = vpack.c.b16 %v2754, %v2747
      %v3000 = vpack.c.b16 %v2755, %v2748
      %v3001 = vpack.c.b16 %v2756, %v2749
      %v3002 = vpack.c.b16 %v2757, %v2750
      %v3003 = vpack.c.b16 %v2758, %v2751
      %v3004 = vpack.c.b16 %v2759, %v2752
      %v3005 = vpack.c.b16 %v2767, %v2760
      %v3006 = vpack.c.b16 %v2768, %v2761
      %v3007 = vpack.c.b16 %v2769, %v2762
      %v3008 = vpack.c.b16 %v2770, %v2763
      %v3009 = vpack.c.b16 %v2771, %v2764
      %v3010 = vpack.c.b16 %v2772, %v2765
      %v3011 = vpack.c.b16 %v2773, %v2766
      %v3012 = vpack.c.b16 %v2781, %v2774
      %v3013 = vpack.c.b16 %v2782, %v2775
      %v3014 = vpack.c.b16 %v2783, %v2776
      %v3015 = vpack.c.b16 %v2784, %v2777
      %v3016 = vpack.c.b16 %v2785, %v2778
      %v3017 = vpack.c.b16 %v2786, %v2779
      %v3018 = vpack.c.b16 %v2787, %v2780
      %v3019 = vpack.c.b16 %v2795, %v2788
      %v3020 = vpack.c.b16 %v2796, %v2789
      %v3021 = vpack.c.b16 %v2797, %v2790
      %v3022 = vpack.c.b16 %v2798, %v2791
      %v3023 = vpack.c.b16 %v2799, %v2792
      %v3024 = vpack.c.b16 %v2800, %v2793
      %v3025 = vpack.c.b16 %v2801, %v2794
      %v3026 = vpack.c.b16 %v2809, %v2802
      %v3027 = vpack.c.b16 %v2810, %v2803
      %v3028 = vpack.c.b16 %v2811, %v2804
      %v3029 = vpack.c.b16 %v2812, %v2805
      %v3030 = vpack.c.b16 %v2813, %v2806
      %v3031 = vpack.c.b16 %v2814, %v2807
      %v3032 = vpack.c.b16 %v2815, %v2808
      %v3033 = vpack.c.b16 %v2823, %v2816
      %v3034 = vpack.c.b16 %v2824, %v2817
      %v3035 = vpack.c.b16 %v2825, %v2818
      %v3036 = vpack.c.b16 %v2826, %v2819
      %v3037 = vpack.c.b16 %v2827, %v2820
      %v3038 = vpack.c.b16 %v2828, %v2821
      %v3039 = vpack.c.b16 %v2829, %v2822
      %v3040 = vpack.c.b16 %v2837, %v2830
      %v3041 = vpack.c.b16 %v2838, %v2831
      %v3042 = vpack.c.b16 %v2839, %v2832
      %v3043 = vpack.c.b16 %v2840, %v2833
      %v3044 = vpack.c.b16 %v2841, %v2834
      %v3045 = vpack.c.b16 %v2842, %v2835
      %v3046 = vpack.c.b16 %v2843, %v2836
      %v3047 = vpack.c.b16 %v2851, %v2844
      %v3048 = vpack.c.b16 %v2852, %v2845
      %v3049 = vpack.c.b16 %v2853, %v2846
      %v3050 = vpack.c.b16 %v2854, %v2847
      %v3051 = vpack.c.b16 %v2855, %v2848
      %v3052 = vpack.c.b16 %v2856, %v2849
      %v3053 = vpack.c.b16 %v2857, %v2850
      %v3054 = vpack.c.b16 %v2865, %v2858
      %v3055 = vpack.c.b16 %v2866, %v2859
      %v3056 = vpack.c.b16 %v2867, %v2860
      %v3057 = vpack.c.b16 %v2868, %v2861
      %v3058 = vpack.c.b16 %v2869, %v2862
      %v3059 = vpack.c.b16 %v2870, %v2863
      %v3060 = vpack.c.b16 %v2871, %v2864
      %v3061 = vpack.c.b16 %v2879, %v2872
      %v3062 = vpack.c.b16 %v2880, %v2873
      %v3063 = vpack.c.b16 %v2881, %v2874
      %v3064 = vpack.c.b16 %v2882, %v2875
      %v3065 = vpack.c.b16 %v2883, %v2876
      %v3066 = vpack.c.b16 %v2884, %v2877
      %v3067 = vpack.c.b16 %v2885, %v2878
      %v3068 = vpack.c.b16 %v2893, %v2886
      %v3069 = vpack.c.b16 %v2894, %v2887
      %v3070 = vpack.c.b16 %v2895, %v2888
      %v3071 = vpack.c.b16 %v2896, %v2889
      %v3072 = vpack.c.b16 %v2897, %v2890
      %v3073 = vpack.c.b16 %v2898, %v2891
      %v3074 = vpack.c.b16 %v2899, %v2892
      %v3075 = vpack.c.b16 %v2907, %v2900
      %v3076 = vpack.c.b16 %v2908, %v2901
      %v3077 = vpack.c.b16 %v2909, %v2902
      %v3078 = vpack.c.b16 %v2910, %v2903
      %v3079 = vpack.c.b16 %v2911, %v2904
      %v3080 = vpack.c.b16 %v2912, %v2905
      %v3081 = vpack.c.b16 %v2913, %v2906
      %v3082 = vpack.c.b16 %v2921, %v2914
      %v3083 = vpack.c.b16 %v2922, %v2915
      %v3084 = vpack.c.b16 %v2923, %v2916
      %v3085 = vpack.c.b16 %v2924, %v2917
      %v3086 = vpack.c.b16 %v2925, %v2918
      %v3087 = vpack.c.b16 %v2926, %v2919
      %v3088 = vpack.c.b16 %v2927, %v2920
      %v3089 = vpack.c.b16 %v2935, %v2928
      %v3090 = vpack.c.b16 %v2936, %v2929
      %v3091 = vpack.c.b16 %v2937, %v2930
      %v3092 = vpack.c.b16 %v2938, %v2931
      %v3093 = vpack.c.b16 %v2939, %v2932
      %v3094 = vpack.c.b16 %v2940, %v2933
      %v3095 = vpack.c.b16 %v2941, %v2934
      %v3096 = vpack.c.b16 %v2949, %v2942
      %v3097 = vpack.c.b16 %v2950, %v2943
      %v3098 = vpack.c.b16 %v2951, %v2944
      %v3099 = vpack.c.b16 %v2952, %v2945
      %v3100 = vpack.c.b16 %v2953, %v2946
      %v3101 = vpack.c.b16 %v2954, %v2947
      %v3102 = vpack.c.b16 %v2955, %v2948
      %v3103 = vpack.c.b16 %v2963, %v2956
      %v3104 = vpack.c.b16 %v2964, %v2957
      %v3105 = vpack.c.b16 %v2965, %v2958
      %v3106 = vpack.c.b16 %v2966, %v2959
      %v3107 = vpack.c.b16 %v2967, %v2960
      %v3108 = vpack.c.b16 %v2968, %v2961
      %v3109 = vpack.c.b16 %v2969, %v2962
      %v3110 = vpack.c.b16 %v2977, %v2970
      %v3111 = vpack.c.b16 %v2978, %v2971
      %v3112 = vpack.c.b16 %v2979, %v2972
      %v3113 = vpack.c.b16 %v2980, %v2973
      %v3114 = vpack.c.b16 %v2981, %v2974
      %v3115 = vpack.c.b16 %v2982, %v2975
      %v3116 = vpack.c.b16 %v2983, %v2976
      %v3117 = vpack.c.b16 %v2991, %v2984
      %v3118 = vpack.c.b16 %v2992, %v2985
      %v3119 = vpack.c.b16 %v2993, %v2986
      %v3120 = vpack.c.b16 %v2994, %v2987
      %v3121 = vpack.c.b16 %v2995, %v2988
      %v3122 = vpack.c.b16 %v2996, %v2989
      %v3123 = vpack.c.b16 %v2997, %v2990
      %vm3250 = vcmask 261120
      %v3252 = vsel %vm3250, %v2584, 0
      %v3255 = vsel %vm3250, %v2587, 0
      %v3258 = vsel %vm3250, %v2590, 0
      %v3261 = vsel %vm3250, %v2593, 0
      %3263 = vmatpush.bf16.msra.mxu0 %v3047
      %3264 = vmatpush.bf16.msra.mxu0 %v3040
      %3265 = vmatpush.bf16.msra.mxu0 %v3033
      %3266 = vmatpush.bf16.msra.mxu0 %v3026
      %3267 = vmatpush.bf16.msra.mxu0 %v3019
      %3268 = vmatpush.bf16.msra.mxu0 %v3012
      %3269 = vmatpush.bf16.msra.mxu0 %v3005
      %3270 = vmatpush.bf16.msra.mxu0 %v2998
      %3271 = vmatmul.bf16.gmra.mxu0 %v2582
      %v3272 = vpop.f32.mrf.mxu0
      %v3273 = vadd.f32 %v2505, %v3272
      %v3274 = vpop.f32.mrf.mxu0
      %v3275 = vadd.f32 %v2510, %v3274
      %3276 = vmatmul.bf16.gmra.mxu0 %v2585
      %v3277 = vpop.f32.mrf.mxu0
      %v3278 = vadd.f32 %v2515, %v3277
      %v3279 = vpop.f32.mrf.mxu0
      %v3280 = vadd.f32 %v2520, %v3279
      %3281 = vmatmul.bf16.gmra.mxu0 %v2588
      %v3282 = vpop.f32.mrf.mxu0
      %v3283 = vadd.f32 %v2525, %v3282
      %v3284 = vpop.f32.mrf.mxu0
      %v3285 = vadd.f32 %v2530, %v3284
      %3286 = vmatmul.bf16.gmra.mxu0 %v2591
      %v3287 = vpop.f32.mrf.mxu0
      %v3288 = vadd.f32 %v2535, %v3287
      %v3289 = vpop.f32.mrf.mxu0
      %v3290 = vadd.f32 %v2540, %v3289
      %3291 = vdwg.mxu0
      %3292 = vmatpush.bf16.msra.mxu0 %v3103
      %3293 = vmatpush.bf16.msra.mxu0 %v3096
      %3294 = vmatpush.bf16.msra.mxu0 %v3089
      %3295 = vmatpush.bf16.msra.mxu0 %v3082
      %3296 = vmatpush.bf16.msra.mxu0 %v3075
      %3297 = vmatpush.bf16.msra.mxu0 %v3068
      %3298 = vmatpush.bf16.msra.mxu0 %v3061
      %3299 = vmatpush.bf16.msra.mxu0 %v3054
      %3300 = vmatmul.bf16.gmra.mxu0 %v2583
      %v3301 = vpop.f32.mrf.mxu0
      %v3302 = vadd.f32 %v3273, %v3301
      %v3303 = vpop.f32.mrf.mxu0
      %v3304 = vadd.f32 %v3275, %v3303
      %3305 = vmatmul.bf16.gmra.mxu0 %v2586
      %v3306 = vpop.f32.mrf.mxu0
      %v3307 = vadd.f32 %v3278, %v3306
      %v3308 = vpop.f32.mrf.mxu0
      %v3309 = vadd.f32 %v3280, %v3308
      %3310 = vmatmul.bf16.gmra.mxu0 %v2589
      %v3311 = vpop.f32.mrf.mxu0
      %v3312 = vadd.f32 %v3283, %v3311
      %v3313 = vpop.f32.mrf.mxu0
      %v3314 = vadd.f32 %v3285, %v3313
      %3315 = vmatmul.bf16.gmra.mxu0 %v2592
      %v3316 = vpop.f32.mrf.mxu0
      %v3317 = vadd.f32 %v3288, %v3316
      %v3318 = vpop.f32.mrf.mxu0
      %v3319 = vadd.f32 %v3290, %v3318
      %3320 = vdwg.mxu0
      %3321 = vmatpush.bf16.msra.mxu0 0
      %3322 = vmatpush.bf16.msra.mxu0 0
      %3323 = vmatpush.bf16.msra.mxu0 0
      %3324 = vmatpush.bf16.msra.mxu0 0
      %3325 = vmatpush.bf16.msra.mxu0 0
      %3326 = vmatpush.bf16.msra.mxu0 0
      %3327 = vmatpush.bf16.msra.mxu0 %v3117
      %3328 = vmatpush.bf16.msra.mxu0 %v3110
      %3329 = vmatmul.bf16.gmra.mxu0 %v3252
      %v3330 = vpop.f32.mrf.mxu0
      %v3331 = vadd.f32 %v3302, %v3330
      %v3332 = vpop.f32.mrf.mxu0
      %v3333 = vadd.f32 %v3304, %v3332
      %3334 = vmatmul.bf16.gmra.mxu0 %v3255
      %v3335 = vpop.f32.mrf.mxu0
      %v3336 = vadd.f32 %v3307, %v3335
      %v3337 = vpop.f32.mrf.mxu0
      %v3338 = vadd.f32 %v3309, %v3337
      %3339 = vmatmul.bf16.gmra.mxu0 %v3258
      %v3340 = vpop.f32.mrf.mxu0
      %v3341 = vadd.f32 %v3312, %v3340
      %v3342 = vpop.f32.mrf.mxu0
      %v3343 = vadd.f32 %v3314, %v3342
      %3344 = vmatmul.bf16.gmra.mxu0 %v3261
      %v3345 = vpop.f32.mrf.mxu0
      %v3346 = vadd.f32 %v3317, %v3345
      %v3347 = vpop.f32.mrf.mxu0
      %v3348 = vadd.f32 %v3319, %v3347
      %3349 = vdwg.mxu0
      %3350 = vmatpush.bf16.msra.mxu0 %v3048
      %3351 = vmatpush.bf16.msra.mxu0 %v3041
      %3352 = vmatpush.bf16.msra.mxu0 %v3034
      %3353 = vmatpush.bf16.msra.mxu0 %v3027
      %3354 = vmatpush.bf16.msra.mxu0 %v3020
      %3355 = vmatpush.bf16.msra.mxu0 %v3013
      %3356 = vmatpush.bf16.msra.mxu0 %v3006
      %3357 = vmatpush.bf16.msra.mxu0 %v2999
      %3358 = vmatmul.bf16.gmra.mxu0 %v2582
      %v3359 = vpop.f32.mrf.mxu0
      %v3360 = vadd.f32 %v2505, %v3359
      %v3361 = vpop.f32.mrf.mxu0
      %v3362 = vadd.f32 %v2510, %v3361
      %3363 = vmatmul.bf16.gmra.mxu0 %v2585
      %v3364 = vpop.f32.mrf.mxu0
      %v3365 = vadd.f32 %v2515, %v3364
      %v3366 = vpop.f32.mrf.mxu0
      %v3367 = vadd.f32 %v2520, %v3366
      %3368 = vmatmul.bf16.gmra.mxu0 %v2588
      %v3369 = vpop.f32.mrf.mxu0
      %v3370 = vadd.f32 %v2525, %v3369
      %v3371 = vpop.f32.mrf.mxu0
      %v3372 = vadd.f32 %v2530, %v3371
      %3373 = vmatmul.bf16.gmra.mxu0 %v2591
      %v3374 = vpop.f32.mrf.mxu0
      %v3375 = vadd.f32 %v2535, %v3374
      %v3376 = vpop.f32.mrf.mxu0
      %v3377 = vadd.f32 %v2540, %v3376
      %3378 = vdwg.mxu0
      %3379 = vmatpush.bf16.msra.mxu0 %v3104
      %3380 = vmatpush.bf16.msra.mxu0 %v3097
      %3381 = vmatpush.bf16.msra.mxu0 %v3090
      %3382 = vmatpush.bf16.msra.mxu0 %v3083
      %3383 = vmatpush.bf16.msra.mxu0 %v3076
      %3384 = vmatpush.bf16.msra.mxu0 %v3069
      %3385 = vmatpush.bf16.msra.mxu0 %v3062
      %3386 = vmatpush.bf16.msra.mxu0 %v3055
      %3387 = vmatmul.bf16.gmra.mxu0 %v2583
      %v3388 = vpop.f32.mrf.mxu0
      %v3389 = vadd.f32 %v3360, %v3388
      %v3390 = vpop.f32.mrf.mxu0
      %v3391 = vadd.f32 %v3362, %v3390
      %3392 = vmatmul.bf16.gmra.mxu0 %v2586
      %v3393 = vpop.f32.mrf.mxu0
      %v3394 = vadd.f32 %v3365, %v3393
      %v3395 = vpop.f32.mrf.mxu0
      %v3396 = vadd.f32 %v3367, %v3395
      %3397 = vmatmul.bf16.gmra.mxu0 %v2589
      %v3398 = vpop.f32.mrf.mxu0
      %v3399 = vadd.f32 %v3370, %v3398
      %v3400 = vpop.f32.mrf.mxu0
      %v3401 = vadd.f32 %v3372, %v3400
      %3402 = vmatmul.bf16.gmra.mxu0 %v2592
      %v3403 = vpop.f32.mrf.mxu0
      %v3404 = vadd.f32 %v3375, %v3403
      %v3405 = vpop.f32.mrf.mxu0
      %v3406 = vadd.f32 %v3377, %v3405
      %3407 = vdwg.mxu0
      %3408 = vmatpush.bf16.msra.mxu0 0
      %3409 = vmatpush.bf16.msra.mxu0 0
      %3410 = vmatpush.bf16.msra.mxu0 0
      %3411 = vmatpush.bf16.msra.mxu0 0
      %3412 = vmatpush.bf16.msra.mxu0 0
      %3413 = vmatpush.bf16.msra.mxu0 0
      %3414 = vmatpush.bf16.msra.mxu0 %v3118
      %3415 = vmatpush.bf16.msra.mxu0 %v3111
      %3416 = vmatmul.bf16.gmra.mxu0 %v3252
      %v3417 = vpop.f32.mrf.mxu0
      %v3418 = vadd.f32 %v3389, %v3417
      %v3419 = vpop.f32.mrf.mxu0
      %v3420 = vadd.f32 %v3391, %v3419
      %3421 = vmatmul.bf16.gmra.mxu0 %v3255
      %v3422 = vpop.f32.mrf.mxu0
      %v3423 = vadd.f32 %v3394, %v3422
      %v3424 = vpop.f32.mrf.mxu0
      %v3425 = vadd.f32 %v3396, %v3424
      %3426 = vmatmul.bf16.gmra.mxu0 %v3258
      %v3427 = vpop.f32.mrf.mxu0
      %v3428 = vadd.f32 %v3399, %v3427
      %v3429 = vpop.f32.mrf.mxu0
      %v3430 = vadd.f32 %v3401, %v3429
      %3431 = vmatmul.bf16.gmra.mxu0 %v3261
      %v3432 = vpop.f32.mrf.mxu0
      %v3433 = vadd.f32 %v3404, %v3432
      %v3434 = vpop.f32.mrf.mxu0
      %v3435 = vadd.f32 %v3406, %v3434
      %3436 = vdwg.mxu0
      %3437 = vmatpush.bf16.msra.mxu0 %v3049
      %3438 = vmatpush.bf16.msra.mxu0 %v3042
      %3439 = vmatpush.bf16.msra.mxu0 %v3035
      %3440 = vmatpush.bf16.msra.mxu0 %v3028
      %3441 = vmatpush.bf16.msra.mxu0 %v3021
      %3442 = vmatpush.bf16.msra.mxu0 %v3014
      %3443 = vmatpush.bf16.msra.mxu0 %v3007
      %3444 = vmatpush.bf16.msra.mxu0 %v3000
      %3445 = vmatmul.bf16.gmra.mxu0 %v2582
      %v3446 = vpop.f32.mrf.mxu0
      %v3447 = vadd.f32 %v2505, %v3446
      %v3448 = vpop.f32.mrf.mxu0
      %v3449 = vadd.f32 %v2510, %v3448
      %3450 = vmatmul.bf16.gmra.mxu0 %v2585
      %v3451 = vpop.f32.mrf.mxu0
      %v3452 = vadd.f32 %v2515, %v3451
      %v3453 = vpop.f32.mrf.mxu0
      %v3454 = vadd.f32 %v2520, %v3453
      %3455 = vmatmul.bf16.gmra.mxu0 %v2588
      %v3456 = vpop.f32.mrf.mxu0
      %v3457 = vadd.f32 %v2525, %v3456
      %v3458 = vpop.f32.mrf.mxu0
      %v3459 = vadd.f32 %v2530, %v3458
      %3460 = vmatmul.bf16.gmra.mxu0 %v2591
      %v3461 = vpop.f32.mrf.mxu0
      %v3462 = vadd.f32 %v2535, %v3461
      %v3463 = vpop.f32.mrf.mxu0
      %v3464 = vadd.f32 %v2540, %v3463
      %3465 = vdwg.mxu0
      %3466 = vmatpush.bf16.msra.mxu0 %v3105
      %3467 = vmatpush.bf16.msra.mxu0 %v3098
      %3468 = vmatpush.bf16.msra.mxu0 %v3091
      %3469 = vmatpush.bf16.msra.mxu0 %v3084
      %3470 = vmatpush.bf16.msra.mxu0 %v3077
      %3471 = vmatpush.bf16.msra.mxu0 %v3070
      %3472 = vmatpush.bf16.msra.mxu0 %v3063
      %3473 = vmatpush.bf16.msra.mxu0 %v3056
      %3474 = vmatmul.bf16.gmra.mxu0 %v2583
      %v3475 = vpop.f32.mrf.mxu0
      %v3476 = vadd.f32 %v3447, %v3475
      %v3477 = vpop.f32.mrf.mxu0
      %v3478 = vadd.f32 %v3449, %v3477
      %3479 = vmatmul.bf16.gmra.mxu0 %v2586
      %v3480 = vpop.f32.mrf.mxu0
      %v3481 = vadd.f32 %v3452, %v3480
      %v3482 = vpop.f32.mrf.mxu0
      %v3483 = vadd.f32 %v3454, %v3482
      %3484 = vmatmul.bf16.gmra.mxu0 %v2589
      %v3485 = vpop.f32.mrf.mxu0
      %v3486 = vadd.f32 %v3457, %v3485
      %v3487 = vpop.f32.mrf.mxu0
      %v3488 = vadd.f32 %v3459, %v3487
      %3489 = vmatmul.bf16.gmra.mxu0 %v2592
      %v3490 = vpop.f32.mrf.mxu0
      %v3491 = vadd.f32 %v3462, %v3490
      %v3492 = vpop.f32.mrf.mxu0
      %v3493 = vadd.f32 %v3464, %v3492
      %3494 = vdwg.mxu0
      %3495 = vmatpush.bf16.msra.mxu0 0
      %3496 = vmatpush.bf16.msra.mxu0 0
      %3497 = vmatpush.bf16.msra.mxu0 0
      %3498 = vmatpush.bf16.msra.mxu0 0
      %3499 = vmatpush.bf16.msra.mxu0 0
      %3500 = vmatpush.bf16.msra.mxu0 0
      %3501 = vmatpush.bf16.msra.mxu0 %v3119
      %3502 = vmatpush.bf16.msra.mxu0 %v3112
      %3503 = vmatmul.bf16.gmra.mxu0 %v3252
      %v3504 = vpop.f32.mrf.mxu0
      %v3505 = vadd.f32 %v3476, %v3504
      %v3506 = vpop.f32.mrf.mxu0
      %v3507 = vadd.f32 %v3478, %v3506
      %3508 = vmatmul.bf16.gmra.mxu0 %v3255
      %v3509 = vpop.f32.mrf.mxu0
      %v3510 = vadd.f32 %v3481, %v3509
      %v3511 = vpop.f32.mrf.mxu0
      %v3512 = vadd.f32 %v3483, %v3511
      %3513 = vmatmul.bf16.gmra.mxu0 %v3258
      %v3514 = vpop.f32.mrf.mxu0
      %v3515 = vadd.f32 %v3486, %v3514
      %v3516 = vpop.f32.mrf.mxu0
      %v3517 = vadd.f32 %v3488, %v3516
      %3518 = vmatmul.bf16.gmra.mxu0 %v3261
      %v3519 = vpop.f32.mrf.mxu0
      %v3520 = vadd.f32 %v3491, %v3519
      %v3521 = vpop.f32.mrf.mxu0
      %v3522 = vadd.f32 %v3493, %v3521
      %3523 = vdwg.mxu0
      %3524 = vmatpush.bf16.msra.mxu0 %v3050
      %3525 = vmatpush.bf16.msra.mxu0 %v3043
      %3526 = vmatpush.bf16.msra.mxu0 %v3036
      %3527 = vmatpush.bf16.msra.mxu0 %v3029
      %3528 = vmatpush.bf16.msra.mxu0 %v3022
      %3529 = vmatpush.bf16.msra.mxu0 %v3015
      %3530 = vmatpush.bf16.msra.mxu0 %v3008
      %3531 = vmatpush.bf16.msra.mxu0 %v3001
      %3532 = vmatmul.bf16.gmra.mxu0 %v2582
      %v3533 = vpop.f32.mrf.mxu0
      %v3534 = vadd.f32 %v2505, %v3533
      %v3535 = vpop.f32.mrf.mxu0
      %v3536 = vadd.f32 %v2510, %v3535
      %3537 = vmatmul.bf16.gmra.mxu0 %v2585
      %v3538 = vpop.f32.mrf.mxu0
      %v3539 = vadd.f32 %v2515, %v3538
      %v3540 = vpop.f32.mrf.mxu0
      %v3541 = vadd.f32 %v2520, %v3540
      %3542 = vmatmul.bf16.gmra.mxu0 %v2588
      %v3543 = vpop.f32.mrf.mxu0
      %v3544 = vadd.f32 %v2525, %v3543
      %v3545 = vpop.f32.mrf.mxu0
      %v3546 = vadd.f32 %v2530, %v3545
      %3547 = vmatmul.bf16.gmra.mxu0 %v2591
      %v3548 = vpop.f32.mrf.mxu0
      %v3549 = vadd.f32 %v2535, %v3548
      %v3550 = vpop.f32.mrf.mxu0
      %v3551 = vadd.f32 %v2540, %v3550
      %3552 = vdwg.mxu0
      %3553 = vmatpush.bf16.msra.mxu0 %v3106
      %3554 = vmatpush.bf16.msra.mxu0 %v3099
      %3555 = vmatpush.bf16.msra.mxu0 %v3092
      %3556 = vmatpush.bf16.msra.mxu0 %v3085
      %3557 = vmatpush.bf16.msra.mxu0 %v3078
      %3558 = vmatpush.bf16.msra.mxu0 %v3071
      %3559 = vmatpush.bf16.msra.mxu0 %v3064
      %3560 = vmatpush.bf16.msra.mxu0 %v3057
      %3561 = vmatmul.bf16.gmra.mxu0 %v2583
      %v3562 = vpop.f32.mrf.mxu0
      %v3563 = vadd.f32 %v3534, %v3562
      %v3564 = vpop.f32.mrf.mxu0
      %v3565 = vadd.f32 %v3536, %v3564
      %3566 = vmatmul.bf16.gmra.mxu0 %v2586
      %v3567 = vpop.f32.mrf.mxu0
      %v3568 = vadd.f32 %v3539, %v3567
      %v3569 = vpop.f32.mrf.mxu0
      %v3570 = vadd.f32 %v3541, %v3569
      %3571 = vmatmul.bf16.gmra.mxu0 %v2589
      %v3572 = vpop.f32.mrf.mxu0
      %v3573 = vadd.f32 %v3544, %v3572
      %v3574 = vpop.f32.mrf.mxu0
      %v3575 = vadd.f32 %v3546, %v3574
      %3576 = vmatmul.bf16.gmra.mxu0 %v2592
      %v3577 = vpop.f32.mrf.mxu0
      %v3578 = vadd.f32 %v3549, %v3577
      %v3579 = vpop.f32.mrf.mxu0
      %v3580 = vadd.f32 %v3551, %v3579
      %3581 = vdwg.mxu0
      %3582 = vmatpush.bf16.msra.mxu0 0
      %3583 = vmatpush.bf16.msra.mxu0 0
      %3584 = vmatpush.bf16.msra.mxu0 0
      %3585 = vmatpush.bf16.msra.mxu0 0
      %3586 = vmatpush.bf16.msra.mxu0 0
      %3587 = vmatpush.bf16.msra.mxu0 0
      %3588 = vmatpush.bf16.msra.mxu0 %v3120
      %3589 = vmatpush.bf16.msra.mxu0 %v3113
      %3590 = vmatmul.bf16.gmra.mxu0 %v3252
      %v3591 = vpop.f32.mrf.mxu0
      %v3592 = vadd.f32 %v3563, %v3591
      %v3593 = vpop.f32.mrf.mxu0
      %v3594 = vadd.f32 %v3565, %v3593
      %3595 = vmatmul.bf16.gmra.mxu0 %v3255
      %v3596 = vpop.f32.mrf.mxu0
      %v3597 = vadd.f32 %v3568, %v3596
      %v3598 = vpop.f32.mrf.mxu0
      %v3599 = vadd.f32 %v3570, %v3598
      %3600 = vmatmul.bf16.gmra.mxu0 %v3258
      %v3601 = vpop.f32.mrf.mxu0
      %v3602 = vadd.f32 %v3573, %v3601
      %v3603 = vpop.f32.mrf.mxu0
      %v3604 = vadd.f32 %v3575, %v3603
      %3605 = vmatmul.bf16.gmra.mxu0 %v3261
      %v3606 = vpop.f32.mrf.mxu0
      %v3607 = vadd.f32 %v3578, %v3606
      %v3608 = vpop.f32.mrf.mxu0
      %v3609 = vadd.f32 %v3580, %v3608
      %3610 = vdwg.mxu0
      %3611 = vmatpush.bf16.msra.mxu0 %v3051
      %3612 = vmatpush.bf16.msra.mxu0 %v3044
      %3613 = vmatpush.bf16.msra.mxu0 %v3037
      %3614 = vmatpush.bf16.msra.mxu0 %v3030
      %3615 = vmatpush.bf16.msra.mxu0 %v3023
      %3616 = vmatpush.bf16.msra.mxu0 %v3016
      %3617 = vmatpush.bf16.msra.mxu0 %v3009
      %3618 = vmatpush.bf16.msra.mxu0 %v3002
      %3619 = vmatmul.bf16.gmra.mxu0 %v2582
      %v3620 = vpop.f32.mrf.mxu0
      %v3621 = vadd.f32 %v2505, %v3620
      %v3622 = vpop.f32.mrf.mxu0
      %v3623 = vadd.f32 %v2510, %v3622
      %3624 = vmatmul.bf16.gmra.mxu0 %v2585
      %v3625 = vpop.f32.mrf.mxu0
      %v3626 = vadd.f32 %v2515, %v3625
      %v3627 = vpop.f32.mrf.mxu0
      %v3628 = vadd.f32 %v2520, %v3627
      %3629 = vmatmul.bf16.gmra.mxu0 %v2588
      %v3630 = vpop.f32.mrf.mxu0
      %v3631 = vadd.f32 %v2525, %v3630
      %v3632 = vpop.f32.mrf.mxu0
      %v3633 = vadd.f32 %v2530, %v3632
      %3634 = vmatmul.bf16.gmra.mxu0 %v2591
      %v3635 = vpop.f32.mrf.mxu0
      %v3636 = vadd.f32 %v2535, %v3635
      %v3637 = vpop.f32.mrf.mxu0
      %v3638 = vadd.f32 %v2540, %v3637
      %3639 = vdwg.mxu0
      %3640 = vmatpush.bf16.msra.mxu0 %v3107
      %3641 = vmatpush.bf16.msra.mxu0 %v3100
      %3642 = vmatpush.bf16.msra.mxu0 %v3093
      %3643 = vmatpush.bf16.msra.mxu0 %v3086
      %3644 = vmatpush.bf16.msra.mxu0 %v3079
      %3645 = vmatpush.bf16.msra.mxu0 %v3072
      %3646 = vmatpush.bf16.msra.mxu0 %v3065
      %3647 = vmatpush.bf16.msra.mxu0 %v3058
      %3648 = vmatmul.bf16.gmra.mxu0 %v2583
      %v3649 = vpop.f32.mrf.mxu0
      %v3650 = vadd.f32 %v3621, %v3649
      %v3651 = vpop.f32.mrf.mxu0
      %v3652 = vadd.f32 %v3623, %v3651
      %3653 = vmatmul.bf16.gmra.mxu0 %v2586
      %v3654 = vpop.f32.mrf.mxu0
      %v3655 = vadd.f32 %v3626, %v3654
      %v3656 = vpop.f32.mrf.mxu0
      %v3657 = vadd.f32 %v3628, %v3656
      %3658 = vmatmul.bf16.gmra.mxu0 %v2589
      %v3659 = vpop.f32.mrf.mxu0
      %v3660 = vadd.f32 %v3631, %v3659
      %v3661 = vpop.f32.mrf.mxu0
      %v3662 = vadd.f32 %v3633, %v3661
      %3663 = vmatmul.bf16.gmra.mxu0 %v2592
      %v3664 = vpop.f32.mrf.mxu0
      %v3665 = vadd.f32 %v3636, %v3664
      %v3666 = vpop.f32.mrf.mxu0
      %v3667 = vadd.f32 %v3638, %v3666
      %3668 = vdwg.mxu0
      %3669 = vmatpush.bf16.msra.mxu0 0
      %3670 = vmatpush.bf16.msra.mxu0 0
      %3671 = vmatpush.bf16.msra.mxu0 0
      %3672 = vmatpush.bf16.msra.mxu0 0
      %3673 = vmatpush.bf16.msra.mxu0 0
      %3674 = vmatpush.bf16.msra.mxu0 0
      %3675 = vmatpush.bf16.msra.mxu0 %v3121
      %3676 = vmatpush.bf16.msra.mxu0 %v3114
      %3677 = vmatmul.bf16.gmra.mxu0 %v3252
      %v3678 = vpop.f32.mrf.mxu0
      %v3679 = vadd.f32 %v3650, %v3678
      %v3680 = vpop.f32.mrf.mxu0
      %v3681 = vadd.f32 %v3652, %v3680
      %3682 = vmatmul.bf16.gmra.mxu0 %v3255
      %v3683 = vpop.f32.mrf.mxu0
      %v3684 = vadd.f32 %v3655, %v3683
      %v3685 = vpop.f32.mrf.mxu0
      %v3686 = vadd.f32 %v3657, %v3685
      %3687 = vmatmul.bf16.gmra.mxu0 %v3258
      %v3688 = vpop.f32.mrf.mxu0
      %v3689 = vadd.f32 %v3660, %v3688
      %v3690 = vpop.f32.mrf.mxu0
      %v3691 = vadd.f32 %v3662, %v3690
      %3692 = vmatmul.bf16.gmra.mxu0 %v3261
      %v3693 = vpop.f32.mrf.mxu0
      %v3694 = vadd.f32 %v3665, %v3693
      %v3695 = vpop.f32.mrf.mxu0
      %v3696 = vadd.f32 %v3667, %v3695
      %3697 = vdwg.mxu0
      %3698 = vmatpush.bf16.msra.mxu0 %v3052
      %3699 = vmatpush.bf16.msra.mxu0 %v3045
      %3700 = vmatpush.bf16.msra.mxu0 %v3038
      %3701 = vmatpush.bf16.msra.mxu0 %v3031
      %3702 = vmatpush.bf16.msra.mxu0 %v3024
      %3703 = vmatpush.bf16.msra.mxu0 %v3017
      %3704 = vmatpush.bf16.msra.mxu0 %v3010
      %3705 = vmatpush.bf16.msra.mxu0 %v3003
      %3706 = vmatmul.bf16.gmra.mxu0 %v2582
      %v3707 = vpop.f32.mrf.mxu0
      %v3708 = vadd.f32 %v2505, %v3707
      %v3709 = vpop.f32.mrf.mxu0
      %v3710 = vadd.f32 %v2510, %v3709
      %3711 = vmatmul.bf16.gmra.mxu0 %v2585
      %v3712 = vpop.f32.mrf.mxu0
      %v3713 = vadd.f32 %v2515, %v3712
      %v3714 = vpop.f32.mrf.mxu0
      %v3715 = vadd.f32 %v2520, %v3714
      %3716 = vmatmul.bf16.gmra.mxu0 %v2588
      %v3717 = vpop.f32.mrf.mxu0
      %v3718 = vadd.f32 %v2525, %v3717
      %v3719 = vpop.f32.mrf.mxu0
      %v3720 = vadd.f32 %v2530, %v3719
      %3721 = vmatmul.bf16.gmra.mxu0 %v2591
      %v3722 = vpop.f32.mrf.mxu0
      %v3723 = vadd.f32 %v2535, %v3722
      %v3724 = vpop.f32.mrf.mxu0
      %v3725 = vadd.f32 %v2540, %v3724
      %3726 = vdwg.mxu0
      %3727 = vmatpush.bf16.msra.mxu0 %v3108
      %3728 = vmatpush.bf16.msra.mxu0 %v3101
      %3729 = vmatpush.bf16.msra.mxu0 %v3094
      %3730 = vmatpush.bf16.msra.mxu0 %v3087
      %3731 = vmatpush.bf16.msra.mxu0 %v3080
      %3732 = vmatpush.bf16.msra.mxu0 %v3073
      %3733 = vmatpush.bf16.msra.mxu0 %v3066
      %3734 = vmatpush.bf16.msra.mxu0 %v3059
      %3735 = vmatmul.bf16.gmra.mxu0 %v2583
      %v3736 = vpop.f32.mrf.mxu0
      %v3737 = vadd.f32 %v3708, %v3736
      %v3738 = vpop.f32.mrf.mxu0
      %v3739 = vadd.f32 %v3710, %v3738
      %3740 = vmatmul.bf16.gmra.mxu0 %v2586
      %v3741 = vpop.f32.mrf.mxu0
      %v3742 = vadd.f32 %v3713, %v3741
      %v3743 = vpop.f32.mrf.mxu0
      %v3744 = vadd.f32 %v3715, %v3743
      %3745 = vmatmul.bf16.gmra.mxu0 %v2589
      %v3746 = vpop.f32.mrf.mxu0
      %v3747 = vadd.f32 %v3718, %v3746
      %v3748 = vpop.f32.mrf.mxu0
      %v3749 = vadd.f32 %v3720, %v3748
      %3750 = vmatmul.bf16.gmra.mxu0 %v2592
      %v3751 = vpop.f32.mrf.mxu0
      %v3752 = vadd.f32 %v3723, %v3751
      %v3753 = vpop.f32.mrf.mxu0
      %v3754 = vadd.f32 %v3725, %v3753
      %3755 = vdwg.mxu0
      %3756 = vmatpush.bf16.msra.mxu0 0
      %3757 = vmatpush.bf16.msra.mxu0 0
      %3758 = vmatpush.bf16.msra.mxu0 0
      %3759 = vmatpush.bf16.msra.mxu0 0
      %3760 = vmatpush.bf16.msra.mxu0 0
      %3761 = vmatpush.bf16.msra.mxu0 0
      %3762 = vmatpush.bf16.msra.mxu0 %v3122
      %3763 = vmatpush.bf16.msra.mxu0 %v3115
      %3764 = vmatmul.bf16.gmra.mxu0 %v3252
      %v3765 = vpop.f32.mrf.mxu0
      %v3766 = vadd.f32 %v3737, %v3765
      %v3767 = vpop.f32.mrf.mxu0
      %v3768 = vadd.f32 %v3739, %v3767
      %3769 = vmatmul.bf16.gmra.mxu0 %v3255
      %v3770 = vpop.f32.mrf.mxu0
      %v3771 = vadd.f32 %v3742, %v3770
      %v3772 = vpop.f32.mrf.mxu0
      %v3773 = vadd.f32 %v3744, %v3772
      %3774 = vmatmul.bf16.gmra.mxu0 %v3258
      %v3775 = vpop.f32.mrf.mxu0
      %v3776 = vadd.f32 %v3747, %v3775
      %v3777 = vpop.f32.mrf.mxu0
      %v3778 = vadd.f32 %v3749, %v3777
      %3779 = vmatmul.bf16.gmra.mxu0 %v3261
      %v3780 = vpop.f32.mrf.mxu0
      %v3781 = vadd.f32 %v3752, %v3780
      %v3782 = vpop.f32.mrf.mxu0
      %v3783 = vadd.f32 %v3754, %v3782
      %3784 = vdwg.mxu0
      %3785 = vmatpush.bf16.msra.mxu0 %v3053
      %3786 = vmatpush.bf16.msra.mxu0 %v3046
      %3787 = vmatpush.bf16.msra.mxu0 %v3039
      %3788 = vmatpush.bf16.msra.mxu0 %v3032
      %3789 = vmatpush.bf16.msra.mxu0 %v3025
      %3790 = vmatpush.bf16.msra.mxu0 %v3018
      %3791 = vmatpush.bf16.msra.mxu0 %v3011
      %3792 = vmatpush.bf16.msra.mxu0 %v3004
      %3793 = vmatmul.bf16.gmra.mxu0 %v2582
      %v3794 = vpop.f32.mrf.mxu0
      %v3795 = vadd.f32 %v2505, %v3794
      %v3796 = vpop.f32.mrf.mxu0
      %v3797 = vadd.f32 %v2510, %v3796
      %3798 = vmatmul.bf16.gmra.mxu0 %v2585
      %v3799 = vpop.f32.mrf.mxu0
      %v3800 = vadd.f32 %v2515, %v3799
      %v3801 = vpop.f32.mrf.mxu0
      %v3802 = vadd.f32 %v2520, %v3801
      %3803 = vmatmul.bf16.gmra.mxu0 %v2588
      %v3804 = vpop.f32.mrf.mxu0
      %v3805 = vadd.f32 %v2525, %v3804
      %v3806 = vpop.f32.mrf.mxu0
      %v3807 = vadd.f32 %v2530, %v3806
      %3808 = vmatmul.bf16.gmra.mxu0 %v2591
      %v3809 = vpop.f32.mrf.mxu0
      %v3810 = vadd.f32 %v2535, %v3809
      %v3811 = vpop.f32.mrf.mxu0
      %v3812 = vadd.f32 %v2540, %v3811
      %3813 = vdwg.mxu0
      %3814 = vmatpush.bf16.msra.mxu0 %v3109
      %3815 = vmatpush.bf16.msra.mxu0 %v3102
      %3816 = vmatpush.bf16.msra.mxu0 %v3095
      %3817 = vmatpush.bf16.msra.mxu0 %v3088
      %3818 = vmatpush.bf16.msra.mxu0 %v3081
      %3819 = vmatpush.bf16.msra.mxu0 %v3074
      %3820 = vmatpush.bf16.msra.mxu0 %v3067
      %3821 = vmatpush.bf16.msra.mxu0 %v3060
      %3822 = vmatmul.bf16.gmra.mxu0 %v2583
      %v3823 = vpop.f32.mrf.mxu0
      %v3824 = vadd.f32 %v3795, %v3823
      %v3825 = vpop.f32.mrf.mxu0
      %v3826 = vadd.f32 %v3797, %v3825
      %3827 = vmatmul.bf16.gmra.mxu0 %v2586
      %v3828 = vpop.f32.mrf.mxu0
      %v3829 = vadd.f32 %v3800, %v3828
      %v3830 = vpop.f32.mrf.mxu0
      %v3831 = vadd.f32 %v3802, %v3830
      %3832 = vmatmul.bf16.gmra.mxu0 %v2589
      %v3833 = vpop.f32.mrf.mxu0
      %v3834 = vadd.f32 %v3805, %v3833
      %v3835 = vpop.f32.mrf.mxu0
      %v3836 = vadd.f32 %v3807, %v3835
      %3837 = vmatmul.bf16.gmra.mxu0 %v2592
      %v3838 = vpop.f32.mrf.mxu0
      %v3839 = vadd.f32 %v3810, %v3838
      %v3840 = vpop.f32.mrf.mxu0
      %v3841 = vadd.f32 %v3812, %v3840
      %3842 = vdwg.mxu0
      %3843 = vmatpush.bf16.msra.mxu0 0
      %3844 = vmatpush.bf16.msra.mxu0 0
      %3845 = vmatpush.bf16.msra.mxu0 0
      %3846 = vmatpush.bf16.msra.mxu0 0
      %3847 = vmatpush.bf16.msra.mxu0 0
      %3848 = vmatpush.bf16.msra.mxu0 0
      %3849 = vmatpush.bf16.msra.mxu0 %v3123
      %3850 = vmatpush.bf16.msra.mxu0 %v3116
      %3851 = vmatmul.bf16.gmra.mxu0 %v3252
      %v3852 = vpop.f32.mrf.mxu0
      %v3853 = vadd.f32 %v3824, %v3852
      %v3854 = vpop.f32.mrf.mxu0
      %v3855 = vadd.f32 %v3826, %v3854
      %3856 = vmatmul.bf16.gmra.mxu0 %v3255
      %v3857 = vpop.f32.mrf.mxu0
      %v3858 = vadd.f32 %v3829, %v3857
      %v3859 = vpop.f32.mrf.mxu0
      %v3860 = vadd.f32 %v3831, %v3859
      %3861 = vmatmul.bf16.gmra.mxu0 %v3258
      %v3862 = vpop.f32.mrf.mxu0
      %v3863 = vadd.f32 %v3834, %v3862
      %v3864 = vpop.f32.mrf.mxu0
      %v3865 = vadd.f32 %v3836, %v3864
      %3866 = vmatmul.bf16.gmra.mxu0 %v3261
      %v3867 = vpop.f32.mrf.mxu0
      %v3868 = vadd.f32 %v3839, %v3867
      %v3869 = vpop.f32.mrf.mxu0
      %v3870 = vadd.f32 %v3841, %v3869
      %3871 = vdwg.mxu0
      %v3872 = vmax.f32 %v3331, 0.0
      %v3873 = vmax.f32 %v3418, 0.0
      %v3874 = vmax.f32 %v3505, 0.0
      %v3875 = vmax.f32 %v3592, 0.0
      %v3876 = vmax.f32 %v3679, 0.0
      %v3877 = vmax.f32 %v3766, 0.0
      %v3878 = vmax.f32 %v3853, 0.0
      %v3879 = vmax.f32 %v3333, 0.0
      %v3880 = vmax.f32 %v3420, 0.0
      %v3881 = vmax.f32 %v3507, 0.0
      %v3882 = vmax.f32 %v3594, 0.0
      %v3883 = vmax.f32 %v3681, 0.0
      %v3884 = vmax.f32 %v3768, 0.0
      %v3885 = vmax.f32 %v3855, 0.0
      %v3886 = vmax.f32 %v3336, 0.0
      %v3887 = vmax.f32 %v3423, 0.0
      %v3888 = vmax.f32 %v3510, 0.0
      %v3889 = vmax.f32 %v3597, 0.0
      %v3890 = vmax.f32 %v3684, 0.0
      %v3891 = vmax.f32 %v3771, 0.0
      %v3892 = vmax.f32 %v3858, 0.0
      %v3893 = vmax.f32 %v3338, 0.0
      %v3894 = vmax.f32 %v3425, 0.0
      %v3895 = vmax.f32 %v3512, 0.0
      %v3896 = vmax.f32 %v3599, 0.0
      %v3897 = vmax.f32 %v3686, 0.0
      %v3898 = vmax.f32 %v3773, 0.0
      %v3899 = vmax.f32 %v3860, 0.0
      %v3900 = vmax.f32 %v3341, 0.0
      %v3901 = vmax.f32 %v3428, 0.0
      %v3902 = vmax.f32 %v3515, 0.0
      %v3903 = vmax.f32 %v3602, 0.0
      %v3904 = vmax.f32 %v3689, 0.0
      %v3905 = vmax.f32 %v3776, 0.0
      %v3906 = vmax.f32 %v3863, 0.0
      %v3907 = vmax.f32 %v3343, 0.0
      %v3908 = vmax.f32 %v3430, 0.0
      %v3909 = vmax.f32 %v3517, 0.0
      %v3910 = vmax.f32 %v3604, 0.0
      %v3911 = vmax.f32 %v3691, 0.0
      %v3912 = vmax.f32 %v3778, 0.0
      %v3913 = vmax.f32 %v3865, 0.0
      %v3914 = vmax.f32 %v3346, 0.0
      %v3915 = vmax.f32 %v3433, 0.0
      %v3916 = vmax.f32 %v3520, 0.0
      %v3917 = vmax.f32 %v3607, 0.0
      %v3918 = vmax.f32 %v3694, 0.0
      %v3919 = vmax.f32 %v3781, 0.0
      %v3920 = vmax.f32 %v3868, 0.0
      %v3921 = vmax.f32 %v3348, 0.0
      %v3922 = vmax.f32 %v3435, 0.0
      %v3923 = vmax.f32 %v3522, 0.0
      %v3924 = vmax.f32 %v3609, 0.0
      %v3925 = vmax.f32 %v3696, 0.0
      %v3926 = vmax.f32 %v3783, 0.0
      %v3927 = vmax.f32 %v3870, 0.0
      %v3928 = vpack.c.bf16 %v3873, %v3872
      %v3929 = vpack.c.bf16 %v3875, %v3874
      %v3930 = vpack.c.bf16 %v3877, %v3876
      %v3931 = vpack.c.bf16 %v3878, %v3878
      %v3932 = vpack.c.bf16 %v3880, %v3879
      %v3933 = vpack.c.bf16 %v3882, %v3881
      %v3934 = vpack.c.bf16 %v3884, %v3883
      %v3935 = vpack.c.bf16 %v3885, %v3885
      %v3936 = vpack.c.bf16 %v3887, %v3886
      %v3937 = vpack.c.bf16 %v3889, %v3888
      %v3938 = vpack.c.bf16 %v3891, %v3890
      %v3939 = vpack.c.bf16 %v3892, %v3892
      %v3940 = vpack.c.bf16 %v3894, %v3893
      %v3941 = vpack.c.bf16 %v3896, %v3895
      %v3942 = vpack.c.bf16 %v3898, %v3897
      %v3943 = vpack.c.bf16 %v3899, %v3899
      %v3944 = vpack.c.bf16 %v3901, %v3900
      %v3945 = vpack.c.bf16 %v3903, %v3902
      %v3946 = vpack.c.bf16 %v3905, %v3904
      %v3947 = vpack.c.bf16 %v3906, %v3906
      %v3948 = vpack.c.bf16 %v3908, %v3907
      %v3949 = vpack.c.bf16 %v3910, %v3909
      %v3950 = vpack.c.bf16 %v3912, %v3911
      %v3951 = vpack.c.bf16 %v3913, %v3913
      %v3952 = vpack.c.bf16 %v3915, %v3914
      %v3953 = vpack.c.bf16 %v3917, %v3916
      %v3954 = vpack.c.bf16 %v3919, %v3918
      %v3955 = vpack.c.bf16 %v3920, %v3920
      %v3956 = vpack.c.bf16 %v3922, %v3921
      %v3957 = vpack.c.bf16 %v3924, %v3923
      %v3958 = vpack.c.bf16 %v3926, %v3925
      %v3959 = vpack.c.bf16 %v3927, %v3927
      %3960 = vst [vmem:[#allocation4] sm:$0xff] %v3928
      %3961 = vst [vmem:[#allocation4 + $0x8] sm:$0xff] %v3929
      %3962 = vst [vmem:[#allocation4 + $0x10] sm:$0xff] %v3930
      %3963 = vst [vmem:[#allocation4 + $0x18] sm:$0xf] %v3931
      %3964 = vst [vmem:[#allocation4 + $0x20] sm:$0xff] %v3932
      %3965 = vst [vmem:[#allocation4 + $0x28] sm:$0xff] %v3933
      %3966 = vst [vmem:[#allocation4 + $0x30] sm:$0xff] %v3934
      %3967 = vst [vmem:[#allocation4 + $0x38] sm:$0xf] %v3935
      %3968 = vst [vmem:[#allocation4 + $0x40] sm:$0xff] %v3936
      %3969 = vst [vmem:[#allocation4 + $0x48] sm:$0xff] %v3937
      %3970 = vst [vmem:[#allocation4 + $0x50] sm:$0xff] %v3938
      %3971 = vst [vmem:[#allocation4 + $0x58] sm:$0xf] %v3939
      %3972 = vst [vmem:[#allocation4 + $0x60] sm:$0xff] %v3940
      %3973 = vst [vmem:[#allocation4 + $0x68] sm:$0xff] %v3941
      %3974 = vst [vmem:[#allocation4 + $0x70] sm:$0xff] %v3942
      %3975 = vst [vmem:[#allocation4 + $0x78] sm:$0xf] %v3943
      %3976 = vst [vmem:[#allocation4 + $0x80] sm:$0xff] %v3944
      %3977 = vst [vmem:[#allocation4 + $0x88] sm:$0xff] %v3945
      %3978 = vst [vmem:[#allocation4 + $0x90] sm:$0xff] %v3946
      %3979 = vst [vmem:[#allocation4 + $0x98] sm:$0xf] %v3947
      %3980 = vst [vmem:[#allocation4 + $0xa0] sm:$0xff] %v3948
      %3981 = vst [vmem:[#allocation4 + $0xa8] sm:$0xff] %v3949
      %3982 = vst [vmem:[#allocation4 + $0xb0] sm:$0xff] %v3950
      %3983 = vst [vmem:[#allocation4 + $0xb8] sm:$0xf] %v3951
      %3984 = vst [vmem:[#allocation4 + $0xc0] sm:$0xff] %v3952
      %3985 = vst [vmem:[#allocation4 + $0xc8] sm:$0xff] %v3953
      %3986 = vst [vmem:[#allocation4 + $0xd0] sm:$0xff] %v3954
      %3987 = vst [vmem:[#allocation4 + $0xd8] sm:$0xf] %v3955
      %3988 = vst [vmem:[#allocation4 + $0xe0] sm:$0xff] %v3956
      %3989 = vst [vmem:[#allocation4 + $0xe8] sm:$0xff] %v3957
      %3990 = vst [vmem:[#allocation4 + $0xf0] sm:$0xff] %v3958
      %3991 = vst [vmem:[#allocation4 + $0xf8] sm:$0xf] %v3959
      %v3992 = vld [vmem:[#allocation4] sm:$0xff]
      %v3993 = vld [vmem:[#allocation4 + $0x8] sm:$0xff]
      %v3994 = vld [vmem:[#allocation4 + $0x10] sm:$0xff]
      %v3995 = vld [vmem:[#allocation4 + $0x18] sm:$0xf]
      %v3996 = vld [vmem:[#allocation4 + $0x20] sm:$0xff]
      %v3997 = vld [vmem:[#allocation4 + $0x28] sm:$0xff]
      %v3998 = vld [vmem:[#allocation4 + $0x30] sm:$0xff]
      %v3999 = vld [vmem:[#allocation4 + $0x38] sm:$0xf]
      %v4000 = vld [vmem:[#allocation4 + $0x40] sm:$0xff]
      %v4001 = vld [vmem:[#allocation4 + $0x48] sm:$0xff]
      %v4002 = vld [vmem:[#allocation4 + $0x50] sm:$0xff]
      %v4003 = vld [vmem:[#allocation4 + $0x58] sm:$0xf]
      %v4004 = vld [vmem:[#allocation4 + $0x60] sm:$0xff]
      %v4005 = vld [vmem:[#allocation4 + $0x68] sm:$0xff]
      %v4006 = vld [vmem:[#allocation4 + $0x70] sm:$0xff]
      %v4007 = vld [vmem:[#allocation4 + $0x78] sm:$0xf]
      %v4008 = vld [vmem:[#allocation4 + $0x80] sm:$0xff]
      %v4009 = vld [vmem:[#allocation4 + $0x88] sm:$0xff]
      %v4010 = vld [vmem:[#allocation4 + $0x90] sm:$0xff]
      %v4011 = vld [vmem:[#allocation4 + $0x98] sm:$0xf]
      %v4012 = vld [vmem:[#allocation4 + $0xa0] sm:$0xff]
      %v4013 = vld [vmem:[#allocation4 + $0xa8] sm:$0xff]
      %v4014 = vld [vmem:[#allocation4 + $0xb0] sm:$0xff]
      %v4015 = vld [vmem:[#allocation4 + $0xb8] sm:$0xf]
      %v4016 = vld [vmem:[#allocation4 + $0xc0] sm:$0xff]
      %v4017 = vld [vmem:[#allocation4 + $0xc8] sm:$0xff]
      %v4018 = vld [vmem:[#allocation4 + $0xd0] sm:$0xff]
      %v4019 = vld [vmem:[#allocation4 + $0xd8] sm:$0xf]
      %v4020 = vld [vmem:[#allocation4 + $0xe0] sm:$0xff]
      %v4021 = vld [vmem:[#allocation4 + $0xe8] sm:$0xff]
      %v4022 = vld [vmem:[#allocation4 + $0xf0] sm:$0xff]
      %v4023 = vld [vmem:[#allocation4 + $0xf8] sm:$0xf]
      %4024 = vst [vmem:[#allocation2] sm:$0xff] %v3992
      %4025 = vst [vmem:[#allocation2 + $0x8] sm:$0xff] %v3993
      %4026 = vst [vmem:[#allocation2 + $0x10] sm:$0xff] %v3994
      %4027 = vst [vmem:[#allocation2 + $0x18] sm:$0xf] %v3995
      %4028 = vst [vmem:[#allocation2 + $0x1c] sm:$0xff] %v3996
      %4029 = vst [vmem:[#allocation2 + $0x24] sm:$0xff] %v3997
      %4030 = vst [vmem:[#allocation2 + $0x2c] sm:$0xff] %v3998
      %4031 = vst [vmem:[#allocation2 + $0x34] sm:$0xf] %v3999
      %4032 = vst [vmem:[#allocation2 + $0x38] sm:$0xff] %v4000
      %4033 = vst [vmem:[#allocation2 + $0x40] sm:$0xff] %v4001
      %4034 = vst [vmem:[#allocation2 + $0x48] sm:$0xff] %v4002
      %4035 = vst [vmem:[#allocation2 + $0x50] sm:$0xf] %v4003
      %4036 = vst [vmem:[#allocation2 + $0x54] sm:$0xff] %v4004
      %4037 = vst [vmem:[#allocation2 + $0x5c] sm:$0xff] %v4005
      %4038 = vst [vmem:[#allocation2 + $0x64] sm:$0xff] %v4006
      %4039 = vst [vmem:[#allocation2 + $0x6c] sm:$0xf] %v4007
      %4040 = vst [vmem:[#allocation2 + $0x70] sm:$0xff] %v4008
      %4041 = vst [vmem:[#allocation2 + $0x78] sm:$0xff] %v4009
      %4042 = vst [vmem:[#allocation2 + $0x80] sm:$0xff] %v4010
      %4043 = vst [vmem:[#allocation2 + $0x88] sm:$0xf] %v4011
      %4044 = vst [vmem:[#allocation2 + $0x8c] sm:$0xff] %v4012
      %4045 = vst [vmem:[#allocation2 + $0x94] sm:$0xff] %v4013
      %4046 = vst [vmem:[#allocation2 + $0x9c] sm:$0xff] %v4014
      %4047 = vst [vmem:[#allocation2 + $0xa4] sm:$0xf] %v4015
      %4048 = vst [vmem:[#allocation2 + $0xa8] sm:$0xff] %v4016
      %4049 = vst [vmem:[#allocation2 + $0xb0] sm:$0xff] %v4017
      %4050 = vst [vmem:[#allocation2 + $0xb8] sm:$0xff] %v4018
      %4051 = vst [vmem:[#allocation2 + $0xc0] sm:$0xf] %v4019
      %4052 = vst [vmem:[#allocation2 + $0xc4] sm:$0xff] %v4020
      %4053 = vst [vmem:[#allocation2 + $0xcc] sm:$0xff] %v4021
      %4054 = vst [vmem:[#allocation2 + $0xd4] sm:$0xff] %v4022
      %4055 = vst [vmem:[#allocation2 + $0xdc] sm:$0xf] %v4023
      %v4056 = vld [vmem:[#allocation4] sm:$0xff]
      %v4057 = vld [vmem:[#allocation4 + $0x8] sm:$0xff]
      %v4058 = vld [vmem:[#allocation4 + $0x10] sm:$0xff]
      %v4059 = vld [vmem:[#allocation4 + $0x18] sm:$0xff]
      %v4060 = vld [vmem:[#allocation4 + $0x20] sm:$0xff]
      %v4061 = vld [vmem:[#allocation4 + $0x28] sm:$0xff]
      %v4062 = vld [vmem:[#allocation4 + $0x30] sm:$0xff]
      %v4063 = vld [vmem:[#allocation4 + $0x38] sm:$0xff]
      %v4064 = vld [vmem:[#allocation4 + $0x40] sm:$0xff]
      %v4065 = vld [vmem:[#allocation4 + $0x48] sm:$0xff]
      %v4066 = vld [vmem:[#allocation4 + $0x50] sm:$0xff]
      %v4067 = vld [vmem:[#allocation4 + $0x58] sm:$0xff]
      %v4068 = vld [vmem:[#allocation4 + $0x60] sm:$0xff]
      %v4069 = vld [vmem:[#allocation4 + $0x68] sm:$0xff]
      %v4070 = vld [vmem:[#allocation4 + $0x70] sm:$0xff]
      %v4071 = vld [vmem:[#allocation4 + $0x78] sm:$0xff]
      %v4072 = vld [vmem:[#allocation4 + $0x80] sm:$0xff]
      %v4073 = vld [vmem:[#allocation4 + $0x88] sm:$0xff]
      %v4074 = vld [vmem:[#allocation4 + $0x90] sm:$0xff]
      %v4075 = vld [vmem:[#allocation4 + $0x98] sm:$0xff]
      %v4076 = vld [vmem:[#allocation4 + $0xa0] sm:$0xff]
      %v4077 = vld [vmem:[#allocation4 + $0xa8] sm:$0xff]
      %v4078 = vld [vmem:[#allocation4 + $0xb0] sm:$0xff]
      %v4079 = vld [vmem:[#allocation4 + $0xb8] sm:$0xff]
      %v4080 = vld [vmem:[#allocation4 + $0xc0] sm:$0xff]
      %v4081 = vld [vmem:[#allocation4 + $0xc8] sm:$0xff]
      %v4082 = vld [vmem:[#allocation4 + $0xd0] sm:$0xff]
      %v4083 = vld [vmem:[#allocation4 + $0xd8] sm:$0xff]
      %v4084 = vld [vmem:[#allocation4 + $0xe0] sm:$0xff]
      %v4085 = vld [vmem:[#allocation4 + $0xe8] sm:$0xff]
      %v4086 = vld [vmem:[#allocation4 + $0xf0] sm:$0xff]
      %v4087 = vld [vmem:[#allocation4 + $0xf8] sm:$0xff]
      %4120 = vrot.lane.b32.xlu0 %v4056, 127
      %v4121 = vpop.permute.xlu0 %4120
      %4122 = vrot.lane.b32.xlu0 %v4057, 127
      %v4123 = vpop.permute.xlu0 %4122
      %4124 = vrot.lane.b32.xlu0 %v4058, 127
      %v4125 = vpop.permute.xlu0 %4124
      %4126 = vrot.lane.b32.xlu0 %v4059, 127
      %v4127 = vpop.permute.xlu0 %4126
      %4128 = vrot.lane.b32.xlu0 %v4060, 127
      %v4129 = vpop.permute.xlu0 %4128
      %4130 = vrot.lane.b32.xlu0 %v4061, 127
      %v4131 = vpop.permute.xlu0 %4130
      %4132 = vrot.lane.b32.xlu0 %v4062, 127
      %v4133 = vpop.permute.xlu0 %4132
      %4134 = vrot.lane.b32.xlu0 %v4063, 127
      %v4135 = vpop.permute.xlu0 %4134
      %4136 = vrot.lane.b32.xlu0 %v4064, 127
      %v4137 = vpop.permute.xlu0 %4136
      %4138 = vrot.lane.b32.xlu0 %v4065, 127
      %v4139 = vpop.permute.xlu0 %4138
      %4140 = vrot.lane.b32.xlu0 %v4066, 127
      %v4141 = vpop.permute.xlu0 %4140
      %4142 = vrot.lane.b32.xlu0 %v4067, 127
      %v4143 = vpop.permute.xlu0 %4142
      %4144 = vrot.lane.b32.xlu0 %v4068, 127
      %v4145 = vpop.permute.xlu0 %4144
      %4146 = vrot.lane.b32.xlu0 %v4069, 127
      %v4147 = vpop.permute.xlu0 %4146
      %4148 = vrot.lane.b32.xlu0 %v4070, 127
      %v4149 = vpop.permute.xlu0 %4148
      %4150 = vrot.lane.b32.xlu0 %v4071, 127
      %v4151 = vpop.permute.xlu0 %4150
      %4152 = vrot.lane.b32.xlu0 %v4072, 127
      %v4153 = vpop.permute.xlu0 %4152
      %4154 = vrot.lane.b32.xlu0 %v4073, 127
      %v4155 = vpop.permute.xlu0 %4154
      %4156 = vrot.lane.b32.xlu0 %v4074, 127
      %v4157 = vpop.permute.xlu0 %4156
      %4158 = vrot.lane.b32.xlu0 %v4075, 127
      %v4159 = vpop.permute.xlu0 %4158
      %4160 = vrot.lane.b32.xlu0 %v4076, 127
      %v4161 = vpop.permute.xlu0 %4160
      %4162 = vrot.lane.b32.xlu0 %v4077, 127
      %v4163 = vpop.permute.xlu0 %4162
      %4164 = vrot.lane.b32.xlu0 %v4078, 127
      %v4165 = vpop.permute.xlu0 %4164
      %4166 = vrot.lane.b32.xlu0 %v4079, 127
      %v4167 = vpop.permute.xlu0 %4166
      %4168 = vrot.lane.b32.xlu0 %v4080, 127
      %v4169 = vpop.permute.xlu0 %4168
      %4170 = vrot.lane.b32.xlu0 %v4081, 127
      %v4171 = vpop.permute.xlu0 %4170
      %4172 = vrot.lane.b32.xlu0 %v4082, 127
      %v4173 = vpop.permute.xlu0 %4172
      %4174 = vrot.lane.b32.xlu0 %v4083, 127
      %v4175 = vpop.permute.xlu0 %4174
      %4176 = vrot.lane.b32.xlu0 %v4084, 127
      %v4177 = vpop.permute.xlu0 %4176
      %4178 = vrot.lane.b32.xlu0 %v4085, 127
      %v4179 = vpop.permute.xlu0 %4178
      %4180 = vrot.lane.b32.xlu0 %v4086, 127
      %v4181 = vpop.permute.xlu0 %4180
      %4182 = vrot.lane.b32.xlu0 %v4087, 127
      %v4183 = vpop.permute.xlu0 %4182
      %v4184 = vrot.slane %v4121, 4
      %v4185 = vrot.slane %v4123, 4
      %v4186 = vrot.slane %v4125, 4
      %v4187 = vrot.slane %v4127, 4
      %v4188 = vrot.slane %v4129, 4
      %v4189 = vrot.slane %v4131, 4
      %v4190 = vrot.slane %v4133, 4
      %v4191 = vrot.slane %v4135, 4
      %v4192 = vrot.slane %v4137, 4
      %v4193 = vrot.slane %v4139, 4
      %v4194 = vrot.slane %v4141, 4
      %v4195 = vrot.slane %v4143, 4
      %v4196 = vrot.slane %v4145, 4
      %v4197 = vrot.slane %v4147, 4
      %v4198 = vrot.slane %v4149, 4
      %v4199 = vrot.slane %v4151, 4
      %v4200 = vrot.slane %v4153, 4
      %v4201 = vrot.slane %v4155, 4
      %v4202 = vrot.slane %v4157, 4
      %v4203 = vrot.slane %v4159, 4
      %v4204 = vrot.slane %v4161, 4
      %v4205 = vrot.slane %v4163, 4
      %v4206 = vrot.slane %v4165, 4
      %v4207 = vrot.slane %v4167, 4
      %v4208 = vrot.slane %v4169, 4
      %v4209 = vrot.slane %v4171, 4
      %v4210 = vrot.slane %v4173, 4
      %v4211 = vrot.slane %v4175, 4
      %v4212 = vrot.slane %v4177, 4
      %v4213 = vrot.slane %v4179, 4
      %v4214 = vrot.slane %v4181, 4
      %v4215 = vrot.slane %v4183, 4
      %v4216 = vsel %vm895, %v4184, %v4185
      %v4217 = vsel %vm403, %v4121, %v4216
      %v4218 = vsel %vm895, %v4185, %v4186
      %v4219 = vsel %vm403, %v4123, %v4218
      %v4220 = vsel %vm895, %v4186, %v4187
      %v4221 = vsel %vm403, %v4125, %v4220
      %v4222 = vsel %vm403, %v4127, %v4187
      %v4223 = vsel %vm895, %v4188, %v4189
      %v4224 = vsel %vm403, %v4129, %v4223
      %v4225 = vsel %vm895, %v4189, %v4190
      %v4226 = vsel %vm403, %v4131, %v4225
      %v4227 = vsel %vm895, %v4190, %v4191
      %v4228 = vsel %vm403, %v4133, %v4227
      %v4229 = vsel %vm403, %v4135, %v4191
      %v4230 = vsel %vm895, %v4192, %v4193
      %v4231 = vsel %vm403, %v4137, %v4230
      %v4232 = vsel %vm895, %v4193, %v4194
      %v4233 = vsel %vm403, %v4139, %v4232
      %v4234 = vsel %vm895, %v4194, %v4195
      %v4235 = vsel %vm403, %v4141, %v4234
      %v4236 = vsel %vm403, %v4143, %v4195
      %v4237 = vsel %vm895, %v4196, %v4197
      %v4238 = vsel %vm403, %v4145, %v4237
      %v4239 = vsel %vm895, %v4197, %v4198
      %v4240 = vsel %vm403, %v4147, %v4239
      %v4241 = vsel %vm895, %v4198, %v4199
      %v4242 = vsel %vm403, %v4149, %v4241
      %v4243 = vsel %vm403, %v4151, %v4199
      %v4244 = vsel %vm895, %v4200, %v4201
      %v4245 = vsel %vm403, %v4153, %v4244
      %v4246 = vsel %vm895, %v4201, %v4202
      %v4247 = vsel %vm403, %v4155, %v4246
      %v4248 = vsel %vm895, %v4202, %v4203
      %v4249 = vsel %vm403, %v4157, %v4248
      %v4250 = vsel %vm403, %v4159, %v4203
      %v4251 = vsel %vm895, %v4204, %v4205
      %v4252 = vsel %vm403, %v4161, %v4251
      %v4253 = vsel %vm895, %v4205, %v4206
      %v4254 = vsel %vm403, %v4163, %v4253
      %v4255 = vsel %vm895, %v4206, %v4207
      %v4256 = vsel %vm403, %v4165, %v4255
      %v4257 = vsel %vm403, %v4167, %v4207
      %v4258 = vsel %vm895, %v4208, %v4209
      %v4259 = vsel %vm403, %v4169, %v4258
      %v4260 = vsel %vm895, %v4209, %v4210
      %v4261 = vsel %vm403, %v4171, %v4260
      %v4262 = vsel %vm895, %v4210, %v4211
      %v4263 = vsel %vm403, %v4173, %v4262
      %v4264 = vsel %vm403, %v4175, %v4211
      %v4265 = vsel %vm895, %v4212, %v4213
      %v4266 = vsel %vm403, %v4177, %v4265
      %v4267 = vsel %vm895, %v4213, %v4214
      %v4268 = vsel %vm403, %v4179, %v4267
      %v4269 = vsel %vm895, %v4214, %v4215
      %v4270 = vsel %vm403, %v4181, %v4269
      %v4271 = vsel %vm403, %v4183, %v4215
      %4304 = vst [vmem:[#allocation2 + $0xe0] sm:$0xff] %v4217
      %4305 = vst [vmem:[#allocation2 + $0xe8] sm:$0xff] %v4219
      %4306 = vst [vmem:[#allocation2 + $0xf0] sm:$0xff] %v4221
      %4307 = vst [vmem:[#allocation2 + $0xf8] sm:$0xf] %v4222
      %4308 = vst [vmem:[#allocation2 + $0xfc] sm:$0xff] %v4224
      %4309 = vst [vmem:[#allocation2 + $0x104] sm:$0xff] %v4226
      %4310 = vst [vmem:[#allocation2 + $0x10c] sm:$0xff] %v4228
      %4311 = vst [vmem:[#allocation2 + $0x114] sm:$0xf] %v4229
      %4312 = vst [vmem:[#allocation2 + $0x118] sm:$0xff] %v4231
      %4313 = vst [vmem:[#allocation2 + $0x120] sm:$0xff] %v4233
      %4314 = vst [vmem:[#allocation2 + $0x128] sm:$0xff] %v4235
      %4315 = vst [vmem:[#allocation2 + $0x130] sm:$0xf] %v4236
      %4316 = vst [vmem:[#allocation2 + $0x134] sm:$0xff] %v4238
      %4317 = vst [vmem:[#allocation2 + $0x13c] sm:$0xff] %v4240
      %4318 = vst [vmem:[#allocation2 + $0x144] sm:$0xff] %v4242
      %4319 = vst [vmem:[#allocation2 + $0x14c] sm:$0xf] %v4243
      %4320 = vst [vmem:[#allocation2 + $0x150] sm:$0xff] %v4245
      %4321 = vst [vmem:[#allocation2 + $0x158] sm:$0xff] %v4247
      %4322 = vst [vmem:[#allocation2 + $0x160] sm:$0xff] %v4249
      %4323 = vst [vmem:[#allocation2 + $0x168] sm:$0xf] %v4250
      %4324 = vst [vmem:[#allocation2 + $0x16c] sm:$0xff] %v4252
      %4325 = vst [vmem:[#allocation2 + $0x174] sm:$0xff] %v4254
      %4326 = vst [vmem:[#allocation2 + $0x17c] sm:$0xff] %v4256
      %4327 = vst [vmem:[#allocation2 + $0x184] sm:$0xf] %v4257
      %4328 = vst [vmem:[#allocation2 + $0x188] sm:$0xff] %v4259
      %4329 = vst [vmem:[#allocation2 + $0x190] sm:$0xff] %v4261
      %4330 = vst [vmem:[#allocation2 + $0x198] sm:$0xff] %v4263
      %4331 = vst [vmem:[#allocation2 + $0x1a0] sm:$0xf] %v4264
      %4332 = vst [vmem:[#allocation2 + $0x1a4] sm:$0xff] %v4266
      %4333 = vst [vmem:[#allocation2 + $0x1ac] sm:$0xff] %v4268
      %4334 = vst [vmem:[#allocation2 + $0x1b4] sm:$0xff] %v4270
      %4335 = vst [vmem:[#allocation2 + $0x1bc] sm:$0xf] %v4271
      %v4336 = vld [vmem:[#allocation4] sm:$0xff]
      %v4337 = vld [vmem:[#allocation4 + $0x8] sm:$0xff]
      %v4338 = vld [vmem:[#allocation4 + $0x10] sm:$0xff]
      %v4339 = vld [vmem:[#allocation4 + $0x18] sm:$0xff]
      %v4340 = vld [vmem:[#allocation4 + $0x20] sm:$0xff]
      %v4341 = vld [vmem:[#allocation4 + $0x28] sm:$0xff]
      %v4342 = vld [vmem:[#allocation4 + $0x30] sm:$0xff]
      %v4343 = vld [vmem:[#allocation4 + $0x38] sm:$0xff]
      %v4344 = vld [vmem:[#allocation4 + $0x40] sm:$0xff]
      %v4345 = vld [vmem:[#allocation4 + $0x48] sm:$0xff]
      %v4346 = vld [vmem:[#allocation4 + $0x50] sm:$0xff]
      %v4347 = vld [vmem:[#allocation4 + $0x58] sm:$0xff]
      %v4348 = vld [vmem:[#allocation4 + $0x60] sm:$0xff]
      %v4349 = vld [vmem:[#allocation4 + $0x68] sm:$0xff]
      %v4350 = vld [vmem:[#allocation4 + $0x70] sm:$0xff]
      %v4351 = vld [vmem:[#allocation4 + $0x78] sm:$0xff]
      %v4352 = vld [vmem:[#allocation4 + $0x80] sm:$0xff]
      %v4353 = vld [vmem:[#allocation4 + $0x88] sm:$0xff]
      %v4354 = vld [vmem:[#allocation4 + $0x90] sm:$0xff]
      %v4355 = vld [vmem:[#allocation4 + $0x98] sm:$0xff]
      %v4356 = vld [vmem:[#allocation4 + $0xa0] sm:$0xff]
      %v4357 = vld [vmem:[#allocation4 + $0xa8] sm:$0xff]
      %v4358 = vld [vmem:[#allocation4 + $0xb0] sm:$0xff]
      %v4359 = vld [vmem:[#allocation4 + $0xb8] sm:$0xff]
      %v4360 = vld [vmem:[#allocation4 + $0xc0] sm:$0xff]
      %v4361 = vld [vmem:[#allocation4 + $0xc8] sm:$0xff]
      %v4362 = vld [vmem:[#allocation4 + $0xd0] sm:$0xff]
      %v4363 = vld [vmem:[#allocation4 + $0xd8] sm:$0xff]
      %v4364 = vld [vmem:[#allocation4 + $0xe0] sm:$0xff]
      %v4365 = vld [vmem:[#allocation4 + $0xe8] sm:$0xff]
      %v4366 = vld [vmem:[#allocation4 + $0xf0] sm:$0xff]
      %v4367 = vld [vmem:[#allocation4 + $0xf8] sm:$0xff]
      %4400 = vrot.lane.b32.xlu0 %v4336, 126
      %v4401 = vpop.permute.xlu0 %4400
      %4402 = vrot.lane.b32.xlu0 %v4337, 126
      %v4403 = vpop.permute.xlu0 %4402
      %4404 = vrot.lane.b32.xlu0 %v4338, 126
      %v4405 = vpop.permute.xlu0 %4404
      %4406 = vrot.lane.b32.xlu0 %v4339, 126
      %v4407 = vpop.permute.xlu0 %4406
      %4408 = vrot.lane.b32.xlu0 %v4340, 126
      %v4409 = vpop.permute.xlu0 %4408
      %4410 = vrot.lane.b32.xlu0 %v4341, 126
      %v4411 = vpop.permute.xlu0 %4410
      %4412 = vrot.lane.b32.xlu0 %v4342, 126
      %v4413 = vpop.permute.xlu0 %4412
      %4414 = vrot.lane.b32.xlu0 %v4343, 126
      %v4415 = vpop.permute.xlu0 %4414
      %4416 = vrot.lane.b32.xlu0 %v4344, 126
      %v4417 = vpop.permute.xlu0 %4416
      %4418 = vrot.lane.b32.xlu0 %v4345, 126
      %v4419 = vpop.permute.xlu0 %4418
      %4420 = vrot.lane.b32.xlu0 %v4346, 126
      %v4421 = vpop.permute.xlu0 %4420
      %4422 = vrot.lane.b32.xlu0 %v4347, 126
      %v4423 = vpop.permute.xlu0 %4422
      %4424 = vrot.lane.b32.xlu0 %v4348, 126
      %v4425 = vpop.permute.xlu0 %4424
      %4426 = vrot.lane.b32.xlu0 %v4349, 126
      %v4427 = vpop.permute.xlu0 %4426
      %4428 = vrot.lane.b32.xlu0 %v4350, 126
      %v4429 = vpop.permute.xlu0 %4428
      %4430 = vrot.lane.b32.xlu0 %v4351, 126
      %v4431 = vpop.permute.xlu0 %4430
      %4432 = vrot.lane.b32.xlu0 %v4352, 126
      %v4433 = vpop.permute.xlu0 %4432
      %4434 = vrot.lane.b32.xlu0 %v4353, 126
      %v4435 = vpop.permute.xlu0 %4434
      %4436 = vrot.lane.b32.xlu0 %v4354, 126
      %v4437 = vpop.permute.xlu0 %4436
      %4438 = vrot.lane.b32.xlu0 %v4355, 126
      %v4439 = vpop.permute.xlu0 %4438
      %4440 = vrot.lane.b32.xlu0 %v4356, 126
      %v4441 = vpop.permute.xlu0 %4440
      %4442 = vrot.lane.b32.xlu0 %v4357, 126
      %v4443 = vpop.permute.xlu0 %4442
      %4444 = vrot.lane.b32.xlu0 %v4358, 126
      %v4445 = vpop.permute.xlu0 %4444
      %4446 = vrot.lane.b32.xlu0 %v4359, 126
      %v4447 = vpop.permute.xlu0 %4446
      %4448 = vrot.lane.b32.xlu0 %v4360, 126
      %v4449 = vpop.permute.xlu0 %4448
      %4450 = vrot.lane.b32.xlu0 %v4361, 126
      %v4451 = vpop.permute.xlu0 %4450
      %4452 = vrot.lane.b32.xlu0 %v4362, 126
      %v4453 = vpop.permute.xlu0 %4452
      %4454 = vrot.lane.b32.xlu0 %v4363, 126
      %v4455 = vpop.permute.xlu0 %4454
      %4456 = vrot.lane.b32.xlu0 %v4364, 126
      %v4457 = vpop.permute.xlu0 %4456
      %4458 = vrot.lane.b32.xlu0 %v4365, 126
      %v4459 = vpop.permute.xlu0 %4458
      %4460 = vrot.lane.b32.xlu0 %v4366, 126
      %v4461 = vpop.permute.xlu0 %4460
      %4462 = vrot.lane.b32.xlu0 %v4367, 126
      %v4463 = vpop.permute.xlu0 %4462
      %v4464 = vrot.slane %v4401, 4
      %v4465 = vrot.slane %v4403, 4
      %v4466 = vrot.slane %v4405, 4
      %v4467 = vrot.slane %v4407, 4
      %v4468 = vrot.slane %v4409, 4
      %v4469 = vrot.slane %v4411, 4
      %v4470 = vrot.slane %v4413, 4
      %v4471 = vrot.slane %v4415, 4
      %v4472 = vrot.slane %v4417, 4
      %v4473 = vrot.slane %v4419, 4
      %v4474 = vrot.slane %v4421, 4
      %v4475 = vrot.slane %v4423, 4
      %v4476 = vrot.slane %v4425, 4
      %v4477 = vrot.slane %v4427, 4
      %v4478 = vrot.slane %v4429, 4
      %v4479 = vrot.slane %v4431, 4
      %v4480 = vrot.slane %v4433, 4
      %v4481 = vrot.slane %v4435, 4
      %v4482 = vrot.slane %v4437, 4
      %v4483 = vrot.slane %v4439, 4
      %v4484 = vrot.slane %v4441, 4
      %v4485 = vrot.slane %v4443, 4
      %v4486 = vrot.slane %v4445, 4
      %v4487 = vrot.slane %v4447, 4
      %v4488 = vrot.slane %v4449, 4
      %v4489 = vrot.slane %v4451, 4
      %v4490 = vrot.slane %v4453, 4
      %v4491 = vrot.slane %v4455, 4
      %v4492 = vrot.slane %v4457, 4
      %v4493 = vrot.slane %v4459, 4
      %v4494 = vrot.slane %v4461, 4
      %v4495 = vrot.slane %v4463, 4
      %v4496 = vsel %vm895, %v4464, %v4465
      %v4497 = vsel %vm452, %v4401, %v4496
      %v4498 = vsel %vm895, %v4465, %v4466
      %v4499 = vsel %vm452, %v4403, %v4498
      %v4500 = vsel %vm895, %v4466, %v4467
      %v4501 = vsel %vm452, %v4405, %v4500
      %v4502 = vsel %vm452, %v4407, %v4467
      %v4503 = vsel %vm895, %v4468, %v4469
      %v4504 = vsel %vm452, %v4409, %v4503
      %v4505 = vsel %vm895, %v4469, %v4470
      %v4506 = vsel %vm452, %v4411, %v4505
      %v4507 = vsel %vm895, %v4470, %v4471
      %v4508 = vsel %vm452, %v4413, %v4507
      %v4509 = vsel %vm452, %v4415, %v4471
      %v4510 = vsel %vm895, %v4472, %v4473
      %v4511 = vsel %vm452, %v4417, %v4510
      %v4512 = vsel %vm895, %v4473, %v4474
      %v4513 = vsel %vm452, %v4419, %v4512
      %v4514 = vsel %vm895, %v4474, %v4475
      %v4515 = vsel %vm452, %v4421, %v4514
      %v4516 = vsel %vm452, %v4423, %v4475
      %v4517 = vsel %vm895, %v4476, %v4477
      %v4518 = vsel %vm452, %v4425, %v4517
      %v4519 = vsel %vm895, %v4477, %v4478
      %v4520 = vsel %vm452, %v4427, %v4519
      %v4521 = vsel %vm895, %v4478, %v4479
      %v4522 = vsel %vm452, %v4429, %v4521
      %v4523 = vsel %vm452, %v4431, %v4479
      %v4524 = vsel %vm895, %v4480, %v4481
      %v4525 = vsel %vm452, %v4433, %v4524
      %v4526 = vsel %vm895, %v4481, %v4482
      %v4527 = vsel %vm452, %v4435, %v4526
      %v4528 = vsel %vm895, %v4482, %v4483
      %v4529 = vsel %vm452, %v4437, %v4528
      %v4530 = vsel %vm452, %v4439, %v4483
      %v4531 = vsel %vm895, %v4484, %v4485
      %v4532 = vsel %vm452, %v4441, %v4531
      %v4533 = vsel %vm895, %v4485, %v4486
      %v4534 = vsel %vm452, %v4443, %v4533
      %v4535 = vsel %vm895, %v4486, %v4487
      %v4536 = vsel %vm452, %v4445, %v4535
      %v4537 = vsel %vm452, %v4447, %v4487
      %v4538 = vsel %vm895, %v4488, %v4489
      %v4539 = vsel %vm452, %v4449, %v4538
      %v4540 = vsel %vm895, %v4489, %v4490
      %v4541 = vsel %vm452, %v4451, %v4540
      %v4542 = vsel %vm895, %v4490, %v4491
      %v4543 = vsel %vm452, %v4453, %v4542
      %v4544 = vsel %vm452, %v4455, %v4491
      %v4545 = vsel %vm895, %v4492, %v4493
      %v4546 = vsel %vm452, %v4457, %v4545
      %v4547 = vsel %vm895, %v4493, %v4494
      %v4548 = vsel %vm452, %v4459, %v4547
      %v4549 = vsel %vm895, %v4494, %v4495
      %v4550 = vsel %vm452, %v4461, %v4549
      %v4551 = vsel %vm452, %v4463, %v4495
      %4584 = vst [vmem:[#allocation2 + $0x1c0] sm:$0xff] %v4497
      %4585 = vst [vmem:[#allocation2 + $0x1c8] sm:$0xff] %v4499
      %4586 = vst [vmem:[#allocation2 + $0x1d0] sm:$0xff] %v4501
      %4587 = vst [vmem:[#allocation2 + $0x1d8] sm:$0xf] %v4502
      %4588 = vst [vmem:[#allocation2 + $0x1dc] sm:$0xff] %v4504
      %4589 = vst [vmem:[#allocation2 + $0x1e4] sm:$0xff] %v4506
      %4590 = vst [vmem:[#allocation2 + $0x1ec] sm:$0xff] %v4508
      %4591 = vst [vmem:[#allocation2 + $0x1f4] sm:$0xf] %v4509
      %4592 = vst [vmem:[#allocation2 + $0x1f8] sm:$0xff] %v4511
      %4593 = vst [vmem:[#allocation2 + $0x200] sm:$0xff] %v4513
      %4594 = vst [vmem:[#allocation2 + $0x208] sm:$0xff] %v4515
      %4595 = vst [vmem:[#allocation2 + $0x210] sm:$0xf] %v4516
      %4596 = vst [vmem:[#allocation2 + $0x214] sm:$0xff] %v4518
      %4597 = vst [vmem:[#allocation2 + $0x21c] sm:$0xff] %v4520
      %4598 = vst [vmem:[#allocation2 + $0x224] sm:$0xff] %v4522
      %4599 = vst [vmem:[#allocation2 + $0x22c] sm:$0xf] %v4523
      %4600 = vst [vmem:[#allocation2 + $0x230] sm:$0xff] %v4525
      %4601 = vst [vmem:[#allocation2 + $0x238] sm:$0xff] %v4527
      %4602 = vst [vmem:[#allocation2 + $0x240] sm:$0xff] %v4529
      %4603 = vst [vmem:[#allocation2 + $0x248] sm:$0xf] %v4530
      %4604 = vst [vmem:[#allocation2 + $0x24c] sm:$0xff] %v4532
      %4605 = vst [vmem:[#allocation2 + $0x254] sm:$0xff] %v4534
      %4606 = vst [vmem:[#allocation2 + $0x25c] sm:$0xff] %v4536
      %4607 = vst [vmem:[#allocation2 + $0x264] sm:$0xf] %v4537
      %4608 = vst [vmem:[#allocation2 + $0x268] sm:$0xff] %v4539
      %4609 = vst [vmem:[#allocation2 + $0x270] sm:$0xff] %v4541
      %4610 = vst [vmem:[#allocation2 + $0x278] sm:$0xff] %v4543
      %4611 = vst [vmem:[#allocation2 + $0x280] sm:$0xf] %v4544
      %4612 = vst [vmem:[#allocation2 + $0x284] sm:$0xff] %v4546
      %4613 = vst [vmem:[#allocation2 + $0x28c] sm:$0xff] %v4548
      %4614 = vst [vmem:[#allocation2 + $0x294] sm:$0xff] %v4550
      %4615 = vst [vmem:[#allocation2 + $0x29c] sm:$0xf] %v4551
      %v4616 = vld [vmem:[#allocation4] sm:$0xff]
      %v4617 = vld [vmem:[#allocation4 + $0x8] sm:$0xff]
      %v4618 = vld [vmem:[#allocation4 + $0x10] sm:$0xff]
      %v4619 = vld [vmem:[#allocation4 + $0x18] sm:$0xff]
      %v4620 = vld [vmem:[#allocation4 + $0x20] sm:$0xff]
      %v4621 = vld [vmem:[#allocation4 + $0x28] sm:$0xff]
      %v4622 = vld [vmem:[#allocation4 + $0x30] sm:$0xff]
      %v4623 = vld [vmem:[#allocation4 + $0x38] sm:$0xff]
      %v4624 = vld [vmem:[#allocation4 + $0x40] sm:$0xff]
      %v4625 = vld [vmem:[#allocation4 + $0x48] sm:$0xff]
      %v4626 = vld [vmem:[#allocation4 + $0x50] sm:$0xff]
      %v4627 = vld [vmem:[#allocation4 + $0x58] sm:$0xff]
      %v4628 = vld [vmem:[#allocation4 + $0x60] sm:$0xff]
      %v4629 = vld [vmem:[#allocation4 + $0x68] sm:$0xff]
      %v4630 = vld [vmem:[#allocation4 + $0x70] sm:$0xff]
      %v4631 = vld [vmem:[#allocation4 + $0x78] sm:$0xff]
      %v4632 = vld [vmem:[#allocation4 + $0x80] sm:$0xff]
      %v4633 = vld [vmem:[#allocation4 + $0x88] sm:$0xff]
      %v4634 = vld [vmem:[#allocation4 + $0x90] sm:$0xff]
      %v4635 = vld [vmem:[#allocation4 + $0x98] sm:$0xff]
      %v4636 = vld [vmem:[#allocation4 + $0xa0] sm:$0xff]
      %v4637 = vld [vmem:[#allocation4 + $0xa8] sm:$0xff]
      %v4638 = vld [vmem:[#allocation4 + $0xb0] sm:$0xff]
      %v4639 = vld [vmem:[#allocation4 + $0xb8] sm:$0xff]
      %v4640 = vld [vmem:[#allocation4 + $0xc0] sm:$0xff]
      %v4641 = vld [vmem:[#allocation4 + $0xc8] sm:$0xff]
      %v4642 = vld [vmem:[#allocation4 + $0xd0] sm:$0xff]
      %v4643 = vld [vmem:[#allocation4 + $0xd8] sm:$0xff]
      %v4644 = vld [vmem:[#allocation4 + $0xe0] sm:$0xff]
      %v4645 = vld [vmem:[#allocation4 + $0xe8] sm:$0xff]
      %v4646 = vld [vmem:[#allocation4 + $0xf0] sm:$0xff]
      %v4647 = vld [vmem:[#allocation4 + $0xf8] sm:$0xff]
      %4680 = vrot.lane.b32.xlu0 %v4616, 100
      %v4681 = vpop.permute.xlu0 %4680
      %4682 = vrot.lane.b32.xlu0 %v4617, 100
      %v4683 = vpop.permute.xlu0 %4682
      %4684 = vrot.lane.b32.xlu0 %v4618, 100
      %v4685 = vpop.permute.xlu0 %4684
      %4686 = vrot.lane.b32.xlu0 %v4619, 100
      %v4687 = vpop.permute.xlu0 %4686
      %4688 = vrot.lane.b32.xlu0 %v4620, 100
      %v4689 = vpop.permute.xlu0 %4688
      %4690 = vrot.lane.b32.xlu0 %v4621, 100
      %v4691 = vpop.permute.xlu0 %4690
      %4692 = vrot.lane.b32.xlu0 %v4622, 100
      %v4693 = vpop.permute.xlu0 %4692
      %4694 = vrot.lane.b32.xlu0 %v4623, 100
      %v4695 = vpop.permute.xlu0 %4694
      %4696 = vrot.lane.b32.xlu0 %v4624, 100
      %v4697 = vpop.permute.xlu0 %4696
      %4698 = vrot.lane.b32.xlu0 %v4625, 100
      %v4699 = vpop.permute.xlu0 %4698
      %4700 = vrot.lane.b32.xlu0 %v4626, 100
      %v4701 = vpop.permute.xlu0 %4700
      %4702 = vrot.lane.b32.xlu0 %v4627, 100
      %v4703 = vpop.permute.xlu0 %4702
      %4704 = vrot.lane.b32.xlu0 %v4628, 100
      %v4705 = vpop.permute.xlu0 %4704
      %4706 = vrot.lane.b32.xlu0 %v4629, 100
      %v4707 = vpop.permute.xlu0 %4706
      %4708 = vrot.lane.b32.xlu0 %v4630, 100
      %v4709 = vpop.permute.xlu0 %4708
      %4710 = vrot.lane.b32.xlu0 %v4631, 100
      %v4711 = vpop.permute.xlu0 %4710
      %4712 = vrot.lane.b32.xlu0 %v4632, 100
      %v4713 = vpop.permute.xlu0 %4712
      %4714 = vrot.lane.b32.xlu0 %v4633, 100
      %v4715 = vpop.permute.xlu0 %4714
      %4716 = vrot.lane.b32.xlu0 %v4634, 100
      %v4717 = vpop.permute.xlu0 %4716
      %4718 = vrot.lane.b32.xlu0 %v4635, 100
      %v4719 = vpop.permute.xlu0 %4718
      %4720 = vrot.lane.b32.xlu0 %v4636, 100
      %v4721 = vpop.permute.xlu0 %4720
      %4722 = vrot.lane.b32.xlu0 %v4637, 100
      %v4723 = vpop.permute.xlu0 %4722
      %4724 = vrot.lane.b32.xlu0 %v4638, 100
      %v4725 = vpop.permute.xlu0 %4724
      %4726 = vrot.lane.b32.xlu0 %v4639, 100
      %v4727 = vpop.permute.xlu0 %4726
      %4728 = vrot.lane.b32.xlu0 %v4640, 100
      %v4729 = vpop.permute.xlu0 %4728
      %4730 = vrot.lane.b32.xlu0 %v4641, 100
      %v4731 = vpop.permute.xlu0 %4730
      %4732 = vrot.lane.b32.xlu0 %v4642, 100
      %v4733 = vpop.permute.xlu0 %4732
      %4734 = vrot.lane.b32.xlu0 %v4643, 100
      %v4735 = vpop.permute.xlu0 %4734
      %4736 = vrot.lane.b32.xlu0 %v4644, 100
      %v4737 = vpop.permute.xlu0 %4736
      %4738 = vrot.lane.b32.xlu0 %v4645, 100
      %v4739 = vpop.permute.xlu0 %4738
      %4740 = vrot.lane.b32.xlu0 %v4646, 100
      %v4741 = vpop.permute.xlu0 %4740
      %4742 = vrot.lane.b32.xlu0 %v4647, 100
      %v4743 = vpop.permute.xlu0 %4742
      %v4744 = vrot.slane %v4681, 4
      %v4745 = vrot.slane %v4683, 4
      %v4746 = vrot.slane %v4685, 4
      %v4747 = vrot.slane %v4687, 4
      %v4748 = vrot.slane %v4689, 4
      %v4749 = vrot.slane %v4691, 4
      %v4750 = vrot.slane %v4693, 4
      %v4751 = vrot.slane %v4695, 4
      %v4752 = vrot.slane %v4697, 4
      %v4753 = vrot.slane %v4699, 4
      %v4754 = vrot.slane %v4701, 4
      %v4755 = vrot.slane %v4703, 4
      %v4756 = vrot.slane %v4705, 4
      %v4757 = vrot.slane %v4707, 4
      %v4758 = vrot.slane %v4709, 4
      %v4759 = vrot.slane %v4711, 4
      %v4760 = vrot.slane %v4713, 4
      %v4761 = vrot.slane %v4715, 4
      %v4762 = vrot.slane %v4717, 4
      %v4763 = vrot.slane %v4719, 4
      %v4764 = vrot.slane %v4721, 4
      %v4765 = vrot.slane %v4723, 4
      %v4766 = vrot.slane %v4725, 4
      %v4767 = vrot.slane %v4727, 4
      %v4768 = vrot.slane %v4729, 4
      %v4769 = vrot.slane %v4731, 4
      %v4770 = vrot.slane %v4733, 4
      %v4771 = vrot.slane %v4735, 4
      %v4772 = vrot.slane %v4737, 4
      %v4773 = vrot.slane %v4739, 4
      %v4774 = vrot.slane %v4741, 4
      %v4775 = vrot.slane %v4743, 4
      %v4776 = vsel %vm895, %v4744, %v4745
      %v4777 = vsel %vm509, %v4681, %v4776
      %v4778 = vsel %vm895, %v4745, %v4746
      %v4779 = vsel %vm509, %v4683, %v4778
      %v4780 = vsel %vm895, %v4746, %v4747
      %v4781 = vsel %vm509, %v4685, %v4780
      %v4782 = vsel %vm509, %v4687, %v4747
      %v4783 = vsel %vm895, %v4748, %v4749
      %v4784 = vsel %vm509, %v4689, %v4783
      %v4785 = vsel %vm895, %v4749, %v4750
      %v4786 = vsel %vm509, %v4691, %v4785
      %v4787 = vsel %vm895, %v4750, %v4751
      %v4788 = vsel %vm509, %v4693, %v4787
      %v4789 = vsel %vm509, %v4695, %v4751
      %v4790 = vsel %vm895, %v4752, %v4753
      %v4791 = vsel %vm509, %v4697, %v4790
      %v4792 = vsel %vm895, %v4753, %v4754
      %v4793 = vsel %vm509, %v4699, %v4792
      %v4794 = vsel %vm895, %v4754, %v4755
      %v4795 = vsel %vm509, %v4701, %v4794
      %v4796 = vsel %vm509, %v4703, %v4755
      %v4797 = vsel %vm895, %v4756, %v4757
      %v4798 = vsel %vm509, %v4705, %v4797
      %v4799 = vsel %vm895, %v4757, %v4758
      %v4800 = vsel %vm509, %v4707, %v4799
      %v4801 = vsel %vm895, %v4758, %v4759
      %v4802 = vsel %vm509, %v4709, %v4801
      %v4803 = vsel %vm509, %v4711, %v4759
      %v4804 = vsel %vm895, %v4760, %v4761
      %v4805 = vsel %vm509, %v4713, %v4804
      %v4806 = vsel %vm895, %v4761, %v4762
      %v4807 = vsel %vm509, %v4715, %v4806
      %v4808 = vsel %vm895, %v4762, %v4763
      %v4809 = vsel %vm509, %v4717, %v4808
      %v4810 = vsel %vm509, %v4719, %v4763
      %v4811 = vsel %vm895, %v4764, %v4765
      %v4812 = vsel %vm509, %v4721, %v4811
      %v4813 = vsel %vm895, %v4765, %v4766
      %v4814 = vsel %vm509, %v4723, %v4813
      %v4815 = vsel %vm895, %v4766, %v4767
      %v4816 = vsel %vm509, %v4725, %v4815
      %v4817 = vsel %vm509, %v4727, %v4767
      %v4818 = vsel %vm895, %v4768, %v4769
      %v4819 = vsel %vm509, %v4729, %v4818
      %v4820 = vsel %vm895, %v4769, %v4770
      %v4821 = vsel %vm509, %v4731, %v4820
      %v4822 = vsel %vm895, %v4770, %v4771
      %v4823 = vsel %vm509, %v4733, %v4822
      %v4824 = vsel %vm509, %v4735, %v4771
      %v4825 = vsel %vm895, %v4772, %v4773
      %v4826 = vsel %vm509, %v4737, %v4825
      %v4827 = vsel %vm895, %v4773, %v4774
      %v4828 = vsel %vm509, %v4739, %v4827
      %v4829 = vsel %vm895, %v4774, %v4775
      %v4830 = vsel %vm509, %v4741, %v4829
      %v4831 = vsel %vm509, %v4743, %v4775
      %4864 = vst [vmem:[#allocation2 + $0x2a0] sm:$0xff] %v4777
      %4865 = vst [vmem:[#allocation2 + $0x2a8] sm:$0xff] %v4779
      %4866 = vst [vmem:[#allocation2 + $0x2b0] sm:$0xff] %v4781
      %4867 = vst [vmem:[#allocation2 + $0x2b8] sm:$0xf] %v4782
      %4868 = vst [vmem:[#allocation2 + $0x2bc] sm:$0xff] %v4784
      %4869 = vst [vmem:[#allocation2 + $0x2c4] sm:$0xff] %v4786
      %4870 = vst [vmem:[#allocation2 + $0x2cc] sm:$0xff] %v4788
      %4871 = vst [vmem:[#allocation2 + $0x2d4] sm:$0xf] %v4789
      %4872 = vst [vmem:[#allocation2 + $0x2d8] sm:$0xff] %v4791
      %4873 = vst [vmem:[#allocation2 + $0x2e0] sm:$0xff] %v4793
      %4874 = vst [vmem:[#allocation2 + $0x2e8] sm:$0xff] %v4795
      %4875 = vst [vmem:[#allocation2 + $0x2f0] sm:$0xf] %v4796
      %4876 = vst [vmem:[#allocation2 + $0x2f4] sm:$0xff] %v4798
      %4877 = vst [vmem:[#allocation2 + $0x2fc] sm:$0xff] %v4800
      %4878 = vst [vmem:[#allocation2 + $0x304] sm:$0xff] %v4802
      %4879 = vst [vmem:[#allocation2 + $0x30c] sm:$0xf] %v4803
      %4880 = vst [vmem:[#allocation2 + $0x310] sm:$0xff] %v4805
      %4881 = vst [vmem:[#allocation2 + $0x318] sm:$0xff] %v4807
      %4882 = vst [vmem:[#allocation2 + $0x320] sm:$0xff] %v4809
      %4883 = vst [vmem:[#allocation2 + $0x328] sm:$0xf] %v4810
      %4884 = vst [vmem:[#allocation2 + $0x32c] sm:$0xff] %v4812
      %4885 = vst [vmem:[#allocation2 + $0x334] sm:$0xff] %v4814
      %4886 = vst [vmem:[#allocation2 + $0x33c] sm:$0xff] %v4816
      %4887 = vst [vmem:[#allocation2 + $0x344] sm:$0xf] %v4817
      %4888 = vst [vmem:[#allocation2 + $0x348] sm:$0xff] %v4819
      %4889 = vst [vmem:[#allocation2 + $0x350] sm:$0xff] %v4821
      %4890 = vst [vmem:[#allocation2 + $0x358] sm:$0xff] %v4823
      %4891 = vst [vmem:[#allocation2 + $0x360] sm:$0xf] %v4824
      %4892 = vst [vmem:[#allocation2 + $0x364] sm:$0xff] %v4826
      %4893 = vst [vmem:[#allocation2 + $0x36c] sm:$0xff] %v4828
      %4894 = vst [vmem:[#allocation2 + $0x374] sm:$0xff] %v4830
      %4895 = vst [vmem:[#allocation2 + $0x37c] sm:$0xf] %v4831
      %v4896 = vld [vmem:[#allocation4] sm:$0xff]
      %v4897 = vld [vmem:[#allocation4 + $0x8] sm:$0xff]
      %v4898 = vld [vmem:[#allocation4 + $0x10] sm:$0xff]
      %v4899 = vld [vmem:[#allocation4 + $0x18] sm:$0xff]
      %v4900 = vld [vmem:[#allocation4 + $0x20] sm:$0xff]
      %v4901 = vld [vmem:[#allocation4 + $0x28] sm:$0xff]
      %v4902 = vld [vmem:[#allocation4 + $0x30] sm:$0xff]
      %v4903 = vld [vmem:[#allocation4 + $0x38] sm:$0xff]
      %v4904 = vld [vmem:[#allocation4 + $0x40] sm:$0xff]
      %v4905 = vld [vmem:[#allocation4 + $0x48] sm:$0xff]
      %v4906 = vld [vmem:[#allocation4 + $0x50] sm:$0xff]
      %v4907 = vld [vmem:[#allocation4 + $0x58] sm:$0xff]
      %v4908 = vld [vmem:[#allocation4 + $0x60] sm:$0xff]
      %v4909 = vld [vmem:[#allocation4 + $0x68] sm:$0xff]
      %v4910 = vld [vmem:[#allocation4 + $0x70] sm:$0xff]
      %v4911 = vld [vmem:[#allocation4 + $0x78] sm:$0xff]
      %v4912 = vld [vmem:[#allocation4 + $0x80] sm:$0xff]
      %v4913 = vld [vmem:[#allocation4 + $0x88] sm:$0xff]
      %v4914 = vld [vmem:[#allocation4 + $0x90] sm:$0xff]
      %v4915 = vld [vmem:[#allocation4 + $0x98] sm:$0xff]
      %v4916 = vld [vmem:[#allocation4 + $0xa0] sm:$0xff]
      %v4917 = vld [vmem:[#allocation4 + $0xa8] sm:$0xff]
      %v4918 = vld [vmem:[#allocation4 + $0xb0] sm:$0xff]
      %v4919 = vld [vmem:[#allocation4 + $0xb8] sm:$0xff]
      %v4920 = vld [vmem:[#allocation4 + $0xc0] sm:$0xff]
      %v4921 = vld [vmem:[#allocation4 + $0xc8] sm:$0xff]
      %v4922 = vld [vmem:[#allocation4 + $0xd0] sm:$0xff]
      %v4923 = vld [vmem:[#allocation4 + $0xd8] sm:$0xff]
      %v4924 = vld [vmem:[#allocation4 + $0xe0] sm:$0xff]
      %v4925 = vld [vmem:[#allocation4 + $0xe8] sm:$0xff]
      %v4926 = vld [vmem:[#allocation4 + $0xf0] sm:$0xff]
      %v4927 = vld [vmem:[#allocation4 + $0xf8] sm:$0xff]
      %4960 = vrot.lane.b32.xlu0 %v4896, 99
      %v4961 = vpop.permute.xlu0 %4960
      %4962 = vrot.lane.b32.xlu0 %v4897, 99
      %v4963 = vpop.permute.xlu0 %4962
      %4964 = vrot.lane.b32.xlu0 %v4898, 99
      %v4965 = vpop.permute.xlu0 %4964
      %4966 = vrot.lane.b32.xlu0 %v4899, 99
      %v4967 = vpop.permute.xlu0 %4966
      %4968 = vrot.lane.b32.xlu0 %v4900, 99
      %v4969 = vpop.permute.xlu0 %4968
      %4970 = vrot.lane.b32.xlu0 %v4901, 99
      %v4971 = vpop.permute.xlu0 %4970
      %4972 = vrot.lane.b32.xlu0 %v4902, 99
      %v4973 = vpop.permute.xlu0 %4972
      %4974 = vrot.lane.b32.xlu0 %v4903, 99
      %v4975 = vpop.permute.xlu0 %4974
      %4976 = vrot.lane.b32.xlu0 %v4904, 99
      %v4977 = vpop.permute.xlu0 %4976
      %4978 = vrot.lane.b32.xlu0 %v4905, 99
      %v4979 = vpop.permute.xlu0 %4978
      %4980 = vrot.lane.b32.xlu0 %v4906, 99
      %v4981 = vpop.permute.xlu0 %4980
      %4982 = vrot.lane.b32.xlu0 %v4907, 99
      %v4983 = vpop.permute.xlu0 %4982
      %4984 = vrot.lane.b32.xlu0 %v4908, 99
      %v4985 = vpop.permute.xlu0 %4984
      %4986 = vrot.lane.b32.xlu0 %v4909, 99
      %v4987 = vpop.permute.xlu0 %4986
      %4988 = vrot.lane.b32.xlu0 %v4910, 99
      %v4989 = vpop.permute.xlu0 %4988
      %4990 = vrot.lane.b32.xlu0 %v4911, 99
      %v4991 = vpop.permute.xlu0 %4990
      %4992 = vrot.lane.b32.xlu0 %v4912, 99
      %v4993 = vpop.permute.xlu0 %4992
      %4994 = vrot.lane.b32.xlu0 %v4913, 99
      %v4995 = vpop.permute.xlu0 %4994
      %4996 = vrot.lane.b32.xlu0 %v4914, 99
      %v4997 = vpop.permute.xlu0 %4996
      %4998 = vrot.lane.b32.xlu0 %v4915, 99
      %v4999 = vpop.permute.xlu0 %4998
      %5000 = vrot.lane.b32.xlu0 %v4916, 99
      %v5001 = vpop.permute.xlu0 %5000
      %5002 = vrot.lane.b32.xlu0 %v4917, 99
      %v5003 = vpop.permute.xlu0 %5002
      %5004 = vrot.lane.b32.xlu0 %v4918, 99
      %v5005 = vpop.permute.xlu0 %5004
      %5006 = vrot.lane.b32.xlu0 %v4919, 99
      %v5007 = vpop.permute.xlu0 %5006
      %5008 = vrot.lane.b32.xlu0 %v4920, 99
      %v5009 = vpop.permute.xlu0 %5008
      %5010 = vrot.lane.b32.xlu0 %v4921, 99
      %v5011 = vpop.permute.xlu0 %5010
      %5012 = vrot.lane.b32.xlu0 %v4922, 99
      %v5013 = vpop.permute.xlu0 %5012
      %5014 = vrot.lane.b32.xlu0 %v4923, 99
      %v5015 = vpop.permute.xlu0 %5014
      %5016 = vrot.lane.b32.xlu0 %v4924, 99
      %v5017 = vpop.permute.xlu0 %5016
      %5018 = vrot.lane.b32.xlu0 %v4925, 99
      %v5019 = vpop.permute.xlu0 %5018
      %5020 = vrot.lane.b32.xlu0 %v4926, 99
      %v5021 = vpop.permute.xlu0 %5020
      %5022 = vrot.lane.b32.xlu0 %v4927, 99
      %v5023 = vpop.permute.xlu0 %5022
      %v5024 = vrot.slane %v4961, 4
      %v5025 = vrot.slane %v4963, 4
      %v5026 = vrot.slane %v4965, 4
      %v5027 = vrot.slane %v4967, 4
      %v5028 = vrot.slane %v4969, 4
      %v5029 = vrot.slane %v4971, 4
      %v5030 = vrot.slane %v4973, 4
      %v5031 = vrot.slane %v4975, 4
      %v5032 = vrot.slane %v4977, 4
      %v5033 = vrot.slane %v4979, 4
      %v5034 = vrot.slane %v4981, 4
      %v5035 = vrot.slane %v4983, 4
      %v5036 = vrot.slane %v4985, 4
      %v5037 = vrot.slane %v4987, 4
      %v5038 = vrot.slane %v4989, 4
      %v5039 = vrot.slane %v4991, 4
      %v5040 = vrot.slane %v4993, 4
      %v5041 = vrot.slane %v4995, 4
      %v5042 = vrot.slane %v4997, 4
      %v5043 = vrot.slane %v4999, 4
      %v5044 = vrot.slane %v5001, 4
      %v5045 = vrot.slane %v5003, 4
      %v5046 = vrot.slane %v5005, 4
      %v5047 = vrot.slane %v5007, 4
      %v5048 = vrot.slane %v5009, 4
      %v5049 = vrot.slane %v5011, 4
      %v5050 = vrot.slane %v5013, 4
      %v5051 = vrot.slane %v5015, 4
      %v5052 = vrot.slane %v5017, 4
      %v5053 = vrot.slane %v5019, 4
      %v5054 = vrot.slane %v5021, 4
      %v5055 = vrot.slane %v5023, 4
      %v5056 = vsel %vm895, %v5024, %v5025
      %v5057 = vsel %vm558, %v4961, %v5056
      %v5058 = vsel %vm895, %v5025, %v5026
      %v5059 = vsel %vm558, %v4963, %v5058
      %v5060 = vsel %vm895, %v5026, %v5027
      %v5061 = vsel %vm558, %v4965, %v5060
      %v5062 = vsel %vm558, %v4967, %v5027
      %v5063 = vsel %vm895, %v5028, %v5029
      %v5064 = vsel %vm558, %v4969, %v5063
      %v5065 = vsel %vm895, %v5029, %v5030
      %v5066 = vsel %vm558, %v4971, %v5065
      %v5067 = vsel %vm895, %v5030, %v5031
      %v5068 = vsel %vm558, %v4973, %v5067
      %v5069 = vsel %vm558, %v4975, %v5031
      %v5070 = vsel %vm895, %v5032, %v5033
      %v5071 = vsel %vm558, %v4977, %v5070
      %v5072 = vsel %vm895, %v5033, %v5034
      %v5073 = vsel %vm558, %v4979, %v5072
      %v5074 = vsel %vm895, %v5034, %v5035
      %v5075 = vsel %vm558, %v4981, %v5074
      %v5076 = vsel %vm558, %v4983, %v5035
      %v5077 = vsel %vm895, %v5036, %v5037
      %v5078 = vsel %vm558, %v4985, %v5077
      %v5079 = vsel %vm895, %v5037, %v5038
      %v5080 = vsel %vm558, %v4987, %v5079
      %v5081 = vsel %vm895, %v5038, %v5039
      %v5082 = vsel %vm558, %v4989, %v5081
      %v5083 = vsel %vm558, %v4991, %v5039
      %v5084 = vsel %vm895, %v5040, %v5041
      %v5085 = vsel %vm558, %v4993, %v5084
      %v5086 = vsel %vm895, %v5041, %v5042
      %v5087 = vsel %vm558, %v4995, %v5086
      %v5088 = vsel %vm895, %v5042, %v5043
      %v5089 = vsel %vm558, %v4997, %v5088
      %v5090 = vsel %vm558, %v4999, %v5043
      %v5091 = vsel %vm895, %v5044, %v5045
      %v5092 = vsel %vm558, %v5001, %v5091
      %v5093 = vsel %vm895, %v5045, %v5046
      %v5094 = vsel %vm558, %v5003, %v5093
      %v5095 = vsel %vm895, %v5046, %v5047
      %v5096 = vsel %vm558, %v5005, %v5095
      %v5097 = vsel %vm558, %v5007, %v5047
      %v5098 = vsel %vm895, %v5048, %v5049
      %v5099 = vsel %vm558, %v5009, %v5098
      %v5100 = vsel %vm895, %v5049, %v5050
      %v5101 = vsel %vm558, %v5011, %v5100
      %v5102 = vsel %vm895, %v5050, %v5051
      %v5103 = vsel %vm558, %v5013, %v5102
      %v5104 = vsel %vm558, %v5015, %v5051
      %v5105 = vsel %vm895, %v5052, %v5053
      %v5106 = vsel %vm558, %v5017, %v5105
      %v5107 = vsel %vm895, %v5053, %v5054
      %v5108 = vsel %vm558, %v5019, %v5107
      %v5109 = vsel %vm895, %v5054, %v5055
      %v5110 = vsel %vm558, %v5021, %v5109
      %v5111 = vsel %vm558, %v5023, %v5055
      %5144 = vst [vmem:[#allocation2 + $0x380] sm:$0xff] %v5057
      %5145 = vst [vmem:[#allocation2 + $0x388] sm:$0xff] %v5059
      %5146 = vst [vmem:[#allocation2 + $0x390] sm:$0xff] %v5061
      %5147 = vst [vmem:[#allocation2 + $0x398] sm:$0xf] %v5062
      %5148 = vst [vmem:[#allocation2 + $0x39c] sm:$0xff] %v5064
      %5149 = vst [vmem:[#allocation2 + $0x3a4] sm:$0xff] %v5066
      %5150 = vst [vmem:[#allocation2 + $0x3ac] sm:$0xff] %v5068
      %5151 = vst [vmem:[#allocation2 + $0x3b4] sm:$0xf] %v5069
      %5152 = vst [vmem:[#allocation2 + $0x3b8] sm:$0xff] %v5071
      %5153 = vst [vmem:[#allocation2 + $0x3c0] sm:$0xff] %v5073
      %5154 = vst [vmem:[#allocation2 + $0x3c8] sm:$0xff] %v5075
      %5155 = vst [vmem:[#allocation2 + $0x3d0] sm:$0xf] %v5076
      %5156 = vst [vmem:[#allocation2 + $0x3d4] sm:$0xff] %v5078
      %5157 = vst [vmem:[#allocation2 + $0x3dc] sm:$0xff] %v5080
      %5158 = vst [vmem:[#allocation2 + $0x3e4] sm:$0xff] %v5082
      %5159 = vst [vmem:[#allocation2 + $0x3ec] sm:$0xf] %v5083
      %5160 = vst [vmem:[#allocation2 + $0x3f0] sm:$0xff] %v5085
      %5161 = vst [vmem:[#allocation2 + $0x3f8] sm:$0xff] %v5087
      %5162 = vst [vmem:[#allocation2 + $0x400] sm:$0xff] %v5089
      %5163 = vst [vmem:[#allocation2 + $0x408] sm:$0xf] %v5090
      %5164 = vst [vmem:[#allocation2 + $0x40c] sm:$0xff] %v5092
      %5165 = vst [vmem:[#allocation2 + $0x414] sm:$0xff] %v5094
      %5166 = vst [vmem:[#allocation2 + $0x41c] sm:$0xff] %v5096
      %5167 = vst [vmem:[#allocation2 + $0x424] sm:$0xf] %v5097
      %5168 = vst [vmem:[#allocation2 + $0x428] sm:$0xff] %v5099
      %5169 = vst [vmem:[#allocation2 + $0x430] sm:$0xff] %v5101
      %5170 = vst [vmem:[#allocation2 + $0x438] sm:$0xff] %v5103
      %5171 = vst [vmem:[#allocation2 + $0x440] sm:$0xf] %v5104
      %5172 = vst [vmem:[#allocation2 + $0x444] sm:$0xff] %v5106
      %5173 = vst [vmem:[#allocation2 + $0x44c] sm:$0xff] %v5108
      %5174 = vst [vmem:[#allocation2 + $0x454] sm:$0xff] %v5110
      %5175 = vst [vmem:[#allocation2 + $0x45c] sm:$0xf] %v5111
      %v5176 = vld [vmem:[#allocation4] sm:$0xff]
      %v5177 = vld [vmem:[#allocation4 + $0x8] sm:$0xff]
      %v5178 = vld [vmem:[#allocation4 + $0x10] sm:$0xff]
      %v5179 = vld [vmem:[#allocation4 + $0x18] sm:$0xff]
      %v5180 = vld [vmem:[#allocation4 + $0x20] sm:$0xff]
      %v5181 = vld [vmem:[#allocation4 + $0x28] sm:$0xff]
      %v5182 = vld [vmem:[#allocation4 + $0x30] sm:$0xff]
      %v5183 = vld [vmem:[#allocation4 + $0x38] sm:$0xff]
      %v5184 = vld [vmem:[#allocation4 + $0x40] sm:$0xff]
      %v5185 = vld [vmem:[#allocation4 + $0x48] sm:$0xff]
      %v5186 = vld [vmem:[#allocation4 + $0x50] sm:$0xff]
      %v5187 = vld [vmem:[#allocation4 + $0x58] sm:$0xff]
      %v5188 = vld [vmem:[#allocation4 + $0x60] sm:$0xff]
      %v5189 = vld [vmem:[#allocation4 + $0x68] sm:$0xff]
      %v5190 = vld [vmem:[#allocation4 + $0x70] sm:$0xff]
      %v5191 = vld [vmem:[#allocation4 + $0x78] sm:$0xff]
      %v5192 = vld [vmem:[#allocation4 + $0x80] sm:$0xff]
      %v5193 = vld [vmem:[#allocation4 + $0x88] sm:$0xff]
      %v5194 = vld [vmem:[#allocation4 + $0x90] sm:$0xff]
      %v5195 = vld [vmem:[#allocation4 + $0x98] sm:$0xff]
      %v5196 = vld [vmem:[#allocation4 + $0xa0] sm:$0xff]
      %v5197 = vld [vmem:[#allocation4 + $0xa8] sm:$0xff]
      %v5198 = vld [vmem:[#allocation4 + $0xb0] sm:$0xff]
      %v5199 = vld [vmem:[#allocation4 + $0xb8] sm:$0xff]
      %v5200 = vld [vmem:[#allocation4 + $0xc0] sm:$0xff]
      %v5201 = vld [vmem:[#allocation4 + $0xc8] sm:$0xff]
      %v5202 = vld [vmem:[#allocation4 + $0xd0] sm:$0xff]
      %v5203 = vld [vmem:[#allocation4 + $0xd8] sm:$0xff]
      %v5204 = vld [vmem:[#allocation4 + $0xe0] sm:$0xff]
      %v5205 = vld [vmem:[#allocation4 + $0xe8] sm:$0xff]
      %v5206 = vld [vmem:[#allocation4 + $0xf0] sm:$0xff]
      %v5207 = vld [vmem:[#allocation4 + $0xf8] sm:$0xff]
      %5240 = vrot.lane.b32.xlu0 %v5176, 98
      %v5241 = vpop.permute.xlu0 %5240
      %5242 = vrot.lane.b32.xlu0 %v5177, 98
      %v5243 = vpop.permute.xlu0 %5242
      %5244 = vrot.lane.b32.xlu0 %v5178, 98
      %v5245 = vpop.permute.xlu0 %5244
      %5246 = vrot.lane.b32.xlu0 %v5179, 98
      %v5247 = vpop.permute.xlu0 %5246
      %5248 = vrot.lane.b32.xlu0 %v5180, 98
      %v5249 = vpop.permute.xlu0 %5248
      %5250 = vrot.lane.b32.xlu0 %v5181, 98
      %v5251 = vpop.permute.xlu0 %5250
      %5252 = vrot.lane.b32.xlu0 %v5182, 98
      %v5253 = vpop.permute.xlu0 %5252
      %5254 = vrot.lane.b32.xlu0 %v5183, 98
      %v5255 = vpop.permute.xlu0 %5254
      %5256 = vrot.lane.b32.xlu0 %v5184, 98
      %v5257 = vpop.permute.xlu0 %5256
      %5258 = vrot.lane.b32.xlu0 %v5185, 98
      %v5259 = vpop.permute.xlu0 %5258
      %5260 = vrot.lane.b32.xlu0 %v5186, 98
      %v5261 = vpop.permute.xlu0 %5260
      %5262 = vrot.lane.b32.xlu0 %v5187, 98
      %v5263 = vpop.permute.xlu0 %5262
      %5264 = vrot.lane.b32.xlu0 %v5188, 98
      %v5265 = vpop.permute.xlu0 %5264
      %5266 = vrot.lane.b32.xlu0 %v5189, 98
      %v5267 = vpop.permute.xlu0 %5266
      %5268 = vrot.lane.b32.xlu0 %v5190, 98
      %v5269 = vpop.permute.xlu0 %5268
      %5270 = vrot.lane.b32.xlu0 %v5191, 98
      %v5271 = vpop.permute.xlu0 %5270
      %5272 = vrot.lane.b32.xlu0 %v5192, 98
      %v5273 = vpop.permute.xlu0 %5272
      %5274 = vrot.lane.b32.xlu0 %v5193, 98
      %v5275 = vpop.permute.xlu0 %5274
      %5276 = vrot.lane.b32.xlu0 %v5194, 98
      %v5277 = vpop.permute.xlu0 %5276
      %5278 = vrot.lane.b32.xlu0 %v5195, 98
      %v5279 = vpop.permute.xlu0 %5278
      %5280 = vrot.lane.b32.xlu0 %v5196, 98
      %v5281 = vpop.permute.xlu0 %5280
      %5282 = vrot.lane.b32.xlu0 %v5197, 98
      %v5283 = vpop.permute.xlu0 %5282
      %5284 = vrot.lane.b32.xlu0 %v5198, 98
      %v5285 = vpop.permute.xlu0 %5284
      %5286 = vrot.lane.b32.xlu0 %v5199, 98
      %v5287 = vpop.permute.xlu0 %5286
      %5288 = vrot.lane.b32.xlu0 %v5200, 98
      %v5289 = vpop.permute.xlu0 %5288
      %5290 = vrot.lane.b32.xlu0 %v5201, 98
      %v5291 = vpop.permute.xlu0 %5290
      %5292 = vrot.lane.b32.xlu0 %v5202, 98
      %v5293 = vpop.permute.xlu0 %5292
      %5294 = vrot.lane.b32.xlu0 %v5203, 98
      %v5295 = vpop.permute.xlu0 %5294
      %5296 = vrot.lane.b32.xlu0 %v5204, 98
      %v5297 = vpop.permute.xlu0 %5296
      %5298 = vrot.lane.b32.xlu0 %v5205, 98
      %v5299 = vpop.permute.xlu0 %5298
      %5300 = vrot.lane.b32.xlu0 %v5206, 98
      %v5301 = vpop.permute.xlu0 %5300
      %5302 = vrot.lane.b32.xlu0 %v5207, 98
      %v5303 = vpop.permute.xlu0 %5302
      %v5304 = vrot.slane %v5241, 4
      %v5305 = vrot.slane %v5243, 4
      %v5306 = vrot.slane %v5245, 4
      %v5307 = vrot.slane %v5247, 4
      %v5308 = vrot.slane %v5249, 4
      %v5309 = vrot.slane %v5251, 4
      %v5310 = vrot.slane %v5253, 4
      %v5311 = vrot.slane %v5255, 4
      %v5312 = vrot.slane %v5257, 4
      %v5313 = vrot.slane %v5259, 4
      %v5314 = vrot.slane %v5261, 4
      %v5315 = vrot.slane %v5263, 4
      %v5316 = vrot.slane %v5265, 4
      %v5317 = vrot.slane %v5267, 4
      %v5318 = vrot.slane %v5269, 4
      %v5319 = vrot.slane %v5271, 4
      %v5320 = vrot.slane %v5273, 4
      %v5321 = vrot.slane %v5275, 4
      %v5322 = vrot.slane %v5277, 4
      %v5323 = vrot.slane %v5279, 4
      %v5324 = vrot.slane %v5281, 4
      %v5325 = vrot.slane %v5283, 4
      %v5326 = vrot.slane %v5285, 4
      %v5327 = vrot.slane %v5287, 4
      %v5328 = vrot.slane %v5289, 4
      %v5329 = vrot.slane %v5291, 4
      %v5330 = vrot.slane %v5293, 4
      %v5331 = vrot.slane %v5295, 4
      %v5332 = vrot.slane %v5297, 4
      %v5333 = vrot.slane %v5299, 4
      %v5334 = vrot.slane %v5301, 4
      %v5335 = vrot.slane %v5303, 4
      %v5336 = vsel %vm895, %v5304, %v5305
      %v5337 = vsel %vm615, %v5241, %v5336
      %v5338 = vsel %vm895, %v5305, %v5306
      %v5339 = vsel %vm615, %v5243, %v5338
      %v5340 = vsel %vm895, %v5306, %v5307
      %v5341 = vsel %vm615, %v5245, %v5340
      %v5342 = vsel %vm615, %v5247, %v5307
      %v5343 = vsel %vm895, %v5308, %v5309
      %v5344 = vsel %vm615, %v5249, %v5343
      %v5345 = vsel %vm895, %v5309, %v5310
      %v5346 = vsel %vm615, %v5251, %v5345
      %v5347 = vsel %vm895, %v5310, %v5311
      %v5348 = vsel %vm615, %v5253, %v5347
      %v5349 = vsel %vm615, %v5255, %v5311
      %v5350 = vsel %vm895, %v5312, %v5313
      %v5351 = vsel %vm615, %v5257, %v5350
      %v5352 = vsel %vm895, %v5313, %v5314
      %v5353 = vsel %vm615, %v5259, %v5352
      %v5354 = vsel %vm895, %v5314, %v5315
      %v5355 = vsel %vm615, %v5261, %v5354
      %v5356 = vsel %vm615, %v5263, %v5315
      %v5357 = vsel %vm895, %v5316, %v5317
      %v5358 = vsel %vm615, %v5265, %v5357
      %v5359 = vsel %vm895, %v5317, %v5318
      %v5360 = vsel %vm615, %v5267, %v5359
      %v5361 = vsel %vm895, %v5318, %v5319
      %v5362 = vsel %vm615, %v5269, %v5361
      %v5363 = vsel %vm615, %v5271, %v5319
      %v5364 = vsel %vm895, %v5320, %v5321
      %v5365 = vsel %vm615, %v5273, %v5364
      %v5366 = vsel %vm895, %v5321, %v5322
      %v5367 = vsel %vm615, %v5275, %v5366
      %v5368 = vsel %vm895, %v5322, %v5323
      %v5369 = vsel %vm615, %v5277, %v5368
      %v5370 = vsel %vm615, %v5279, %v5323
      %v5371 = vsel %vm895, %v5324, %v5325
      %v5372 = vsel %vm615, %v5281, %v5371
      %v5373 = vsel %vm895, %v5325, %v5326
      %v5374 = vsel %vm615, %v5283, %v5373
      %v5375 = vsel %vm895, %v5326, %v5327
      %v5376 = vsel %vm615, %v5285, %v5375
      %v5377 = vsel %vm615, %v5287, %v5327
      %v5378 = vsel %vm895, %v5328, %v5329
      %v5379 = vsel %vm615, %v5289, %v5378
      %v5380 = vsel %vm895, %v5329, %v5330
      %v5381 = vsel %vm615, %v5291, %v5380
      %v5382 = vsel %vm895, %v5330, %v5331
      %v5383 = vsel %vm615, %v5293, %v5382
      %v5384 = vsel %vm615, %v5295, %v5331
      %v5385 = vsel %vm895, %v5332, %v5333
      %v5386 = vsel %vm615, %v5297, %v5385
      %v5387 = vsel %vm895, %v5333, %v5334
      %v5388 = vsel %vm615, %v5299, %v5387
      %v5389 = vsel %vm895, %v5334, %v5335
      %v5390 = vsel %vm615, %v5301, %v5389
      %v5391 = vsel %vm615, %v5303, %v5335
      %5424 = vst [vmem:[#allocation2 + $0x460] sm:$0xff] %v5337
      %5425 = vst [vmem:[#allocation2 + $0x468] sm:$0xff] %v5339
      %5426 = vst [vmem:[#allocation2 + $0x470] sm:$0xff] %v5341
      %5427 = vst [vmem:[#allocation2 + $0x478] sm:$0xf] %v5342
      %5428 = vst [vmem:[#allocation2 + $0x47c] sm:$0xff] %v5344
      %5429 = vst [vmem:[#allocation2 + $0x484] sm:$0xff] %v5346
      %5430 = vst [vmem:[#allocation2 + $0x48c] sm:$0xff] %v5348
      %5431 = vst [vmem:[#allocation2 + $0x494] sm:$0xf] %v5349
      %5432 = vst [vmem:[#allocation2 + $0x498] sm:$0xff] %v5351
      %5433 = vst [vmem:[#allocation2 + $0x4a0] sm:$0xff] %v5353
      %5434 = vst [vmem:[#allocation2 + $0x4a8] sm:$0xff] %v5355
      %5435 = vst [vmem:[#allocation2 + $0x4b0] sm:$0xf] %v5356
      %5436 = vst [vmem:[#allocation2 + $0x4b4] sm:$0xff] %v5358
      %5437 = vst [vmem:[#allocation2 + $0x4bc] sm:$0xff] %v5360
      %5438 = vst [vmem:[#allocation2 + $0x4c4] sm:$0xff] %v5362
      %5439 = vst [vmem:[#allocation2 + $0x4cc] sm:$0xf] %v5363
      %5440 = vst [vmem:[#allocation2 + $0x4d0] sm:$0xff] %v5365
      %5441 = vst [vmem:[#allocation2 + $0x4d8] sm:$0xff] %v5367
      %5442 = vst [vmem:[#allocation2 + $0x4e0] sm:$0xff] %v5369
      %5443 = vst [vmem:[#allocation2 + $0x4e8] sm:$0xf] %v5370
      %5444 = vst [vmem:[#allocation2 + $0x4ec] sm:$0xff] %v5372
      %5445 = vst [vmem:[#allocation2 + $0x4f4] sm:$0xff] %v5374
      %5446 = vst [vmem:[#allocation2 + $0x4fc] sm:$0xff] %v5376
      %5447 = vst [vmem:[#allocation2 + $0x504] sm:$0xf] %v5377
      %5448 = vst [vmem:[#allocation2 + $0x508] sm:$0xff] %v5379
      %5449 = vst [vmem:[#allocation2 + $0x510] sm:$0xff] %v5381
      %5450 = vst [vmem:[#allocation2 + $0x518] sm:$0xff] %v5383
      %5451 = vst [vmem:[#allocation2 + $0x520] sm:$0xf] %v5384
      %5452 = vst [vmem:[#allocation2 + $0x524] sm:$0xff] %v5386
      %5453 = vst [vmem:[#allocation2 + $0x52c] sm:$0xff] %v5388
      %5454 = vst [vmem:[#allocation2 + $0x534] sm:$0xff] %v5390
      %5455 = vst [vmem:[#allocation2 + $0x53c] sm:$0xf] %v5391
      %v5456 = vld [vmem:[#allocation4] sm:$0xff]
      %v5457 = vld [vmem:[#allocation4 + $0x8] sm:$0xff]
      %v5458 = vld [vmem:[#allocation4 + $0x10] sm:$0xff]
      %v5459 = vld [vmem:[#allocation4 + $0x18] sm:$0xff]
      %v5460 = vld [vmem:[#allocation4 + $0x20] sm:$0xff]
      %v5461 = vld [vmem:[#allocation4 + $0x28] sm:$0xff]
      %v5462 = vld [vmem:[#allocation4 + $0x30] sm:$0xff]
      %v5463 = vld [vmem:[#allocation4 + $0x38] sm:$0xff]
      %v5464 = vld [vmem:[#allocation4 + $0x40] sm:$0xff]
      %v5465 = vld [vmem:[#allocation4 + $0x48] sm:$0xff]
      %v5466 = vld [vmem:[#allocation4 + $0x50] sm:$0xff]
      %v5467 = vld [vmem:[#allocation4 + $0x58] sm:$0xff]
      %v5468 = vld [vmem:[#allocation4 + $0x60] sm:$0xff]
      %v5469 = vld [vmem:[#allocation4 + $0x68] sm:$0xff]
      %v5470 = vld [vmem:[#allocation4 + $0x70] sm:$0xff]
      %v5471 = vld [vmem:[#allocation4 + $0x78] sm:$0xff]
      %v5472 = vld [vmem:[#allocation4 + $0x80] sm:$0xff]
      %v5473 = vld [vmem:[#allocation4 + $0x88] sm:$0xff]
      %v5474 = vld [vmem:[#allocation4 + $0x90] sm:$0xff]
      %v5475 = vld [vmem:[#allocation4 + $0x98] sm:$0xff]
      %v5476 = vld [vmem:[#allocation4 + $0xa0] sm:$0xff]
      %v5477 = vld [vmem:[#allocation4 + $0xa8] sm:$0xff]
      %v5478 = vld [vmem:[#allocation4 + $0xb0] sm:$0xff]
      %v5479 = vld [vmem:[#allocation4 + $0xb8] sm:$0xff]
      %v5480 = vld [vmem:[#allocation4 + $0xc0] sm:$0xff]
      %v5481 = vld [vmem:[#allocation4 + $0xc8] sm:$0xff]
      %v5482 = vld [vmem:[#allocation4 + $0xd0] sm:$0xff]
      %v5483 = vld [vmem:[#allocation4 + $0xd8] sm:$0xff]
      %v5484 = vld [vmem:[#allocation4 + $0xe0] sm:$0xff]
      %v5485 = vld [vmem:[#allocation4 + $0xe8] sm:$0xff]
      %v5486 = vld [vmem:[#allocation4 + $0xf0] sm:$0xff]
      %v5487 = vld [vmem:[#allocation4 + $0xf8] sm:$0xff]
      %5520 = vrot.lane.b32.xlu0 %v5456, 72
      %v5521 = vpop.permute.xlu0 %5520
      %5522 = vrot.lane.b32.xlu0 %v5457, 72
      %v5523 = vpop.permute.xlu0 %5522
      %5524 = vrot.lane.b32.xlu0 %v5458, 72
      %v5525 = vpop.permute.xlu0 %5524
      %5526 = vrot.lane.b32.xlu0 %v5459, 72
      %v5527 = vpop.permute.xlu0 %5526
      %5528 = vrot.lane.b32.xlu0 %v5460, 72
      %v5529 = vpop.permute.xlu0 %5528
      %5530 = vrot.lane.b32.xlu0 %v5461, 72
      %v5531 = vpop.permute.xlu0 %5530
      %5532 = vrot.lane.b32.xlu0 %v5462, 72
      %v5533 = vpop.permute.xlu0 %5532
      %5534 = vrot.lane.b32.xlu0 %v5463, 72
      %v5535 = vpop.permute.xlu0 %5534
      %5536 = vrot.lane.b32.xlu0 %v5464, 72
      %v5537 = vpop.permute.xlu0 %5536
      %5538 = vrot.lane.b32.xlu0 %v5465, 72
      %v5539 = vpop.permute.xlu0 %5538
      %5540 = vrot.lane.b32.xlu0 %v5466, 72
      %v5541 = vpop.permute.xlu0 %5540
      %5542 = vrot.lane.b32.xlu0 %v5467, 72
      %v5543 = vpop.permute.xlu0 %5542
      %5544 = vrot.lane.b32.xlu0 %v5468, 72
      %v5545 = vpop.permute.xlu0 %5544
      %5546 = vrot.lane.b32.xlu0 %v5469, 72
      %v5547 = vpop.permute.xlu0 %5546
      %5548 = vrot.lane.b32.xlu0 %v5470, 72
      %v5549 = vpop.permute.xlu0 %5548
      %5550 = vrot.lane.b32.xlu0 %v5471, 72
      %v5551 = vpop.permute.xlu0 %5550
      %5552 = vrot.lane.b32.xlu0 %v5472, 72
      %v5553 = vpop.permute.xlu0 %5552
      %5554 = vrot.lane.b32.xlu0 %v5473, 72
      %v5555 = vpop.permute.xlu0 %5554
      %5556 = vrot.lane.b32.xlu0 %v5474, 72
      %v5557 = vpop.permute.xlu0 %5556
      %5558 = vrot.lane.b32.xlu0 %v5475, 72
      %v5559 = vpop.permute.xlu0 %5558
      %5560 = vrot.lane.b32.xlu0 %v5476, 72
      %v5561 = vpop.permute.xlu0 %5560
      %5562 = vrot.lane.b32.xlu0 %v5477, 72
      %v5563 = vpop.permute.xlu0 %5562
      %5564 = vrot.lane.b32.xlu0 %v5478, 72
      %v5565 = vpop.permute.xlu0 %5564
      %5566 = vrot.lane.b32.xlu0 %v5479, 72
      %v5567 = vpop.permute.xlu0 %5566
      %5568 = vrot.lane.b32.xlu0 %v5480, 72
      %v5569 = vpop.permute.xlu0 %5568
      %5570 = vrot.lane.b32.xlu0 %v5481, 72
      %v5571 = vpop.permute.xlu0 %5570
      %5572 = vrot.lane.b32.xlu0 %v5482, 72
      %v5573 = vpop.permute.xlu0 %5572
      %5574 = vrot.lane.b32.xlu0 %v5483, 72
      %v5575 = vpop.permute.xlu0 %5574
      %5576 = vrot.lane.b32.xlu0 %v5484, 72
      %v5577 = vpop.permute.xlu0 %5576
      %5578 = vrot.lane.b32.xlu0 %v5485, 72
      %v5579 = vpop.permute.xlu0 %5578
      %5580 = vrot.lane.b32.xlu0 %v5486, 72
      %v5581 = vpop.permute.xlu0 %5580
      %5582 = vrot.lane.b32.xlu0 %v5487, 72
      %v5583 = vpop.permute.xlu0 %5582
      %v5584 = vrot.slane %v5521, 4
      %v5585 = vrot.slane %v5523, 4
      %v5586 = vrot.slane %v5525, 4
      %v5587 = vrot.slane %v5527, 4
      %v5588 = vrot.slane %v5529, 4
      %v5589 = vrot.slane %v5531, 4
      %v5590 = vrot.slane %v5533, 4
      %v5591 = vrot.slane %v5535, 4
      %v5592 = vrot.slane %v5537, 4
      %v5593 = vrot.slane %v5539, 4
      %v5594 = vrot.slane %v5541, 4
      %v5595 = vrot.slane %v5543, 4
      %v5596 = vrot.slane %v5545, 4
      %v5597 = vrot.slane %v5547, 4
      %v5598 = vrot.slane %v5549, 4
      %v5599 = vrot.slane %v5551, 4
      %v5600 = vrot.slane %v5553, 4
      %v5601 = vrot.slane %v5555, 4
      %v5602 = vrot.slane %v5557, 4
      %v5603 = vrot.slane %v5559, 4
      %v5604 = vrot.slane %v5561, 4
      %v5605 = vrot.slane %v5563, 4
      %v5606 = vrot.slane %v5565, 4
      %v5607 = vrot.slane %v5567, 4
      %v5608 = vrot.slane %v5569, 4
      %v5609 = vrot.slane %v5571, 4
      %v5610 = vrot.slane %v5573, 4
      %v5611 = vrot.slane %v5575, 4
      %v5612 = vrot.slane %v5577, 4
      %v5613 = vrot.slane %v5579, 4
      %v5614 = vrot.slane %v5581, 4
      %v5615 = vrot.slane %v5583, 4
      %v5616 = vsel %vm895, %v5584, %v5585
      %v5617 = vsel %vm664, %v5521, %v5616
      %v5618 = vsel %vm895, %v5585, %v5586
      %v5619 = vsel %vm664, %v5523, %v5618
      %v5620 = vsel %vm895, %v5586, %v5587
      %v5621 = vsel %vm664, %v5525, %v5620
      %v5622 = vsel %vm664, %v5527, %v5587
      %v5623 = vsel %vm895, %v5588, %v5589
      %v5624 = vsel %vm664, %v5529, %v5623
      %v5625 = vsel %vm895, %v5589, %v5590
      %v5626 = vsel %vm664, %v5531, %v5625
      %v5627 = vsel %vm895, %v5590, %v5591
      %v5628 = vsel %vm664, %v5533, %v5627
      %v5629 = vsel %vm664, %v5535, %v5591
      %v5630 = vsel %vm895, %v5592, %v5593
      %v5631 = vsel %vm664, %v5537, %v5630
      %v5632 = vsel %vm895, %v5593, %v5594
      %v5633 = vsel %vm664, %v5539, %v5632
      %v5634 = vsel %vm895, %v5594, %v5595
      %v5635 = vsel %vm664, %v5541, %v5634
      %v5636 = vsel %vm664, %v5543, %v5595
      %v5637 = vsel %vm895, %v5596, %v5597
      %v5638 = vsel %vm664, %v5545, %v5637
      %v5639 = vsel %vm895, %v5597, %v5598
      %v5640 = vsel %vm664, %v5547, %v5639
      %v5641 = vsel %vm895, %v5598, %v5599
      %v5642 = vsel %vm664, %v5549, %v5641
      %v5643 = vsel %vm664, %v5551, %v5599
      %v5644 = vsel %vm895, %v5600, %v5601
      %v5645 = vsel %vm664, %v5553, %v5644
      %v5646 = vsel %vm895, %v5601, %v5602
      %v5647 = vsel %vm664, %v5555, %v5646
      %v5648 = vsel %vm895, %v5602, %v5603
      %v5649 = vsel %vm664, %v5557, %v5648
      %v5650 = vsel %vm664, %v5559, %v5603
      %v5651 = vsel %vm895, %v5604, %v5605
      %v5652 = vsel %vm664, %v5561, %v5651
      %v5653 = vsel %vm895, %v5605, %v5606
      %v5654 = vsel %vm664, %v5563, %v5653
      %v5655 = vsel %vm895, %v5606, %v5607
      %v5656 = vsel %vm664, %v5565, %v5655
      %v5657 = vsel %vm664, %v5567, %v5607
      %v5658 = vsel %vm895, %v5608, %v5609
      %v5659 = vsel %vm664, %v5569, %v5658
      %v5660 = vsel %vm895, %v5609, %v5610
      %v5661 = vsel %vm664, %v5571, %v5660
      %v5662 = vsel %vm895, %v5610, %v5611
      %v5663 = vsel %vm664, %v5573, %v5662
      %v5664 = vsel %vm664, %v5575, %v5611
      %v5665 = vsel %vm895, %v5612, %v5613
      %v5666 = vsel %vm664, %v5577, %v5665
      %v5667 = vsel %vm895, %v5613, %v5614
      %v5668 = vsel %vm664, %v5579, %v5667
      %v5669 = vsel %vm895, %v5614, %v5615
      %v5670 = vsel %vm664, %v5581, %v5669
      %v5671 = vsel %vm664, %v5583, %v5615
      %5704 = vst [vmem:[#allocation2 + $0x540] sm:$0xff] %v5617
      %5705 = vst [vmem:[#allocation2 + $0x548] sm:$0xff] %v5619
      %5706 = vst [vmem:[#allocation2 + $0x550] sm:$0xff] %v5621
      %5707 = vst [vmem:[#allocation2 + $0x558] sm:$0xf] %v5622
      %5708 = vst [vmem:[#allocation2 + $0x55c] sm:$0xff] %v5624
      %5709 = vst [vmem:[#allocation2 + $0x564] sm:$0xff] %v5626
      %5710 = vst [vmem:[#allocation2 + $0x56c] sm:$0xff] %v5628
      %5711 = vst [vmem:[#allocation2 + $0x574] sm:$0xf] %v5629
      %5712 = vst [vmem:[#allocation2 + $0x578] sm:$0xff] %v5631
      %5713 = vst [vmem:[#allocation2 + $0x580] sm:$0xff] %v5633
      %5714 = vst [vmem:[#allocation2 + $0x588] sm:$0xff] %v5635
      %5715 = vst [vmem:[#allocation2 + $0x590] sm:$0xf] %v5636
      %5716 = vst [vmem:[#allocation2 + $0x594] sm:$0xff] %v5638
      %5717 = vst [vmem:[#allocation2 + $0x59c] sm:$0xff] %v5640
      %5718 = vst [vmem:[#allocation2 + $0x5a4] sm:$0xff] %v5642
      %5719 = vst [vmem:[#allocation2 + $0x5ac] sm:$0xf] %v5643
      %5720 = vst [vmem:[#allocation2 + $0x5b0] sm:$0xff] %v5645
      %5721 = vst [vmem:[#allocation2 + $0x5b8] sm:$0xff] %v5647
      %5722 = vst [vmem:[#allocation2 + $0x5c0] sm:$0xff] %v5649
      %5723 = vst [vmem:[#allocation2 + $0x5c8] sm:$0xf] %v5650
      %5724 = vst [vmem:[#allocation2 + $0x5cc] sm:$0xff] %v5652
      %5725 = vst [vmem:[#allocation2 + $0x5d4] sm:$0xff] %v5654
      %5726 = vst [vmem:[#allocation2 + $0x5dc] sm:$0xff] %v5656
      %5727 = vst [vmem:[#allocation2 + $0x5e4] sm:$0xf] %v5657
      %5728 = vst [vmem:[#allocation2 + $0x5e8] sm:$0xff] %v5659
      %5729 = vst [vmem:[#allocation2 + $0x5f0] sm:$0xff] %v5661
      %5730 = vst [vmem:[#allocation2 + $0x5f8] sm:$0xff] %v5663
      %5731 = vst [vmem:[#allocation2 + $0x600] sm:$0xf] %v5664
      %5732 = vst [vmem:[#allocation2 + $0x604] sm:$0xff] %v5666
      %5733 = vst [vmem:[#allocation2 + $0x60c] sm:$0xff] %v5668
      %5734 = vst [vmem:[#allocation2 + $0x614] sm:$0xff] %v5670
      %5735 = vst [vmem:[#allocation2 + $0x61c] sm:$0xf] %v5671
      %v5736 = vld [vmem:[#allocation4] sm:$0xff]
      %v5737 = vld [vmem:[#allocation4 + $0x8] sm:$0xff]
      %v5738 = vld [vmem:[#allocation4 + $0x10] sm:$0xff]
      %v5739 = vld [vmem:[#allocation4 + $0x18] sm:$0xff]
      %v5740 = vld [vmem:[#allocation4 + $0x20] sm:$0xff]
      %v5741 = vld [vmem:[#allocation4 + $0x28] sm:$0xff]
      %v5742 = vld [vmem:[#allocation4 + $0x30] sm:$0xff]
      %v5743 = vld [vmem:[#allocation4 + $0x38] sm:$0xff]
      %v5744 = vld [vmem:[#allocation4 + $0x40] sm:$0xff]
      %v5745 = vld [vmem:[#allocation4 + $0x48] sm:$0xff]
      %v5746 = vld [vmem:[#allocation4 + $0x50] sm:$0xff]
      %v5747 = vld [vmem:[#allocation4 + $0x58] sm:$0xff]
      %v5748 = vld [vmem:[#allocation4 + $0x60] sm:$0xff]
      %v5749 = vld [vmem:[#allocation4 + $0x68] sm:$0xff]
      %v5750 = vld [vmem:[#allocation4 + $0x70] sm:$0xff]
      %v5751 = vld [vmem:[#allocation4 + $0x78] sm:$0xff]
      %v5752 = vld [vmem:[#allocation4 + $0x80] sm:$0xff]
      %v5753 = vld [vmem:[#allocation4 + $0x88] sm:$0xff]
      %v5754 = vld [vmem:[#allocation4 + $0x90] sm:$0xff]
      %v5755 = vld [vmem:[#allocation4 + $0x98] sm:$0xff]
      %v5756 = vld [vmem:[#allocation4 + $0xa0] sm:$0xff]
      %v5757 = vld [vmem:[#allocation4 + $0xa8] sm:$0xff]
      %v5758 = vld [vmem:[#allocation4 + $0xb0] sm:$0xff]
      %v5759 = vld [vmem:[#allocation4 + $0xb8] sm:$0xff]
      %v5760 = vld [vmem:[#allocation4 + $0xc0] sm:$0xff]
      %v5761 = vld [vmem:[#allocation4 + $0xc8] sm:$0xff]
      %v5762 = vld [vmem:[#allocation4 + $0xd0] sm:$0xff]
      %v5763 = vld [vmem:[#allocation4 + $0xd8] sm:$0xff]
      %v5764 = vld [vmem:[#allocation4 + $0xe0] sm:$0xff]
      %v5765 = vld [vmem:[#allocation4 + $0xe8] sm:$0xff]
      %v5766 = vld [vmem:[#allocation4 + $0xf0] sm:$0xff]
      %v5767 = vld [vmem:[#allocation4 + $0xf8] sm:$0xff]
      %5800 = vrot.lane.b32.xlu0 %v5736, 71
      %v5801 = vpop.permute.xlu0 %5800
      %5802 = vrot.lane.b32.xlu0 %v5737, 71
      %v5803 = vpop.permute.xlu0 %5802
      %5804 = vrot.lane.b32.xlu0 %v5738, 71
      %v5805 = vpop.permute.xlu0 %5804
      %5806 = vrot.lane.b32.xlu0 %v5739, 71
      %v5807 = vpop.permute.xlu0 %5806
      %5808 = vrot.lane.b32.xlu0 %v5740, 71
      %v5809 = vpop.permute.xlu0 %5808
      %5810 = vrot.lane.b32.xlu0 %v5741, 71
      %v5811 = vpop.permute.xlu0 %5810
      %5812 = vrot.lane.b32.xlu0 %v5742, 71
      %v5813 = vpop.permute.xlu0 %5812
      %5814 = vrot.lane.b32.xlu0 %v5743, 71
      %v5815 = vpop.permute.xlu0 %5814
      %5816 = vrot.lane.b32.xlu0 %v5744, 71
      %v5817 = vpop.permute.xlu0 %5816
      %5818 = vrot.lane.b32.xlu0 %v5745, 71
      %v5819 = vpop.permute.xlu0 %5818
      %5820 = vrot.lane.b32.xlu0 %v5746, 71
      %v5821 = vpop.permute.xlu0 %5820
      %5822 = vrot.lane.b32.xlu0 %v5747, 71
      %v5823 = vpop.permute.xlu0 %5822
      %5824 = vrot.lane.b32.xlu0 %v5748, 71
      %v5825 = vpop.permute.xlu0 %5824
      %5826 = vrot.lane.b32.xlu0 %v5749, 71
      %v5827 = vpop.permute.xlu0 %5826
      %5828 = vrot.lane.b32.xlu0 %v5750, 71
      %v5829 = vpop.permute.xlu0 %5828
      %5830 = vrot.lane.b32.xlu0 %v5751, 71
      %v5831 = vpop.permute.xlu0 %5830
      %5832 = vrot.lane.b32.xlu0 %v5752, 71
      %v5833 = vpop.permute.xlu0 %5832
      %5834 = vrot.lane.b32.xlu0 %v5753, 71
      %v5835 = vpop.permute.xlu0 %5834
      %5836 = vrot.lane.b32.xlu0 %v5754, 71
      %v5837 = vpop.permute.xlu0 %5836
      %5838 = vrot.lane.b32.xlu0 %v5755, 71
      %v5839 = vpop.permute.xlu0 %5838
      %5840 = vrot.lane.b32.xlu0 %v5756, 71
      %v5841 = vpop.permute.xlu0 %5840
      %5842 = vrot.lane.b32.xlu0 %v5757, 71
      %v5843 = vpop.permute.xlu0 %5842
      %5844 = vrot.lane.b32.xlu0 %v5758, 71
      %v5845 = vpop.permute.xlu0 %5844
      %5846 = vrot.lane.b32.xlu0 %v5759, 71
      %v5847 = vpop.permute.xlu0 %5846
      %5848 = vrot.lane.b32.xlu0 %v5760, 71
      %v5849 = vpop.permute.xlu0 %5848
      %5850 = vrot.lane.b32.xlu0 %v5761, 71
      %v5851 = vpop.permute.xlu0 %5850
      %5852 = vrot.lane.b32.xlu0 %v5762, 71
      %v5853 = vpop.permute.xlu0 %5852
      %5854 = vrot.lane.b32.xlu0 %v5763, 71
      %v5855 = vpop.permute.xlu0 %5854
      %5856 = vrot.lane.b32.xlu0 %v5764, 71
      %v5857 = vpop.permute.xlu0 %5856
      %5858 = vrot.lane.b32.xlu0 %v5765, 71
      %v5859 = vpop.permute.xlu0 %5858
      %5860 = vrot.lane.b32.xlu0 %v5766, 71
      %v5861 = vpop.permute.xlu0 %5860
      %5862 = vrot.lane.b32.xlu0 %v5767, 71
      %v5863 = vpop.permute.xlu0 %5862
      %v5864 = vrot.slane %v5801, 4
      %v5865 = vrot.slane %v5803, 4
      %v5866 = vrot.slane %v5805, 4
      %v5867 = vrot.slane %v5807, 4
      %v5868 = vrot.slane %v5809, 4
      %v5869 = vrot.slane %v5811, 4
      %v5870 = vrot.slane %v5813, 4
      %v5871 = vrot.slane %v5815, 4
      %v5872 = vrot.slane %v5817, 4
      %v5873 = vrot.slane %v5819, 4
      %v5874 = vrot.slane %v5821, 4
      %v5875 = vrot.slane %v5823, 4
      %v5876 = vrot.slane %v5825, 4
      %v5877 = vrot.slane %v5827, 4
      %v5878 = vrot.slane %v5829, 4
      %v5879 = vrot.slane %v5831, 4
      %v5880 = vrot.slane %v5833, 4
      %v5881 = vrot.slane %v5835, 4
      %v5882 = vrot.slane %v5837, 4
      %v5883 = vrot.slane %v5839, 4
      %v5884 = vrot.slane %v5841, 4
      %v5885 = vrot.slane %v5843, 4
      %v5886 = vrot.slane %v5845, 4
      %v5887 = vrot.slane %v5847, 4
      %v5888 = vrot.slane %v5849, 4
      %v5889 = vrot.slane %v5851, 4
      %v5890 = vrot.slane %v5853, 4
      %v5891 = vrot.slane %v5855, 4
      %v5892 = vrot.slane %v5857, 4
      %v5893 = vrot.slane %v5859, 4
      %v5894 = vrot.slane %v5861, 4
      %v5895 = vrot.slane %v5863, 4
      %v5896 = vsel %vm895, %v5864, %v5865
      %v5897 = vsel %vm721, %v5801, %v5896
      %v5898 = vsel %vm895, %v5865, %v5866
      %v5899 = vsel %vm721, %v5803, %v5898
      %v5900 = vsel %vm895, %v5866, %v5867
      %v5901 = vsel %vm721, %v5805, %v5900
      %v5902 = vsel %vm721, %v5807, %v5867
      %v5903 = vsel %vm895, %v5868, %v5869
      %v5904 = vsel %vm721, %v5809, %v5903
      %v5905 = vsel %vm895, %v5869, %v5870
      %v5906 = vsel %vm721, %v5811, %v5905
      %v5907 = vsel %vm895, %v5870, %v5871
      %v5908 = vsel %vm721, %v5813, %v5907
      %v5909 = vsel %vm721, %v5815, %v5871
      %v5910 = vsel %vm895, %v5872, %v5873
      %v5911 = vsel %vm721, %v5817, %v5910
      %v5912 = vsel %vm895, %v5873, %v5874
      %v5913 = vsel %vm721, %v5819, %v5912
      %v5914 = vsel %vm895, %v5874, %v5875
      %v5915 = vsel %vm721, %v5821, %v5914
      %v5916 = vsel %vm721, %v5823, %v5875
      %v5917 = vsel %vm895, %v5876, %v5877
      %v5918 = vsel %vm721, %v5825, %v5917
      %v5919 = vsel %vm895, %v5877, %v5878
      %v5920 = vsel %vm721, %v5827, %v5919
      %v5921 = vsel %vm895, %v5878, %v5879
      %v5922 = vsel %vm721, %v5829, %v5921
      %v5923 = vsel %vm721, %v5831, %v5879
      %v5924 = vsel %vm895, %v5880, %v5881
      %v5925 = vsel %vm721, %v5833, %v5924
      %v5926 = vsel %vm895, %v5881, %v5882
      %v5927 = vsel %vm721, %v5835, %v5926
      %v5928 = vsel %vm895, %v5882, %v5883
      %v5929 = vsel %vm721, %v5837, %v5928
      %v5930 = vsel %vm721, %v5839, %v5883
      %v5931 = vsel %vm895, %v5884, %v5885
      %v5932 = vsel %vm721, %v5841, %v5931
      %v5933 = vsel %vm895, %v5885, %v5886
      %v5934 = vsel %vm721, %v5843, %v5933
      %v5935 = vsel %vm895, %v5886, %v5887
      %v5936 = vsel %vm721, %v5845, %v5935
      %v5937 = vsel %vm721, %v5847, %v5887
      %v5938 = vsel %vm895, %v5888, %v5889
      %v5939 = vsel %vm721, %v5849, %v5938
      %v5940 = vsel %vm895, %v5889, %v5890
      %v5941 = vsel %vm721, %v5851, %v5940
      %v5942 = vsel %vm895, %v5890, %v5891
      %v5943 = vsel %vm721, %v5853, %v5942
      %v5944 = vsel %vm721, %v5855, %v5891
      %v5945 = vsel %vm895, %v5892, %v5893
      %v5946 = vsel %vm721, %v5857, %v5945
      %v5947 = vsel %vm895, %v5893, %v5894
      %v5948 = vsel %vm721, %v5859, %v5947
      %v5949 = vsel %vm895, %v5894, %v5895
      %v5950 = vsel %vm721, %v5861, %v5949
      %v5951 = vsel %vm721, %v5863, %v5895
      %5984 = vst [vmem:[#allocation2 + $0x620] sm:$0xff] %v5897
      %5985 = vst [vmem:[#allocation2 + $0x628] sm:$0xff] %v5899
      %5986 = vst [vmem:[#allocation2 + $0x630] sm:$0xff] %v5901
      %5987 = vst [vmem:[#allocation2 + $0x638] sm:$0xf] %v5902
      %5988 = vst [vmem:[#allocation2 + $0x63c] sm:$0xff] %v5904
      %5989 = vst [vmem:[#allocation2 + $0x644] sm:$0xff] %v5906
      %5990 = vst [vmem:[#allocation2 + $0x64c] sm:$0xff] %v5908
      %5991 = vst [vmem:[#allocation2 + $0x654] sm:$0xf] %v5909
      %5992 = vst [vmem:[#allocation2 + $0x658] sm:$0xff] %v5911
      %5993 = vst [vmem:[#allocation2 + $0x660] sm:$0xff] %v5913
      %5994 = vst [vmem:[#allocation2 + $0x668] sm:$0xff] %v5915
      %5995 = vst [vmem:[#allocation2 + $0x670] sm:$0xf] %v5916
      %5996 = vst [vmem:[#allocation2 + $0x674] sm:$0xff] %v5918
      %5997 = vst [vmem:[#allocation2 + $0x67c] sm:$0xff] %v5920
      %5998 = vst [vmem:[#allocation2 + $0x684] sm:$0xff] %v5922
      %5999 = vst [vmem:[#allocation2 + $0x68c] sm:$0xf] %v5923
      %6000 = vst [vmem:[#allocation2 + $0x690] sm:$0xff] %v5925
      %6001 = vst [vmem:[#allocation2 + $0x698] sm:$0xff] %v5927
      %6002 = vst [vmem:[#allocation2 + $0x6a0] sm:$0xff] %v5929
      %6003 = vst [vmem:[#allocation2 + $0x6a8] sm:$0xf] %v5930
      %6004 = vst [vmem:[#allocation2 + $0x6ac] sm:$0xff] %v5932
      %6005 = vst [vmem:[#allocation2 + $0x6b4] sm:$0xff] %v5934
      %6006 = vst [vmem:[#allocation2 + $0x6bc] sm:$0xff] %v5936
      %6007 = vst [vmem:[#allocation2 + $0x6c4] sm:$0xf] %v5937
      %6008 = vst [vmem:[#allocation2 + $0x6c8] sm:$0xff] %v5939
      %6009 = vst [vmem:[#allocation2 + $0x6d0] sm:$0xff] %v5941
      %6010 = vst [vmem:[#allocation2 + $0x6d8] sm:$0xff] %v5943
      %6011 = vst [vmem:[#allocation2 + $0x6e0] sm:$0xf] %v5944
      %6012 = vst [vmem:[#allocation2 + $0x6e4] sm:$0xff] %v5946
      %6013 = vst [vmem:[#allocation2 + $0x6ec] sm:$0xff] %v5948
      %6014 = vst [vmem:[#allocation2 + $0x6f4] sm:$0xff] %v5950
      %6015 = vst [vmem:[#allocation2 + $0x6fc] sm:$0xf] %v5951
      %v6016 = vld [vmem:[#allocation4] sm:$0xff]
      %v6017 = vld [vmem:[#allocation4 + $0x8] sm:$0xff]
      %v6018 = vld [vmem:[#allocation4 + $0x10] sm:$0xff]
      %v6019 = vld [vmem:[#allocation4 + $0x18] sm:$0xff]
      %v6020 = vld [vmem:[#allocation4 + $0x20] sm:$0xff]
      %v6021 = vld [vmem:[#allocation4 + $0x28] sm:$0xff]
      %v6022 = vld [vmem:[#allocation4 + $0x30] sm:$0xff]
      %v6023 = vld [vmem:[#allocation4 + $0x38] sm:$0xff]
      %v6024 = vld [vmem:[#allocation4 + $0x40] sm:$0xff]
      %v6025 = vld [vmem:[#allocation4 + $0x48] sm:$0xff]
      %v6026 = vld [vmem:[#allocation4 + $0x50] sm:$0xff]
      %v6027 = vld [vmem:[#allocation4 + $0x58] sm:$0xff]
      %v6028 = vld [vmem:[#allocation4 + $0x60] sm:$0xff]
      %v6029 = vld [vmem:[#allocation4 + $0x68] sm:$0xff]
      %v6030 = vld [vmem:[#allocation4 + $0x70] sm:$0xff]
      %v6031 = vld [vmem:[#allocation4 + $0x78] sm:$0xff]
      %v6032 = vld [vmem:[#allocation4 + $0x80] sm:$0xff]
      %v6033 = vld [vmem:[#allocation4 + $0x88] sm:$0xff]
      %v6034 = vld [vmem:[#allocation4 + $0x90] sm:$0xff]
      %v6035 = vld [vmem:[#allocation4 + $0x98] sm:$0xff]
      %v6036 = vld [vmem:[#allocation4 + $0xa0] sm:$0xff]
      %v6037 = vld [vmem:[#allocation4 + $0xa8] sm:$0xff]
      %v6038 = vld [vmem:[#allocation4 + $0xb0] sm:$0xff]
      %v6039 = vld [vmem:[#allocation4 + $0xb8] sm:$0xff]
      %v6040 = vld [vmem:[#allocation4 + $0xc0] sm:$0xff]
      %v6041 = vld [vmem:[#allocation4 + $0xc8] sm:$0xff]
      %v6042 = vld [vmem:[#allocation4 + $0xd0] sm:$0xff]
      %v6043 = vld [vmem:[#allocation4 + $0xd8] sm:$0xff]
      %v6044 = vld [vmem:[#allocation4 + $0xe0] sm:$0xff]
      %v6045 = vld [vmem:[#allocation4 + $0xe8] sm:$0xff]
      %v6046 = vld [vmem:[#allocation4 + $0xf0] sm:$0xff]
      %v6047 = vld [vmem:[#allocation4 + $0xf8] sm:$0xff]
      %6080 = vrot.lane.b32.xlu0 %v6016, 70
      %v6081 = vpop.permute.xlu0 %6080
      %6082 = vrot.lane.b32.xlu0 %v6017, 70
      %v6083 = vpop.permute.xlu0 %6082
      %6084 = vrot.lane.b32.xlu0 %v6018, 70
      %v6085 = vpop.permute.xlu0 %6084
      %6086 = vrot.lane.b32.xlu0 %v6019, 70
      %v6087 = vpop.permute.xlu0 %6086
      %6088 = vrot.lane.b32.xlu0 %v6020, 70
      %v6089 = vpop.permute.xlu0 %6088
      %6090 = vrot.lane.b32.xlu0 %v6021, 70
      %v6091 = vpop.permute.xlu0 %6090
      %6092 = vrot.lane.b32.xlu0 %v6022, 70
      %v6093 = vpop.permute.xlu0 %6092
      %6094 = vrot.lane.b32.xlu0 %v6023, 70
      %v6095 = vpop.permute.xlu0 %6094
      %6096 = vrot.lane.b32.xlu0 %v6024, 70
      %v6097 = vpop.permute.xlu0 %6096
      %6098 = vrot.lane.b32.xlu0 %v6025, 70
      %v6099 = vpop.permute.xlu0 %6098
      %6100 = vrot.lane.b32.xlu0 %v6026, 70
      %v6101 = vpop.permute.xlu0 %6100
      %6102 = vrot.lane.b32.xlu0 %v6027, 70
      %v6103 = vpop.permute.xlu0 %6102
      %6104 = vrot.lane.b32.xlu0 %v6028, 70
      %v6105 = vpop.permute.xlu0 %6104
      %6106 = vrot.lane.b32.xlu0 %v6029, 70
      %v6107 = vpop.permute.xlu0 %6106
      %6108 = vrot.lane.b32.xlu0 %v6030, 70
      %v6109 = vpop.permute.xlu0 %6108
      %6110 = vrot.lane.b32.xlu0 %v6031, 70
      %v6111 = vpop.permute.xlu0 %6110
      %6112 = vrot.lane.b32.xlu0 %v6032, 70
      %v6113 = vpop.permute.xlu0 %6112
      %6114 = vrot.lane.b32.xlu0 %v6033, 70
      %v6115 = vpop.permute.xlu0 %6114
      %6116 = vrot.lane.b32.xlu0 %v6034, 70
      %v6117 = vpop.permute.xlu0 %6116
      %6118 = vrot.lane.b32.xlu0 %v6035, 70
      %v6119 = vpop.permute.xlu0 %6118
      %6120 = vrot.lane.b32.xlu0 %v6036, 70
      %v6121 = vpop.permute.xlu0 %6120
      %6122 = vrot.lane.b32.xlu0 %v6037, 70
      %v6123 = vpop.permute.xlu0 %6122
      %6124 = vrot.lane.b32.xlu0 %v6038, 70
      %v6125 = vpop.permute.xlu0 %6124
      %6126 = vrot.lane.b32.xlu0 %v6039, 70
      %v6127 = vpop.permute.xlu0 %6126
      %6128 = vrot.lane.b32.xlu0 %v6040, 70
      %v6129 = vpop.permute.xlu0 %6128
      %6130 = vrot.lane.b32.xlu0 %v6041, 70
      %v6131 = vpop.permute.xlu0 %6130
      %6132 = vrot.lane.b32.xlu0 %v6042, 70
      %v6133 = vpop.permute.xlu0 %6132
      %6134 = vrot.lane.b32.xlu0 %v6043, 70
      %v6135 = vpop.permute.xlu0 %6134
      %6136 = vrot.lane.b32.xlu0 %v6044, 70
      %v6137 = vpop.permute.xlu0 %6136
      %6138 = vrot.lane.b32.xlu0 %v6045, 70
      %v6139 = vpop.permute.xlu0 %6138
      %6140 = vrot.lane.b32.xlu0 %v6046, 70
      %v6141 = vpop.permute.xlu0 %6140
      %6142 = vrot.lane.b32.xlu0 %v6047, 70
      %v6143 = vpop.permute.xlu0 %6142
      %v6144 = vrot.slane %v6081, 4
      %v6145 = vrot.slane %v6083, 4
      %v6146 = vrot.slane %v6085, 4
      %v6147 = vrot.slane %v6087, 4
      %v6148 = vrot.slane %v6089, 4
      %v6149 = vrot.slane %v6091, 4
      %v6150 = vrot.slane %v6093, 4
      %v6151 = vrot.slane %v6095, 4
      %v6152 = vrot.slane %v6097, 4
      %v6153 = vrot.slane %v6099, 4
      %v6154 = vrot.slane %v6101, 4
      %v6155 = vrot.slane %v6103, 4
      %v6156 = vrot.slane %v6105, 4
      %v6157 = vrot.slane %v6107, 4
      %v6158 = vrot.slane %v6109, 4
      %v6159 = vrot.slane %v6111, 4
      %v6160 = vrot.slane %v6113, 4
      %v6161 = vrot.slane %v6115, 4
      %v6162 = vrot.slane %v6117, 4
      %v6163 = vrot.slane %v6119, 4
      %v6164 = vrot.slane %v6121, 4
      %v6165 = vrot.slane %v6123, 4
      %v6166 = vrot.slane %v6125, 4
      %v6167 = vrot.slane %v6127, 4
      %v6168 = vrot.slane %v6129, 4
      %v6169 = vrot.slane %v6131, 4
      %v6170 = vrot.slane %v6133, 4
      %v6171 = vrot.slane %v6135, 4
      %v6172 = vrot.slane %v6137, 4
      %v6173 = vrot.slane %v6139, 4
      %v6174 = vrot.slane %v6141, 4
      %v6175 = vrot.slane %v6143, 4
      %v6176 = vsel %vm895, %v6144, %v6145
      %v6177 = vsel %vm770, %v6081, %v6176
      %v6178 = vsel %vm895, %v6145, %v6146
      %v6179 = vsel %vm770, %v6083, %v6178
      %v6180 = vsel %vm895, %v6146, %v6147
      %v6181 = vsel %vm770, %v6085, %v6180
      %v6182 = vsel %vm770, %v6087, %v6147
      %v6183 = vsel %vm895, %v6148, %v6149
      %v6184 = vsel %vm770, %v6089, %v6183
      %v6185 = vsel %vm895, %v6149, %v6150
      %v6186 = vsel %vm770, %v6091, %v6185
      %v6187 = vsel %vm895, %v6150, %v6151
      %v6188 = vsel %vm770, %v6093, %v6187
      %v6189 = vsel %vm770, %v6095, %v6151
      %v6190 = vsel %vm895, %v6152, %v6153
      %v6191 = vsel %vm770, %v6097, %v6190
      %v6192 = vsel %vm895, %v6153, %v6154
      %v6193 = vsel %vm770, %v6099, %v6192
      %v6194 = vsel %vm895, %v6154, %v6155
      %v6195 = vsel %vm770, %v6101, %v6194
      %v6196 = vsel %vm770, %v6103, %v6155
      %v6197 = vsel %vm895, %v6156, %v6157
      %v6198 = vsel %vm770, %v6105, %v6197
      %v6199 = vsel %vm895, %v6157, %v6158
      %v6200 = vsel %vm770, %v6107, %v6199
      %v6201 = vsel %vm895, %v6158, %v6159
      %v6202 = vsel %vm770, %v6109, %v6201
      %v6203 = vsel %vm770, %v6111, %v6159
      %v6204 = vsel %vm895, %v6160, %v6161
      %v6205 = vsel %vm770, %v6113, %v6204
      %v6206 = vsel %vm895, %v6161, %v6162
      %v6207 = vsel %vm770, %v6115, %v6206
      %v6208 = vsel %vm895, %v6162, %v6163
      %v6209 = vsel %vm770, %v6117, %v6208
      %v6210 = vsel %vm770, %v6119, %v6163
      %v6211 = vsel %vm895, %v6164, %v6165
      %v6212 = vsel %vm770, %v6121, %v6211
      %v6213 = vsel %vm895, %v6165, %v6166
      %v6214 = vsel %vm770, %v6123, %v6213
      %v6215 = vsel %vm895, %v6166, %v6167
      %v6216 = vsel %vm770, %v6125, %v6215
      %v6217 = vsel %vm770, %v6127, %v6167
      %v6218 = vsel %vm895, %v6168, %v6169
      %v6219 = vsel %vm770, %v6129, %v6218
      %v6220 = vsel %vm895, %v6169, %v6170
      %v6221 = vsel %vm770, %v6131, %v6220
      %v6222 = vsel %vm895, %v6170, %v6171
      %v6223 = vsel %vm770, %v6133, %v6222
      %v6224 = vsel %vm770, %v6135, %v6171
      %v6225 = vsel %vm895, %v6172, %v6173
      %v6226 = vsel %vm770, %v6137, %v6225
      %v6227 = vsel %vm895, %v6173, %v6174
      %v6228 = vsel %vm770, %v6139, %v6227
      %v6229 = vsel %vm895, %v6174, %v6175
      %v6230 = vsel %vm770, %v6141, %v6229
      %v6231 = vsel %vm770, %v6143, %v6175
      %6264 = vst [vmem:[#allocation2 + $0x700] sm:$0xff] %v6177
      %6265 = vst [vmem:[#allocation2 + $0x708] sm:$0xff] %v6179
      %6266 = vst [vmem:[#allocation2 + $0x710] sm:$0xff] %v6181
      %6267 = vst [vmem:[#allocation2 + $0x718] sm:$0xf] %v6182
      %6268 = vst [vmem:[#allocation2 + $0x71c] sm:$0xff] %v6184
      %6269 = vst [vmem:[#allocation2 + $0x724] sm:$0xff] %v6186
      %6270 = vst [vmem:[#allocation2 + $0x72c] sm:$0xff] %v6188
      %6271 = vst [vmem:[#allocation2 + $0x734] sm:$0xf] %v6189
      %6272 = vst [vmem:[#allocation2 + $0x738] sm:$0xff] %v6191
      %6273 = vst [vmem:[#allocation2 + $0x740] sm:$0xff] %v6193
      %6274 = vst [vmem:[#allocation2 + $0x748] sm:$0xff] %v6195
      %6275 = vst [vmem:[#allocation2 + $0x750] sm:$0xf] %v6196
      %6276 = vst [vmem:[#allocation2 + $0x754] sm:$0xff] %v6198
      %6277 = vst [vmem:[#allocation2 + $0x75c] sm:$0xff] %v6200
      %6278 = vst [vmem:[#allocation2 + $0x764] sm:$0xff] %v6202
      %6279 = vst [vmem:[#allocation2 + $0x76c] sm:$0xf] %v6203
      %6280 = vst [vmem:[#allocation2 + $0x770] sm:$0xff] %v6205
      %6281 = vst [vmem:[#allocation2 + $0x778] sm:$0xff] %v6207
      %6282 = vst [vmem:[#allocation2 + $0x780] sm:$0xff] %v6209
      %6283 = vst [vmem:[#allocation2 + $0x788] sm:$0xf] %v6210
      %6284 = vst [vmem:[#allocation2 + $0x78c] sm:$0xff] %v6212
      %6285 = vst [vmem:[#allocation2 + $0x794] sm:$0xff] %v6214
      %6286 = vst [vmem:[#allocation2 + $0x79c] sm:$0xff] %v6216
      %6287 = vst [vmem:[#allocation2 + $0x7a4] sm:$0xf] %v6217
      %6288 = vst [vmem:[#allocation2 + $0x7a8] sm:$0xff] %v6219
      %6289 = vst [vmem:[#allocation2 + $0x7b0] sm:$0xff] %v6221
      %6290 = vst [vmem:[#allocation2 + $0x7b8] sm:$0xff] %v6223
      %6291 = vst [vmem:[#allocation2 + $0x7c0] sm:$0xf] %v6224
      %6292 = vst [vmem:[#allocation2 + $0x7c4] sm:$0xff] %v6226
      %6293 = vst [vmem:[#allocation2 + $0x7cc] sm:$0xff] %v6228
      %6294 = vst [vmem:[#allocation2 + $0x7d4] sm:$0xff] %v6230
      %6295 = vst [vmem:[#allocation2 + $0x7dc] sm:$0xf] %v6231
      %v6296 = vld [vmem:[%s5] sm:$0xff]
      %v6297 = vld [vmem:[%s5 + $0x8] sm:$0xff]
      %v6298 = vld [vmem:[%s5 + $0x10] sm:$0xf]
      %v6299 = vld [vmem:[%s5 + $0x14] sm:$0xff]
      %v6300 = vld [vmem:[%s5 + $0x1c] sm:$0xff]
      %v6301 = vld [vmem:[%s5 + $0x24] sm:$0xf]
      %v6302 = vld [vmem:[%s5 + $0x28] sm:$0xff]
      %v6303 = vld [vmem:[%s5 + $0x30] sm:$0xff]
      %v6304 = vld [vmem:[%s5 + $0x38] sm:$0xf]
      %v6305 = vld [vmem:[%s5 + $0x3c] sm:$0xff]
      %v6306 = vld [vmem:[%s5 + $0x44] sm:$0xff]
      %v6307 = vld [vmem:[%s5 + $0x4c] sm:$0xf]
      %v6308 = vld [vmem:[%s5 + $0x50] sm:$0xff]
      %v6309 = vld [vmem:[%s5 + $0x58] sm:$0xff]
      %v6310 = vld [vmem:[%s5 + $0x60] sm:$0xf]
      %v6311 = vld [vmem:[%s5 + $0x64] sm:$0xff]
      %v6312 = vld [vmem:[%s5 + $0x6c] sm:$0xff]
      %v6313 = vld [vmem:[%s5 + $0x74] sm:$0xf]
      %v6314 = vld [vmem:[%s5 + $0x78] sm:$0xff]
      %v6315 = vld [vmem:[%s5 + $0x80] sm:$0xff]
      %v6316 = vld [vmem:[%s5 + $0x88] sm:$0xf]
      %v6317 = vld [vmem:[%s5 + $0x8c] sm:$0xff]
      %v6318 = vld [vmem:[%s5 + $0x94] sm:$0xff]
      %v6319 = vld [vmem:[%s5 + $0x9c] sm:$0xf]
      %v6320 = vld [vmem:[#allocation2] sm:$0xff]
      %v6321 = vld [vmem:[#allocation2 + $0x8] sm:$0xff]
      %v6322 = vld [vmem:[#allocation2 + $0x10] sm:$0xff]
      %v6323 = vld [vmem:[#allocation2 + $0x18] sm:$0xf]
      %v6324 = vld [vmem:[#allocation2 + $0x1c] sm:$0xff]
      %v6325 = vld [vmem:[#allocation2 + $0x24] sm:$0xff]
      %v6326 = vld [vmem:[#allocation2 + $0x2c] sm:$0xff]
      %v6327 = vld [vmem:[#allocation2 + $0x34] sm:$0xf]
      %v6328 = vld [vmem:[#allocation2 + $0x38] sm:$0xff]
      %v6329 = vld [vmem:[#allocation2 + $0x40] sm:$0xff]
      %v6330 = vld [vmem:[#allocation2 + $0x48] sm:$0xff]
      %v6331 = vld [vmem:[#allocation2 + $0x50] sm:$0xf]
      %v6332 = vld [vmem:[#allocation2 + $0x54] sm:$0xff]
      %v6333 = vld [vmem:[#allocation2 + $0x5c] sm:$0xff]
      %v6334 = vld [vmem:[#allocation2 + $0x64] sm:$0xff]
      %v6335 = vld [vmem:[#allocation2 + $0x6c] sm:$0xf]
      %v6336 = vld [vmem:[#allocation2 + $0x70] sm:$0xff]
      %v6337 = vld [vmem:[#allocation2 + $0x78] sm:$0xff]
      %v6338 = vld [vmem:[#allocation2 + $0x80] sm:$0xff]
      %v6339 = vld [vmem:[#allocation2 + $0x88] sm:$0xf]
      %v6340 = vld [vmem:[#allocation2 + $0x8c] sm:$0xff]
      %v6341 = vld [vmem:[#allocation2 + $0x94] sm:$0xff]
      %v6342 = vld [vmem:[#allocation2 + $0x9c] sm:$0xff]
      %v6343 = vld [vmem:[#allocation2 + $0xa4] sm:$0xf]
      %v6344 = vld [vmem:[#allocation2 + $0xa8] sm:$0xff]
      %v6345 = vld [vmem:[#allocation2 + $0xb0] sm:$0xff]
      %v6346 = vld [vmem:[#allocation2 + $0xb8] sm:$0xff]
      %v6347 = vld [vmem:[#allocation2 + $0xc0] sm:$0xf]
      %v6348 = vld [vmem:[#allocation2 + $0xc4] sm:$0xff]
      %v6349 = vld [vmem:[#allocation2 + $0xcc] sm:$0xff]
      %v6350 = vld [vmem:[#allocation2 + $0xd4] sm:$0xff]
      %v6351 = vld [vmem:[#allocation2 + $0xdc] sm:$0xf]
      %v6352 = vld [vmem:[#allocation2 + $0xe0] sm:$0xff]
      %v6353 = vld [vmem:[#allocation2 + $0xe8] sm:$0xff]
      %v6354 = vld [vmem:[#allocation2 + $0xf0] sm:$0xff]
      %v6355 = vld [vmem:[#allocation2 + $0xf8] sm:$0xf]
      %v6356 = vld [vmem:[#allocation2 + $0xfc] sm:$0xff]
      %v6357 = vld [vmem:[#allocation2 + $0x104] sm:$0xff]
      %v6358 = vld [vmem:[#allocation2 + $0x10c] sm:$0xff]
      %v6359 = vld [vmem:[#allocation2 + $0x114] sm:$0xf]
      %v6360 = vld [vmem:[#allocation2 + $0x118] sm:$0xff]
      %v6361 = vld [vmem:[#allocation2 + $0x120] sm:$0xff]
      %v6362 = vld [vmem:[#allocation2 + $0x128] sm:$0xff]
      %v6363 = vld [vmem:[#allocation2 + $0x130] sm:$0xf]
      %v6364 = vld [vmem:[#allocation2 + $0x134] sm:$0xff]
      %v6365 = vld [vmem:[#allocation2 + $0x13c] sm:$0xff]
      %v6366 = vld [vmem:[#allocation2 + $0x144] sm:$0xff]
      %v6367 = vld [vmem:[#allocation2 + $0x14c] sm:$0xf]
      %v6368 = vld [vmem:[#allocation2 + $0x150] sm:$0xff]
      %v6369 = vld [vmem:[#allocation2 + $0x158] sm:$0xff]
      %v6370 = vld [vmem:[#allocation2 + $0x160] sm:$0xff]
      %v6371 = vld [vmem:[#allocation2 + $0x168] sm:$0xf]
      %v6372 = vld [vmem:[#allocation2 + $0x16c] sm:$0xff]
      %v6373 = vld [vmem:[#allocation2 + $0x174] sm:$0xff]
      %v6374 = vld [vmem:[#allocation2 + $0x17c] sm:$0xff]
      %v6375 = vld [vmem:[#allocation2 + $0x184] sm:$0xf]
      %v6376 = vld [vmem:[#allocation2 + $0x188] sm:$0xff]
      %v6377 = vld [vmem:[#allocation2 + $0x190] sm:$0xff]
      %v6378 = vld [vmem:[#allocation2 + $0x198] sm:$0xff]
      %v6379 = vld [vmem:[#allocation2 + $0x1a0] sm:$0xf]
      %v6380 = vld [vmem:[#allocation2 + $0x1a4] sm:$0xff]
      %v6381 = vld [vmem:[#allocation2 + $0x1ac] sm:$0xff]
      %v6382 = vld [vmem:[#allocation2 + $0x1b4] sm:$0xff]
      %v6383 = vld [vmem:[#allocation2 + $0x1bc] sm:$0xf]
      %v6384 = vld [vmem:[#allocation2 + $0x1c0] sm:$0xff]
      %v6385 = vld [vmem:[#allocation2 + $0x1c8] sm:$0xff]
      %v6386 = vld [vmem:[#allocation2 + $0x1d0] sm:$0xff]
      %v6387 = vld [vmem:[#allocation2 + $0x1d8] sm:$0xf]
      %v6388 = vld [vmem:[#allocation2 + $0x1dc] sm:$0xff]
      %v6389 = vld [vmem:[#allocation2 + $0x1e4] sm:$0xff]
      %v6390 = vld [vmem:[#allocation2 + $0x1ec] sm:$0xff]
      %v6391 = vld [vmem:[#allocation2 + $0x1f4] sm:$0xf]
      %v6392 = vld [vmem:[#allocation2 + $0x1f8] sm:$0xff]
      %v6393 = vld [vmem:[#allocation2 + $0x200] sm:$0xff]
      %v6394 = vld [vmem:[#allocation2 + $0x208] sm:$0xff]
      %v6395 = vld [vmem:[#allocation2 + $0x210] sm:$0xf]
      %v6396 = vld [vmem:[#allocation2 + $0x214] sm:$0xff]
      %v6397 = vld [vmem:[#allocation2 + $0x21c] sm:$0xff]
      %v6398 = vld [vmem:[#allocation2 + $0x224] sm:$0xff]
      %v6399 = vld [vmem:[#allocation2 + $0x22c] sm:$0xf]
      %v6400 = vld [vmem:[#allocation2 + $0x230] sm:$0xff]
      %v6401 = vld [vmem:[#allocation2 + $0x238] sm:$0xff]
      %v6402 = vld [vmem:[#allocation2 + $0x240] sm:$0xff]
      %v6403 = vld [vmem:[#allocation2 + $0x248] sm:$0xf]
      %v6404 = vld [vmem:[#allocation2 + $0x24c] sm:$0xff]
      %v6405 = vld [vmem:[#allocation2 + $0x254] sm:$0xff]
      %v6406 = vld [vmem:[#allocation2 + $0x25c] sm:$0xff]
      %v6407 = vld [vmem:[#allocation2 + $0x264] sm:$0xf]
      %v6408 = vld [vmem:[#allocation2 + $0x268] sm:$0xff]
      %v6409 = vld [vmem:[#allocation2 + $0x270] sm:$0xff]
      %v6410 = vld [vmem:[#allocation2 + $0x278] sm:$0xff]
      %v6411 = vld [vmem:[#allocation2 + $0x280] sm:$0xf]
      %v6412 = vld [vmem:[#allocation2 + $0x284] sm:$0xff]
      %v6413 = vld [vmem:[#allocation2 + $0x28c] sm:$0xff]
      %v6414 = vld [vmem:[#allocation2 + $0x294] sm:$0xff]
      %v6415 = vld [vmem:[#allocation2 + $0x29c] sm:$0xf]
      %v6416 = vld [vmem:[#allocation2 + $0x2a0] sm:$0xff]
      %v6417 = vld [vmem:[#allocation2 + $0x2a8] sm:$0xff]
      %v6418 = vld [vmem:[#allocation2 + $0x2b0] sm:$0xff]
      %v6419 = vld [vmem:[#allocation2 + $0x2b8] sm:$0xf]
      %v6420 = vld [vmem:[#allocation2 + $0x2bc] sm:$0xff]
      %v6421 = vld [vmem:[#allocation2 + $0x2c4] sm:$0xff]
      %v6422 = vld [vmem:[#allocation2 + $0x2cc] sm:$0xff]
      %v6423 = vld [vmem:[#allocation2 + $0x2d4] sm:$0xf]
      %v6424 = vld [vmem:[#allocation2 + $0x2d8] sm:$0xff]
      %v6425 = vld [vmem:[#allocation2 + $0x2e0] sm:$0xff]
      %v6426 = vld [vmem:[#allocation2 + $0x2e8] sm:$0xff]
      %v6427 = vld [vmem:[#allocation2 + $0x2f0] sm:$0xf]
      %v6428 = vld [vmem:[#allocation2 + $0x2f4] sm:$0xff]
      %v6429 = vld [vmem:[#allocation2 + $0x2fc] sm:$0xff]
      %v6430 = vld [vmem:[#allocation2 + $0x304] sm:$0xff]
      %v6431 = vld [vmem:[#allocation2 + $0x30c] sm:$0xf]
      %v6432 = vld [vmem:[#allocation2 + $0x310] sm:$0xff]
      %v6433 = vld [vmem:[#allocation2 + $0x318] sm:$0xff]
      %v6434 = vld [vmem:[#allocation2 + $0x320] sm:$0xff]
      %v6435 = vld [vmem:[#allocation2 + $0x328] sm:$0xf]
      %v6436 = vld [vmem:[#allocation2 + $0x32c] sm:$0xff]
      %v6437 = vld [vmem:[#allocation2 + $0x334] sm:$0xff]
      %v6438 = vld [vmem:[#allocation2 + $0x33c] sm:$0xff]
      %v6439 = vld [vmem:[#allocation2 + $0x344] sm:$0xf]
      %v6440 = vld [vmem:[#allocation2 + $0x348] sm:$0xff]
      %v6441 = vld [vmem:[#allocation2 + $0x350] sm:$0xff]
      %v6442 = vld [vmem:[#allocation2 + $0x358] sm:$0xff]
      %v6443 = vld [vmem:[#allocation2 + $0x360] sm:$0xf]
      %v6444 = vld [vmem:[#allocation2 + $0x364] sm:$0xff]
      %v6445 = vld [vmem:[#allocation2 + $0x36c] sm:$0xff]
      %v6446 = vld [vmem:[#allocation2 + $0x374] sm:$0xff]
      %v6447 = vld [vmem:[#allocation2 + $0x37c] sm:$0xf]
      %v6448 = vld [vmem:[#allocation2 + $0x380] sm:$0xff]
      %v6449 = vld [vmem:[#allocation2 + $0x388] sm:$0xff]
      %v6450 = vld [vmem:[#allocation2 + $0x390] sm:$0xff]
      %v6451 = vld [vmem:[#allocation2 + $0x398] sm:$0xf]
      %v6452 = vld [vmem:[#allocation2 + $0x39c] sm:$0xff]
      %v6453 = vld [vmem:[#allocation2 + $0x3a4] sm:$0xff]
      %v6454 = vld [vmem:[#allocation2 + $0x3ac] sm:$0xff]
      %v6455 = vld [vmem:[#allocation2 + $0x3b4] sm:$0xf]
      %v6456 = vld [vmem:[#allocation2 + $0x3b8] sm:$0xff]
      %v6457 = vld [vmem:[#allocation2 + $0x3c0] sm:$0xff]
      %v6458 = vld [vmem:[#allocation2 + $0x3c8] sm:$0xff]
      %v6459 = vld [vmem:[#allocation2 + $0x3d0] sm:$0xf]
      %v6460 = vld [vmem:[#allocation2 + $0x3d4] sm:$0xff]
      %v6461 = vld [vmem:[#allocation2 + $0x3dc] sm:$0xff]
      %v6462 = vld [vmem:[#allocation2 + $0x3e4] sm:$0xff]
      %v6463 = vld [vmem:[#allocation2 + $0x3ec] sm:$0xf]
      %v6464 = vld [vmem:[#allocation2 + $0x3f0] sm:$0xff]
      %v6465 = vld [vmem:[#allocation2 + $0x3f8] sm:$0xff]
      %v6466 = vld [vmem:[#allocation2 + $0x400] sm:$0xff]
      %v6467 = vld [vmem:[#allocation2 + $0x408] sm:$0xf]
      %v6468 = vld [vmem:[#allocation2 + $0x40c] sm:$0xff]
      %v6469 = vld [vmem:[#allocation2 + $0x414] sm:$0xff]
      %v6470 = vld [vmem:[#allocation2 + $0x41c] sm:$0xff]
      %v6471 = vld [vmem:[#allocation2 + $0x424] sm:$0xf]
      %v6472 = vld [vmem:[#allocation2 + $0x428] sm:$0xff]
      %v6473 = vld [vmem:[#allocation2 + $0x430] sm:$0xff]
      %v6474 = vld [vmem:[#allocation2 + $0x438] sm:$0xff]
      %v6475 = vld [vmem:[#allocation2 + $0x440] sm:$0xf]
      %v6476 = vld [vmem:[#allocation2 + $0x444] sm:$0xff]
      %v6477 = vld [vmem:[#allocation2 + $0x44c] sm:$0xff]
      %v6478 = vld [vmem:[#allocation2 + $0x454] sm:$0xff]
      %v6479 = vld [vmem:[#allocation2 + $0x45c] sm:$0xf]
      %v6480 = vld [vmem:[#allocation2 + $0x460] sm:$0xff]
      %v6481 = vld [vmem:[#allocation2 + $0x468] sm:$0xff]
      %v6482 = vld [vmem:[#allocation2 + $0x470] sm:$0xff]
      %v6483 = vld [vmem:[#allocation2 + $0x478] sm:$0xf]
      %v6484 = vld [vmem:[#allocation2 + $0x47c] sm:$0xff]
      %v6485 = vld [vmem:[#allocation2 + $0x484] sm:$0xff]
      %v6486 = vld [vmem:[#allocation2 + $0x48c] sm:$0xff]
      %v6487 = vld [vmem:[#allocation2 + $0x494] sm:$0xf]
      %v6488 = vld [vmem:[#allocation2 + $0x498] sm:$0xff]
      %v6489 = vld [vmem:[#allocation2 + $0x4a0] sm:$0xff]
      %v6490 = vld [vmem:[#allocation2 + $0x4a8] sm:$0xff]
      %v6491 = vld [vmem:[#allocation2 + $0x4b0] sm:$0xf]
      %v6492 = vld [vmem:[#allocation2 + $0x4b4] sm:$0xff]
      %v6493 = vld [vmem:[#allocation2 + $0x4bc] sm:$0xff]
      %v6494 = vld [vmem:[#allocation2 + $0x4c4] sm:$0xff]
      %v6495 = vld [vmem:[#allocation2 + $0x4cc] sm:$0xf]
      %v6496 = vld [vmem:[#allocation2 + $0x4d0] sm:$0xff]
      %v6497 = vld [vmem:[#allocation2 + $0x4d8] sm:$0xff]
      %v6498 = vld [vmem:[#allocation2 + $0x4e0] sm:$0xff]
      %v6499 = vld [vmem:[#allocation2 + $0x4e8] sm:$0xf]
      %v6500 = vld [vmem:[#allocation2 + $0x4ec] sm:$0xff]
      %v6501 = vld [vmem:[#allocation2 + $0x4f4] sm:$0xff]
      %v6502 = vld [vmem:[#allocation2 + $0x4fc] sm:$0xff]
      %v6503 = vld [vmem:[#allocation2 + $0x504] sm:$0xf]
      %v6504 = vld [vmem:[#allocation2 + $0x508] sm:$0xff]
      %v6505 = vld [vmem:[#allocation2 + $0x510] sm:$0xff]
      %v6506 = vld [vmem:[#allocation2 + $0x518] sm:$0xff]
      %v6507 = vld [vmem:[#allocation2 + $0x520] sm:$0xf]
      %v6508 = vld [vmem:[#allocation2 + $0x524] sm:$0xff]
      %v6509 = vld [vmem:[#allocation2 + $0x52c] sm:$0xff]
      %v6510 = vld [vmem:[#allocation2 + $0x534] sm:$0xff]
      %v6511 = vld [vmem:[#allocation2 + $0x53c] sm:$0xf]
      %v6512 = vld [vmem:[#allocation2 + $0x540] sm:$0xff]
      %v6513 = vld [vmem:[#allocation2 + $0x548] sm:$0xff]
      %v6514 = vld [vmem:[#allocation2 + $0x550] sm:$0xff]
      %v6515 = vld [vmem:[#allocation2 + $0x558] sm:$0xf]
      %v6516 = vld [vmem:[#allocation2 + $0x55c] sm:$0xff]
      %v6517 = vld [vmem:[#allocation2 + $0x564] sm:$0xff]
      %v6518 = vld [vmem:[#allocation2 + $0x56c] sm:$0xff]
      %v6519 = vld [vmem:[#allocation2 + $0x574] sm:$0xf]
      %v6520 = vld [vmem:[#allocation2 + $0x578] sm:$0xff]
      %v6521 = vld [vmem:[#allocation2 + $0x580] sm:$0xff]
      %v6522 = vld [vmem:[#allocation2 + $0x588] sm:$0xff]
      %v6523 = vld [vmem:[#allocation2 + $0x590] sm:$0xf]
      %v6524 = vld [vmem:[#allocation2 + $0x594] sm:$0xff]
      %v6525 = vld [vmem:[#allocation2 + $0x59c] sm:$0xff]
      %v6526 = vld [vmem:[#allocation2 + $0x5a4] sm:$0xff]
      %v6527 = vld [vmem:[#allocation2 + $0x5ac] sm:$0xf]
      %v6528 = vld [vmem:[#allocation2 + $0x5b0] sm:$0xff]
      %v6529 = vld [vmem:[#allocation2 + $0x5b8] sm:$0xff]
      %v6530 = vld [vmem:[#allocation2 + $0x5c0] sm:$0xff]
      %v6531 = vld [vmem:[#allocation2 + $0x5c8] sm:$0xf]
      %v6532 = vld [vmem:[#allocation2 + $0x5cc] sm:$0xff]
      %v6533 = vld [vmem:[#allocation2 + $0x5d4] sm:$0xff]
      %v6534 = vld [vmem:[#allocation2 + $0x5dc] sm:$0xff]
      %v6535 = vld [vmem:[#allocation2 + $0x5e4] sm:$0xf]
      %v6536 = vld [vmem:[#allocation2 + $0x5e8] sm:$0xff]
      %v6537 = vld [vmem:[#allocation2 + $0x5f0] sm:$0xff]
      %v6538 = vld [vmem:[#allocation2 + $0x5f8] sm:$0xff]
      %v6539 = vld [vmem:[#allocation2 + $0x600] sm:$0xf]
      %v6540 = vld [vmem:[#allocation2 + $0x604] sm:$0xff]
      %v6541 = vld [vmem:[#allocation2 + $0x60c] sm:$0xff]
      %v6542 = vld [vmem:[#allocation2 + $0x614] sm:$0xff]
      %v6543 = vld [vmem:[#allocation2 + $0x61c] sm:$0xf]
      %v6544 = vld [vmem:[#allocation2 + $0x620] sm:$0xff]
      %v6545 = vld [vmem:[#allocation2 + $0x628] sm:$0xff]
      %v6546 = vld [vmem:[#allocation2 + $0x630] sm:$0xff]
      %v6547 = vld [vmem:[#allocation2 + $0x638] sm:$0xf]
      %v6548 = vld [vmem:[#allocation2 + $0x63c] sm:$0xff]
      %v6549 = vld [vmem:[#allocation2 + $0x644] sm:$0xff]
      %v6550 = vld [vmem:[#allocation2 + $0x64c] sm:$0xff]
      %v6551 = vld [vmem:[#allocation2 + $0x654] sm:$0xf]
      %v6552 = vld [vmem:[#allocation2 + $0x658] sm:$0xff]
      %v6553 = vld [vmem:[#allocation2 + $0x660] sm:$0xff]
      %v6554 = vld [vmem:[#allocation2 + $0x668] sm:$0xff]
      %v6555 = vld [vmem:[#allocation2 + $0x670] sm:$0xf]
      %v6556 = vld [vmem:[#allocation2 + $0x674] sm:$0xff]
      %v6557 = vld [vmem:[#allocation2 + $0x67c] sm:$0xff]
      %v6558 = vld [vmem:[#allocation2 + $0x684] sm:$0xff]
      %v6559 = vld [vmem:[#allocation2 + $0x68c] sm:$0xf]
      %v6560 = vld [vmem:[#allocation2 + $0x690] sm:$0xff]
      %v6561 = vld [vmem:[#allocation2 + $0x698] sm:$0xff]
      %v6562 = vld [vmem:[#allocation2 + $0x6a0] sm:$0xff]
      %v6563 = vld [vmem:[#allocation2 + $0x6a8] sm:$0xf]
      %v6564 = vld [vmem:[#allocation2 + $0x6ac] sm:$0xff]
      %v6565 = vld [vmem:[#allocation2 + $0x6b4] sm:$0xff]
      %v6566 = vld [vmem:[#allocation2 + $0x6bc] sm:$0xff]
      %v6567 = vld [vmem:[#allocation2 + $0x6c4] sm:$0xf]
      %v6568 = vld [vmem:[#allocation2 + $0x6c8] sm:$0xff]
      %v6569 = vld [vmem:[#allocation2 + $0x6d0] sm:$0xff]
      %v6570 = vld [vmem:[#allocation2 + $0x6d8] sm:$0xff]
      %v6571 = vld [vmem:[#allocation2 + $0x6e0] sm:$0xf]
      %v6572 = vld [vmem:[#allocation2 + $0x6e4] sm:$0xff]
      %v6573 = vld [vmem:[#allocation2 + $0x6ec] sm:$0xff]
      %v6574 = vld [vmem:[#allocation2 + $0x6f4] sm:$0xff]
      %v6575 = vld [vmem:[#allocation2 + $0x6fc] sm:$0xf]
      %v6576 = vld [vmem:[#allocation2 + $0x700] sm:$0xff]
      %v6577 = vld [vmem:[#allocation2 + $0x708] sm:$0xff]
      %v6578 = vld [vmem:[#allocation2 + $0x710] sm:$0xff]
      %v6579 = vld [vmem:[#allocation2 + $0x718] sm:$0xf]
      %v6580 = vld [vmem:[#allocation2 + $0x71c] sm:$0xff]
      %v6581 = vld [vmem:[#allocation2 + $0x724] sm:$0xff]
      %v6582 = vld [vmem:[#allocation2 + $0x72c] sm:$0xff]
      %v6583 = vld [vmem:[#allocation2 + $0x734] sm:$0xf]
      %v6584 = vld [vmem:[#allocation2 + $0x738] sm:$0xff]
      %v6585 = vld [vmem:[#allocation2 + $0x740] sm:$0xff]
      %v6586 = vld [vmem:[#allocation2 + $0x748] sm:$0xff]
      %v6587 = vld [vmem:[#allocation2 + $0x750] sm:$0xf]
      %v6588 = vld [vmem:[#allocation2 + $0x754] sm:$0xff]
      %v6589 = vld [vmem:[#allocation2 + $0x75c] sm:$0xff]
      %v6590 = vld [vmem:[#allocation2 + $0x764] sm:$0xff]
      %v6591 = vld [vmem:[#allocation2 + $0x76c] sm:$0xf]
      %v6592 = vld [vmem:[#allocation2 + $0x770] sm:$0xff]
      %v6593 = vld [vmem:[#allocation2 + $0x778] sm:$0xff]
      %v6594 = vld [vmem:[#allocation2 + $0x780] sm:$0xff]
      %v6595 = vld [vmem:[#allocation2 + $0x788] sm:$0xf]
      %v6596 = vld [vmem:[#allocation2 + $0x78c] sm:$0xff]
      %v6597 = vld [vmem:[#allocation2 + $0x794] sm:$0xff]
      %v6598 = vld [vmem:[#allocation2 + $0x79c] sm:$0xff]
      %v6599 = vld [vmem:[#allocation2 + $0x7a4] sm:$0xf]
      %v6600 = vld [vmem:[#allocation2 + $0x7a8] sm:$0xff]
      %v6601 = vld [vmem:[#allocation2 + $0x7b0] sm:$0xff]
      %v6602 = vld [vmem:[#allocation2 + $0x7b8] sm:$0xff]
      %v6603 = vld [vmem:[#allocation2 + $0x7c0] sm:$0xf]
      %v6604 = vld [vmem:[#allocation2 + $0x7c4] sm:$0xff]
      %v6605 = vld [vmem:[#allocation2 + $0x7cc] sm:$0xff]
      %v6606 = vld [vmem:[#allocation2 + $0x7d4] sm:$0xff]
      %v6607 = vld [vmem:[#allocation2 + $0x7dc] sm:$0xf]
      %v6608 = vld [vmem:[%s6] sm:$0xff]
      %v6609 = vld [vmem:[%s6 + $0x8] sm:$0xff]
      %v6610 = vld [vmem:[%s6 + $0x10] sm:$0xff]
      %v6611 = vld [vmem:[%s6 + $0x18] sm:$0xff]
      %v6612 = vld [vmem:[%s6 + $0x20] sm:$0xff]
      %v6613 = vld [vmem:[%s6 + $0x28] sm:$0xff]
      %v6614 = vld [vmem:[%s6 + $0x30] sm:$0xff]
      %v6615 = vld [vmem:[%s6 + $0x38] sm:$0xff]
      %6617 = vset.pattern.permute.xlu0 0
      %6618 = vperm.xlu0 %6617, %v6608
      %v6619 = vpop.permute.xlu0 %6618
      %6622 = vset.pattern.permute.xlu0 0
      %6623 = vperm.xlu0 %6622, %v6609
      %v6624 = vpop.permute.xlu0 %6623
      %6627 = vset.pattern.permute.xlu0 0
      %6628 = vperm.xlu0 %6627, %v6610
      %v6629 = vpop.permute.xlu0 %6628
      %6632 = vset.pattern.permute.xlu0 0
      %6633 = vperm.xlu0 %6632, %v6611
      %v6634 = vpop.permute.xlu0 %6633
      %6637 = vset.pattern.permute.xlu0 0
      %6638 = vperm.xlu0 %6637, %v6612
      %v6639 = vpop.permute.xlu0 %6638
      %6642 = vset.pattern.permute.xlu0 0
      %6643 = vperm.xlu0 %6642, %v6613
      %v6644 = vpop.permute.xlu0 %6643
      %6647 = vset.pattern.permute.xlu0 0
      %6648 = vperm.xlu0 %6647, %v6614
      %v6649 = vpop.permute.xlu0 %6648
      %6652 = vset.pattern.permute.xlu0 0
      %6653 = vperm.xlu0 %6652, %v6615
      %v6654 = vpop.permute.xlu0 %6653
      %v6680 = vunpack.c.l.b16 %v6296
      %v6681 = vunpack.c.h.b16 %v6296
      %v6682 = vunpack.c.l.b16 %v6297
      %v6683 = vunpack.c.h.b16 %v6297
      %v6684 = vunpack.c.l.b16 %v6298
      %v6685 = vunpack.c.l.b16 %v6299
      %v6686 = vunpack.c.h.b16 %v6299
      %v6687 = vunpack.c.l.b16 %v6300
      %v6688 = vunpack.c.h.b16 %v6300
      %v6689 = vunpack.c.l.b16 %v6301
      %v6690 = vunpack.c.l.b16 %v6302
      %v6691 = vunpack.c.h.b16 %v6302
      %v6692 = vunpack.c.l.b16 %v6303
      %v6693 = vunpack.c.h.b16 %v6303
      %v6694 = vunpack.c.l.b16 %v6304
      %v6695 = vunpack.c.l.b16 %v6305
      %v6696 = vunpack.c.h.b16 %v6305
      %v6697 = vunpack.c.l.b16 %v6306
      %v6698 = vunpack.c.h.b16 %v6306
      %v6699 = vunpack.c.l.b16 %v6307
      %v6700 = vunpack.c.l.b16 %v6308
      %v6701 = vunpack.c.h.b16 %v6308
      %v6702 = vunpack.c.l.b16 %v6309
      %v6703 = vunpack.c.h.b16 %v6309
      %v6704 = vunpack.c.l.b16 %v6310
      %v6705 = vunpack.c.l.b16 %v6311
      %v6706 = vunpack.c.h.b16 %v6311
      %v6707 = vunpack.c.l.b16 %v6312
      %v6708 = vunpack.c.h.b16 %v6312
      %v6709 = vunpack.c.l.b16 %v6313
      %v6710 = vunpack.c.l.b16 %v6314
      %v6711 = vunpack.c.h.b16 %v6314
      %v6712 = vunpack.c.l.b16 %v6315
      %v6713 = vunpack.c.h.b16 %v6315
      %v6714 = vunpack.c.l.b16 %v6316
      %v6715 = vunpack.c.l.b16 %v6317
      %v6716 = vunpack.c.h.b16 %v6317
      %v6717 = vunpack.c.l.b16 %v6318
      %v6718 = vunpack.c.h.b16 %v6318
      %v6719 = vunpack.c.l.b16 %v6319
      %v6720 = vpack.c.b16 %v6685, %v6680
      %v6721 = vpack.c.b16 %v6686, %v6681
      %v6722 = vpack.c.b16 %v6687, %v6682
      %v6723 = vpack.c.b16 %v6688, %v6683
      %v6724 = vpack.c.b16 %v6689, %v6684
      %v6725 = vpack.c.b16 %v6695, %v6690
      %v6726 = vpack.c.b16 %v6696, %v6691
      %v6727 = vpack.c.b16 %v6697, %v6692
      %v6728 = vpack.c.b16 %v6698, %v6693
      %v6729 = vpack.c.b16 %v6699, %v6694
      %v6730 = vpack.c.b16 %v6705, %v6700
      %v6731 = vpack.c.b16 %v6706, %v6701
      %v6732 = vpack.c.b16 %v6707, %v6702
      %v6733 = vpack.c.b16 %v6708, %v6703
      %v6734 = vpack.c.b16 %v6709, %v6704
      %v6735 = vpack.c.b16 %v6715, %v6710
      %v6736 = vpack.c.b16 %v6716, %v6711
      %v6737 = vpack.c.b16 %v6717, %v6712
      %v6738 = vpack.c.b16 %v6718, %v6713
      %v6739 = vpack.c.b16 %v6719, %v6714
      %v7044 = vunpack.c.l.b16 %v6320
      %v7045 = vunpack.c.h.b16 %v6320
      %v7046 = vunpack.c.l.b16 %v6321
      %v7047 = vunpack.c.h.b16 %v6321
      %v7048 = vunpack.c.l.b16 %v6322
      %v7049 = vunpack.c.h.b16 %v6322
      %v7050 = vunpack.c.l.b16 %v6323
      %v7051 = vunpack.c.l.b16 %v6324
      %v7052 = vunpack.c.h.b16 %v6324
      %v7053 = vunpack.c.l.b16 %v6325
      %v7054 = vunpack.c.h.b16 %v6325
      %v7055 = vunpack.c.l.b16 %v6326
      %v7056 = vunpack.c.h.b16 %v6326
      %v7057 = vunpack.c.l.b16 %v6327
      %v7058 = vunpack.c.l.b16 %v6328
      %v7059 = vunpack.c.h.b16 %v6328
      %v7060 = vunpack.c.l.b16 %v6329
      %v7061 = vunpack.c.h.b16 %v6329
      %v7062 = vunpack.c.l.b16 %v6330
      %v7063 = vunpack.c.h.b16 %v6330
      %v7064 = vunpack.c.l.b16 %v6331
      %v7065 = vunpack.c.l.b16 %v6332
      %v7066 = vunpack.c.h.b16 %v6332
      %v7067 = vunpack.c.l.b16 %v6333
      %v7068 = vunpack.c.h.b16 %v6333
      %v7069 = vunpack.c.l.b16 %v6334
      %v7070 = vunpack.c.h.b16 %v6334
      %v7071 = vunpack.c.l.b16 %v6335
      %v7072 = vunpack.c.l.b16 %v6336
      %v7073 = vunpack.c.h.b16 %v6336
      %v7074 = vunpack.c.l.b16 %v6337
      %v7075 = vunpack.c.h.b16 %v6337
      %v7076 = vunpack.c.l.b16 %v6338
      %v7077 = vunpack.c.h.b16 %v6338
      %v7078 = vunpack.c.l.b16 %v6339
      %v7079 = vunpack.c.l.b16 %v6340
      %v7080 = vunpack.c.h.b16 %v6340
      %v7081 = vunpack.c.l.b16 %v6341
      %v7082 = vunpack.c.h.b16 %v6341
      %v7083 = vunpack.c.l.b16 %v6342
      %v7084 = vunpack.c.h.b16 %v6342
      %v7085 = vunpack.c.l.b16 %v6343
      %v7086 = vunpack.c.l.b16 %v6344
      %v7087 = vunpack.c.h.b16 %v6344
      %v7088 = vunpack.c.l.b16 %v6345
      %v7089 = vunpack.c.h.b16 %v6345
      %v7090 = vunpack.c.l.b16 %v6346
      %v7091 = vunpack.c.h.b16 %v6346
      %v7092 = vunpack.c.l.b16 %v6347
      %v7093 = vunpack.c.l.b16 %v6348
      %v7094 = vunpack.c.h.b16 %v6348
      %v7095 = vunpack.c.l.b16 %v6349
      %v7096 = vunpack.c.h.b16 %v6349
      %v7097 = vunpack.c.l.b16 %v6350
      %v7098 = vunpack.c.h.b16 %v6350
      %v7099 = vunpack.c.l.b16 %v6351
      %v7100 = vunpack.c.l.b16 %v6352
      %v7101 = vunpack.c.h.b16 %v6352
      %v7102 = vunpack.c.l.b16 %v6353
      %v7103 = vunpack.c.h.b16 %v6353
      %v7104 = vunpack.c.l.b16 %v6354
      %v7105 = vunpack.c.h.b16 %v6354
      %v7106 = vunpack.c.l.b16 %v6355
      %v7107 = vunpack.c.l.b16 %v6356
      %v7108 = vunpack.c.h.b16 %v6356
      %v7109 = vunpack.c.l.b16 %v6357
      %v7110 = vunpack.c.h.b16 %v6357
      %v7111 = vunpack.c.l.b16 %v6358
      %v7112 = vunpack.c.h.b16 %v6358
      %v7113 = vunpack.c.l.b16 %v6359
      %v7114 = vunpack.c.l.b16 %v6360
      %v7115 = vunpack.c.h.b16 %v6360
      %v7116 = vunpack.c.l.b16 %v6361
      %v7117 = vunpack.c.h.b16 %v6361
      %v7118 = vunpack.c.l.b16 %v6362
      %v7119 = vunpack.c.h.b16 %v6362
      %v7120 = vunpack.c.l.b16 %v6363
      %v7121 = vunpack.c.l.b16 %v6364
      %v7122 = vunpack.c.h.b16 %v6364
      %v7123 = vunpack.c.l.b16 %v6365
      %v7124 = vunpack.c.h.b16 %v6365
      %v7125 = vunpack.c.l.b16 %v6366
      %v7126 = vunpack.c.h.b16 %v6366
      %v7127 = vunpack.c.l.b16 %v6367
      %v7128 = vunpack.c.l.b16 %v6368
      %v7129 = vunpack.c.h.b16 %v6368
      %v7130 = vunpack.c.l.b16 %v6369
      %v7131 = vunpack.c.h.b16 %v6369
      %v7132 = vunpack.c.l.b16 %v6370
      %v7133 = vunpack.c.h.b16 %v6370
      %v7134 = vunpack.c.l.b16 %v6371
      %v7135 = vunpack.c.l.b16 %v6372
      %v7136 = vunpack.c.h.b16 %v6372
      %v7137 = vunpack.c.l.b16 %v6373
      %v7138 = vunpack.c.h.b16 %v6373
      %v7139 = vunpack.c.l.b16 %v6374
      %v7140 = vunpack.c.h.b16 %v6374
      %v7141 = vunpack.c.l.b16 %v6375
      %v7142 = vunpack.c.l.b16 %v6376
      %v7143 = vunpack.c.h.b16 %v6376
      %v7144 = vunpack.c.l.b16 %v6377
      %v7145 = vunpack.c.h.b16 %v6377
      %v7146 = vunpack.c.l.b16 %v6378
      %v7147 = vunpack.c.h.b16 %v6378
      %v7148 = vunpack.c.l.b16 %v6379
      %v7149 = vunpack.c.l.b16 %v6380
      %v7150 = vunpack.c.h.b16 %v6380
      %v7151 = vunpack.c.l.b16 %v6381
      %v7152 = vunpack.c.h.b16 %v6381
      %v7153 = vunpack.c.l.b16 %v6382
      %v7154 = vunpack.c.h.b16 %v6382
      %v7155 = vunpack.c.l.b16 %v6383
      %v7156 = vunpack.c.l.b16 %v6384
      %v7157 = vunpack.c.h.b16 %v6384
      %v7158 = vunpack.c.l.b16 %v6385
      %v7159 = vunpack.c.h.b16 %v6385
      %v7160 = vunpack.c.l.b16 %v6386
      %v7161 = vunpack.c.h.b16 %v6386
      %v7162 = vunpack.c.l.b16 %v6387
      %v7163 = vunpack.c.l.b16 %v6388
      %v7164 = vunpack.c.h.b16 %v6388
      %v7165 = vunpack.c.l.b16 %v6389
      %v7166 = vunpack.c.h.b16 %v6389
      %v7167 = vunpack.c.l.b16 %v6390
      %v7168 = vunpack.c.h.b16 %v6390
      %v7169 = vunpack.c.l.b16 %v6391
      %v7170 = vunpack.c.l.b16 %v6392
      %v7171 = vunpack.c.h.b16 %v6392
      %v7172 = vunpack.c.l.b16 %v6393
      %v7173 = vunpack.c.h.b16 %v6393
      %v7174 = vunpack.c.l.b16 %v6394
      %v7175 = vunpack.c.h.b16 %v6394
      %v7176 = vunpack.c.l.b16 %v6395
      %v7177 = vunpack.c.l.b16 %v6396
      %v7178 = vunpack.c.h.b16 %v6396
      %v7179 = vunpack.c.l.b16 %v6397
      %v7180 = vunpack.c.h.b16 %v6397
      %v7181 = vunpack.c.l.b16 %v6398
      %v7182 = vunpack.c.h.b16 %v6398
      %v7183 = vunpack.c.l.b16 %v6399
      %v7184 = vunpack.c.l.b16 %v6400
      %v7185 = vunpack.c.h.b16 %v6400
      %v7186 = vunpack.c.l.b16 %v6401
      %v7187 = vunpack.c.h.b16 %v6401
      %v7188 = vunpack.c.l.b16 %v6402
      %v7189 = vunpack.c.h.b16 %v6402
      %v7190 = vunpack.c.l.b16 %v6403
      %v7191 = vunpack.c.l.b16 %v6404
      %v7192 = vunpack.c.h.b16 %v6404
      %v7193 = vunpack.c.l.b16 %v6405
      %v7194 = vunpack.c.h.b16 %v6405
      %v7195 = vunpack.c.l.b16 %v6406
      %v7196 = vunpack.c.h.b16 %v6406
      %v7197 = vunpack.c.l.b16 %v6407
      %v7198 = vunpack.c.l.b16 %v6408
      %v7199 = vunpack.c.h.b16 %v6408
      %v7200 = vunpack.c.l.b16 %v6409
      %v7201 = vunpack.c.h.b16 %v6409
      %v7202 = vunpack.c.l.b16 %v6410
      %v7203 = vunpack.c.h.b16 %v6410
      %v7204 = vunpack.c.l.b16 %v6411
      %v7205 = vunpack.c.l.b16 %v6412
      %v7206 = vunpack.c.h.b16 %v6412
      %v7207 = vunpack.c.l.b16 %v6413
      %v7208 = vunpack.c.h.b16 %v6413
      %v7209 = vunpack.c.l.b16 %v6414
      %v7210 = vunpack.c.h.b16 %v6414
      %v7211 = vunpack.c.l.b16 %v6415
      %v7212 = vunpack.c.l.b16 %v6416
      %v7213 = vunpack.c.h.b16 %v6416
      %v7214 = vunpack.c.l.b16 %v6417
      %v7215 = vunpack.c.h.b16 %v6417
      %v7216 = vunpack.c.l.b16 %v6418
      %v7217 = vunpack.c.h.b16 %v6418
      %v7218 = vunpack.c.l.b16 %v6419
      %v7219 = vunpack.c.l.b16 %v6420
      %v7220 = vunpack.c.h.b16 %v6420
      %v7221 = vunpack.c.l.b16 %v6421
      %v7222 = vunpack.c.h.b16 %v6421
      %v7223 = vunpack.c.l.b16 %v6422
      %v7224 = vunpack.c.h.b16 %v6422
      %v7225 = vunpack.c.l.b16 %v6423
      %v7226 = vunpack.c.l.b16 %v6424
      %v7227 = vunpack.c.h.b16 %v6424
      %v7228 = vunpack.c.l.b16 %v6425
      %v7229 = vunpack.c.h.b16 %v6425
      %v7230 = vunpack.c.l.b16 %v6426
      %v7231 = vunpack.c.h.b16 %v6426
      %v7232 = vunpack.c.l.b16 %v6427
      %v7233 = vunpack.c.l.b16 %v6428
      %v7234 = vunpack.c.h.b16 %v6428
      %v7235 = vunpack.c.l.b16 %v6429
      %v7236 = vunpack.c.h.b16 %v6429
      %v7237 = vunpack.c.l.b16 %v6430
      %v7238 = vunpack.c.h.b16 %v6430
      %v7239 = vunpack.c.l.b16 %v6431
      %v7240 = vunpack.c.l.b16 %v6432
      %v7241 = vunpack.c.h.b16 %v6432
      %v7242 = vunpack.c.l.b16 %v6433
      %v7243 = vunpack.c.h.b16 %v6433
      %v7244 = vunpack.c.l.b16 %v6434
      %v7245 = vunpack.c.h.b16 %v6434
      %v7246 = vunpack.c.l.b16 %v6435
      %v7247 = vunpack.c.l.b16 %v6436
      %v7248 = vunpack.c.h.b16 %v6436
      %v7249 = vunpack.c.l.b16 %v6437
      %v7250 = vunpack.c.h.b16 %v6437
      %v7251 = vunpack.c.l.b16 %v6438
      %v7252 = vunpack.c.h.b16 %v6438
      %v7253 = vunpack.c.l.b16 %v6439
      %v7254 = vunpack.c.l.b16 %v6440
      %v7255 = vunpack.c.h.b16 %v6440
      %v7256 = vunpack.c.l.b16 %v6441
      %v7257 = vunpack.c.h.b16 %v6441
      %v7258 = vunpack.c.l.b16 %v6442
      %v7259 = vunpack.c.h.b16 %v6442
      %v7260 = vunpack.c.l.b16 %v6443
      %v7261 = vunpack.c.l.b16 %v6444
      %v7262 = vunpack.c.h.b16 %v6444
      %v7263 = vunpack.c.l.b16 %v6445
      %v7264 = vunpack.c.h.b16 %v6445
      %v7265 = vunpack.c.l.b16 %v6446
      %v7266 = vunpack.c.h.b16 %v6446
      %v7267 = vunpack.c.l.b16 %v6447
      %v7268 = vunpack.c.l.b16 %v6448
      %v7269 = vunpack.c.h.b16 %v6448
      %v7270 = vunpack.c.l.b16 %v6449
      %v7271 = vunpack.c.h.b16 %v6449
      %v7272 = vunpack.c.l.b16 %v6450
      %v7273 = vunpack.c.h.b16 %v6450
      %v7274 = vunpack.c.l.b16 %v6451
      %v7275 = vunpack.c.l.b16 %v6452
      %v7276 = vunpack.c.h.b16 %v6452
      %v7277 = vunpack.c.l.b16 %v6453
      %v7278 = vunpack.c.h.b16 %v6453
      %v7279 = vunpack.c.l.b16 %v6454
      %v7280 = vunpack.c.h.b16 %v6454
      %v7281 = vunpack.c.l.b16 %v6455
      %v7282 = vunpack.c.l.b16 %v6456
      %v7283 = vunpack.c.h.b16 %v6456
      %v7284 = vunpack.c.l.b16 %v6457
      %v7285 = vunpack.c.h.b16 %v6457
      %v7286 = vunpack.c.l.b16 %v6458
      %v7287 = vunpack.c.h.b16 %v6458
      %v7288 = vunpack.c.l.b16 %v6459
      %v7289 = vunpack.c.l.b16 %v6460
      %v7290 = vunpack.c.h.b16 %v6460
      %v7291 = vunpack.c.l.b16 %v6461
      %v7292 = vunpack.c.h.b16 %v6461
      %v7293 = vunpack.c.l.b16 %v6462
      %v7294 = vunpack.c.h.b16 %v6462
      %v7295 = vunpack.c.l.b16 %v6463
      %v7296 = vunpack.c.l.b16 %v6464
      %v7297 = vunpack.c.h.b16 %v6464
      %v7298 = vunpack.c.l.b16 %v6465
      %v7299 = vunpack.c.h.b16 %v6465
      %v7300 = vunpack.c.l.b16 %v6466
      %v7301 = vunpack.c.h.b16 %v6466
      %v7302 = vunpack.c.l.b16 %v6467
      %v7303 = vunpack.c.l.b16 %v6468
      %v7304 = vunpack.c.h.b16 %v6468
      %v7305 = vunpack.c.l.b16 %v6469
      %v7306 = vunpack.c.h.b16 %v6469
      %v7307 = vunpack.c.l.b16 %v6470
      %v7308 = vunpack.c.h.b16 %v6470
      %v7309 = vunpack.c.l.b16 %v6471
      %v7310 = vunpack.c.l.b16 %v6472
      %v7311 = vunpack.c.h.b16 %v6472
      %v7312 = vunpack.c.l.b16 %v6473
      %v7313 = vunpack.c.h.b16 %v6473
      %v7314 = vunpack.c.l.b16 %v6474
      %v7315 = vunpack.c.h.b16 %v6474
      %v7316 = vunpack.c.l.b16 %v6475
      %v7317 = vunpack.c.l.b16 %v6476
      %v7318 = vunpack.c.h.b16 %v6476
      %v7319 = vunpack.c.l.b16 %v6477
      %v7320 = vunpack.c.h.b16 %v6477
      %v7321 = vunpack.c.l.b16 %v6478
      %v7322 = vunpack.c.h.b16 %v6478
      %v7323 = vunpack.c.l.b16 %v6479
      %v7324 = vunpack.c.l.b16 %v6480
      %v7325 = vunpack.c.h.b16 %v6480
      %v7326 = vunpack.c.l.b16 %v6481
      %v7327 = vunpack.c.h.b16 %v6481
      %v7328 = vunpack.c.l.b16 %v6482
      %v7329 = vunpack.c.h.b16 %v6482
      %v7330 = vunpack.c.l.b16 %v6483
      %v7331 = vunpack.c.l.b16 %v6484
      %v7332 = vunpack.c.h.b16 %v6484
      %v7333 = vunpack.c.l.b16 %v6485
      %v7334 = vunpack.c.h.b16 %v6485
      %v7335 = vunpack.c.l.b16 %v6486
      %v7336 = vunpack.c.h.b16 %v6486
      %v7337 = vunpack.c.l.b16 %v6487
      %v7338 = vunpack.c.l.b16 %v6488
      %v7339 = vunpack.c.h.b16 %v6488
      %v7340 = vunpack.c.l.b16 %v6489
      %v7341 = vunpack.c.h.b16 %v6489
      %v7342 = vunpack.c.l.b16 %v6490
      %v7343 = vunpack.c.h.b16 %v6490
      %v7344 = vunpack.c.l.b16 %v6491
      %v7345 = vunpack.c.l.b16 %v6492
      %v7346 = vunpack.c.h.b16 %v6492
      %v7347 = vunpack.c.l.b16 %v6493
      %v7348 = vunpack.c.h.b16 %v6493
      %v7349 = vunpack.c.l.b16 %v6494
      %v7350 = vunpack.c.h.b16 %v6494
      %v7351 = vunpack.c.l.b16 %v6495
      %v7352 = vunpack.c.l.b16 %v6496
      %v7353 = vunpack.c.h.b16 %v6496
      %v7354 = vunpack.c.l.b16 %v6497
      %v7355 = vunpack.c.h.b16 %v6497
      %v7356 = vunpack.c.l.b16 %v6498
      %v7357 = vunpack.c.h.b16 %v6498
      %v7358 = vunpack.c.l.b16 %v6499
      %v7359 = vunpack.c.l.b16 %v6500
      %v7360 = vunpack.c.h.b16 %v6500
      %v7361 = vunpack.c.l.b16 %v6501
      %v7362 = vunpack.c.h.b16 %v6501
      %v7363 = vunpack.c.l.b16 %v6502
      %v7364 = vunpack.c.h.b16 %v6502
      %v7365 = vunpack.c.l.b16 %v6503
      %v7366 = vunpack.c.l.b16 %v6504
      %v7367 = vunpack.c.h.b16 %v6504
      %v7368 = vunpack.c.l.b16 %v6505
      %v7369 = vunpack.c.h.b16 %v6505
      %v7370 = vunpack.c.l.b16 %v6506
      %v7371 = vunpack.c.h.b16 %v6506
      %v7372 = vunpack.c.l.b16 %v6507
      %v7373 = vunpack.c.l.b16 %v6508
      %v7374 = vunpack.c.h.b16 %v6508
      %v7375 = vunpack.c.l.b16 %v6509
      %v7376 = vunpack.c.h.b16 %v6509
      %v7377 = vunpack.c.l.b16 %v6510
      %v7378 = vunpack.c.h.b16 %v6510
      %v7379 = vunpack.c.l.b16 %v6511
      %v7380 = vunpack.c.l.b16 %v6512
      %v7381 = vunpack.c.h.b16 %v6512
      %v7382 = vunpack.c.l.b16 %v6513
      %v7383 = vunpack.c.h.b16 %v6513
      %v7384 = vunpack.c.l.b16 %v6514
      %v7385 = vunpack.c.h.b16 %v6514
      %v7386 = vunpack.c.l.b16 %v6515
      %v7387 = vunpack.c.l.b16 %v6516
      %v7388 = vunpack.c.h.b16 %v6516
      %v7389 = vunpack.c.l.b16 %v6517
      %v7390 = vunpack.c.h.b16 %v6517
      %v7391 = vunpack.c.l.b16 %v6518
      %v7392 = vunpack.c.h.b16 %v6518
      %v7393 = vunpack.c.l.b16 %v6519
      %v7394 = vunpack.c.l.b16 %v6520
      %v7395 = vunpack.c.h.b16 %v6520
      %v7396 = vunpack.c.l.b16 %v6521
      %v7397 = vunpack.c.h.b16 %v6521
      %v7398 = vunpack.c.l.b16 %v6522
      %v7399 = vunpack.c.h.b16 %v6522
      %v7400 = vunpack.c.l.b16 %v6523
      %v7401 = vunpack.c.l.b16 %v6524
      %v7402 = vunpack.c.h.b16 %v6524
      %v7403 = vunpack.c.l.b16 %v6525
      %v7404 = vunpack.c.h.b16 %v6525
      %v7405 = vunpack.c.l.b16 %v6526
      %v7406 = vunpack.c.h.b16 %v6526
      %v7407 = vunpack.c.l.b16 %v6527
      %v7408 = vunpack.c.l.b16 %v6528
      %v7409 = vunpack.c.h.b16 %v6528
      %v7410 = vunpack.c.l.b16 %v6529
      %v7411 = vunpack.c.h.b16 %v6529
      %v7412 = vunpack.c.l.b16 %v6530
      %v7413 = vunpack.c.h.b16 %v6530
      %v7414 = vunpack.c.l.b16 %v6531
      %v7415 = vunpack.c.l.b16 %v6532
      %v7416 = vunpack.c.h.b16 %v6532
      %v7417 = vunpack.c.l.b16 %v6533
      %v7418 = vunpack.c.h.b16 %v6533
      %v7419 = vunpack.c.l.b16 %v6534
      %v7420 = vunpack.c.h.b16 %v6534
      %v7421 = vunpack.c.l.b16 %v6535
      %v7422 = vunpack.c.l.b16 %v6536
      %v7423 = vunpack.c.h.b16 %v6536
      %v7424 = vunpack.c.l.b16 %v6537
      %v7425 = vunpack.c.h.b16 %v6537
      %v7426 = vunpack.c.l.b16 %v6538
      %v7427 = vunpack.c.h.b16 %v6538
      %v7428 = vunpack.c.l.b16 %v6539
      %v7429 = vunpack.c.l.b16 %v6540
      %v7430 = vunpack.c.h.b16 %v6540
      %v7431 = vunpack.c.l.b16 %v6541
      %v7432 = vunpack.c.h.b16 %v6541
      %v7433 = vunpack.c.l.b16 %v6542
      %v7434 = vunpack.c.h.b16 %v6542
      %v7435 = vunpack.c.l.b16 %v6543
      %v7436 = vunpack.c.l.b16 %v6544
      %v7437 = vunpack.c.h.b16 %v6544
      %v7438 = vunpack.c.l.b16 %v6545
      %v7439 = vunpack.c.h.b16 %v6545
      %v7440 = vunpack.c.l.b16 %v6546
      %v7441 = vunpack.c.h.b16 %v6546
      %v7442 = vunpack.c.l.b16 %v6547
      %v7443 = vunpack.c.l.b16 %v6548
      %v7444 = vunpack.c.h.b16 %v6548
      %v7445 = vunpack.c.l.b16 %v6549
      %v7446 = vunpack.c.h.b16 %v6549
      %v7447 = vunpack.c.l.b16 %v6550
      %v7448 = vunpack.c.h.b16 %v6550
      %v7449 = vunpack.c.l.b16 %v6551
      %v7450 = vunpack.c.l.b16 %v6552
      %v7451 = vunpack.c.h.b16 %v6552
      %v7452 = vunpack.c.l.b16 %v6553
      %v7453 = vunpack.c.h.b16 %v6553
      %v7454 = vunpack.c.l.b16 %v6554
      %v7455 = vunpack.c.h.b16 %v6554
      %v7456 = vunpack.c.l.b16 %v6555
      %v7457 = vunpack.c.l.b16 %v6556
      %v7458 = vunpack.c.h.b16 %v6556
      %v7459 = vunpack.c.l.b16 %v6557
      %v7460 = vunpack.c.h.b16 %v6557
      %v7461 = vunpack.c.l.b16 %v6558
      %v7462 = vunpack.c.h.b16 %v6558
      %v7463 = vunpack.c.l.b16 %v6559
      %v7464 = vunpack.c.l.b16 %v6560
      %v7465 = vunpack.c.h.b16 %v6560
      %v7466 = vunpack.c.l.b16 %v6561
      %v7467 = vunpack.c.h.b16 %v6561
      %v7468 = vunpack.c.l.b16 %v6562
      %v7469 = vunpack.c.h.b16 %v6562
      %v7470 = vunpack.c.l.b16 %v6563
      %v7471 = vunpack.c.l.b16 %v6564
      %v7472 = vunpack.c.h.b16 %v6564
      %v7473 = vunpack.c.l.b16 %v6565
      %v7474 = vunpack.c.h.b16 %v6565
      %v7475 = vunpack.c.l.b16 %v6566
      %v7476 = vunpack.c.h.b16 %v6566
      %v7477 = vunpack.c.l.b16 %v6567
      %v7478 = vunpack.c.l.b16 %v6568
      %v7479 = vunpack.c.h.b16 %v6568
      %v7480 = vunpack.c.l.b16 %v6569
      %v7481 = vunpack.c.h.b16 %v6569
      %v7482 = vunpack.c.l.b16 %v6570
      %v7483 = vunpack.c.h.b16 %v6570
      %v7484 = vunpack.c.l.b16 %v6571
      %v7485 = vunpack.c.l.b16 %v6572
      %v7486 = vunpack.c.h.b16 %v6572
      %v7487 = vunpack.c.l.b16 %v6573
      %v7488 = vunpack.c.h.b16 %v6573
      %v7489 = vunpack.c.l.b16 %v6574
      %v7490 = vunpack.c.h.b16 %v6574
      %v7491 = vunpack.c.l.b16 %v6575
      %v7492 = vunpack.c.l.b16 %v6576
      %v7493 = vunpack.c.h.b16 %v6576
      %v7494 = vunpack.c.l.b16 %v6577
      %v7495 = vunpack.c.h.b16 %v6577
      %v7496 = vunpack.c.l.b16 %v6578
      %v7497 = vunpack.c.h.b16 %v6578
      %v7498 = vunpack.c.l.b16 %v6579
      %v7499 = vunpack.c.l.b16 %v6580
      %v7500 = vunpack.c.h.b16 %v6580
      %v7501 = vunpack.c.l.b16 %v6581
      %v7502 = vunpack.c.h.b16 %v6581
      %v7503 = vunpack.c.l.b16 %v6582
      %v7504 = vunpack.c.h.b16 %v6582
      %v7505 = vunpack.c.l.b16 %v6583
      %v7506 = vunpack.c.l.b16 %v6584
      %v7507 = vunpack.c.h.b16 %v6584
      %v7508 = vunpack.c.l.b16 %v6585
      %v7509 = vunpack.c.h.b16 %v6585
      %v7510 = vunpack.c.l.b16 %v6586
      %v7511 = vunpack.c.h.b16 %v6586
      %v7512 = vunpack.c.l.b16 %v6587
      %v7513 = vunpack.c.l.b16 %v6588
      %v7514 = vunpack.c.h.b16 %v6588
      %v7515 = vunpack.c.l.b16 %v6589
      %v7516 = vunpack.c.h.b16 %v6589
      %v7517 = vunpack.c.l.b16 %v6590
      %v7518 = vunpack.c.h.b16 %v6590
      %v7519 = vunpack.c.l.b16 %v6591
      %v7520 = vunpack.c.l.b16 %v6592
      %v7521 = vunpack.c.h.b16 %v6592
      %v7522 = vunpack.c.l.b16 %v6593
      %v7523 = vunpack.c.h.b16 %v6593
      %v7524 = vunpack.c.l.b16 %v6594
      %v7525 = vunpack.c.h.b16 %v6594
      %v7526 = vunpack.c.l.b16 %v6595
      %v7527 = vunpack.c.l.b16 %v6596
      %v7528 = vunpack.c.h.b16 %v6596
      %v7529 = vunpack.c.l.b16 %v6597
      %v7530 = vunpack.c.h.b16 %v6597
      %v7531 = vunpack.c.l.b16 %v6598
      %v7532 = vunpack.c.h.b16 %v6598
      %v7533 = vunpack.c.l.b16 %v6599
      %v7534 = vunpack.c.l.b16 %v6600
      %v7535 = vunpack.c.h.b16 %v6600
      %v7536 = vunpack.c.l.b16 %v6601
      %v7537 = vunpack.c.h.b16 %v6601
      %v7538 = vunpack.c.l.b16 %v6602
      %v7539 = vunpack.c.h.b16 %v6602
      %v7540 = vunpack.c.l.b16 %v6603
      %v7541 = vunpack.c.l.b16 %v6604
      %v7542 = vunpack.c.h.b16 %v6604
      %v7543 = vunpack.c.l.b16 %v6605
      %v7544 = vunpack.c.h.b16 %v6605
      %v7545 = vunpack.c.l.b16 %v6606
      %v7546 = vunpack.c.h.b16 %v6606
      %v7547 = vunpack.c.l.b16 %v6607
      %v7548 = vpack.c.b16 %v7051, %v7044
      %v7549 = vpack.c.b16 %v7052, %v7045
      %v7550 = vpack.c.b16 %v7053, %v7046
      %v7551 = vpack.c.b16 %v7054, %v7047
      %v7552 = vpack.c.b16 %v7055, %v7048
      %v7553 = vpack.c.b16 %v7056, %v7049
      %v7554 = vpack.c.b16 %v7057, %v7050
      %v7555 = vpack.c.b16 %v7065, %v7058
      %v7556 = vpack.c.b16 %v7066, %v7059
      %v7557 = vpack.c.b16 %v7067, %v7060
      %v7558 = vpack.c.b16 %v7068, %v7061
      %v7559 = vpack.c.b16 %v7069, %v7062
      %v7560 = vpack.c.b16 %v7070, %v7063
      %v7561 = vpack.c.b16 %v7071, %v7064
      %v7562 = vpack.c.b16 %v7079, %v7072
      %v7563 = vpack.c.b16 %v7080, %v7073
      %v7564 = vpack.c.b16 %v7081, %v7074
      %v7565 = vpack.c.b16 %v7082, %v7075
      %v7566 = vpack.c.b16 %v7083, %v7076
      %v7567 = vpack.c.b16 %v7084, %v7077
      %v7568 = vpack.c.b16 %v7085, %v7078
      %v7569 = vpack.c.b16 %v7093, %v7086
      %v7570 = vpack.c.b16 %v7094, %v7087
      %v7571 = vpack.c.b16 %v7095, %v7088
      %v7572 = vpack.c.b16 %v7096, %v7089
      %v7573 = vpack.c.b16 %v7097, %v7090
      %v7574 = vpack.c.b16 %v7098, %v7091
      %v7575 = vpack.c.b16 %v7099, %v7092
      %v7576 = vpack.c.b16 %v7107, %v7100
      %v7577 = vpack.c.b16 %v7108, %v7101
      %v7578 = vpack.c.b16 %v7109, %v7102
      %v7579 = vpack.c.b16 %v7110, %v7103
      %v7580 = vpack.c.b16 %v7111, %v7104
      %v7581 = vpack.c.b16 %v7112, %v7105
      %v7582 = vpack.c.b16 %v7113, %v7106
      %v7583 = vpack.c.b16 %v7121, %v7114
      %v7584 = vpack.c.b16 %v7122, %v7115
      %v7585 = vpack.c.b16 %v7123, %v7116
      %v7586 = vpack.c.b16 %v7124, %v7117
      %v7587 = vpack.c.b16 %v7125, %v7118
      %v7588 = vpack.c.b16 %v7126, %v7119
      %v7589 = vpack.c.b16 %v7127, %v7120
      %v7590 = vpack.c.b16 %v7135, %v7128
      %v7591 = vpack.c.b16 %v7136, %v7129
      %v7592 = vpack.c.b16 %v7137, %v7130
      %v7593 = vpack.c.b16 %v7138, %v7131
      %v7594 = vpack.c.b16 %v7139, %v7132
      %v7595 = vpack.c.b16 %v7140, %v7133
      %v7596 = vpack.c.b16 %v7141, %v7134
      %v7597 = vpack.c.b16 %v7149, %v7142
      %v7598 = vpack.c.b16 %v7150, %v7143
      %v7599 = vpack.c.b16 %v7151, %v7144
      %v7600 = vpack.c.b16 %v7152, %v7145
      %v7601 = vpack.c.b16 %v7153, %v7146
      %v7602 = vpack.c.b16 %v7154, %v7147
      %v7603 = vpack.c.b16 %v7155, %v7148
      %v7604 = vpack.c.b16 %v7163, %v7156
      %v7605 = vpack.c.b16 %v7164, %v7157
      %v7606 = vpack.c.b16 %v7165, %v7158
      %v7607 = vpack.c.b16 %v7166, %v7159
      %v7608 = vpack.c.b16 %v7167, %v7160
      %v7609 = vpack.c.b16 %v7168, %v7161
      %v7610 = vpack.c.b16 %v7169, %v7162
      %v7611 = vpack.c.b16 %v7177, %v7170
      %v7612 = vpack.c.b16 %v7178, %v7171
      %v7613 = vpack.c.b16 %v7179, %v7172
      %v7614 = vpack.c.b16 %v7180, %v7173
      %v7615 = vpack.c.b16 %v7181, %v7174
      %v7616 = vpack.c.b16 %v7182, %v7175
      %v7617 = vpack.c.b16 %v7183, %v7176
      %v7618 = vpack.c.b16 %v7191, %v7184
      %v7619 = vpack.c.b16 %v7192, %v7185
      %v7620 = vpack.c.b16 %v7193, %v7186
      %v7621 = vpack.c.b16 %v7194, %v7187
      %v7622 = vpack.c.b16 %v7195, %v7188
      %v7623 = vpack.c.b16 %v7196, %v7189
      %v7624 = vpack.c.b16 %v7197, %v7190
      %v7625 = vpack.c.b16 %v7205, %v7198
      %v7626 = vpack.c.b16 %v7206, %v7199
      %v7627 = vpack.c.b16 %v7207, %v7200
      %v7628 = vpack.c.b16 %v7208, %v7201
      %v7629 = vpack.c.b16 %v7209, %v7202
      %v7630 = vpack.c.b16 %v7210, %v7203
      %v7631 = vpack.c.b16 %v7211, %v7204
      %v7632 = vpack.c.b16 %v7219, %v7212
      %v7633 = vpack.c.b16 %v7220, %v7213
      %v7634 = vpack.c.b16 %v7221, %v7214
      %v7635 = vpack.c.b16 %v7222, %v7215
      %v7636 = vpack.c.b16 %v7223, %v7216
      %v7637 = vpack.c.b16 %v7224, %v7217
      %v7638 = vpack.c.b16 %v7225, %v7218
      %v7639 = vpack.c.b16 %v7233, %v7226
      %v7640 = vpack.c.b16 %v7234, %v7227
      %v7641 = vpack.c.b16 %v7235, %v7228
      %v7642 = vpack.c.b16 %v7236, %v7229
      %v7643 = vpack.c.b16 %v7237, %v7230
      %v7644 = vpack.c.b16 %v7238, %v7231
      %v7645 = vpack.c.b16 %v7239, %v7232
      %v7646 = vpack.c.b16 %v7247, %v7240
      %v7647 = vpack.c.b16 %v7248, %v7241
      %v7648 = vpack.c.b16 %v7249, %v7242
      %v7649 = vpack.c.b16 %v7250, %v7243
      %v7650 = vpack.c.b16 %v7251, %v7244
      %v7651 = vpack.c.b16 %v7252, %v7245
      %v7652 = vpack.c.b16 %v7253, %v7246
      %v7653 = vpack.c.b16 %v7261, %v7254
      %v7654 = vpack.c.b16 %v7262, %v7255
      %v7655 = vpack.c.b16 %v7263, %v7256
      %v7656 = vpack.c.b16 %v7264, %v7257
      %v7657 = vpack.c.b16 %v7265, %v7258
      %v7658 = vpack.c.b16 %v7266, %v7259
      %v7659 = vpack.c.b16 %v7267, %v7260
      %v7660 = vpack.c.b16 %v7275, %v7268
      %v7661 = vpack.c.b16 %v7276, %v7269
      %v7662 = vpack.c.b16 %v7277, %v7270
      %v7663 = vpack.c.b16 %v7278, %v7271
      %v7664 = vpack.c.b16 %v7279, %v7272
      %v7665 = vpack.c.b16 %v7280, %v7273
      %v7666 = vpack.c.b16 %v7281, %v7274
      %v7667 = vpack.c.b16 %v7289, %v7282
      %v7668 = vpack.c.b16 %v7290, %v7283
      %v7669 = vpack.c.b16 %v7291, %v7284
      %v7670 = vpack.c.b16 %v7292, %v7285
      %v7671 = vpack.c.b16 %v7293, %v7286
      %v7672 = vpack.c.b16 %v7294, %v7287
      %v7673 = vpack.c.b16 %v7295, %v7288
      %v7674 = vpack.c.b16 %v7303, %v7296
      %v7675 = vpack.c.b16 %v7304, %v7297
      %v7676 = vpack.c.b16 %v7305, %v7298
      %v7677 = vpack.c.b16 %v7306, %v7299
      %v7678 = vpack.c.b16 %v7307, %v7300
      %v7679 = vpack.c.b16 %v7308, %v7301
      %v7680 = vpack.c.b16 %v7309, %v7302
      %v7681 = vpack.c.b16 %v7317, %v7310
      %v7682 = vpack.c.b16 %v7318, %v7311
      %v7683 = vpack.c.b16 %v7319, %v7312
      %v7684 = vpack.c.b16 %v7320, %v7313
      %v7685 = vpack.c.b16 %v7321, %v7314
      %v7686 = vpack.c.b16 %v7322, %v7315
      %v7687 = vpack.c.b16 %v7323, %v7316
      %v7688 = vpack.c.b16 %v7331, %v7324
      %v7689 = vpack.c.b16 %v7332, %v7325
      %v7690 = vpack.c.b16 %v7333, %v7326
      %v7691 = vpack.c.b16 %v7334, %v7327
      %v7692 = vpack.c.b16 %v7335, %v7328
      %v7693 = vpack.c.b16 %v7336, %v7329
      %v7694 = vpack.c.b16 %v7337, %v7330
      %v7695 = vpack.c.b16 %v7345, %v7338
      %v7696 = vpack.c.b16 %v7346, %v7339
      %v7697 = vpack.c.b16 %v7347, %v7340
      %v7698 = vpack.c.b16 %v7348, %v7341
      %v7699 = vpack.c.b16 %v7349, %v7342
      %v7700 = vpack.c.b16 %v7350, %v7343
      %v7701 = vpack.c.b16 %v7351, %v7344
      %v7702 = vpack.c.b16 %v7359, %v7352
      %v7703 = vpack.c.b16 %v7360, %v7353
      %v7704 = vpack.c.b16 %v7361, %v7354
      %v7705 = vpack.c.b16 %v7362, %v7355
      %v7706 = vpack.c.b16 %v7363, %v7356
      %v7707 = vpack.c.b16 %v7364, %v7357
      %v7708 = vpack.c.b16 %v7365, %v7358
      %v7709 = vpack.c.b16 %v7373, %v7366
      %v7710 = vpack.c.b16 %v7374, %v7367
      %v7711 = vpack.c.b16 %v7375, %v7368
      %v7712 = vpack.c.b16 %v7376, %v7369
      %v7713 = vpack.c.b16 %v7377, %v7370
      %v7714 = vpack.c.b16 %v7378, %v7371
      %v7715 = vpack.c.b16 %v7379, %v7372
      %v7716 = vpack.c.b16 %v7387, %v7380
      %v7717 = vpack.c.b16 %v7388, %v7381
      %v7718 = vpack.c.b16 %v7389, %v7382
      %v7719 = vpack.c.b16 %v7390, %v7383
      %v7720 = vpack.c.b16 %v7391, %v7384
      %v7721 = vpack.c.b16 %v7392, %v7385
      %v7722 = vpack.c.b16 %v7393, %v7386
      %v7723 = vpack.c.b16 %v7401, %v7394
      %v7724 = vpack.c.b16 %v7402, %v7395
      %v7725 = vpack.c.b16 %v7403, %v7396
      %v7726 = vpack.c.b16 %v7404, %v7397
      %v7727 = vpack.c.b16 %v7405, %v7398
      %v7728 = vpack.c.b16 %v7406, %v7399
      %v7729 = vpack.c.b16 %v7407, %v7400
      %v7730 = vpack.c.b16 %v7415, %v7408
      %v7731 = vpack.c.b16 %v7416, %v7409
      %v7732 = vpack.c.b16 %v7417, %v7410
      %v7733 = vpack.c.b16 %v7418, %v7411
      %v7734 = vpack.c.b16 %v7419, %v7412
      %v7735 = vpack.c.b16 %v7420, %v7413
      %v7736 = vpack.c.b16 %v7421, %v7414
      %v7737 = vpack.c.b16 %v7429, %v7422
      %v7738 = vpack.c.b16 %v7430, %v7423
      %v7739 = vpack.c.b16 %v7431, %v7424
      %v7740 = vpack.c.b16 %v7432, %v7425
      %v7741 = vpack.c.b16 %v7433, %v7426
      %v7742 = vpack.c.b16 %v7434, %v7427
      %v7743 = vpack.c.b16 %v7435, %v7428
      %v7744 = vpack.c.b16 %v7443, %v7436
      %v7745 = vpack.c.b16 %v7444, %v7437
      %v7746 = vpack.c.b16 %v7445, %v7438
      %v7747 = vpack.c.b16 %v7446, %v7439
      %v7748 = vpack.c.b16 %v7447, %v7440
      %v7749 = vpack.c.b16 %v7448, %v7441
      %v7750 = vpack.c.b16 %v7449, %v7442
      %v7751 = vpack.c.b16 %v7457, %v7450
      %v7752 = vpack.c.b16 %v7458, %v7451
      %v7753 = vpack.c.b16 %v7459, %v7452
      %v7754 = vpack.c.b16 %v7460, %v7453
      %v7755 = vpack.c.b16 %v7461, %v7454
      %v7756 = vpack.c.b16 %v7462, %v7455
      %v7757 = vpack.c.b16 %v7463, %v7456
      %v7758 = vpack.c.b16 %v7471, %v7464
      %v7759 = vpack.c.b16 %v7472, %v7465
      %v7760 = vpack.c.b16 %v7473, %v7466
      %v7761 = vpack.c.b16 %v7474, %v7467
      %v7762 = vpack.c.b16 %v7475, %v7468
      %v7763 = vpack.c.b16 %v7476, %v7469
      %v7764 = vpack.c.b16 %v7477, %v7470
      %v7765 = vpack.c.b16 %v7485, %v7478
      %v7766 = vpack.c.b16 %v7486, %v7479
      %v7767 = vpack.c.b16 %v7487, %v7480
      %v7768 = vpack.c.b16 %v7488, %v7481
      %v7769 = vpack.c.b16 %v7489, %v7482
      %v7770 = vpack.c.b16 %v7490, %v7483
      %v7771 = vpack.c.b16 %v7491, %v7484
      %v7772 = vpack.c.b16 %v7499, %v7492
      %v7773 = vpack.c.b16 %v7500, %v7493
      %v7774 = vpack.c.b16 %v7501, %v7494
      %v7775 = vpack.c.b16 %v7502, %v7495
      %v7776 = vpack.c.b16 %v7503, %v7496
      %v7777 = vpack.c.b16 %v7504, %v7497
      %v7778 = vpack.c.b16 %v7505, %v7498
      %v7779 = vpack.c.b16 %v7513, %v7506
      %v7780 = vpack.c.b16 %v7514, %v7507
      %v7781 = vpack.c.b16 %v7515, %v7508
      %v7782 = vpack.c.b16 %v7516, %v7509
      %v7783 = vpack.c.b16 %v7517, %v7510
      %v7784 = vpack.c.b16 %v7518, %v7511
      %v7785 = vpack.c.b16 %v7519, %v7512
      %v7786 = vpack.c.b16 %v7527, %v7520
      %v7787 = vpack.c.b16 %v7528, %v7521
      %v7788 = vpack.c.b16 %v7529, %v7522
      %v7789 = vpack.c.b16 %v7530, %v7523
      %v7790 = vpack.c.b16 %v7531, %v7524
      %v7791 = vpack.c.b16 %v7532, %v7525
      %v7792 = vpack.c.b16 %v7533, %v7526
      %v7793 = vpack.c.b16 %v7541, %v7534
      %v7794 = vpack.c.b16 %v7542, %v7535
      %v7795 = vpack.c.b16 %v7543, %v7536
      %v7796 = vpack.c.b16 %v7544, %v7537
      %v7797 = vpack.c.b16 %v7545, %v7538
      %v7798 = vpack.c.b16 %v7546, %v7539
      %v7799 = vpack.c.b16 %v7547, %v7540
      %vm8052 = vcmask 523264
      %v8054 = vsel %vm8052, %v6724, 0
      %v8057 = vsel %vm8052, %v6729, 0
      %v8060 = vsel %vm8052, %v6734, 0
      %v8063 = vsel %vm8052, %v6739, 0
      %8065 = vmatpush.bf16.msra.mxu0 %v7597
      %8066 = vmatpush.bf16.msra.mxu0 %v7590
      %8067 = vmatpush.bf16.msra.mxu0 %v7583
      %8068 = vmatpush.bf16.msra.mxu0 %v7576
      %8069 = vmatpush.bf16.msra.mxu0 %v7569
      %8070 = vmatpush.bf16.msra.mxu0 %v7562
      %8071 = vmatpush.bf16.msra.mxu0 %v7555
      %8072 = vmatpush.bf16.msra.mxu0 %v7548
      %8073 = vmatmul.bf16.gmra.mxu0 %v6720
      %v8074 = vpop.f32.mrf.mxu0
      %v8075 = vadd.f32 %v6619, %v8074
      %v8076 = vpop.f32.mrf.mxu0
      %v8077 = vadd.f32 %v6624, %v8076
      %8078 = vmatmul.bf16.gmra.mxu0 %v6725
      %v8079 = vpop.f32.mrf.mxu0
      %v8080 = vadd.f32 %v6629, %v8079
      %v8081 = vpop.f32.mrf.mxu0
      %v8082 = vadd.f32 %v6634, %v8081
      %8083 = vmatmul.bf16.gmra.mxu0 %v6730
      %v8084 = vpop.f32.mrf.mxu0
      %v8085 = vadd.f32 %v6639, %v8084
      %v8086 = vpop.f32.mrf.mxu0
      %v8087 = vadd.f32 %v6644, %v8086
      %8088 = vmatmul.bf16.gmra.mxu0 %v6735
      %v8089 = vpop.f32.mrf.mxu0
      %v8090 = vadd.f32 %v6649, %v8089
      %v8091 = vpop.f32.mrf.mxu0
      %v8092 = vadd.f32 %v6654, %v8091
      %8093 = vdwg.mxu0
      %8094 = vmatpush.bf16.msra.mxu0 %v7653
      %8095 = vmatpush.bf16.msra.mxu0 %v7646
      %8096 = vmatpush.bf16.msra.mxu0 %v7639
      %8097 = vmatpush.bf16.msra.mxu0 %v7632
      %8098 = vmatpush.bf16.msra.mxu0 %v7625
      %8099 = vmatpush.bf16.msra.mxu0 %v7618
      %8100 = vmatpush.bf16.msra.mxu0 %v7611
      %8101 = vmatpush.bf16.msra.mxu0 %v7604
      %8102 = vmatmul.bf16.gmra.mxu0 %v6721
      %v8103 = vpop.f32.mrf.mxu0
      %v8104 = vadd.f32 %v8075, %v8103
      %v8105 = vpop.f32.mrf.mxu0
      %v8106 = vadd.f32 %v8077, %v8105
      %8107 = vmatmul.bf16.gmra.mxu0 %v6726
      %v8108 = vpop.f32.mrf.mxu0
      %v8109 = vadd.f32 %v8080, %v8108
      %v8110 = vpop.f32.mrf.mxu0
      %v8111 = vadd.f32 %v8082, %v8110
      %8112 = vmatmul.bf16.gmra.mxu0 %v6731
      %v8113 = vpop.f32.mrf.mxu0
      %v8114 = vadd.f32 %v8085, %v8113
      %v8115 = vpop.f32.mrf.mxu0
      %v8116 = vadd.f32 %v8087, %v8115
      %8117 = vmatmul.bf16.gmra.mxu0 %v6736
      %v8118 = vpop.f32.mrf.mxu0
      %v8119 = vadd.f32 %v8090, %v8118
      %v8120 = vpop.f32.mrf.mxu0
      %v8121 = vadd.f32 %v8092, %v8120
      %8122 = vdwg.mxu0
      %8123 = vmatpush.bf16.msra.mxu0 %v7709
      %8124 = vmatpush.bf16.msra.mxu0 %v7702
      %8125 = vmatpush.bf16.msra.mxu0 %v7695
      %8126 = vmatpush.bf16.msra.mxu0 %v7688
      %8127 = vmatpush.bf16.msra.mxu0 %v7681
      %8128 = vmatpush.bf16.msra.mxu0 %v7674
      %8129 = vmatpush.bf16.msra.mxu0 %v7667
      %8130 = vmatpush.bf16.msra.mxu0 %v7660
      %8131 = vmatmul.bf16.gmra.mxu0 %v6722
      %v8132 = vpop.f32.mrf.mxu0
      %v8133 = vadd.f32 %v8104, %v8132
      %v8134 = vpop.f32.mrf.mxu0
      %v8135 = vadd.f32 %v8106, %v8134
      %8136 = vmatmul.bf16.gmra.mxu0 %v6727
      %v8137 = vpop.f32.mrf.mxu0
      %v8138 = vadd.f32 %v8109, %v8137
      %v8139 = vpop.f32.mrf.mxu0
      %v8140 = vadd.f32 %v8111, %v8139
      %8141 = vmatmul.bf16.gmra.mxu0 %v6732
      %v8142 = vpop.f32.mrf.mxu0
      %v8143 = vadd.f32 %v8114, %v8142
      %v8144 = vpop.f32.mrf.mxu0
      %v8145 = vadd.f32 %v8116, %v8144
      %8146 = vmatmul.bf16.gmra.mxu0 %v6737
      %v8147 = vpop.f32.mrf.mxu0
      %v8148 = vadd.f32 %v8119, %v8147
      %v8149 = vpop.f32.mrf.mxu0
      %v8150 = vadd.f32 %v8121, %v8149
      %8151 = vdwg.mxu0
      %8152 = vmatpush.bf16.msra.mxu0 %v7765
      %8153 = vmatpush.bf16.msra.mxu0 %v7758
      %8154 = vmatpush.bf16.msra.mxu0 %v7751
      %8155 = vmatpush.bf16.msra.mxu0 %v7744
      %8156 = vmatpush.bf16.msra.mxu0 %v7737
      %8157 = vmatpush.bf16.msra.mxu0 %v7730
      %8158 = vmatpush.bf16.msra.mxu0 %v7723
      %8159 = vmatpush.bf16.msra.mxu0 %v7716
      %8160 = vmatmul.bf16.gmra.mxu0 %v6723
      %v8161 = vpop.f32.mrf.mxu0
      %v8162 = vadd.f32 %v8133, %v8161
      %v8163 = vpop.f32.mrf.mxu0
      %v8164 = vadd.f32 %v8135, %v8163
      %8165 = vmatmul.bf16.gmra.mxu0 %v6728
      %v8166 = vpop.f32.mrf.mxu0
      %v8167 = vadd.f32 %v8138, %v8166
      %v8168 = vpop.f32.mrf.mxu0
      %v8169 = vadd.f32 %v8140, %v8168
      %8170 = vmatmul.bf16.gmra.mxu0 %v6733
      %v8171 = vpop.f32.mrf.mxu0
      %v8172 = vadd.f32 %v8143, %v8171
      %v8173 = vpop.f32.mrf.mxu0
      %v8174 = vadd.f32 %v8145, %v8173
      %8175 = vmatmul.bf16.gmra.mxu0 %v6738
      %v8176 = vpop.f32.mrf.mxu0
      %v8177 = vadd.f32 %v8148, %v8176
      %v8178 = vpop.f32.mrf.mxu0
      %v8179 = vadd.f32 %v8150, %v8178
      %8180 = vdwg.mxu0
      %8181 = vmatpush.bf16.msra.mxu0 0
      %8182 = vmatpush.bf16.msra.mxu0 0
      %8183 = vmatpush.bf16.msra.mxu0 0
      %8184 = vmatpush.bf16.msra.mxu0 0
      %8185 = vmatpush.bf16.msra.mxu0 %v7793
      %8186 = vmatpush.bf16.msra.mxu0 %v7786
      %8187 = vmatpush.bf16.msra.mxu0 %v7779
      %8188 = vmatpush.bf16.msra.mxu0 %v7772
      %8189 = vmatmul.bf16.gmra.mxu0 %v8054
      %v8190 = vpop.f32.mrf.mxu0
      %v8191 = vadd.f32 %v8162, %v8190
      %v8192 = vpop.f32.mrf.mxu0
      %v8193 = vadd.f32 %v8164, %v8192
      %8194 = vmatmul.bf16.gmra.mxu0 %v8057
      %v8195 = vpop.f32.mrf.mxu0
      %v8196 = vadd.f32 %v8167, %v8195
      %v8197 = vpop.f32.mrf.mxu0
      %v8198 = vadd.f32 %v8169, %v8197
      %8199 = vmatmul.bf16.gmra.mxu0 %v8060
      %v8200 = vpop.f32.mrf.mxu0
      %v8201 = vadd.f32 %v8172, %v8200
      %v8202 = vpop.f32.mrf.mxu0
      %v8203 = vadd.f32 %v8174, %v8202
      %8204 = vmatmul.bf16.gmra.mxu0 %v8063
      %v8205 = vpop.f32.mrf.mxu0
      %v8206 = vadd.f32 %v8177, %v8205
      %v8207 = vpop.f32.mrf.mxu0
      %v8208 = vadd.f32 %v8179, %v8207
      %8209 = vdwg.mxu0
      %8210 = vmatpush.bf16.msra.mxu0 %v7598
      %8211 = vmatpush.bf16.msra.mxu0 %v7591
      %8212 = vmatpush.bf16.msra.mxu0 %v7584
      %8213 = vmatpush.bf16.msra.mxu0 %v7577
      %8214 = vmatpush.bf16.msra.mxu0 %v7570
      %8215 = vmatpush.bf16.msra.mxu0 %v7563
      %8216 = vmatpush.bf16.msra.mxu0 %v7556
      %8217 = vmatpush.bf16.msra.mxu0 %v7549
      %8218 = vmatmul.bf16.gmra.mxu0 %v6720
      %v8219 = vpop.f32.mrf.mxu0
      %v8220 = vadd.f32 %v6619, %v8219
      %v8221 = vpop.f32.mrf.mxu0
      %v8222 = vadd.f32 %v6624, %v8221
      %8223 = vmatmul.bf16.gmra.mxu0 %v6725
      %v8224 = vpop.f32.mrf.mxu0
      %v8225 = vadd.f32 %v6629, %v8224
      %v8226 = vpop.f32.mrf.mxu0
      %v8227 = vadd.f32 %v6634, %v8226
      %8228 = vmatmul.bf16.gmra.mxu0 %v6730
      %v8229 = vpop.f32.mrf.mxu0
      %v8230 = vadd.f32 %v6639, %v8229
      %v8231 = vpop.f32.mrf.mxu0
      %v8232 = vadd.f32 %v6644, %v8231
      %8233 = vmatmul.bf16.gmra.mxu0 %v6735
      %v8234 = vpop.f32.mrf.mxu0
      %v8235 = vadd.f32 %v6649, %v8234
      %v8236 = vpop.f32.mrf.mxu0
      %v8237 = vadd.f32 %v6654, %v8236
      %8238 = vdwg.mxu0
      %8239 = vmatpush.bf16.msra.mxu0 %v7654
      %8240 = vmatpush.bf16.msra.mxu0 %v7647
      %8241 = vmatpush.bf16.msra.mxu0 %v7640
      %8242 = vmatpush.bf16.msra.mxu0 %v7633
      %8243 = vmatpush.bf16.msra.mxu0 %v7626
      %8244 = vmatpush.bf16.msra.mxu0 %v7619
      %8245 = vmatpush.bf16.msra.mxu0 %v7612
      %8246 = vmatpush.bf16.msra.mxu0 %v7605
      %8247 = vmatmul.bf16.gmra.mxu0 %v6721
      %v8248 = vpop.f32.mrf.mxu0
      %v8249 = vadd.f32 %v8220, %v8248
      %v8250 = vpop.f32.mrf.mxu0
      %v8251 = vadd.f32 %v8222, %v8250
      %8252 = vmatmul.bf16.gmra.mxu0 %v6726
      %v8253 = vpop.f32.mrf.mxu0
      %v8254 = vadd.f32 %v8225, %v8253
      %v8255 = vpop.f32.mrf.mxu0
      %v8256 = vadd.f32 %v8227, %v8255
      %8257 = vmatmul.bf16.gmra.mxu0 %v6731
      %v8258 = vpop.f32.mrf.mxu0
      %v8259 = vadd.f32 %v8230, %v8258
      %v8260 = vpop.f32.mrf.mxu0
      %v8261 = vadd.f32 %v8232, %v8260
      %8262 = vmatmul.bf16.gmra.mxu0 %v6736
      %v8263 = vpop.f32.mrf.mxu0
      %v8264 = vadd.f32 %v8235, %v8263
      %v8265 = vpop.f32.mrf.mxu0
      %v8266 = vadd.f32 %v8237, %v8265
      %8267 = vdwg.mxu0
      %8268 = vmatpush.bf16.msra.mxu0 %v7710
      %8269 = vmatpush.bf16.msra.mxu0 %v7703
      %8270 = vmatpush.bf16.msra.mxu0 %v7696
      %8271 = vmatpush.bf16.msra.mxu0 %v7689
      %8272 = vmatpush.bf16.msra.mxu0 %v7682
      %8273 = vmatpush.bf16.msra.mxu0 %v7675
      %8274 = vmatpush.bf16.msra.mxu0 %v7668
      %8275 = vmatpush.bf16.msra.mxu0 %v7661
      %8276 = vmatmul.bf16.gmra.mxu0 %v6722
      %v8277 = vpop.f32.mrf.mxu0
      %v8278 = vadd.f32 %v8249, %v8277
      %v8279 = vpop.f32.mrf.mxu0
      %v8280 = vadd.f32 %v8251, %v8279
      %8281 = vmatmul.bf16.gmra.mxu0 %v6727
      %v8282 = vpop.f32.mrf.mxu0
      %v8283 = vadd.f32 %v8254, %v8282
      %v8284 = vpop.f32.mrf.mxu0
      %v8285 = vadd.f32 %v8256, %v8284
      %8286 = vmatmul.bf16.gmra.mxu0 %v6732
      %v8287 = vpop.f32.mrf.mxu0
      %v8288 = vadd.f32 %v8259, %v8287
      %v8289 = vpop.f32.mrf.mxu0
      %v8290 = vadd.f32 %v8261, %v8289
      %8291 = vmatmul.bf16.gmra.mxu0 %v6737
      %v8292 = vpop.f32.mrf.mxu0
      %v8293 = vadd.f32 %v8264, %v8292
      %v8294 = vpop.f32.mrf.mxu0
      %v8295 = vadd.f32 %v8266, %v8294
      %8296 = vdwg.mxu0
      %8297 = vmatpush.bf16.msra.mxu0 %v7766
      %8298 = vmatpush.bf16.msra.mxu0 %v7759
      %8299 = vmatpush.bf16.msra.mxu0 %v7752
      %8300 = vmatpush.bf16.msra.mxu0 %v7745
      %8301 = vmatpush.bf16.msra.mxu0 %v7738
      %8302 = vmatpush.bf16.msra.mxu0 %v7731
      %8303 = vmatpush.bf16.msra.mxu0 %v7724
      %8304 = vmatpush.bf16.msra.mxu0 %v7717
      %8305 = vmatmul.bf16.gmra.mxu0 %v6723
      %v8306 = vpop.f32.mrf.mxu0
      %v8307 = vadd.f32 %v8278, %v8306
      %v8308 = vpop.f32.mrf.mxu0
      %v8309 = vadd.f32 %v8280, %v8308
      %8310 = vmatmul.bf16.gmra.mxu0 %v6728
      %v8311 = vpop.f32.mrf.mxu0
      %v8312 = vadd.f32 %v8283, %v8311
      %v8313 = vpop.f32.mrf.mxu0
      %v8314 = vadd.f32 %v8285, %v8313
      %8315 = vmatmul.bf16.gmra.mxu0 %v6733
      %v8316 = vpop.f32.mrf.mxu0
      %v8317 = vadd.f32 %v8288, %v8316
      %v8318 = vpop.f32.mrf.mxu0
      %v8319 = vadd.f32 %v8290, %v8318
      %8320 = vmatmul.bf16.gmra.mxu0 %v6738
      %v8321 = vpop.f32.mrf.mxu0
      %v8322 = vadd.f32 %v8293, %v8321
      %v8323 = vpop.f32.mrf.mxu0
      %v8324 = vadd.f32 %v8295, %v8323
      %8325 = vdwg.mxu0
      %8326 = vmatpush.bf16.msra.mxu0 0
      %8327 = vmatpush.bf16.msra.mxu0 0
      %8328 = vmatpush.bf16.msra.mxu0 0
      %8329 = vmatpush.bf16.msra.mxu0 0
      %8330 = vmatpush.bf16.msra.mxu0 %v7794
      %8331 = vmatpush.bf16.msra.mxu0 %v7787
      %8332 = vmatpush.bf16.msra.mxu0 %v7780
      %8333 = vmatpush.bf16.msra.mxu0 %v7773
      %8334 = vmatmul.bf16.gmra.mxu0 %v8054
      %v8335 = vpop.f32.mrf.mxu0
      %v8336 = vadd.f32 %v8307, %v8335
      %v8337 = vpop.f32.mrf.mxu0
      %v8338 = vadd.f32 %v8309, %v8337
      %8339 = vmatmul.bf16.gmra.mxu0 %v8057
      %v8340 = vpop.f32.mrf.mxu0
      %v8341 = vadd.f32 %v8312, %v8340
      %v8342 = vpop.f32.mrf.mxu0
      %v8343 = vadd.f32 %v8314, %v8342
      %8344 = vmatmul.bf16.gmra.mxu0 %v8060
      %v8345 = vpop.f32.mrf.mxu0
      %v8346 = vadd.f32 %v8317, %v8345
      %v8347 = vpop.f32.mrf.mxu0
      %v8348 = vadd.f32 %v8319, %v8347
      %8349 = vmatmul.bf16.gmra.mxu0 %v8063
      %v8350 = vpop.f32.mrf.mxu0
      %v8351 = vadd.f32 %v8322, %v8350
      %v8352 = vpop.f32.mrf.mxu0
      %v8353 = vadd.f32 %v8324, %v8352
      %8354 = vdwg.mxu0
      %8355 = vmatpush.bf16.msra.mxu0 %v7599
      %8356 = vmatpush.bf16.msra.mxu0 %v7592
      %8357 = vmatpush.bf16.msra.mxu0 %v7585
      %8358 = vmatpush.bf16.msra.mxu0 %v7578
      %8359 = vmatpush.bf16.msra.mxu0 %v7571
      %8360 = vmatpush.bf16.msra.mxu0 %v7564
      %8361 = vmatpush.bf16.msra.mxu0 %v7557
      %8362 = vmatpush.bf16.msra.mxu0 %v7550
      %8363 = vmatmul.bf16.gmra.mxu0 %v6720
      %v8364 = vpop.f32.mrf.mxu0
      %v8365 = vadd.f32 %v6619, %v8364
      %v8366 = vpop.f32.mrf.mxu0
      %v8367 = vadd.f32 %v6624, %v8366
      %8368 = vmatmul.bf16.gmra.mxu0 %v6725
      %v8369 = vpop.f32.mrf.mxu0
      %v8370 = vadd.f32 %v6629, %v8369
      %v8371 = vpop.f32.mrf.mxu0
      %v8372 = vadd.f32 %v6634, %v8371
      %8373 = vmatmul.bf16.gmra.mxu0 %v6730
      %v8374 = vpop.f32.mrf.mxu0
      %v8375 = vadd.f32 %v6639, %v8374
      %v8376 = vpop.f32.mrf.mxu0
      %v8377 = vadd.f32 %v6644, %v8376
      %8378 = vmatmul.bf16.gmra.mxu0 %v6735
      %v8379 = vpop.f32.mrf.mxu0
      %v8380 = vadd.f32 %v6649, %v8379
      %v8381 = vpop.f32.mrf.mxu0
      %v8382 = vadd.f32 %v6654, %v8381
      %8383 = vdwg.mxu0
      %8384 = vmatpush.bf16.msra.mxu0 %v7655
      %8385 = vmatpush.bf16.msra.mxu0 %v7648
      %8386 = vmatpush.bf16.msra.mxu0 %v7641
      %8387 = vmatpush.bf16.msra.mxu0 %v7634
      %8388 = vmatpush.bf16.msra.mxu0 %v7627
      %8389 = vmatpush.bf16.msra.mxu0 %v7620
      %8390 = vmatpush.bf16.msra.mxu0 %v7613
      %8391 = vmatpush.bf16.msra.mxu0 %v7606
      %8392 = vmatmul.bf16.gmra.mxu0 %v6721
      %v8393 = vpop.f32.mrf.mxu0
      %v8394 = vadd.f32 %v8365, %v8393
      %v8395 = vpop.f32.mrf.mxu0
      %v8396 = vadd.f32 %v8367, %v8395
      %8397 = vmatmul.bf16.gmra.mxu0 %v6726
      %v8398 = vpop.f32.mrf.mxu0
      %v8399 = vadd.f32 %v8370, %v8398
      %v8400 = vpop.f32.mrf.mxu0
      %v8401 = vadd.f32 %v8372, %v8400
      %8402 = vmatmul.bf16.gmra.mxu0 %v6731
      %v8403 = vpop.f32.mrf.mxu0
      %v8404 = vadd.f32 %v8375, %v8403
      %v8405 = vpop.f32.mrf.mxu0
      %v8406 = vadd.f32 %v8377, %v8405
      %8407 = vmatmul.bf16.gmra.mxu0 %v6736
      %v8408 = vpop.f32.mrf.mxu0
      %v8409 = vadd.f32 %v8380, %v8408
      %v8410 = vpop.f32.mrf.mxu0
      %v8411 = vadd.f32 %v8382, %v8410
      %8412 = vdwg.mxu0
      %8413 = vmatpush.bf16.msra.mxu0 %v7711
      %8414 = vmatpush.bf16.msra.mxu0 %v7704
      %8415 = vmatpush.bf16.msra.mxu0 %v7697
      %8416 = vmatpush.bf16.msra.mxu0 %v7690
      %8417 = vmatpush.bf16.msra.mxu0 %v7683
      %8418 = vmatpush.bf16.msra.mxu0 %v7676
      %8419 = vmatpush.bf16.msra.mxu0 %v7669
      %8420 = vmatpush.bf16.msra.mxu0 %v7662
      %8421 = vmatmul.bf16.gmra.mxu0 %v6722
      %v8422 = vpop.f32.mrf.mxu0
      %v8423 = vadd.f32 %v8394, %v8422
      %v8424 = vpop.f32.mrf.mxu0
      %v8425 = vadd.f32 %v8396, %v8424
      %8426 = vmatmul.bf16.gmra.mxu0 %v6727
      %v8427 = vpop.f32.mrf.mxu0
      %v8428 = vadd.f32 %v8399, %v8427
      %v8429 = vpop.f32.mrf.mxu0
      %v8430 = vadd.f32 %v8401, %v8429
      %8431 = vmatmul.bf16.gmra.mxu0 %v6732
      %v8432 = vpop.f32.mrf.mxu0
      %v8433 = vadd.f32 %v8404, %v8432
      %v8434 = vpop.f32.mrf.mxu0
      %v8435 = vadd.f32 %v8406, %v8434
      %8436 = vmatmul.bf16.gmra.mxu0 %v6737
      %v8437 = vpop.f32.mrf.mxu0
      %v8438 = vadd.f32 %v8409, %v8437
      %v8439 = vpop.f32.mrf.mxu0
      %v8440 = vadd.f32 %v8411, %v8439
      %8441 = vdwg.mxu0
      %8442 = vmatpush.bf16.msra.mxu0 %v7767
      %8443 = vmatpush.bf16.msra.mxu0 %v7760
      %8444 = vmatpush.bf16.msra.mxu0 %v7753
      %8445 = vmatpush.bf16.msra.mxu0 %v7746
      %8446 = vmatpush.bf16.msra.mxu0 %v7739
      %8447 = vmatpush.bf16.msra.mxu0 %v7732
      %8448 = vmatpush.bf16.msra.mxu0 %v7725
      %8449 = vmatpush.bf16.msra.mxu0 %v7718
      %8450 = vmatmul.bf16.gmra.mxu0 %v6723
      %v8451 = vpop.f32.mrf.mxu0
      %v8452 = vadd.f32 %v8423, %v8451
      %v8453 = vpop.f32.mrf.mxu0
      %v8454 = vadd.f32 %v8425, %v8453
      %8455 = vmatmul.bf16.gmra.mxu0 %v6728
      %v8456 = vpop.f32.mrf.mxu0
      %v8457 = vadd.f32 %v8428, %v8456
      %v8458 = vpop.f32.mrf.mxu0
      %v8459 = vadd.f32 %v8430, %v8458
      %8460 = vmatmul.bf16.gmra.mxu0 %v6733
      %v8461 = vpop.f32.mrf.mxu0
      %v8462 = vadd.f32 %v8433, %v8461
      %v8463 = vpop.f32.mrf.mxu0
      %v8464 = vadd.f32 %v8435, %v8463
      %8465 = vmatmul.bf16.gmra.mxu0 %v6738
      %v8466 = vpop.f32.mrf.mxu0
      %v8467 = vadd.f32 %v8438, %v8466
      %v8468 = vpop.f32.mrf.mxu0
      %v8469 = vadd.f32 %v8440, %v8468
      %8470 = vdwg.mxu0
      %8471 = vmatpush.bf16.msra.mxu0 0
      %8472 = vmatpush.bf16.msra.mxu0 0
      %8473 = vmatpush.bf16.msra.mxu0 0
      %8474 = vmatpush.bf16.msra.mxu0 0
      %8475 = vmatpush.bf16.msra.mxu0 %v7795
      %8476 = vmatpush.bf16.msra.mxu0 %v7788
      %8477 = vmatpush.bf16.msra.mxu0 %v7781
      %8478 = vmatpush.bf16.msra.mxu0 %v7774
      %8479 = vmatmul.bf16.gmra.mxu0 %v8054
      %v8480 = vpop.f32.mrf.mxu0
      %v8481 = vadd.f32 %v8452, %v8480
      %v8482 = vpop.f32.mrf.mxu0
      %v8483 = vadd.f32 %v8454, %v8482
      %8484 = vmatmul.bf16.gmra.mxu0 %v8057
      %v8485 = vpop.f32.mrf.mxu0
      %v8486 = vadd.f32 %v8457, %v8485
      %v8487 = vpop.f32.mrf.mxu0
      %v8488 = vadd.f32 %v8459, %v8487
      %8489 = vmatmul.bf16.gmra.mxu0 %v8060
      %v8490 = vpop.f32.mrf.mxu0
      %v8491 = vadd.f32 %v8462, %v8490
      %v8492 = vpop.f32.mrf.mxu0
      %v8493 = vadd.f32 %v8464, %v8492
      %8494 = vmatmul.bf16.gmra.mxu0 %v8063
      %v8495 = vpop.f32.mrf.mxu0
      %v8496 = vadd.f32 %v8467, %v8495
      %v8497 = vpop.f32.mrf.mxu0
      %v8498 = vadd.f32 %v8469, %v8497
      %8499 = vdwg.mxu0
      %8500 = vmatpush.bf16.msra.mxu0 %v7600
      %8501 = vmatpush.bf16.msra.mxu0 %v7593
      %8502 = vmatpush.bf16.msra.mxu0 %v7586
      %8503 = vmatpush.bf16.msra.mxu0 %v7579
      %8504 = vmatpush.bf16.msra.mxu0 %v7572
      %8505 = vmatpush.bf16.msra.mxu0 %v7565
      %8506 = vmatpush.bf16.msra.mxu0 %v7558
      %8507 = vmatpush.bf16.msra.mxu0 %v7551
      %8508 = vmatmul.bf16.gmra.mxu0 %v6720
      %v8509 = vpop.f32.mrf.mxu0
      %v8510 = vadd.f32 %v6619, %v8509
      %v8511 = vpop.f32.mrf.mxu0
      %v8512 = vadd.f32 %v6624, %v8511
      %8513 = vmatmul.bf16.gmra.mxu0 %v6725
      %v8514 = vpop.f32.mrf.mxu0
      %v8515 = vadd.f32 %v6629, %v8514
      %v8516 = vpop.f32.mrf.mxu0
      %v8517 = vadd.f32 %v6634, %v8516
      %8518 = vmatmul.bf16.gmra.mxu0 %v6730
      %v8519 = vpop.f32.mrf.mxu0
      %v8520 = vadd.f32 %v6639, %v8519
      %v8521 = vpop.f32.mrf.mxu0
      %v8522 = vadd.f32 %v6644, %v8521
      %8523 = vmatmul.bf16.gmra.mxu0 %v6735
      %v8524 = vpop.f32.mrf.mxu0
      %v8525 = vadd.f32 %v6649, %v8524
      %v8526 = vpop.f32.mrf.mxu0
      %v8527 = vadd.f32 %v6654, %v8526
      %8528 = vdwg.mxu0
      %8529 = vmatpush.bf16.msra.mxu0 %v7656
      %8530 = vmatpush.bf16.msra.mxu0 %v7649
      %8531 = vmatpush.bf16.msra.mxu0 %v7642
      %8532 = vmatpush.bf16.msra.mxu0 %v7635
      %8533 = vmatpush.bf16.msra.mxu0 %v7628
      %8534 = vmatpush.bf16.msra.mxu0 %v7621
      %8535 = vmatpush.bf16.msra.mxu0 %v7614
      %8536 = vmatpush.bf16.msra.mxu0 %v7607
      %8537 = vmatmul.bf16.gmra.mxu0 %v6721
      %v8538 = vpop.f32.mrf.mxu0
      %v8539 = vadd.f32 %v8510, %v8538
      %v8540 = vpop.f32.mrf.mxu0
      %v8541 = vadd.f32 %v8512, %v8540
      %8542 = vmatmul.bf16.gmra.mxu0 %v6726
      %v8543 = vpop.f32.mrf.mxu0
      %v8544 = vadd.f32 %v8515, %v8543
      %v8545 = vpop.f32.mrf.mxu0
      %v8546 = vadd.f32 %v8517, %v8545
      %8547 = vmatmul.bf16.gmra.mxu0 %v6731
      %v8548 = vpop.f32.mrf.mxu0
      %v8549 = vadd.f32 %v8520, %v8548
      %v8550 = vpop.f32.mrf.mxu0
      %v8551 = vadd.f32 %v8522, %v8550
      %8552 = vmatmul.bf16.gmra.mxu0 %v6736
      %v8553 = vpop.f32.mrf.mxu0
      %v8554 = vadd.f32 %v8525, %v8553
      %v8555 = vpop.f32.mrf.mxu0
      %v8556 = vadd.f32 %v8527, %v8555
      %8557 = vdwg.mxu0
      %8558 = vmatpush.bf16.msra.mxu0 %v7712
      %8559 = vmatpush.bf16.msra.mxu0 %v7705
      %8560 = vmatpush.bf16.msra.mxu0 %v7698
      %8561 = vmatpush.bf16.msra.mxu0 %v7691
      %8562 = vmatpush.bf16.msra.mxu0 %v7684
      %8563 = vmatpush.bf16.msra.mxu0 %v7677
      %8564 = vmatpush.bf16.msra.mxu0 %v7670
      %8565 = vmatpush.bf16.msra.mxu0 %v7663
      %8566 = vmatmul.bf16.gmra.mxu0 %v6722
      %v8567 = vpop.f32.mrf.mxu0
      %v8568 = vadd.f32 %v8539, %v8567
      %v8569 = vpop.f32.mrf.mxu0
      %v8570 = vadd.f32 %v8541, %v8569
      %8571 = vmatmul.bf16.gmra.mxu0 %v6727
      %v8572 = vpop.f32.mrf.mxu0
      %v8573 = vadd.f32 %v8544, %v8572
      %v8574 = vpop.f32.mrf.mxu0
      %v8575 = vadd.f32 %v8546, %v8574
      %8576 = vmatmul.bf16.gmra.mxu0 %v6732
      %v8577 = vpop.f32.mrf.mxu0
      %v8578 = vadd.f32 %v8549, %v8577
      %v8579 = vpop.f32.mrf.mxu0
      %v8580 = vadd.f32 %v8551, %v8579
      %8581 = vmatmul.bf16.gmra.mxu0 %v6737
      %v8582 = vpop.f32.mrf.mxu0
      %v8583 = vadd.f32 %v8554, %v8582
      %v8584 = vpop.f32.mrf.mxu0
      %v8585 = vadd.f32 %v8556, %v8584
      %8586 = vdwg.mxu0
      %8587 = vmatpush.bf16.msra.mxu0 %v7768
      %8588 = vmatpush.bf16.msra.mxu0 %v7761
      %8589 = vmatpush.bf16.msra.mxu0 %v7754
      %8590 = vmatpush.bf16.msra.mxu0 %v7747
      %8591 = vmatpush.bf16.msra.mxu0 %v7740
      %8592 = vmatpush.bf16.msra.mxu0 %v7733
      %8593 = vmatpush.bf16.msra.mxu0 %v7726
      %8594 = vmatpush.bf16.msra.mxu0 %v7719
      %8595 = vmatmul.bf16.gmra.mxu0 %v6723
      %v8596 = vpop.f32.mrf.mxu0
      %v8597 = vadd.f32 %v8568, %v8596
      %v8598 = vpop.f32.mrf.mxu0
      %v8599 = vadd.f32 %v8570, %v8598
      %8600 = vmatmul.bf16.gmra.mxu0 %v6728
      %v8601 = vpop.f32.mrf.mxu0
      %v8602 = vadd.f32 %v8573, %v8601
      %v8603 = vpop.f32.mrf.mxu0
      %v8604 = vadd.f32 %v8575, %v8603
      %8605 = vmatmul.bf16.gmra.mxu0 %v6733
      %v8606 = vpop.f32.mrf.mxu0
      %v8607 = vadd.f32 %v8578, %v8606
      %v8608 = vpop.f32.mrf.mxu0
      %v8609 = vadd.f32 %v8580, %v8608
      %8610 = vmatmul.bf16.gmra.mxu0 %v6738
      %v8611 = vpop.f32.mrf.mxu0
      %v8612 = vadd.f32 %v8583, %v8611
      %v8613 = vpop.f32.mrf.mxu0
      %v8614 = vadd.f32 %v8585, %v8613
      %8615 = vdwg.mxu0
      %8616 = vmatpush.bf16.msra.mxu0 0
      %8617 = vmatpush.bf16.msra.mxu0 0
      %8618 = vmatpush.bf16.msra.mxu0 0
      %8619 = vmatpush.bf16.msra.mxu0 0
      %8620 = vmatpush.bf16.msra.mxu0 %v7796
      %8621 = vmatpush.bf16.msra.mxu0 %v7789
      %8622 = vmatpush.bf16.msra.mxu0 %v7782
      %8623 = vmatpush.bf16.msra.mxu0 %v7775
      %8624 = vmatmul.bf16.gmra.mxu0 %v8054
      %v8625 = vpop.f32.mrf.mxu0
      %v8626 = vadd.f32 %v8597, %v8625
      %v8627 = vpop.f32.mrf.mxu0
      %v8628 = vadd.f32 %v8599, %v8627
      %8629 = vmatmul.bf16.gmra.mxu0 %v8057
      %v8630 = vpop.f32.mrf.mxu0
      %v8631 = vadd.f32 %v8602, %v8630
      %v8632 = vpop.f32.mrf.mxu0
      %v8633 = vadd.f32 %v8604, %v8632
      %8634 = vmatmul.bf16.gmra.mxu0 %v8060
      %v8635 = vpop.f32.mrf.mxu0
      %v8636 = vadd.f32 %v8607, %v8635
      %v8637 = vpop.f32.mrf.mxu0
      %v8638 = vadd.f32 %v8609, %v8637
      %8639 = vmatmul.bf16.gmra.mxu0 %v8063
      %v8640 = vpop.f32.mrf.mxu0
      %v8641 = vadd.f32 %v8612, %v8640
      %v8642 = vpop.f32.mrf.mxu0
      %v8643 = vadd.f32 %v8614, %v8642
      %8644 = vdwg.mxu0
      %8645 = vmatpush.bf16.msra.mxu0 %v7601
      %8646 = vmatpush.bf16.msra.mxu0 %v7594
      %8647 = vmatpush.bf16.msra.mxu0 %v7587
      %8648 = vmatpush.bf16.msra.mxu0 %v7580
      %8649 = vmatpush.bf16.msra.mxu0 %v7573
      %8650 = vmatpush.bf16.msra.mxu0 %v7566
      %8651 = vmatpush.bf16.msra.mxu0 %v7559
      %8652 = vmatpush.bf16.msra.mxu0 %v7552
      %8653 = vmatmul.bf16.gmra.mxu0 %v6720
      %v8654 = vpop.f32.mrf.mxu0
      %v8655 = vadd.f32 %v6619, %v8654
      %v8656 = vpop.f32.mrf.mxu0
      %v8657 = vadd.f32 %v6624, %v8656
      %8658 = vmatmul.bf16.gmra.mxu0 %v6725
      %v8659 = vpop.f32.mrf.mxu0
      %v8660 = vadd.f32 %v6629, %v8659
      %v8661 = vpop.f32.mrf.mxu0
      %v8662 = vadd.f32 %v6634, %v8661
      %8663 = vmatmul.bf16.gmra.mxu0 %v6730
      %v8664 = vpop.f32.mrf.mxu0
      %v8665 = vadd.f32 %v6639, %v8664
      %v8666 = vpop.f32.mrf.mxu0
      %v8667 = vadd.f32 %v6644, %v8666
      %8668 = vmatmul.bf16.gmra.mxu0 %v6735
      %v8669 = vpop.f32.mrf.mxu0
      %v8670 = vadd.f32 %v6649, %v8669
      %v8671 = vpop.f32.mrf.mxu0
      %v8672 = vadd.f32 %v6654, %v8671
      %8673 = vdwg.mxu0
      %8674 = vmatpush.bf16.msra.mxu0 %v7657
      %8675 = vmatpush.bf16.msra.mxu0 %v7650
      %8676 = vmatpush.bf16.msra.mxu0 %v7643
      %8677 = vmatpush.bf16.msra.mxu0 %v7636
      %8678 = vmatpush.bf16.msra.mxu0 %v7629
      %8679 = vmatpush.bf16.msra.mxu0 %v7622
      %8680 = vmatpush.bf16.msra.mxu0 %v7615
      %8681 = vmatpush.bf16.msra.mxu0 %v7608
      %8682 = vmatmul.bf16.gmra.mxu0 %v6721
      %v8683 = vpop.f32.mrf.mxu0
      %v8684 = vadd.f32 %v8655, %v8683
      %v8685 = vpop.f32.mrf.mxu0
      %v8686 = vadd.f32 %v8657, %v8685
      %8687 = vmatmul.bf16.gmra.mxu0 %v6726
      %v8688 = vpop.f32.mrf.mxu0
      %v8689 = vadd.f32 %v8660, %v8688
      %v8690 = vpop.f32.mrf.mxu0
      %v8691 = vadd.f32 %v8662, %v8690
      %8692 = vmatmul.bf16.gmra.mxu0 %v6731
      %v8693 = vpop.f32.mrf.mxu0
      %v8694 = vadd.f32 %v8665, %v8693
      %v8695 = vpop.f32.mrf.mxu0
      %v8696 = vadd.f32 %v8667, %v8695
      %8697 = vmatmul.bf16.gmra.mxu0 %v6736
      %v8698 = vpop.f32.mrf.mxu0
      %v8699 = vadd.f32 %v8670, %v8698
      %v8700 = vpop.f32.mrf.mxu0
      %v8701 = vadd.f32 %v8672, %v8700
      %8702 = vdwg.mxu0
      %8703 = vmatpush.bf16.msra.mxu0 %v7713
      %8704 = vmatpush.bf16.msra.mxu0 %v7706
      %8705 = vmatpush.bf16.msra.mxu0 %v7699
      %8706 = vmatpush.bf16.msra.mxu0 %v7692
      %8707 = vmatpush.bf16.msra.mxu0 %v7685
      %8708 = vmatpush.bf16.msra.mxu0 %v7678
      %8709 = vmatpush.bf16.msra.mxu0 %v7671
      %8710 = vmatpush.bf16.msra.mxu0 %v7664
      %8711 = vmatmul.bf16.gmra.mxu0 %v6722
      %v8712 = vpop.f32.mrf.mxu0
      %v8713 = vadd.f32 %v8684, %v8712
      %v8714 = vpop.f32.mrf.mxu0
      %v8715 = vadd.f32 %v8686, %v8714
      %8716 = vmatmul.bf16.gmra.mxu0 %v6727
      %v8717 = vpop.f32.mrf.mxu0
      %v8718 = vadd.f32 %v8689, %v8717
      %v8719 = vpop.f32.mrf.mxu0
      %v8720 = vadd.f32 %v8691, %v8719
      %8721 = vmatmul.bf16.gmra.mxu0 %v6732
      %v8722 = vpop.f32.mrf.mxu0
      %v8723 = vadd.f32 %v8694, %v8722
      %v8724 = vpop.f32.mrf.mxu0
      %v8725 = vadd.f32 %v8696, %v8724
      %8726 = vmatmul.bf16.gmra.mxu0 %v6737
      %v8727 = vpop.f32.mrf.mxu0
      %v8728 = vadd.f32 %v8699, %v8727
      %v8729 = vpop.f32.mrf.mxu0
      %v8730 = vadd.f32 %v8701, %v8729
      %8731 = vdwg.mxu0
      %8732 = vmatpush.bf16.msra.mxu0 %v7769
      %8733 = vmatpush.bf16.msra.mxu0 %v7762
      %8734 = vmatpush.bf16.msra.mxu0 %v7755
      %8735 = vmatpush.bf16.msra.mxu0 %v7748
      %8736 = vmatpush.bf16.msra.mxu0 %v7741
      %8737 = vmatpush.bf16.msra.mxu0 %v7734
      %8738 = vmatpush.bf16.msra.mxu0 %v7727
      %8739 = vmatpush.bf16.msra.mxu0 %v7720
      %8740 = vmatmul.bf16.gmra.mxu0 %v6723
      %v8741 = vpop.f32.mrf.mxu0
      %v8742 = vadd.f32 %v8713, %v8741
      %v8743 = vpop.f32.mrf.mxu0
      %v8744 = vadd.f32 %v8715, %v8743
      %8745 = vmatmul.bf16.gmra.mxu0 %v6728
      %v8746 = vpop.f32.mrf.mxu0
      %v8747 = vadd.f32 %v8718, %v8746
      %v8748 = vpop.f32.mrf.mxu0
      %v8749 = vadd.f32 %v8720, %v8748
      %8750 = vmatmul.bf16.gmra.mxu0 %v6733
      %v8751 = vpop.f32.mrf.mxu0
      %v8752 = vadd.f32 %v8723, %v8751
      %v8753 = vpop.f32.mrf.mxu0
      %v8754 = vadd.f32 %v8725, %v8753
      %8755 = vmatmul.bf16.gmra.mxu0 %v6738
      %v8756 = vpop.f32.mrf.mxu0
      %v8757 = vadd.f32 %v8728, %v8756
      %v8758 = vpop.f32.mrf.mxu0
      %v8759 = vadd.f32 %v8730, %v8758
      %8760 = vdwg.mxu0
      %8761 = vmatpush.bf16.msra.mxu0 0
      %8762 = vmatpush.bf16.msra.mxu0 0
      %8763 = vmatpush.bf16.msra.mxu0 0
      %8764 = vmatpush.bf16.msra.mxu0 0
      %8765 = vmatpush.bf16.msra.mxu0 %v7797
      %8766 = vmatpush.bf16.msra.mxu0 %v7790
      %8767 = vmatpush.bf16.msra.mxu0 %v7783
      %8768 = vmatpush.bf16.msra.mxu0 %v7776
      %8769 = vmatmul.bf16.gmra.mxu0 %v8054
      %v8770 = vpop.f32.mrf.mxu0
      %v8771 = vadd.f32 %v8742, %v8770
      %v8772 = vpop.f32.mrf.mxu0
      %v8773 = vadd.f32 %v8744, %v8772
      %8774 = vmatmul.bf16.gmra.mxu0 %v8057
      %v8775 = vpop.f32.mrf.mxu0
      %v8776 = vadd.f32 %v8747, %v8775
      %v8777 = vpop.f32.mrf.mxu0
      %v8778 = vadd.f32 %v8749, %v8777
      %8779 = vmatmul.bf16.gmra.mxu0 %v8060
      %v8780 = vpop.f32.mrf.mxu0
      %v8781 = vadd.f32 %v8752, %v8780
      %v8782 = vpop.f32.mrf.mxu0
      %v8783 = vadd.f32 %v8754, %v8782
      %8784 = vmatmul.bf16.gmra.mxu0 %v8063
      %v8785 = vpop.f32.mrf.mxu0
      %v8786 = vadd.f32 %v8757, %v8785
      %v8787 = vpop.f32.mrf.mxu0
      %v8788 = vadd.f32 %v8759, %v8787
      %8789 = vdwg.mxu0
      %8790 = vmatpush.bf16.msra.mxu0 %v7602
      %8791 = vmatpush.bf16.msra.mxu0 %v7595
      %8792 = vmatpush.bf16.msra.mxu0 %v7588
      %8793 = vmatpush.bf16.msra.mxu0 %v7581
      %8794 = vmatpush.bf16.msra.mxu0 %v7574
      %8795 = vmatpush.bf16.msra.mxu0 %v7567
      %8796 = vmatpush.bf16.msra.mxu0 %v7560
      %8797 = vmatpush.bf16.msra.mxu0 %v7553
      %8798 = vmatmul.bf16.gmra.mxu0 %v6720
      %v8799 = vpop.f32.mrf.mxu0
      %v8800 = vadd.f32 %v6619, %v8799
      %v8801 = vpop.f32.mrf.mxu0
      %v8802 = vadd.f32 %v6624, %v8801
      %8803 = vmatmul.bf16.gmra.mxu0 %v6725
      %v8804 = vpop.f32.mrf.mxu0
      %v8805 = vadd.f32 %v6629, %v8804
      %v8806 = vpop.f32.mrf.mxu0
      %v8807 = vadd.f32 %v6634, %v8806
      %8808 = vmatmul.bf16.gmra.mxu0 %v6730
      %v8809 = vpop.f32.mrf.mxu0
      %v8810 = vadd.f32 %v6639, %v8809
      %v8811 = vpop.f32.mrf.mxu0
      %v8812 = vadd.f32 %v6644, %v8811
      %8813 = vmatmul.bf16.gmra.mxu0 %v6735
      %v8814 = vpop.f32.mrf.mxu0
      %v8815 = vadd.f32 %v6649, %v8814
      %v8816 = vpop.f32.mrf.mxu0
      %v8817 = vadd.f32 %v6654, %v8816
      %8818 = vdwg.mxu0
      %8819 = vmatpush.bf16.msra.mxu0 %v7658
      %8820 = vmatpush.bf16.msra.mxu0 %v7651
      %8821 = vmatpush.bf16.msra.mxu0 %v7644
      %8822 = vmatpush.bf16.msra.mxu0 %v7637
      %8823 = vmatpush.bf16.msra.mxu0 %v7630
      %8824 = vmatpush.bf16.msra.mxu0 %v7623
      %8825 = vmatpush.bf16.msra.mxu0 %v7616
      %8826 = vmatpush.bf16.msra.mxu0 %v7609
      %8827 = vmatmul.bf16.gmra.mxu0 %v6721
      %v8828 = vpop.f32.mrf.mxu0
      %v8829 = vadd.f32 %v8800, %v8828
      %v8830 = vpop.f32.mrf.mxu0
      %v8831 = vadd.f32 %v8802, %v8830
      %8832 = vmatmul.bf16.gmra.mxu0 %v6726
      %v8833 = vpop.f32.mrf.mxu0
      %v8834 = vadd.f32 %v8805, %v8833
      %v8835 = vpop.f32.mrf.mxu0
      %v8836 = vadd.f32 %v8807, %v8835
      %8837 = vmatmul.bf16.gmra.mxu0 %v6731
      %v8838 = vpop.f32.mrf.mxu0
      %v8839 = vadd.f32 %v8810, %v8838
      %v8840 = vpop.f32.mrf.mxu0
      %v8841 = vadd.f32 %v8812, %v8840
      %8842 = vmatmul.bf16.gmra.mxu0 %v6736
      %v8843 = vpop.f32.mrf.mxu0
      %v8844 = vadd.f32 %v8815, %v8843
      %v8845 = vpop.f32.mrf.mxu0
      %v8846 = vadd.f32 %v8817, %v8845
      %8847 = vdwg.mxu0
      %8848 = vmatpush.bf16.msra.mxu0 %v7714
      %8849 = vmatpush.bf16.msra.mxu0 %v7707
      %8850 = vmatpush.bf16.msra.mxu0 %v7700
      %8851 = vmatpush.bf16.msra.mxu0 %v7693
      %8852 = vmatpush.bf16.msra.mxu0 %v7686
      %8853 = vmatpush.bf16.msra.mxu0 %v7679
      %8854 = vmatpush.bf16.msra.mxu0 %v7672
      %8855 = vmatpush.bf16.msra.mxu0 %v7665
      %8856 = vmatmul.bf16.gmra.mxu0 %v6722
      %v8857 = vpop.f32.mrf.mxu0
      %v8858 = vadd.f32 %v8829, %v8857
      %v8859 = vpop.f32.mrf.mxu0
      %v8860 = vadd.f32 %v8831, %v8859
      %8861 = vmatmul.bf16.gmra.mxu0 %v6727
      %v8862 = vpop.f32.mrf.mxu0
      %v8863 = vadd.f32 %v8834, %v8862
      %v8864 = vpop.f32.mrf.mxu0
      %v8865 = vadd.f32 %v8836, %v8864
      %8866 = vmatmul.bf16.gmra.mxu0 %v6732
      %v8867 = vpop.f32.mrf.mxu0
      %v8868 = vadd.f32 %v8839, %v8867
      %v8869 = vpop.f32.mrf.mxu0
      %v8870 = vadd.f32 %v8841, %v8869
      %8871 = vmatmul.bf16.gmra.mxu0 %v6737
      %v8872 = vpop.f32.mrf.mxu0
      %v8873 = vadd.f32 %v8844, %v8872
      %v8874 = vpop.f32.mrf.mxu0
      %v8875 = vadd.f32 %v8846, %v8874
      %8876 = vdwg.mxu0
      %8877 = vmatpush.bf16.msra.mxu0 %v7770
      %8878 = vmatpush.bf16.msra.mxu0 %v7763
      %8879 = vmatpush.bf16.msra.mxu0 %v7756
      %8880 = vmatpush.bf16.msra.mxu0 %v7749
      %8881 = vmatpush.bf16.msra.mxu0 %v7742
      %8882 = vmatpush.bf16.msra.mxu0 %v7735
      %8883 = vmatpush.bf16.msra.mxu0 %v7728
      %8884 = vmatpush.bf16.msra.mxu0 %v7721
      %8885 = vmatmul.bf16.gmra.mxu0 %v6723
      %v8886 = vpop.f32.mrf.mxu0
      %v8887 = vadd.f32 %v8858, %v8886
      %v8888 = vpop.f32.mrf.mxu0
      %v8889 = vadd.f32 %v8860, %v8888
      %8890 = vmatmul.bf16.gmra.mxu0 %v6728
      %v8891 = vpop.f32.mrf.mxu0
      %v8892 = vadd.f32 %v8863, %v8891
      %v8893 = vpop.f32.mrf.mxu0
      %v8894 = vadd.f32 %v8865, %v8893
      %8895 = vmatmul.bf16.gmra.mxu0 %v6733
      %v8896 = vpop.f32.mrf.mxu0
      %v8897 = vadd.f32 %v8868, %v8896
      %v8898 = vpop.f32.mrf.mxu0
      %v8899 = vadd.f32 %v8870, %v8898
      %8900 = vmatmul.bf16.gmra.mxu0 %v6738
      %v8901 = vpop.f32.mrf.mxu0
      %v8902 = vadd.f32 %v8873, %v8901
      %v8903 = vpop.f32.mrf.mxu0
      %v8904 = vadd.f32 %v8875, %v8903
      %8905 = vdwg.mxu0
      %8906 = vmatpush.bf16.msra.mxu0 0
      %8907 = vmatpush.bf16.msra.mxu0 0
      %8908 = vmatpush.bf16.msra.mxu0 0
      %8909 = vmatpush.bf16.msra.mxu0 0
      %8910 = vmatpush.bf16.msra.mxu0 %v7798
      %8911 = vmatpush.bf16.msra.mxu0 %v7791
      %8912 = vmatpush.bf16.msra.mxu0 %v7784
      %8913 = vmatpush.bf16.msra.mxu0 %v7777
      %8914 = vmatmul.bf16.gmra.mxu0 %v8054
      %v8915 = vpop.f32.mrf.mxu0
      %v8916 = vadd.f32 %v8887, %v8915
      %v8917 = vpop.f32.mrf.mxu0
      %v8918 = vadd.f32 %v8889, %v8917
      %8919 = vmatmul.bf16.gmra.mxu0 %v8057
      %v8920 = vpop.f32.mrf.mxu0
      %v8921 = vadd.f32 %v8892, %v8920
      %v8922 = vpop.f32.mrf.mxu0
      %v8923 = vadd.f32 %v8894, %v8922
      %8924 = vmatmul.bf16.gmra.mxu0 %v8060
      %v8925 = vpop.f32.mrf.mxu0
      %v8926 = vadd.f32 %v8897, %v8925
      %v8927 = vpop.f32.mrf.mxu0
      %v8928 = vadd.f32 %v8899, %v8927
      %8929 = vmatmul.bf16.gmra.mxu0 %v8063
      %v8930 = vpop.f32.mrf.mxu0
      %v8931 = vadd.f32 %v8902, %v8930
      %v8932 = vpop.f32.mrf.mxu0
      %v8933 = vadd.f32 %v8904, %v8932
      %8934 = vdwg.mxu0
      %8935 = vmatpush.bf16.msra.mxu0 %v7603
      %8936 = vmatpush.bf16.msra.mxu0 %v7596
      %8937 = vmatpush.bf16.msra.mxu0 %v7589
      %8938 = vmatpush.bf16.msra.mxu0 %v7582
      %8939 = vmatpush.bf16.msra.mxu0 %v7575
      %8940 = vmatpush.bf16.msra.mxu0 %v7568
      %8941 = vmatpush.bf16.msra.mxu0 %v7561
      %8942 = vmatpush.bf16.msra.mxu0 %v7554
      %8943 = vmatmul.bf16.gmra.mxu0 %v6720
      %v8944 = vpop.f32.mrf.mxu0
      %v8945 = vadd.f32 %v6619, %v8944
      %v8946 = vpop.f32.mrf.mxu0
      %v8947 = vadd.f32 %v6624, %v8946
      %8948 = vmatmul.bf16.gmra.mxu0 %v6725
      %v8949 = vpop.f32.mrf.mxu0
      %v8950 = vadd.f32 %v6629, %v8949
      %v8951 = vpop.f32.mrf.mxu0
      %v8952 = vadd.f32 %v6634, %v8951
      %8953 = vmatmul.bf16.gmra.mxu0 %v6730
      %v8954 = vpop.f32.mrf.mxu0
      %v8955 = vadd.f32 %v6639, %v8954
      %v8956 = vpop.f32.mrf.mxu0
      %v8957 = vadd.f32 %v6644, %v8956
      %8958 = vmatmul.bf16.gmra.mxu0 %v6735
      %v8959 = vpop.f32.mrf.mxu0
      %v8960 = vadd.f32 %v6649, %v8959
      %v8961 = vpop.f32.mrf.mxu0
      %v8962 = vadd.f32 %v6654, %v8961
      %8963 = vdwg.mxu0
      %8964 = vmatpush.bf16.msra.mxu0 %v7659
      %8965 = vmatpush.bf16.msra.mxu0 %v7652
      %8966 = vmatpush.bf16.msra.mxu0 %v7645
      %8967 = vmatpush.bf16.msra.mxu0 %v7638
      %8968 = vmatpush.bf16.msra.mxu0 %v7631
      %8969 = vmatpush.bf16.msra.mxu0 %v7624
      %8970 = vmatpush.bf16.msra.mxu0 %v7617
      %8971 = vmatpush.bf16.msra.mxu0 %v7610
      %8972 = vmatmul.bf16.gmra.mxu0 %v6721
      %v8973 = vpop.f32.mrf.mxu0
      %v8974 = vadd.f32 %v8945, %v8973
      %v8975 = vpop.f32.mrf.mxu0
      %v8976 = vadd.f32 %v8947, %v8975
      %8977 = vmatmul.bf16.gmra.mxu0 %v6726
      %v8978 = vpop.f32.mrf.mxu0
      %v8979 = vadd.f32 %v8950, %v8978
      %v8980 = vpop.f32.mrf.mxu0
      %v8981 = vadd.f32 %v8952, %v8980
      %8982 = vmatmul.bf16.gmra.mxu0 %v6731
      %v8983 = vpop.f32.mrf.mxu0
      %v8984 = vadd.f32 %v8955, %v8983
      %v8985 = vpop.f32.mrf.mxu0
      %v8986 = vadd.f32 %v8957, %v8985
      %8987 = vmatmul.bf16.gmra.mxu0 %v6736
      %v8988 = vpop.f32.mrf.mxu0
      %v8989 = vadd.f32 %v8960, %v8988
      %v8990 = vpop.f32.mrf.mxu0
      %v8991 = vadd.f32 %v8962, %v8990
      %8992 = vdwg.mxu0
      %8993 = vmatpush.bf16.msra.mxu0 %v7715
      %8994 = vmatpush.bf16.msra.mxu0 %v7708
      %8995 = vmatpush.bf16.msra.mxu0 %v7701
      %8996 = vmatpush.bf16.msra.mxu0 %v7694
      %8997 = vmatpush.bf16.msra.mxu0 %v7687
      %8998 = vmatpush.bf16.msra.mxu0 %v7680
      %8999 = vmatpush.bf16.msra.mxu0 %v7673
      %9000 = vmatpush.bf16.msra.mxu0 %v7666
      %9001 = vmatmul.bf16.gmra.mxu0 %v6722
      %v9002 = vpop.f32.mrf.mxu0
      %v9003 = vadd.f32 %v8974, %v9002
      %v9004 = vpop.f32.mrf.mxu0
      %v9005 = vadd.f32 %v8976, %v9004
      %9006 = vmatmul.bf16.gmra.mxu0 %v6727
      %v9007 = vpop.f32.mrf.mxu0
      %v9008 = vadd.f32 %v8979, %v9007
      %v9009 = vpop.f32.mrf.mxu0
      %v9010 = vadd.f32 %v8981, %v9009
      %9011 = vmatmul.bf16.gmra.mxu0 %v6732
      %v9012 = vpop.f32.mrf.mxu0
      %v9013 = vadd.f32 %v8984, %v9012
      %v9014 = vpop.f32.mrf.mxu0
      %v9015 = vadd.f32 %v8986, %v9014
      %9016 = vmatmul.bf16.gmra.mxu0 %v6737
      %v9017 = vpop.f32.mrf.mxu0
      %v9018 = vadd.f32 %v8989, %v9017
      %v9019 = vpop.f32.mrf.mxu0
      %v9020 = vadd.f32 %v8991, %v9019
      %9021 = vdwg.mxu0
      %9022 = vmatpush.bf16.msra.mxu0 %v7771
      %9023 = vmatpush.bf16.msra.mxu0 %v7764
      %9024 = vmatpush.bf16.msra.mxu0 %v7757
      %9025 = vmatpush.bf16.msra.mxu0 %v7750
      %9026 = vmatpush.bf16.msra.mxu0 %v7743
      %9027 = vmatpush.bf16.msra.mxu0 %v7736
      %9028 = vmatpush.bf16.msra.mxu0 %v7729
      %9029 = vmatpush.bf16.msra.mxu0 %v7722
      %9030 = vmatmul.bf16.gmra.mxu0 %v6723
      %v9031 = vpop.f32.mrf.mxu0
      %v9032 = vadd.f32 %v9003, %v9031
      %v9033 = vpop.f32.mrf.mxu0
      %v9034 = vadd.f32 %v9005, %v9033
      %9035 = vmatmul.bf16.gmra.mxu0 %v6728
      %v9036 = vpop.f32.mrf.mxu0
      %v9037 = vadd.f32 %v9008, %v9036
      %v9038 = vpop.f32.mrf.mxu0
      %v9039 = vadd.f32 %v9010, %v9038
      %9040 = vmatmul.bf16.gmra.mxu0 %v6733
      %v9041 = vpop.f32.mrf.mxu0
      %v9042 = vadd.f32 %v9013, %v9041
      %v9043 = vpop.f32.mrf.mxu0
      %v9044 = vadd.f32 %v9015, %v9043
      %9045 = vmatmul.bf16.gmra.mxu0 %v6738
      %v9046 = vpop.f32.mrf.mxu0
      %v9047 = vadd.f32 %v9018, %v9046
      %v9048 = vpop.f32.mrf.mxu0
      %v9049 = vadd.f32 %v9020, %v9048
      %9050 = vdwg.mxu0
      %9051 = vmatpush.bf16.msra.mxu0 0
      %9052 = vmatpush.bf16.msra.mxu0 0
      %9053 = vmatpush.bf16.msra.mxu0 0
      %9054 = vmatpush.bf16.msra.mxu0 0
      %9055 = vmatpush.bf16.msra.mxu0 %v7799
      %9056 = vmatpush.bf16.msra.mxu0 %v7792
      %9057 = vmatpush.bf16.msra.mxu0 %v7785
      %9058 = vmatpush.bf16.msra.mxu0 %v7778
      %9059 = vmatmul.bf16.gmra.mxu0 %v8054
      %v9060 = vpop.f32.mrf.mxu0
      %v9061 = vadd.f32 %v9032, %v9060
      %v9062 = vpop.f32.mrf.mxu0
      %v9063 = vadd.f32 %v9034, %v9062
      %9064 = vmatmul.bf16.gmra.mxu0 %v8057
      %v9065 = vpop.f32.mrf.mxu0
      %v9066 = vadd.f32 %v9037, %v9065
      %v9067 = vpop.f32.mrf.mxu0
      %v9068 = vadd.f32 %v9039, %v9067
      %9069 = vmatmul.bf16.gmra.mxu0 %v8060
      %v9070 = vpop.f32.mrf.mxu0
      %v9071 = vadd.f32 %v9042, %v9070
      %v9072 = vpop.f32.mrf.mxu0
      %v9073 = vadd.f32 %v9044, %v9072
      %9074 = vmatmul.bf16.gmra.mxu0 %v8063
      %v9075 = vpop.f32.mrf.mxu0
      %v9076 = vadd.f32 %v9047, %v9075
      %v9077 = vpop.f32.mrf.mxu0
      %v9078 = vadd.f32 %v9049, %v9077
      %9079 = vdwg.mxu0
      %v9080 = vmax.f32 %v8191, 0.0
      %v9081 = vmax.f32 %v8336, 0.0
      %v9082 = vmax.f32 %v8481, 0.0
      %v9083 = vmax.f32 %v8626, 0.0
      %v9084 = vmax.f32 %v8771, 0.0
      %v9085 = vmax.f32 %v8916, 0.0
      %v9086 = vmax.f32 %v9061, 0.0
      %v9087 = vmax.f32 %v8193, 0.0
      %v9088 = vmax.f32 %v8338, 0.0
      %v9089 = vmax.f32 %v8483, 0.0
      %v9090 = vmax.f32 %v8628, 0.0
      %v9091 = vmax.f32 %v8773, 0.0
      %v9092 = vmax.f32 %v8918, 0.0
      %v9093 = vmax.f32 %v9063, 0.0
      %v9094 = vmax.f32 %v8196, 0.0
      %v9095 = vmax.f32 %v8341, 0.0
      %v9096 = vmax.f32 %v8486, 0.0
      %v9097 = vmax.f32 %v8631, 0.0
      %v9098 = vmax.f32 %v8776, 0.0
      %v9099 = vmax.f32 %v8921, 0.0
      %v9100 = vmax.f32 %v9066, 0.0
      %v9101 = vmax.f32 %v8198, 0.0
      %v9102 = vmax.f32 %v8343, 0.0
      %v9103 = vmax.f32 %v8488, 0.0
      %v9104 = vmax.f32 %v8633, 0.0
      %v9105 = vmax.f32 %v8778, 0.0
      %v9106 = vmax.f32 %v8923, 0.0
      %v9107 = vmax.f32 %v9068, 0.0
      %v9108 = vmax.f32 %v8201, 0.0
      %v9109 = vmax.f32 %v8346, 0.0
      %v9110 = vmax.f32 %v8491, 0.0
      %v9111 = vmax.f32 %v8636, 0.0
      %v9112 = vmax.f32 %v8781, 0.0
      %v9113 = vmax.f32 %v8926, 0.0
      %v9114 = vmax.f32 %v9071, 0.0
      %v9115 = vmax.f32 %v8203, 0.0
      %v9116 = vmax.f32 %v8348, 0.0
      %v9117 = vmax.f32 %v8493, 0.0
      %v9118 = vmax.f32 %v8638, 0.0
      %v9119 = vmax.f32 %v8783, 0.0
      %v9120 = vmax.f32 %v8928, 0.0
      %v9121 = vmax.f32 %v9073, 0.0
      %v9122 = vmax.f32 %v8206, 0.0
      %v9123 = vmax.f32 %v8351, 0.0
      %v9124 = vmax.f32 %v8496, 0.0
      %v9125 = vmax.f32 %v8641, 0.0
      %v9126 = vmax.f32 %v8786, 0.0
      %v9127 = vmax.f32 %v8931, 0.0
      %v9128 = vmax.f32 %v9076, 0.0
      %v9129 = vmax.f32 %v8208, 0.0
      %v9130 = vmax.f32 %v8353, 0.0
      %v9131 = vmax.f32 %v8498, 0.0
      %v9132 = vmax.f32 %v8643, 0.0
      %v9133 = vmax.f32 %v8788, 0.0
      %v9134 = vmax.f32 %v8933, 0.0
      %v9135 = vmax.f32 %v9078, 0.0
      %9136 = vst [vmem:[#allocation5] sm:$0xff] %v9080
      %9137 = vst [vmem:[#allocation5 + $0x8] sm:$0xff] %v9081
      %9138 = vst [vmem:[#allocation5 + $0x10] sm:$0xff] %v9082
      %9139 = vst [vmem:[#allocation5 + $0x18] sm:$0xff] %v9083
      %9140 = vst [vmem:[#allocation5 + $0x20] sm:$0xff] %v9084
      %9141 = vst [vmem:[#allocation5 + $0x28] sm:$0xff] %v9085
      %9142 = vst [vmem:[#allocation5 + $0x30] sm:$0xff] %v9086
      %9143 = vst [vmem:[#allocation5 + $0x38] sm:$0xff] %v9087
      %9144 = vst [vmem:[#allocation5 + $0x40] sm:$0xff] %v9088
      %9145 = vst [vmem:[#allocation5 + $0x48] sm:$0xff] %v9089
      %9146 = vst [vmem:[#allocation5 + $0x50] sm:$0xff] %v9090
      %9147 = vst [vmem:[#allocation5 + $0x58] sm:$0xff] %v9091
      %9148 = vst [vmem:[#allocation5 + $0x60] sm:$0xff] %v9092
      %9149 = vst [vmem:[#allocation5 + $0x68] sm:$0xff] %v9093
      %9150 = vst [vmem:[#allocation5 + $0x70] sm:$0xff] %v9094
      %9151 = vst [vmem:[#allocation5 + $0x78] sm:$0xff] %v9095
      %9152 = vst [vmem:[#allocation5 + $0x80] sm:$0xff] %v9096
      %9153 = vst [vmem:[#allocation5 + $0x88] sm:$0xff] %v9097
      %9154 = vst [vmem:[#allocation5 + $0x90] sm:$0xff] %v9098
      %9155 = vst [vmem:[#allocation5 + $0x98] sm:$0xff] %v9099
      %9156 = vst [vmem:[#allocation5 + $0xa0] sm:$0xff] %v9100
      %9157 = vst [vmem:[#allocation5 + $0xa8] sm:$0xff] %v9101
      %9158 = vst [vmem:[#allocation5 + $0xb0] sm:$0xff] %v9102
      %9159 = vst [vmem:[#allocation5 + $0xb8] sm:$0xff] %v9103
      %9160 = vst [vmem:[#allocation5 + $0xc0] sm:$0xff] %v9104
      %9161 = vst [vmem:[#allocation5 + $0xc8] sm:$0xff] %v9105
      %9162 = vst [vmem:[#allocation5 + $0xd0] sm:$0xff] %v9106
      %9163 = vst [vmem:[#allocation5 + $0xd8] sm:$0xff] %v9107
      %9164 = vst [vmem:[#allocation5 + $0xe0] sm:$0xff] %v9108
      %9165 = vst [vmem:[#allocation5 + $0xe8] sm:$0xff] %v9109
      %9166 = vst [vmem:[#allocation5 + $0xf0] sm:$0xff] %v9110
      %9167 = vst [vmem:[#allocation5 + $0xf8] sm:$0xff] %v9111
      %9168 = vst [vmem:[#allocation5 + $0x100] sm:$0xff] %v9112
      %9169 = vst [vmem:[#allocation5 + $0x108] sm:$0xff] %v9113
      %9170 = vst [vmem:[#allocation5 + $0x110] sm:$0xff] %v9114
      %9171 = vst [vmem:[#allocation5 + $0x118] sm:$0xff] %v9115
      %9172 = vst [vmem:[#allocation5 + $0x120] sm:$0xff] %v9116
      %9173 = vst [vmem:[#allocation5 + $0x128] sm:$0xff] %v9117
      %9174 = vst [vmem:[#allocation5 + $0x130] sm:$0xff] %v9118
      %9175 = vst [vmem:[#allocation5 + $0x138] sm:$0xff] %v9119
      %9176 = vst [vmem:[#allocation5 + $0x140] sm:$0xff] %v9120
      %9177 = vst [vmem:[#allocation5 + $0x148] sm:$0xff] %v9121
      %9178 = vst [vmem:[#allocation5 + $0x150] sm:$0xff] %v9122
      %9179 = vst [vmem:[#allocation5 + $0x158] sm:$0xff] %v9123
      %9180 = vst [vmem:[#allocation5 + $0x160] sm:$0xff] %v9124
      %9181 = vst [vmem:[#allocation5 + $0x168] sm:$0xff] %v9125
      %9182 = vst [vmem:[#allocation5 + $0x170] sm:$0xff] %v9126
      %9183 = vst [vmem:[#allocation5 + $0x178] sm:$0xff] %v9127
      %9184 = vst [vmem:[#allocation5 + $0x180] sm:$0xff] %v9128
      %9185 = vst [vmem:[#allocation5 + $0x188] sm:$0xff] %v9129
      %9186 = vst [vmem:[#allocation5 + $0x190] sm:$0xff] %v9130
      %9187 = vst [vmem:[#allocation5 + $0x198] sm:$0xff] %v9131
      %9188 = vst [vmem:[#allocation5 + $0x1a0] sm:$0xff] %v9132
      %9189 = vst [vmem:[#allocation5 + $0x1a8] sm:$0xff] %v9133
      %9190 = vst [vmem:[#allocation5 + $0x1b0] sm:$0xff] %v9134
      %9191 = vst [vmem:[#allocation5 + $0x1b8] sm:$0xff] %v9135
      %v9192 = vld [vmem:[%s7] sm:$0xff]
      %v9193 = vld [vmem:[%s7 + $0x8] sm:$0xff]
      %v9194 = vld [vmem:[%s7 + $0x10] sm:$0xff]
      %v9195 = vld [vmem:[%s7 + $0x18] sm:$0xff]
      %v9196 = vld [vmem:[%s7 + $0x20] sm:$0xff]
      %v9197 = vld [vmem:[%s7 + $0x28] sm:$0xff]
      %v9198 = vld [vmem:[%s7 + $0x30] sm:$0xff]
      %v9199 = vld [vmem:[%s7 + $0x38] sm:$0xff]
      %v9200 = vld [vmem:[%s7 + $0x40] sm:$0xff]
      %v9201 = vld [vmem:[%s7 + $0x48] sm:$0xff]
      %v9202 = vld [vmem:[%s7 + $0x50] sm:$0xff]
      %v9203 = vld [vmem:[%s7 + $0x58] sm:$0xff]
      %v9204 = vld [vmem:[%s7 + $0x60] sm:$0xff]
      %v9205 = vld [vmem:[%s7 + $0x68] sm:$0xff]
      %v9206 = vld [vmem:[%s7 + $0x70] sm:$0xff]
      %v9207 = vld [vmem:[%s7 + $0x78] sm:$0xff]
      %v9208 = vld [vmem:[%s7 + $0x80] sm:$0xff]
      %v9209 = vld [vmem:[%s7 + $0x88] sm:$0xff]
      %v9210 = vld [vmem:[%s7 + $0x90] sm:$0xff]
      %v9211 = vld [vmem:[%s7 + $0x98] sm:$0xff]
      %v9212 = vld [vmem:[%s7 + $0xa0] sm:$0xff]
      %v9213 = vld [vmem:[%s7 + $0xa8] sm:$0xff]
      %v9214 = vld [vmem:[%s7 + $0xb0] sm:$0xff]
      %v9215 = vld [vmem:[%s7 + $0xb8] sm:$0xff]
      %v9216 = vld [vmem:[%s7 + $0xc0] sm:$0xff]
      %v9217 = vld [vmem:[%s7 + $0xc8] sm:$0xff]
      %v9218 = vld [vmem:[%s7 + $0xd0] sm:$0xff]
      %v9219 = vld [vmem:[%s7 + $0xd8] sm:$0xff]
      %v9220 = vld [vmem:[%s7 + $0xe0] sm:$0xff]
      %v9221 = vld [vmem:[%s7 + $0xe8] sm:$0xff]
      %v9222 = vld [vmem:[%s7 + $0xf0] sm:$0xff]
      %v9223 = vld [vmem:[%s7 + $0xf8] sm:$0xff]
      %v9224 = vld [vmem:[%s7 + $0x100] sm:$0xff]
      %v9225 = vld [vmem:[%s7 + $0x108] sm:$0xff]
      %v9226 = vld [vmem:[%s7 + $0x110] sm:$0xff]
      %v9227 = vld [vmem:[%s7 + $0x118] sm:$0xff]
      %v9228 = vld [vmem:[%s7 + $0x120] sm:$0xff]
      %v9229 = vld [vmem:[%s7 + $0x128] sm:$0xff]
      %v9230 = vld [vmem:[%s7 + $0x130] sm:$0xff]
      %v9231 = vld [vmem:[%s7 + $0x138] sm:$0xff]
      %v9232 = vld [vmem:[%s7 + $0x140] sm:$0xff]
      %v9233 = vld [vmem:[%s7 + $0x148] sm:$0xff]
      %v9234 = vld [vmem:[%s7 + $0x150] sm:$0xff]
      %v9235 = vld [vmem:[%s7 + $0x158] sm:$0xff]
      %v9236 = vld [vmem:[%s7 + $0x160] sm:$0xff]
      %v9237 = vld [vmem:[%s7 + $0x168] sm:$0xff]
      %v9238 = vld [vmem:[%s7 + $0x170] sm:$0xff]
      %v9239 = vld [vmem:[%s7 + $0x178] sm:$0xff]
      %v9240 = vld [vmem:[%s7 + $0x180] sm:$0xff]
      %v9241 = vld [vmem:[%s7 + $0x188] sm:$0xff]
      %v9242 = vld [vmem:[%s7 + $0x190] sm:$0xff]
      %v9243 = vld [vmem:[%s7 + $0x198] sm:$0xff]
      %v9244 = vld [vmem:[%s7 + $0x1a0] sm:$0xff]
      %v9245 = vld [vmem:[%s7 + $0x1a8] sm:$0xff]
      %v9246 = vld [vmem:[%s7 + $0x1b0] sm:$0xff]
      %v9247 = vld [vmem:[%s7 + $0x1b8] sm:$0xff]
      %v9248 = vld [vmem:[%s7 + $0x1c0] sm:$0xff]
      %v9249 = vld [vmem:[%s7 + $0x1c8] sm:$0xff]
      %v9250 = vld [vmem:[%s7 + $0x1d0] sm:$0xff]
      %v9251 = vld [vmem:[%s7 + $0x1d8] sm:$0xff]
      %v9252 = vld [vmem:[%s7 + $0x1e0] sm:$0xff]
      %v9253 = vld [vmem:[%s7 + $0x1e8] sm:$0xff]
      %v9254 = vld [vmem:[%s7 + $0x1f0] sm:$0xff]
      %v9255 = vld [vmem:[%s7 + $0x1f8] sm:$0xff]
      %v9256 = vld [vmem:[%s7 + $0x200] sm:$0xff]
      %v9257 = vld [vmem:[%s7 + $0x208] sm:$0xff]
      %v9258 = vld [vmem:[%s7 + $0x210] sm:$0xff]
      %v9259 = vld [vmem:[%s7 + $0x218] sm:$0xff]
      %v9260 = vld [vmem:[%s7 + $0x220] sm:$0xff]
      %v9261 = vld [vmem:[%s7 + $0x228] sm:$0xff]
      %v9262 = vld [vmem:[%s7 + $0x230] sm:$0xff]
      %v9263 = vld [vmem:[%s7 + $0x238] sm:$0xff]
      %v9264 = vld [vmem:[%s7 + $0x240] sm:$0xff]
      %v9265 = vld [vmem:[%s7 + $0x248] sm:$0xff]
      %v9266 = vld [vmem:[%s7 + $0x250] sm:$0xff]
      %v9267 = vld [vmem:[%s7 + $0x258] sm:$0xff]
      %v9268 = vld [vmem:[%s7 + $0x260] sm:$0xff]
      %v9269 = vld [vmem:[%s7 + $0x268] sm:$0xff]
      %v9270 = vld [vmem:[%s7 + $0x270] sm:$0xff]
      %v9271 = vld [vmem:[%s7 + $0x278] sm:$0xff]
      %v9272 = vld [vmem:[%s7 + $0x280] sm:$0xff]
      %v9273 = vld [vmem:[%s7 + $0x288] sm:$0xff]
      %v9274 = vld [vmem:[%s7 + $0x290] sm:$0xff]
      %v9275 = vld [vmem:[%s7 + $0x298] sm:$0xff]
      %v9276 = vld [vmem:[%s7 + $0x2a0] sm:$0xff]
      %v9277 = vld [vmem:[%s7 + $0x2a8] sm:$0xff]
      %v9278 = vld [vmem:[%s7 + $0x2b0] sm:$0xff]
      %v9279 = vld [vmem:[%s7 + $0x2b8] sm:$0xff]
      %v9280 = vld [vmem:[%s7 + $0x2c0] sm:$0xff]
      %v9281 = vld [vmem:[%s7 + $0x2c8] sm:$0xff]
      %v9282 = vld [vmem:[%s7 + $0x2d0] sm:$0xff]
      %v9283 = vld [vmem:[%s7 + $0x2d8] sm:$0xff]
      %v9284 = vld [vmem:[%s7 + $0x2e0] sm:$0xff]
      %v9285 = vld [vmem:[%s7 + $0x2e8] sm:$0xff]
      %v9286 = vld [vmem:[%s7 + $0x2f0] sm:$0xff]
      %v9287 = vld [vmem:[%s7 + $0x2f8] sm:$0xff]
      %v9288 = vld [vmem:[%s7 + $0x300] sm:$0xff]
      %v9289 = vld [vmem:[%s7 + $0x308] sm:$0xff]
      %v9290 = vld [vmem:[%s7 + $0x310] sm:$0xff]
      %v9291 = vld [vmem:[%s7 + $0x318] sm:$0xff]
      %v9292 = vld [vmem:[%s7 + $0x320] sm:$0xff]
      %v9293 = vld [vmem:[%s7 + $0x328] sm:$0xff]
      %v9294 = vld [vmem:[%s7 + $0x330] sm:$0xff]
      %v9295 = vld [vmem:[%s7 + $0x338] sm:$0xff]
      %v9296 = vld [vmem:[%s7 + $0x340] sm:$0xff]
      %v9297 = vld [vmem:[%s7 + $0x348] sm:$0xff]
      %v9298 = vld [vmem:[%s7 + $0x350] sm:$0xff]
      %v9299 = vld [vmem:[%s7 + $0x358] sm:$0xff]
      %v9300 = vld [vmem:[%s7 + $0x360] sm:$0xff]
      %v9301 = vld [vmem:[%s7 + $0x368] sm:$0xff]
      %v9302 = vld [vmem:[%s7 + $0x370] sm:$0xff]
      %v9303 = vld [vmem:[%s7 + $0x378] sm:$0xff]
      %v9304 = vld [vmem:[%s7 + $0x380] sm:$0xff]
      %v9305 = vld [vmem:[%s7 + $0x388] sm:$0xff]
      %v9306 = vld [vmem:[%s7 + $0x390] sm:$0xff]
      %v9307 = vld [vmem:[%s7 + $0x398] sm:$0xff]
      %v9308 = vld [vmem:[%s7 + $0x3a0] sm:$0xff]
      %v9309 = vld [vmem:[%s7 + $0x3a8] sm:$0xff]
      %v9310 = vld [vmem:[%s7 + $0x3b0] sm:$0xff]
      %v9311 = vld [vmem:[%s7 + $0x3b8] sm:$0xff]
      %v9312 = vld [vmem:[%s7 + $0x3c0] sm:$0xff]
      %v9313 = vld [vmem:[%s7 + $0x3c8] sm:$0xff]
      %v9314 = vld [vmem:[%s7 + $0x3d0] sm:$0xff]
      %v9315 = vld [vmem:[%s7 + $0x3d8] sm:$0xff]
      %v9316 = vld [vmem:[%s7 + $0x3e0] sm:$0xff]
      %v9317 = vld [vmem:[%s7 + $0x3e8] sm:$0xff]
      %v9318 = vld [vmem:[%s7 + $0x3f0] sm:$0xff]
      %v9319 = vld [vmem:[%s7 + $0x3f8] sm:$0xff]
      %v9320 = vld [vmem:[%s7 + $0x400] sm:$0xff]
      %v9321 = vld [vmem:[%s7 + $0x408] sm:$0xff]
      %v9322 = vld [vmem:[%s7 + $0x410] sm:$0xff]
      %v9323 = vld [vmem:[%s7 + $0x418] sm:$0xff]
      %v9324 = vld [vmem:[%s7 + $0x420] sm:$0xff]
      %v9325 = vld [vmem:[%s7 + $0x428] sm:$0xff]
      %v9326 = vld [vmem:[%s7 + $0x430] sm:$0xff]
      %v9327 = vld [vmem:[%s7 + $0x438] sm:$0xff]
      %v9328 = vld [vmem:[%s7 + $0x440] sm:$0xff]
      %v9329 = vld [vmem:[%s7 + $0x448] sm:$0xff]
      %v9330 = vld [vmem:[%s7 + $0x450] sm:$0xff]
      %v9331 = vld [vmem:[%s7 + $0x458] sm:$0xff]
      %v9332 = vld [vmem:[%s7 + $0x460] sm:$0xff]
      %v9333 = vld [vmem:[%s7 + $0x468] sm:$0xff]
      %v9334 = vld [vmem:[%s7 + $0x470] sm:$0xff]
      %v9335 = vld [vmem:[%s7 + $0x478] sm:$0xff]
      %v9336 = vld [vmem:[%s7 + $0x480] sm:$0xff]
      %v9337 = vld [vmem:[%s7 + $0x488] sm:$0xff]
      %v9338 = vld [vmem:[%s7 + $0x490] sm:$0xff]
      %v9339 = vld [vmem:[%s7 + $0x498] sm:$0xff]
      %v9340 = vld [vmem:[%s7 + $0x4a0] sm:$0xff]
      %v9341 = vld [vmem:[%s7 + $0x4a8] sm:$0xff]
      %v9342 = vld [vmem:[%s7 + $0x4b0] sm:$0xff]
      %v9343 = vld [vmem:[%s7 + $0x4b8] sm:$0xff]
      %v9344 = vld [vmem:[%s7 + $0x4c0] sm:$0xff]
      %v9345 = vld [vmem:[%s7 + $0x4c8] sm:$0xff]
      %v9346 = vld [vmem:[%s7 + $0x4d0] sm:$0xff]
      %v9347 = vld [vmem:[%s7 + $0x4d8] sm:$0xff]
      %v9348 = vld [vmem:[%s7 + $0x4e0] sm:$0xff]
      %v9349 = vld [vmem:[%s7 + $0x4e8] sm:$0xff]
      %v9350 = vld [vmem:[%s7 + $0x4f0] sm:$0xff]
      %v9351 = vld [vmem:[%s7 + $0x4f8] sm:$0xff]
      %v9352 = vld [vmem:[%s7 + $0x500] sm:$0xff]
      %v9353 = vld [vmem:[%s7 + $0x508] sm:$0xff]
      %v9354 = vld [vmem:[%s7 + $0x510] sm:$0xff]
      %v9355 = vld [vmem:[%s7 + $0x518] sm:$0xff]
      %v9356 = vld [vmem:[%s7 + $0x520] sm:$0xff]
      %v9357 = vld [vmem:[%s7 + $0x528] sm:$0xff]
      %v9358 = vld [vmem:[%s7 + $0x530] sm:$0xff]
      %v9359 = vld [vmem:[%s7 + $0x538] sm:$0xff]
      %v9360 = vld [vmem:[%s7 + $0x540] sm:$0xff]
      %v9361 = vld [vmem:[%s7 + $0x548] sm:$0xff]
      %v9362 = vld [vmem:[%s7 + $0x550] sm:$0xff]
      %v9363 = vld [vmem:[%s7 + $0x558] sm:$0xff]
      %v9364 = vld [vmem:[%s7 + $0x560] sm:$0xff]
      %v9365 = vld [vmem:[%s7 + $0x568] sm:$0xff]
      %v9366 = vld [vmem:[%s7 + $0x570] sm:$0xff]
      %v9367 = vld [vmem:[%s7 + $0x578] sm:$0xff]
      %v9368 = vld [vmem:[%s7 + $0x580] sm:$0xff]
      %v9369 = vld [vmem:[%s7 + $0x588] sm:$0xff]
      %v9370 = vld [vmem:[%s7 + $0x590] sm:$0xff]
      %v9371 = vld [vmem:[%s7 + $0x598] sm:$0xff]
      %v9372 = vld [vmem:[%s7 + $0x5a0] sm:$0xff]
      %v9373 = vld [vmem:[%s7 + $0x5a8] sm:$0xff]
      %v9374 = vld [vmem:[%s7 + $0x5b0] sm:$0xff]
      %v9375 = vld [vmem:[%s7 + $0x5b8] sm:$0xff]
      %v9376 = vld [vmem:[%s7 + $0x5c0] sm:$0xff]
      %v9377 = vld [vmem:[%s7 + $0x5c8] sm:$0xff]
      %v9378 = vld [vmem:[%s7 + $0x5d0] sm:$0xff]
      %v9379 = vld [vmem:[%s7 + $0x5d8] sm:$0xff]
      %v9380 = vld [vmem:[%s7 + $0x5e0] sm:$0xff]
      %v9381 = vld [vmem:[%s7 + $0x5e8] sm:$0xff]
      %v9382 = vld [vmem:[%s7 + $0x5f0] sm:$0xff]
      %v9383 = vld [vmem:[%s7 + $0x5f8] sm:$0xff]
      %v9384 = vld [vmem:[%s7 + $0x600] sm:$0xff]
      %v9385 = vld [vmem:[%s7 + $0x608] sm:$0xff]
      %v9386 = vld [vmem:[%s7 + $0x610] sm:$0xff]
      %v9387 = vld [vmem:[%s7 + $0x618] sm:$0xff]
      %v9388 = vld [vmem:[%s7 + $0x620] sm:$0xff]
      %v9389 = vld [vmem:[%s7 + $0x628] sm:$0xff]
      %v9390 = vld [vmem:[%s7 + $0x630] sm:$0xff]
      %v9391 = vld [vmem:[%s7 + $0x638] sm:$0xff]
      %v9392 = vld [vmem:[%s7 + $0x640] sm:$0xff]
      %v9393 = vld [vmem:[%s7 + $0x648] sm:$0xff]
      %v9394 = vld [vmem:[%s7 + $0x650] sm:$0xff]
      %v9395 = vld [vmem:[%s7 + $0x658] sm:$0xff]
      %v9396 = vld [vmem:[%s7 + $0x660] sm:$0xff]
      %v9397 = vld [vmem:[%s7 + $0x668] sm:$0xff]
      %v9398 = vld [vmem:[%s7 + $0x670] sm:$0xff]
      %v9399 = vld [vmem:[%s7 + $0x678] sm:$0xff]
      %v9400 = vld [vmem:[%s7 + $0x680] sm:$0xff]
      %v9401 = vld [vmem:[%s7 + $0x688] sm:$0xff]
      %v9402 = vld [vmem:[%s7 + $0x690] sm:$0xff]
      %v9403 = vld [vmem:[%s7 + $0x698] sm:$0xff]
      %v9404 = vld [vmem:[%s7 + $0x6a0] sm:$0xff]
      %v9405 = vld [vmem:[%s7 + $0x6a8] sm:$0xff]
      %v9406 = vld [vmem:[%s7 + $0x6b0] sm:$0xff]
      %v9407 = vld [vmem:[%s7 + $0x6b8] sm:$0xff]
      %v9408 = vld [vmem:[%s7 + $0x6c0] sm:$0xff]
      %v9409 = vld [vmem:[%s7 + $0x6c8] sm:$0xff]
      %v9410 = vld [vmem:[%s7 + $0x6d0] sm:$0xff]
      %v9411 = vld [vmem:[%s7 + $0x6d8] sm:$0xff]
      %v9412 = vld [vmem:[%s7 + $0x6e0] sm:$0xff]
      %v9413 = vld [vmem:[%s7 + $0x6e8] sm:$0xff]
      %v9414 = vld [vmem:[%s7 + $0x6f0] sm:$0xff]
      %v9415 = vld [vmem:[%s7 + $0x6f8] sm:$0xff]
      %v9416 = vld [vmem:[%s7 + $0x700] sm:$0xff]
      %v9417 = vld [vmem:[%s7 + $0x708] sm:$0xff]
      %v9418 = vld [vmem:[%s7 + $0x710] sm:$0xff]
      %v9419 = vld [vmem:[%s7 + $0x718] sm:$0xff]
      %v9420 = vld [vmem:[%s7 + $0x720] sm:$0xff]
      %v9421 = vld [vmem:[%s7 + $0x728] sm:$0xff]
      %v9422 = vld [vmem:[%s7 + $0x730] sm:$0xff]
      %v9423 = vld [vmem:[%s7 + $0x738] sm:$0xff]
      %v9424 = vld [vmem:[%s7 + $0x740] sm:$0xff]
      %v9425 = vld [vmem:[%s7 + $0x748] sm:$0xff]
      %v9426 = vld [vmem:[%s7 + $0x750] sm:$0xff]
      %v9427 = vld [vmem:[%s7 + $0x758] sm:$0xff]
      %v9428 = vld [vmem:[%s7 + $0x760] sm:$0xff]
      %v9429 = vld [vmem:[%s7 + $0x768] sm:$0xff]
      %v9430 = vld [vmem:[%s7 + $0x770] sm:$0xff]
      %v9431 = vld [vmem:[%s7 + $0x778] sm:$0xff]
      %v9432 = vld [vmem:[%s7 + $0x780] sm:$0xff]
      %v9433 = vld [vmem:[%s7 + $0x788] sm:$0xff]
      %v9434 = vld [vmem:[%s7 + $0x790] sm:$0xff]
      %v9435 = vld [vmem:[%s7 + $0x798] sm:$0xff]
      %v9436 = vld [vmem:[%s7 + $0x7a0] sm:$0xff]
      %v9437 = vld [vmem:[%s7 + $0x7a8] sm:$0xff]
      %v9438 = vld [vmem:[%s7 + $0x7b0] sm:$0xff]
      %v9439 = vld [vmem:[%s7 + $0x7b8] sm:$0xff]
      %v9440 = vld [vmem:[%s7 + $0x7c0] sm:$0xff]
      %v9441 = vld [vmem:[%s7 + $0x7c8] sm:$0xff]
      %v9442 = vld [vmem:[%s7 + $0x7d0] sm:$0xff]
      %v9443 = vld [vmem:[%s7 + $0x7d8] sm:$0xff]
      %v9444 = vld [vmem:[%s7 + $0x7e0] sm:$0xff]
      %v9445 = vld [vmem:[%s7 + $0x7e8] sm:$0xff]
      %v9446 = vld [vmem:[%s7 + $0x7f0] sm:$0xff]
      %v9447 = vld [vmem:[%s7 + $0x7f8] sm:$0xff]
      %v9448 = vld [vmem:[%s7 + $0x800] sm:$0xff]
      %v9449 = vld [vmem:[%s7 + $0x808] sm:$0xff]
      %v9450 = vld [vmem:[%s7 + $0x810] sm:$0xff]
      %v9451 = vld [vmem:[%s7 + $0x818] sm:$0xff]
      %v9452 = vld [vmem:[%s7 + $0x820] sm:$0xff]
      %v9453 = vld [vmem:[%s7 + $0x828] sm:$0xff]
      %v9454 = vld [vmem:[%s7 + $0x830] sm:$0xff]
      %v9455 = vld [vmem:[%s7 + $0x838] sm:$0xff]
      %v9456 = vld [vmem:[%s7 + $0x840] sm:$0xff]
      %v9457 = vld [vmem:[%s7 + $0x848] sm:$0xff]
      %v9458 = vld [vmem:[%s7 + $0x850] sm:$0xff]
      %v9459 = vld [vmem:[%s7 + $0x858] sm:$0xff]
      %v9460 = vld [vmem:[%s7 + $0x860] sm:$0xff]
      %v9461 = vld [vmem:[%s7 + $0x868] sm:$0xff]
      %v9462 = vld [vmem:[%s7 + $0x870] sm:$0xff]
      %v9463 = vld [vmem:[%s7 + $0x878] sm:$0xff]
      %v9464 = vld [vmem:[%s7 + $0x880] sm:$0xff]
      %v9465 = vld [vmem:[%s7 + $0x888] sm:$0xff]
      %v9466 = vld [vmem:[%s7 + $0x890] sm:$0xff]
      %v9467 = vld [vmem:[%s7 + $0x898] sm:$0xff]
      %v9468 = vld [vmem:[%s7 + $0x8a0] sm:$0xff]
      %v9469 = vld [vmem:[%s7 + $0x8a8] sm:$0xff]
      %v9470 = vld [vmem:[%s7 + $0x8b0] sm:$0xff]
      %v9471 = vld [vmem:[%s7 + $0x8b8] sm:$0xff]
      %v9472 = vld [vmem:[%s7 + $0x8c0] sm:$0xff]
      %v9473 = vld [vmem:[%s7 + $0x8c8] sm:$0xff]
      %v9474 = vld [vmem:[%s7 + $0x8d0] sm:$0xff]
      %v9475 = vld [vmem:[%s7 + $0x8d8] sm:$0xff]
      %v9476 = vld [vmem:[%s7 + $0x8e0] sm:$0xff]
      %v9477 = vld [vmem:[%s7 + $0x8e8] sm:$0xff]
      %v9478 = vld [vmem:[%s7 + $0x8f0] sm:$0xff]
      %v9479 = vld [vmem:[%s7 + $0x8f8] sm:$0xff]
      %v9480 = vld [vmem:[%s7 + $0x900] sm:$0xff]
      %v9481 = vld [vmem:[%s7 + $0x908] sm:$0xff]
      %v9482 = vld [vmem:[%s7 + $0x910] sm:$0xff]
      %v9483 = vld [vmem:[%s7 + $0x918] sm:$0xff]
      %v9484 = vld [vmem:[%s7 + $0x920] sm:$0xff]
      %v9485 = vld [vmem:[%s7 + $0x928] sm:$0xff]
      %v9486 = vld [vmem:[%s7 + $0x930] sm:$0xff]
      %v9487 = vld [vmem:[%s7 + $0x938] sm:$0xff]
      %v9488 = vld [vmem:[%s7 + $0x940] sm:$0xff]
      %v9489 = vld [vmem:[%s7 + $0x948] sm:$0xff]
      %v9490 = vld [vmem:[%s7 + $0x950] sm:$0xff]
      %v9491 = vld [vmem:[%s7 + $0x958] sm:$0xff]
      %v9492 = vld [vmem:[%s7 + $0x960] sm:$0xff]
      %v9493 = vld [vmem:[%s7 + $0x968] sm:$0xff]
      %v9494 = vld [vmem:[%s7 + $0x970] sm:$0xff]
      %v9495 = vld [vmem:[%s7 + $0x978] sm:$0xff]
      %v9496 = vld [vmem:[%s7 + $0x980] sm:$0xff]
      %v9497 = vld [vmem:[%s7 + $0x988] sm:$0xff]
      %v9498 = vld [vmem:[%s7 + $0x990] sm:$0xff]
      %v9499 = vld [vmem:[%s7 + $0x998] sm:$0xff]
      %v9500 = vld [vmem:[%s7 + $0x9a0] sm:$0xff]
      %v9501 = vld [vmem:[%s7 + $0x9a8] sm:$0xff]
      %v9502 = vld [vmem:[%s7 + $0x9b0] sm:$0xff]
      %v9503 = vld [vmem:[%s7 + $0x9b8] sm:$0xff]
      %v9504 = vld [vmem:[%s7 + $0x9c0] sm:$0xff]
      %v9505 = vld [vmem:[%s7 + $0x9c8] sm:$0xff]
      %v9506 = vld [vmem:[%s7 + $0x9d0] sm:$0xff]
      %v9507 = vld [vmem:[%s7 + $0x9d8] sm:$0xff]
      %v9508 = vld [vmem:[%s7 + $0x9e0] sm:$0xff]
      %v9509 = vld [vmem:[%s7 + $0x9e8] sm:$0xff]
      %v9510 = vld [vmem:[%s7 + $0x9f0] sm:$0xff]
      %v9511 = vld [vmem:[%s7 + $0x9f8] sm:$0xff]
      %v9512 = vld [vmem:[%s7 + $0xa00] sm:$0xff]
      %v9513 = vld [vmem:[%s7 + $0xa08] sm:$0xff]
      %v9514 = vld [vmem:[%s7 + $0xa10] sm:$0xff]
      %v9515 = vld [vmem:[%s7 + $0xa18] sm:$0xff]
      %v9516 = vld [vmem:[%s7 + $0xa20] sm:$0xff]
      %v9517 = vld [vmem:[%s7 + $0xa28] sm:$0xff]
      %v9518 = vld [vmem:[%s7 + $0xa30] sm:$0xff]
      %v9519 = vld [vmem:[%s7 + $0xa38] sm:$0xff]
      %v9520 = vld [vmem:[%s7 + $0xa40] sm:$0xff]
      %v9521 = vld [vmem:[%s7 + $0xa48] sm:$0xff]
      %v9522 = vld [vmem:[%s7 + $0xa50] sm:$0xff]
      %v9523 = vld [vmem:[%s7 + $0xa58] sm:$0xff]
      %v9524 = vld [vmem:[%s7 + $0xa60] sm:$0xff]
      %v9525 = vld [vmem:[%s7 + $0xa68] sm:$0xff]
      %v9526 = vld [vmem:[%s7 + $0xa70] sm:$0xff]
      %v9527 = vld [vmem:[%s7 + $0xa78] sm:$0xff]
      %v9528 = vld [vmem:[%s7 + $0xa80] sm:$0xff]
      %v9529 = vld [vmem:[%s7 + $0xa88] sm:$0xff]
      %v9530 = vld [vmem:[%s7 + $0xa90] sm:$0xff]
      %v9531 = vld [vmem:[%s7 + $0xa98] sm:$0xff]
      %v9532 = vld [vmem:[%s7 + $0xaa0] sm:$0xff]
      %v9533 = vld [vmem:[%s7 + $0xaa8] sm:$0xff]
      %v9534 = vld [vmem:[%s7 + $0xab0] sm:$0xff]
      %v9535 = vld [vmem:[%s7 + $0xab8] sm:$0xff]
      %v9536 = vld [vmem:[%s7 + $0xac0] sm:$0xff]
      %v9537 = vld [vmem:[%s7 + $0xac8] sm:$0xff]
      %v9538 = vld [vmem:[%s7 + $0xad0] sm:$0xff]
      %v9539 = vld [vmem:[%s7 + $0xad8] sm:$0xff]
      %v9540 = vld [vmem:[%s7 + $0xae0] sm:$0xff]
      %v9541 = vld [vmem:[%s7 + $0xae8] sm:$0xff]
      %v9542 = vld [vmem:[%s7 + $0xaf0] sm:$0xff]
      %v9543 = vld [vmem:[%s7 + $0xaf8] sm:$0xff]
      %v9544 = vld [vmem:[%s7 + $0xb00] sm:$0xff]
      %v9545 = vld [vmem:[%s7 + $0xb08] sm:$0xff]
      %v9546 = vld [vmem:[%s7 + $0xb10] sm:$0xff]
      %v9547 = vld [vmem:[%s7 + $0xb18] sm:$0xff]
      %v9548 = vld [vmem:[%s7 + $0xb20] sm:$0xff]
      %v9549 = vld [vmem:[%s7 + $0xb28] sm:$0xff]
      %v9550 = vld [vmem:[%s7 + $0xb30] sm:$0xff]
      %v9551 = vld [vmem:[%s7 + $0xb38] sm:$0xff]
      %v9552 = vld [vmem:[%s7 + $0xb40] sm:$0xff]
      %v9553 = vld [vmem:[%s7 + $0xb48] sm:$0xff]
      %v9554 = vld [vmem:[%s7 + $0xb50] sm:$0xff]
      %v9555 = vld [vmem:[%s7 + $0xb58] sm:$0xff]
      %v9556 = vld [vmem:[%s7 + $0xb60] sm:$0xff]
      %v9557 = vld [vmem:[%s7 + $0xb68] sm:$0xff]
      %v9558 = vld [vmem:[%s7 + $0xb70] sm:$0xff]
      %v9559 = vld [vmem:[%s7 + $0xb78] sm:$0xff]
      %v9560 = vld [vmem:[%s7 + $0xb80] sm:$0xff]
      %v9561 = vld [vmem:[%s7 + $0xb88] sm:$0xff]
      %v9562 = vld [vmem:[%s7 + $0xb90] sm:$0xff]
      %v9563 = vld [vmem:[%s7 + $0xb98] sm:$0xff]
      %v9564 = vld [vmem:[%s7 + $0xba0] sm:$0xff]
      %v9565 = vld [vmem:[%s7 + $0xba8] sm:$0xff]
      %v9566 = vld [vmem:[%s7 + $0xbb0] sm:$0xff]
      %v9567 = vld [vmem:[%s7 + $0xbb8] sm:$0xff]
      %v9568 = vld [vmem:[%s7 + $0xbc0] sm:$0xff]
      %v9569 = vld [vmem:[%s7 + $0xbc8] sm:$0xff]
      %v9570 = vld [vmem:[%s7 + $0xbd0] sm:$0xff]
      %v9571 = vld [vmem:[%s7 + $0xbd8] sm:$0xff]
      %v9572 = vld [vmem:[%s7 + $0xbe0] sm:$0xff]
      %v9573 = vld [vmem:[%s7 + $0xbe8] sm:$0xff]
      %v9574 = vld [vmem:[%s7 + $0xbf0] sm:$0xff]
      %v9575 = vld [vmem:[%s7 + $0xbf8] sm:$0xff]
      %v9576 = vld [vmem:[%s7 + $0xc00] sm:$0xff]
      %v9577 = vld [vmem:[%s7 + $0xc08] sm:$0xff]
      %v9578 = vld [vmem:[%s7 + $0xc10] sm:$0xff]
      %v9579 = vld [vmem:[%s7 + $0xc18] sm:$0xff]
      %v9580 = vld [vmem:[%s7 + $0xc20] sm:$0xff]
      %v9581 = vld [vmem:[%s7 + $0xc28] sm:$0xff]
      %v9582 = vld [vmem:[%s7 + $0xc30] sm:$0xff]
      %v9583 = vld [vmem:[%s7 + $0xc38] sm:$0xff]
      %v9584 = vld [vmem:[%s7 + $0xc40] sm:$0xff]
      %v9585 = vld [vmem:[%s7 + $0xc48] sm:$0xff]
      %v9586 = vld [vmem:[%s7 + $0xc50] sm:$0xff]
      %v9587 = vld [vmem:[%s7 + $0xc58] sm:$0xff]
      %v9588 = vld [vmem:[%s7 + $0xc60] sm:$0xff]
      %v9589 = vld [vmem:[%s7 + $0xc68] sm:$0xff]
      %v9590 = vld [vmem:[%s7 + $0xc70] sm:$0xff]
      %v9591 = vld [vmem:[%s7 + $0xc78] sm:$0xff]
      %v9592 = vld [vmem:[#allocation5] sm:$0xff]
      %v9593 = vld [vmem:[#allocation5 + $0x8] sm:$0xff]
      %v9594 = vld [vmem:[#allocation5 + $0x10] sm:$0xff]
      %v9595 = vld [vmem:[#allocation5 + $0x18] sm:$0xff]
      %v9596 = vld [vmem:[#allocation5 + $0x20] sm:$0xff]
      %v9597 = vld [vmem:[#allocation5 + $0x38] sm:$0xff]
      %v9598 = vld [vmem:[#allocation5 + $0x40] sm:$0xff]
      %v9599 = vld [vmem:[#allocation5 + $0x48] sm:$0xff]
      %v9600 = vld [vmem:[#allocation5 + $0x50] sm:$0xff]
      %v9601 = vld [vmem:[#allocation5 + $0x58] sm:$0xff]
      %v9602 = vld [vmem:[#allocation5 + $0x70] sm:$0xff]
      %v9603 = vld [vmem:[#allocation5 + $0x78] sm:$0xff]
      %v9604 = vld [vmem:[#allocation5 + $0x80] sm:$0xff]
      %v9605 = vld [vmem:[#allocation5 + $0x88] sm:$0xff]
      %v9606 = vld [vmem:[#allocation5 + $0x90] sm:$0xff]
      %v9607 = vld [vmem:[#allocation5 + $0xa8] sm:$0xff]
      %v9608 = vld [vmem:[#allocation5 + $0xb0] sm:$0xff]
      %v9609 = vld [vmem:[#allocation5 + $0xb8] sm:$0xff]
      %v9610 = vld [vmem:[#allocation5 + $0xc0] sm:$0xff]
      %v9611 = vld [vmem:[#allocation5 + $0xc8] sm:$0xff]
      %v9612 = vld [vmem:[#allocation5 + $0xe0] sm:$0xff]
      %v9613 = vld [vmem:[#allocation5 + $0xe8] sm:$0xff]
      %v9614 = vld [vmem:[#allocation5 + $0xf0] sm:$0xff]
      %v9615 = vld [vmem:[#allocation5 + $0xf8] sm:$0xff]
      %v9616 = vld [vmem:[#allocation5 + $0x100] sm:$0xff]
      %v9617 = vld [vmem:[#allocation5 + $0x118] sm:$0xff]
      %v9618 = vld [vmem:[#allocation5 + $0x120] sm:$0xff]
      %v9619 = vld [vmem:[#allocation5 + $0x128] sm:$0xff]
      %v9620 = vld [vmem:[#allocation5 + $0x130] sm:$0xff]
      %v9621 = vld [vmem:[#allocation5 + $0x138] sm:$0xff]
      %v9622 = vld [vmem:[#allocation5 + $0x150] sm:$0xff]
      %v9623 = vld [vmem:[#allocation5 + $0x158] sm:$0xff]
      %v9624 = vld [vmem:[#allocation5 + $0x160] sm:$0xff]
      %v9625 = vld [vmem:[#allocation5 + $0x168] sm:$0xff]
      %v9626 = vld [vmem:[#allocation5 + $0x170] sm:$0xff]
      %v9627 = vld [vmem:[#allocation5 + $0x188] sm:$0xff]
      %v9628 = vld [vmem:[#allocation5 + $0x190] sm:$0xff]
      %v9629 = vld [vmem:[#allocation5 + $0x198] sm:$0xff]
      %v9630 = vld [vmem:[#allocation5 + $0x1a0] sm:$0xff]
      %v9631 = vld [vmem:[#allocation5 + $0x1a8] sm:$0xff]
      %v9632 = vmul.f32 %v9192, %v9592
      %v9633 = vmul.f32 %v9193, %v9593
      %v9634 = vmul.f32 %v9194, %v9594
      %v9635 = vmul.f32 %v9195, %v9595
      %v9636 = vmul.f32 %v9196, %v9596
      %v9637 = vmul.f32 %v9197, %v9597
      %v9638 = vmul.f32 %v9198, %v9598
      %v9639 = vmul.f32 %v9199, %v9599
      %v9640 = vmul.f32 %v9200, %v9600
      %v9641 = vmul.f32 %v9201, %v9601
      %v9642 = vmul.f32 %v9202, %v9602
      %v9643 = vmul.f32 %v9203, %v9603
      %v9644 = vmul.f32 %v9204, %v9604
      %v9645 = vmul.f32 %v9205, %v9605
      %v9646 = vmul.f32 %v9206, %v9606
      %v9647 = vmul.f32 %v9207, %v9607
      %v9648 = vmul.f32 %v9208, %v9608
      %v9649 = vmul.f32 %v9209, %v9609
      %v9650 = vmul.f32 %v9210, %v9610
      %v9651 = vmul.f32 %v9211, %v9611
      %v9652 = vmul.f32 %v9212, %v9612
      %v9653 = vmul.f32 %v9213, %v9613
      %v9654 = vmul.f32 %v9214, %v9614
      %v9655 = vmul.f32 %v9215, %v9615
      %v9656 = vmul.f32 %v9216, %v9616
      %v9657 = vmul.f32 %v9217, %v9617
      %v9658 = vmul.f32 %v9218, %v9618
      %v9659 = vmul.f32 %v9219, %v9619
      %v9660 = vmul.f32 %v9220, %v9620
      %v9661 = vmul.f32 %v9221, %v9621
      %v9662 = vmul.f32 %v9222, %v9622
      %v9663 = vmul.f32 %v9223, %v9623
      %v9664 = vmul.f32 %v9224, %v9624
      %v9665 = vmul.f32 %v9225, %v9625
      %v9666 = vmul.f32 %v9226, %v9626
      %v9667 = vmul.f32 %v9227, %v9627
      %v9668 = vmul.f32 %v9228, %v9628
      %v9669 = vmul.f32 %v9229, %v9629
      %v9670 = vmul.f32 %v9230, %v9630
      %v9671 = vmul.f32 %v9231, %v9631
      %v9672 = vmul.f32 %v9232, %v9592
      %v9673 = vmul.f32 %v9233, %v9593
      %v9674 = vmul.f32 %v9234, %v9594
      %v9675 = vmul.f32 %v9235, %v9595
      %v9676 = vmul.f32 %v9236, %v9596
      %v9677 = vmul.f32 %v9237, %v9597
      %v9678 = vmul.f32 %v9238, %v9598
      %v9679 = vmul.f32 %v9239, %v9599
      %v9680 = vmul.f32 %v9240, %v9600
      %v9681 = vmul.f32 %v9241, %v9601
      %v9682 = vmul.f32 %v9242, %v9602
      %v9683 = vmul.f32 %v9243, %v9603
      %v9684 = vmul.f32 %v9244, %v9604
      %v9685 = vmul.f32 %v9245, %v9605
      %v9686 = vmul.f32 %v9246, %v9606
      %v9687 = vmul.f32 %v9247, %v9607
      %v9688 = vmul.f32 %v9248, %v9608
      %v9689 = vmul.f32 %v9249, %v9609
      %v9690 = vmul.f32 %v9250, %v9610
      %v9691 = vmul.f32 %v9251, %v9611
      %v9692 = vmul.f32 %v9252, %v9612
      %v9693 = vmul.f32 %v9253, %v9613
      %v9694 = vmul.f32 %v9254, %v9614
      %v9695 = vmul.f32 %v9255, %v9615
      %v9696 = vmul.f32 %v9256, %v9616
      %v9697 = vmul.f32 %v9257, %v9617
      %v9698 = vmul.f32 %v9258, %v9618
      %v9699 = vmul.f32 %v9259, %v9619
      %v9700 = vmul.f32 %v9260, %v9620
      %v9701 = vmul.f32 %v9261, %v9621
      %v9702 = vmul.f32 %v9262, %v9622
      %v9703 = vmul.f32 %v9263, %v9623
      %v9704 = vmul.f32 %v9264, %v9624
      %v9705 = vmul.f32 %v9265, %v9625
      %v9706 = vmul.f32 %v9266, %v9626
      %v9707 = vmul.f32 %v9267, %v9627
      %v9708 = vmul.f32 %v9268, %v9628
      %v9709 = vmul.f32 %v9269, %v9629
      %v9710 = vmul.f32 %v9270, %v9630
      %v9711 = vmul.f32 %v9271, %v9631
      %v9712 = vmul.f32 %v9272, %v9592
      %v9713 = vmul.f32 %v9273, %v9593
      %v9714 = vmul.f32 %v9274, %v9594
      %v9715 = vmul.f32 %v9275, %v9595
      %v9716 = vmul.f32 %v9276, %v9596
      %v9717 = vmul.f32 %v9277, %v9597
      %v9718 = vmul.f32 %v9278, %v9598
      %v9719 = vmul.f32 %v9279, %v9599
      %v9720 = vmul.f32 %v9280, %v9600
      %v9721 = vmul.f32 %v9281, %v9601
      %v9722 = vmul.f32 %v9282, %v9602
      %v9723 = vmul.f32 %v9283, %v9603
      %v9724 = vmul.f32 %v9284, %v9604
      %v9725 = vmul.f32 %v9285, %v9605
      %v9726 = vmul.f32 %v9286, %v9606
      %v9727 = vmul.f32 %v9287, %v9607
      %v9728 = vmul.f32 %v9288, %v9608
      %v9729 = vmul.f32 %v9289, %v9609
      %v9730 = vmul.f32 %v9290, %v9610
      %v9731 = vmul.f32 %v9291, %v9611
      %v9732 = vmul.f32 %v9292, %v9612
      %v9733 = vmul.f32 %v9293, %v9613
      %v9734 = vmul.f32 %v9294, %v9614
      %v9735 = vmul.f32 %v9295, %v9615
      %v9736 = vmul.f32 %v9296, %v9616
      %v9737 = vmul.f32 %v9297, %v9617
      %v9738 = vmul.f32 %v9298, %v9618
      %v9739 = vmul.f32 %v9299, %v9619
      %v9740 = vmul.f32 %v9300, %v9620
      %v9741 = vmul.f32 %v9301, %v9621
      %v9742 = vmul.f32 %v9302, %v9622
      %v9743 = vmul.f32 %v9303, %v9623
      %v9744 = vmul.f32 %v9304, %v9624
      %v9745 = vmul.f32 %v9305, %v9625
      %v9746 = vmul.f32 %v9306, %v9626
      %v9747 = vmul.f32 %v9307, %v9627
      %v9748 = vmul.f32 %v9308, %v9628
      %v9749 = vmul.f32 %v9309, %v9629
      %v9750 = vmul.f32 %v9310, %v9630
      %v9751 = vmul.f32 %v9311, %v9631
      %v9752 = vmul.f32 %v9312, %v9592
      %v9753 = vmul.f32 %v9313, %v9593
      %v9754 = vmul.f32 %v9314, %v9594
      %v9755 = vmul.f32 %v9315, %v9595
      %v9756 = vmul.f32 %v9316, %v9596
      %v9757 = vmul.f32 %v9317, %v9597
      %v9758 = vmul.f32 %v9318, %v9598
      %v9759 = vmul.f32 %v9319, %v9599
      %v9760 = vmul.f32 %v9320, %v9600
      %v9761 = vmul.f32 %v9321, %v9601
      %v9762 = vmul.f32 %v9322, %v9602
      %v9763 = vmul.f32 %v9323, %v9603
      %v9764 = vmul.f32 %v9324, %v9604
      %v9765 = vmul.f32 %v9325, %v9605
      %v9766 = vmul.f32 %v9326, %v9606
      %v9767 = vmul.f32 %v9327, %v9607
      %v9768 = vmul.f32 %v9328, %v9608
      %v9769 = vmul.f32 %v9329, %v9609
      %v9770 = vmul.f32 %v9330, %v9610
      %v9771 = vmul.f32 %v9331, %v9611
      %v9772 = vmul.f32 %v9332, %v9612
      %v9773 = vmul.f32 %v9333, %v9613
      %v9774 = vmul.f32 %v9334, %v9614
      %v9775 = vmul.f32 %v9335, %v9615
      %v9776 = vmul.f32 %v9336, %v9616
      %v9777 = vmul.f32 %v9337, %v9617
      %v9778 = vmul.f32 %v9338, %v9618
      %v9779 = vmul.f32 %v9339, %v9619
      %v9780 = vmul.f32 %v9340, %v9620
      %v9781 = vmul.f32 %v9341, %v9621
      %v9782 = vmul.f32 %v9342, %v9622
      %v9783 = vmul.f32 %v9343, %v9623
      %v9784 = vmul.f32 %v9344, %v9624
      %v9785 = vmul.f32 %v9345, %v9625
      %v9786 = vmul.f32 %v9346, %v9626
      %v9787 = vmul.f32 %v9347, %v9627
      %v9788 = vmul.f32 %v9348, %v9628
      %v9789 = vmul.f32 %v9349, %v9629
      %v9790 = vmul.f32 %v9350, %v9630
      %v9791 = vmul.f32 %v9351, %v9631
      %v9792 = vmul.f32 %v9352, %v9592
      %v9793 = vmul.f32 %v9353, %v9593
      %v9794 = vmul.f32 %v9354, %v9594
      %v9795 = vmul.f32 %v9355, %v9595
      %v9796 = vmul.f32 %v9356, %v9596
      %v9797 = vmul.f32 %v9357, %v9597
      %v9798 = vmul.f32 %v9358, %v9598
      %v9799 = vmul.f32 %v9359, %v9599
      %v9800 = vmul.f32 %v9360, %v9600
      %v9801 = vmul.f32 %v9361, %v9601
      %v9802 = vmul.f32 %v9362, %v9602
      %v9803 = vmul.f32 %v9363, %v9603
      %v9804 = vmul.f32 %v9364, %v9604
      %v9805 = vmul.f32 %v9365, %v9605
      %v9806 = vmul.f32 %v9366, %v9606
      %v9807 = vmul.f32 %v9367, %v9607
      %v9808 = vmul.f32 %v9368, %v9608
      %v9809 = vmul.f32 %v9369, %v9609
      %v9810 = vmul.f32 %v9370, %v9610
      %v9811 = vmul.f32 %v9371, %v9611
      %v9812 = vmul.f32 %v9372, %v9612
      %v9813 = vmul.f32 %v9373, %v9613
      %v9814 = vmul.f32 %v9374, %v9614
      %v9815 = vmul.f32 %v9375, %v9615
      %v9816 = vmul.f32 %v9376, %v9616
      %v9817 = vmul.f32 %v9377, %v9617
      %v9818 = vmul.f32 %v9378, %v9618
      %v9819 = vmul.f32 %v9379, %v9619
      %v9820 = vmul.f32 %v9380, %v9620
      %v9821 = vmul.f32 %v9381, %v9621
      %v9822 = vmul.f32 %v9382, %v9622
      %v9823 = vmul.f32 %v9383, %v9623
      %v9824 = vmul.f32 %v9384, %v9624
      %v9825 = vmul.f32 %v9385, %v9625
      %v9826 = vmul.f32 %v9386, %v9626
      %v9827 = vmul.f32 %v9387, %v9627
      %v9828 = vmul.f32 %v9388, %v9628
      %v9829 = vmul.f32 %v9389, %v9629
      %v9830 = vmul.f32 %v9390, %v9630
      %v9831 = vmul.f32 %v9391, %v9631
      %v9832 = vmul.f32 %v9392, %v9592
      %v9833 = vmul.f32 %v9393, %v9593
      %v9834 = vmul.f32 %v9394, %v9594
      %v9835 = vmul.f32 %v9395, %v9595
      %v9836 = vmul.f32 %v9396, %v9596
      %v9837 = vmul.f32 %v9397, %v9597
      %v9838 = vmul.f32 %v9398, %v9598
      %v9839 = vmul.f32 %v9399, %v9599
      %v9840 = vmul.f32 %v9400, %v9600
      %v9841 = vmul.f32 %v9401, %v9601
      %v9842 = vmul.f32 %v9402, %v9602
      %v9843 = vmul.f32 %v9403, %v9603
      %v9844 = vmul.f32 %v9404, %v9604
      %v9845 = vmul.f32 %v9405, %v9605
      %v9846 = vmul.f32 %v9406, %v9606
      %v9847 = vmul.f32 %v9407, %v9607
      %v9848 = vmul.f32 %v9408, %v9608
      %v9849 = vmul.f32 %v9409, %v9609
      %v9850 = vmul.f32 %v9410, %v9610
      %v9851 = vmul.f32 %v9411, %v9611
      %v9852 = vmul.f32 %v9412, %v9612
      %v9853 = vmul.f32 %v9413, %v9613
      %v9854 = vmul.f32 %v9414, %v9614
      %v9855 = vmul.f32 %v9415, %v9615
      %v9856 = vmul.f32 %v9416, %v9616
      %v9857 = vmul.f32 %v9417, %v9617
      %v9858 = vmul.f32 %v9418, %v9618
      %v9859 = vmul.f32 %v9419, %v9619
      %v9860 = vmul.f32 %v9420, %v9620
      %v9861 = vmul.f32 %v9421, %v9621
      %v9862 = vmul.f32 %v9422, %v9622
      %v9863 = vmul.f32 %v9423, %v9623
      %v9864 = vmul.f32 %v9424, %v9624
      %v9865 = vmul.f32 %v9425, %v9625
      %v9866 = vmul.f32 %v9426, %v9626
      %v9867 = vmul.f32 %v9427, %v9627
      %v9868 = vmul.f32 %v9428, %v9628
      %v9869 = vmul.f32 %v9429, %v9629
      %v9870 = vmul.f32 %v9430, %v9630
      %v9871 = vmul.f32 %v9431, %v9631
      %v9872 = vmul.f32 %v9432, %v9592
      %v9873 = vmul.f32 %v9433, %v9593
      %v9874 = vmul.f32 %v9434, %v9594
      %v9875 = vmul.f32 %v9435, %v9595
      %v9876 = vmul.f32 %v9436, %v9596
      %v9877 = vmul.f32 %v9437, %v9597
      %v9878 = vmul.f32 %v9438, %v9598
      %v9879 = vmul.f32 %v9439, %v9599
      %v9880 = vmul.f32 %v9440, %v9600
      %v9881 = vmul.f32 %v9441, %v9601
      %v9882 = vmul.f32 %v9442, %v9602
      %v9883 = vmul.f32 %v9443, %v9603
      %v9884 = vmul.f32 %v9444, %v9604
      %v9885 = vmul.f32 %v9445, %v9605
      %v9886 = vmul.f32 %v9446, %v9606
      %v9887 = vmul.f32 %v9447, %v9607
      %v9888 = vmul.f32 %v9448, %v9608
      %v9889 = vmul.f32 %v9449, %v9609
      %v9890 = vmul.f32 %v9450, %v9610
      %v9891 = vmul.f32 %v9451, %v9611
      %v9892 = vmul.f32 %v9452, %v9612
      %v9893 = vmul.f32 %v9453, %v9613
      %v9894 = vmul.f32 %v9454, %v9614
      %v9895 = vmul.f32 %v9455, %v9615
      %v9896 = vmul.f32 %v9456, %v9616
      %v9897 = vmul.f32 %v9457, %v9617
      %v9898 = vmul.f32 %v9458, %v9618
      %v9899 = vmul.f32 %v9459, %v9619
      %v9900 = vmul.f32 %v9460, %v9620
      %v9901 = vmul.f32 %v9461, %v9621
      %v9902 = vmul.f32 %v9462, %v9622
      %v9903 = vmul.f32 %v9463, %v9623
      %v9904 = vmul.f32 %v9464, %v9624
      %v9905 = vmul.f32 %v9465, %v9625
      %v9906 = vmul.f32 %v9466, %v9626
      %v9907 = vmul.f32 %v9467, %v9627
      %v9908 = vmul.f32 %v9468, %v9628
      %v9909 = vmul.f32 %v9469, %v9629
      %v9910 = vmul.f32 %v9470, %v9630
      %v9911 = vmul.f32 %v9471, %v9631
      %v9912 = vmul.f32 %v9472, %v9592
      %v9913 = vmul.f32 %v9473, %v9593
      %v9914 = vmul.f32 %v9474, %v9594
      %v9915 = vmul.f32 %v9475, %v9595
      %v9916 = vmul.f32 %v9476, %v9596
      %v9917 = vmul.f32 %v9477, %v9597
      %v9918 = vmul.f32 %v9478, %v9598
      %v9919 = vmul.f32 %v9479, %v9599
      %v9920 = vmul.f32 %v9480, %v9600
      %v9921 = vmul.f32 %v9481, %v9601
      %v9922 = vmul.f32 %v9482, %v9602
      %v9923 = vmul.f32 %v9483, %v9603
      %v9924 = vmul.f32 %v9484, %v9604
      %v9925 = vmul.f32 %v9485, %v9605
      %v9926 = vmul.f32 %v9486, %v9606
      %v9927 = vmul.f32 %v9487, %v9607
      %v9928 = vmul.f32 %v9488, %v9608
      %v9929 = vmul.f32 %v9489, %v9609
      %v9930 = vmul.f32 %v9490, %v9610
      %v9931 = vmul.f32 %v9491, %v9611
      %v9932 = vmul.f32 %v9492, %v9612
      %v9933 = vmul.f32 %v9493, %v9613
      %v9934 = vmul.f32 %v9494, %v9614
      %v9935 = vmul.f32 %v9495, %v9615
      %v9936 = vmul.f32 %v9496, %v9616
      %v9937 = vmul.f32 %v9497, %v9617
      %v9938 = vmul.f32 %v9498, %v9618
      %v9939 = vmul.f32 %v9499, %v9619
      %v9940 = vmul.f32 %v9500, %v9620
      %v9941 = vmul.f32 %v9501, %v9621
      %v9942 = vmul.f32 %v9502, %v9622
      %v9943 = vmul.f32 %v9503, %v9623
      %v9944 = vmul.f32 %v9504, %v9624
      %v9945 = vmul.f32 %v9505, %v9625
      %v9946 = vmul.f32 %v9506, %v9626
      %v9947 = vmul.f32 %v9507, %v9627
      %v9948 = vmul.f32 %v9508, %v9628
      %v9949 = vmul.f32 %v9509, %v9629
      %v9950 = vmul.f32 %v9510, %v9630
      %v9951 = vmul.f32 %v9511, %v9631
      %v9952 = vmul.f32 %v9512, %v9592
      %v9953 = vmul.f32 %v9513, %v9593
      %v9954 = vmul.f32 %v9514, %v9594
      %v9955 = vmul.f32 %v9515, %v9595
      %v9956 = vmul.f32 %v9516, %v9596
      %v9957 = vmul.f32 %v9517, %v9597
      %v9958 = vmul.f32 %v9518, %v9598
      %v9959 = vmul.f32 %v9519, %v9599
      %v9960 = vmul.f32 %v9520, %v9600
      %v9961 = vmul.f32 %v9521, %v9601
      %v9962 = vmul.f32 %v9522, %v9602
      %v9963 = vmul.f32 %v9523, %v9603
      %v9964 = vmul.f32 %v9524, %v9604
      %v9965 = vmul.f32 %v9525, %v9605
      %v9966 = vmul.f32 %v9526, %v9606
      %v9967 = vmul.f32 %v9527, %v9607
      %v9968 = vmul.f32 %v9528, %v9608
      %v9969 = vmul.f32 %v9529, %v9609
      %v9970 = vmul.f32 %v9530, %v9610
      %v9971 = vmul.f32 %v9531, %v9611
      %v9972 = vmul.f32 %v9532, %v9612
      %v9973 = vmul.f32 %v9533, %v9613
      %v9974 = vmul.f32 %v9534, %v9614
      %v9975 = vmul.f32 %v9535, %v9615
      %v9976 = vmul.f32 %v9536, %v9616
      %v9977 = vmul.f32 %v9537, %v9617
      %v9978 = vmul.f32 %v9538, %v9618
      %v9979 = vmul.f32 %v9539, %v9619
      %v9980 = vmul.f32 %v9540, %v9620
      %v9981 = vmul.f32 %v9541, %v9621
      %v9982 = vmul.f32 %v9542, %v9622
      %v9983 = vmul.f32 %v9543, %v9623
      %v9984 = vmul.f32 %v9544, %v9624
      %v9985 = vmul.f32 %v9545, %v9625
      %v9986 = vmul.f32 %v9546, %v9626
      %v9987 = vmul.f32 %v9547, %v9627
      %v9988 = vmul.f32 %v9548, %v9628
      %v9989 = vmul.f32 %v9549, %v9629
      %v9990 = vmul.f32 %v9550, %v9630
      %v9991 = vmul.f32 %v9551, %v9631
      %v9992 = vmul.f32 %v9552, %v9592
      %v9993 = vmul.f32 %v9553, %v9593
      %v9994 = vmul.f32 %v9554, %v9594
      %v9995 = vmul.f32 %v9555, %v9595
      %v9996 = vmul.f32 %v9556, %v9596
      %v9997 = vmul.f32 %v9557, %v9597
      %v9998 = vmul.f32 %v9558, %v9598
      %v9999 = vmul.f32 %v9559, %v9599
      %v10000 = vmul.f32 %v9560, %v9600
      %v10001 = vmul.f32 %v9561, %v9601
      %v10002 = vmul.f32 %v9562, %v9602
      %v10003 = vmul.f32 %v9563, %v9603
      %v10004 = vmul.f32 %v9564, %v9604
      %v10005 = vmul.f32 %v9565, %v9605
      %v10006 = vmul.f32 %v9566, %v9606
      %v10007 = vmul.f32 %v9567, %v9607
      %v10008 = vmul.f32 %v9568, %v9608
      %v10009 = vmul.f32 %v9569, %v9609
      %v10010 = vmul.f32 %v9570, %v9610
      %v10011 = vmul.f32 %v9571, %v9611
      %v10012 = vmul.f32 %v9572, %v9612
      %v10013 = vmul.f32 %v9573, %v9613
      %v10014 = vmul.f32 %v9574, %v9614
      %v10015 = vmul.f32 %v9575, %v9615
      %v10016 = vmul.f32 %v9576, %v9616
      %v10017 = vmul.f32 %v9577, %v9617
      %v10018 = vmul.f32 %v9578, %v9618
      %v10019 = vmul.f32 %v9579, %v9619
      %v10020 = vmul.f32 %v9580, %v9620
      %v10021 = vmul.f32 %v9581, %v9621
      %v10022 = vmul.f32 %v9582, %v9622
      %v10023 = vmul.f32 %v9583, %v9623
      %v10024 = vmul.f32 %v9584, %v9624
      %v10025 = vmul.f32 %v9585, %v9625
      %v10026 = vmul.f32 %v9586, %v9626
      %v10027 = vmul.f32 %v9587, %v9627
      %v10028 = vmul.f32 %v9588, %v9628
      %v10029 = vmul.f32 %v9589, %v9629
      %v10030 = vmul.f32 %v9590, %v9630
      %v10031 = vmul.f32 %v9591, %v9631
      %v10032 = vadd.f32 %v9632, %v9633
      %v10033 = vadd.f32 %v10032, %v9634
      %v10034 = vadd.f32 %v10033, %v9635
      %vm10035 = vcmask 850944
      %v10036 = vsel %vm10035, %v9636, 0.0
      %v10037 = vadd.f32 %v10034, %v10036
      %10038 = vadd.xlane.f32.xlu0 %v10037
      %v10039 = vpop.xlane.xlu0 %10038
      %v10040 = vadd.f32 %v9637, %v9638
      %v10041 = vadd.f32 %v10040, %v9639
      %v10042 = vadd.f32 %v10041, %v9640
      %v10043 = vsel %vm10035, %v9641, 0.0
      %v10044 = vadd.f32 %v10042, %v10043
      %10045 = vadd.xlane.f32.xlu0 %v10044
      %v10046 = vpop.xlane.xlu0 %10045
      %v10047 = vadd.f32 %v9642, %v9643
      %v10048 = vadd.f32 %v10047, %v9644
      %v10049 = vadd.f32 %v10048, %v9645
      %v10050 = vsel %vm10035, %v9646, 0.0
      %v10051 = vadd.f32 %v10049, %v10050
      %10052 = vadd.xlane.f32.xlu0 %v10051
      %v10053 = vpop.xlane.xlu0 %10052
      %v10054 = vadd.f32 %v9647, %v9648
      %v10055 = vadd.f32 %v10054, %v9649
      %v10056 = vadd.f32 %v10055, %v9650
      %v10057 = vsel %vm10035, %v9651, 0.0
      %v10058 = vadd.f32 %v10056, %v10057
      %10059 = vadd.xlane.f32.xlu0 %v10058
      %v10060 = vpop.xlane.xlu0 %10059
      %v10061 = vadd.f32 %v9652, %v9653
      %v10062 = vadd.f32 %v10061, %v9654
      %v10063 = vadd.f32 %v10062, %v9655
      %v10064 = vsel %vm10035, %v9656, 0.0
      %v10065 = vadd.f32 %v10063, %v10064
      %10066 = vadd.xlane.f32.xlu0 %v10065
      %v10067 = vpop.xlane.xlu0 %10066
      %v10068 = vadd.f32 %v9657, %v9658
      %v10069 = vadd.f32 %v10068, %v9659
      %v10070 = vadd.f32 %v10069, %v9660
      %v10071 = vsel %vm10035, %v9661, 0.0
      %v10072 = vadd.f32 %v10070, %v10071
      %10073 = vadd.xlane.f32.xlu0 %v10072
      %v10074 = vpop.xlane.xlu0 %10073
      %v10075 = vadd.f32 %v9662, %v9663
      %v10076 = vadd.f32 %v10075, %v9664
      %v10077 = vadd.f32 %v10076, %v9665
      %v10078 = vsel %vm10035, %v9666, 0.0
      %v10079 = vadd.f32 %v10077, %v10078
      %10080 = vadd.xlane.f32.xlu0 %v10079
      %v10081 = vpop.xlane.xlu0 %10080
      %v10082 = vadd.f32 %v9667, %v9668
      %v10083 = vadd.f32 %v10082, %v9669
      %v10084 = vadd.f32 %v10083, %v9670
      %v10085 = vsel %vm10035, %v9671, 0.0
      %v10086 = vadd.f32 %v10084, %v10085
      %10087 = vadd.xlane.f32.xlu0 %v10086
      %v10088 = vpop.xlane.xlu0 %10087
      %v10089 = vadd.f32 %v9672, %v9673
      %v10090 = vadd.f32 %v10089, %v9674
      %v10091 = vadd.f32 %v10090, %v9675
      %v10092 = vsel %vm10035, %v9676, 0.0
      %v10093 = vadd.f32 %v10091, %v10092
      %10094 = vadd.xlane.f32.xlu0 %v10093
      %v10095 = vpop.xlane.xlu0 %10094
      %v10096 = vadd.f32 %v9677, %v9678
      %v10097 = vadd.f32 %v10096, %v9679
      %v10098 = vadd.f32 %v10097, %v9680
      %v10099 = vsel %vm10035, %v9681, 0.0
      %v10100 = vadd.f32 %v10098, %v10099
      %10101 = vadd.xlane.f32.xlu0 %v10100
      %v10102 = vpop.xlane.xlu0 %10101
      %v10103 = vadd.f32 %v9682, %v9683
      %v10104 = vadd.f32 %v10103, %v9684
      %v10105 = vadd.f32 %v10104, %v9685
      %v10106 = vsel %vm10035, %v9686, 0.0
      %v10107 = vadd.f32 %v10105, %v10106
      %10108 = vadd.xlane.f32.xlu0 %v10107
      %v10109 = vpop.xlane.xlu0 %10108
      %v10110 = vadd.f32 %v9687, %v9688
      %v10111 = vadd.f32 %v10110, %v9689
      %v10112 = vadd.f32 %v10111, %v9690
      %v10113 = vsel %vm10035, %v9691, 0.0
      %v10114 = vadd.f32 %v10112, %v10113
      %10115 = vadd.xlane.f32.xlu0 %v10114
      %v10116 = vpop.xlane.xlu0 %10115
      %v10117 = vadd.f32 %v9692, %v9693
      %v10118 = vadd.f32 %v10117, %v9694
      %v10119 = vadd.f32 %v10118, %v9695
      %v10120 = vsel %vm10035, %v9696, 0.0
      %v10121 = vadd.f32 %v10119, %v10120
      %10122 = vadd.xlane.f32.xlu0 %v10121
      %v10123 = vpop.xlane.xlu0 %10122
      %v10124 = vadd.f32 %v9697, %v9698
      %v10125 = vadd.f32 %v10124, %v9699
      %v10126 = vadd.f32 %v10125, %v9700
      %v10127 = vsel %vm10035, %v9701, 0.0
      %v10128 = vadd.f32 %v10126, %v10127
      %10129 = vadd.xlane.f32.xlu0 %v10128
      %v10130 = vpop.xlane.xlu0 %10129
      %v10131 = vadd.f32 %v9702, %v9703
      %v10132 = vadd.f32 %v10131, %v9704
      %v10133 = vadd.f32 %v10132, %v9705
      %v10134 = vsel %vm10035, %v9706, 0.0
      %v10135 = vadd.f32 %v10133, %v10134
      %10136 = vadd.xlane.f32.xlu0 %v10135
      %v10137 = vpop.xlane.xlu0 %10136
      %v10138 = vadd.f32 %v9707, %v9708
      %v10139 = vadd.f32 %v10138, %v9709
      %v10140 = vadd.f32 %v10139, %v9710
      %v10141 = vsel %vm10035, %v9711, 0.0
      %v10142 = vadd.f32 %v10140, %v10141
      %10143 = vadd.xlane.f32.xlu0 %v10142
      %v10144 = vpop.xlane.xlu0 %10143
      %v10145 = vadd.f32 %v9712, %v9713
      %v10146 = vadd.f32 %v10145, %v9714
      %v10147 = vadd.f32 %v10146, %v9715
      %v10148 = vsel %vm10035, %v9716, 0.0
      %v10149 = vadd.f32 %v10147, %v10148
      %10150 = vadd.xlane.f32.xlu0 %v10149
      %v10151 = vpop.xlane.xlu0 %10150
      %v10152 = vadd.f32 %v9717, %v9718
      %v10153 = vadd.f32 %v10152, %v9719
      %v10154 = vadd.f32 %v10153, %v9720
      %v10155 = vsel %vm10035, %v9721, 0.0
      %v10156 = vadd.f32 %v10154, %v10155
      %10157 = vadd.xlane.f32.xlu0 %v10156
      %v10158 = vpop.xlane.xlu0 %10157
      %v10159 = vadd.f32 %v9722, %v9723
      %v10160 = vadd.f32 %v10159, %v9724
      %v10161 = vadd.f32 %v10160, %v9725
      %v10162 = vsel %vm10035, %v9726, 0.0
      %v10163 = vadd.f32 %v10161, %v10162
      %10164 = vadd.xlane.f32.xlu0 %v10163
      %v10165 = vpop.xlane.xlu0 %10164
      %v10166 = vadd.f32 %v9727, %v9728
      %v10167 = vadd.f32 %v10166, %v9729
      %v10168 = vadd.f32 %v10167, %v9730
      %v10169 = vsel %vm10035, %v9731, 0.0
      %v10170 = vadd.f32 %v10168, %v10169
      %10171 = vadd.xlane.f32.xlu0 %v10170
      %v10172 = vpop.xlane.xlu0 %10171
      %v10173 = vadd.f32 %v9732, %v9733
      %v10174 = vadd.f32 %v10173, %v9734
      %v10175 = vadd.f32 %v10174, %v9735
      %v10176 = vsel %vm10035, %v9736, 0.0
      %v10177 = vadd.f32 %v10175, %v10176
      %10178 = vadd.xlane.f32.xlu0 %v10177
      %v10179 = vpop.xlane.xlu0 %10178
      %v10180 = vadd.f32 %v9737, %v9738
      %v10181 = vadd.f32 %v10180, %v9739
      %v10182 = vadd.f32 %v10181, %v9740
      %v10183 = vsel %vm10035, %v9741, 0.0
      %v10184 = vadd.f32 %v10182, %v10183
      %10185 = vadd.xlane.f32.xlu0 %v10184
      %v10186 = vpop.xlane.xlu0 %10185
      %v10187 = vadd.f32 %v9742, %v9743
      %v10188 = vadd.f32 %v10187, %v9744
      %v10189 = vadd.f32 %v10188, %v9745
      %v10190 = vsel %vm10035, %v9746, 0.0
      %v10191 = vadd.f32 %v10189, %v10190
      %10192 = vadd.xlane.f32.xlu0 %v10191
      %v10193 = vpop.xlane.xlu0 %10192
      %v10194 = vadd.f32 %v9747, %v9748
      %v10195 = vadd.f32 %v10194, %v9749
      %v10196 = vadd.f32 %v10195, %v9750
      %v10197 = vsel %vm10035, %v9751, 0.0
      %v10198 = vadd.f32 %v10196, %v10197
      %10199 = vadd.xlane.f32.xlu0 %v10198
      %v10200 = vpop.xlane.xlu0 %10199
      %v10201 = vadd.f32 %v9752, %v9753
      %v10202 = vadd.f32 %v10201, %v9754
      %v10203 = vadd.f32 %v10202, %v9755
      %v10204 = vsel %vm10035, %v9756, 0.0
      %v10205 = vadd.f32 %v10203, %v10204
      %10206 = vadd.xlane.f32.xlu0 %v10205
      %v10207 = vpop.xlane.xlu0 %10206
      %v10208 = vadd.f32 %v9757, %v9758
      %v10209 = vadd.f32 %v10208, %v9759
      %v10210 = vadd.f32 %v10209, %v9760
      %v10211 = vsel %vm10035, %v9761, 0.0
      %v10212 = vadd.f32 %v10210, %v10211
      %10213 = vadd.xlane.f32.xlu0 %v10212
      %v10214 = vpop.xlane.xlu0 %10213
      %v10215 = vadd.f32 %v9762, %v9763
      %v10216 = vadd.f32 %v10215, %v9764
      %v10217 = vadd.f32 %v10216, %v9765
      %v10218 = vsel %vm10035, %v9766, 0.0
      %v10219 = vadd.f32 %v10217, %v10218
      %10220 = vadd.xlane.f32.xlu0 %v10219
      %v10221 = vpop.xlane.xlu0 %10220
      %v10222 = vadd.f32 %v9767, %v9768
      %v10223 = vadd.f32 %v10222, %v9769
      %v10224 = vadd.f32 %v10223, %v9770
      %v10225 = vsel %vm10035, %v9771, 0.0
      %v10226 = vadd.f32 %v10224, %v10225
      %10227 = vadd.xlane.f32.xlu0 %v10226
      %v10228 = vpop.xlane.xlu0 %10227
      %v10229 = vadd.f32 %v9772, %v9773
      %v10230 = vadd.f32 %v10229, %v9774
      %v10231 = vadd.f32 %v10230, %v9775
      %v10232 = vsel %vm10035, %v9776, 0.0
      %v10233 = vadd.f32 %v10231, %v10232
      %10234 = vadd.xlane.f32.xlu0 %v10233
      %v10235 = vpop.xlane.xlu0 %10234
      %v10236 = vadd.f32 %v9777, %v9778
      %v10237 = vadd.f32 %v10236, %v9779
      %v10238 = vadd.f32 %v10237, %v9780
      %v10239 = vsel %vm10035, %v9781, 0.0
      %v10240 = vadd.f32 %v10238, %v10239
      %10241 = vadd.xlane.f32.xlu0 %v10240
      %v10242 = vpop.xlane.xlu0 %10241
      %v10243 = vadd.f32 %v9782, %v9783
      %v10244 = vadd.f32 %v10243, %v9784
      %v10245 = vadd.f32 %v10244, %v9785
      %v10246 = vsel %vm10035, %v9786, 0.0
      %v10247 = vadd.f32 %v10245, %v10246
      %10248 = vadd.xlane.f32.xlu0 %v10247
      %v10249 = vpop.xlane.xlu0 %10248
      %v10250 = vadd.f32 %v9787, %v9788
      %v10251 = vadd.f32 %v10250, %v9789
      %v10252 = vadd.f32 %v10251, %v9790
      %v10253 = vsel %vm10035, %v9791, 0.0
      %v10254 = vadd.f32 %v10252, %v10253
      %10255 = vadd.xlane.f32.xlu0 %v10254
      %v10256 = vpop.xlane.xlu0 %10255
      %v10257 = vadd.f32 %v9792, %v9793
      %v10258 = vadd.f32 %v10257, %v9794
      %v10259 = vadd.f32 %v10258, %v9795
      %v10260 = vsel %vm10035, %v9796, 0.0
      %v10261 = vadd.f32 %v10259, %v10260
      %10262 = vadd.xlane.f32.xlu0 %v10261
      %v10263 = vpop.xlane.xlu0 %10262
      %v10264 = vadd.f32 %v9797, %v9798
      %v10265 = vadd.f32 %v10264, %v9799
      %v10266 = vadd.f32 %v10265, %v9800
      %v10267 = vsel %vm10035, %v9801, 0.0
      %v10268 = vadd.f32 %v10266, %v10267
      %10269 = vadd.xlane.f32.xlu0 %v10268
      %v10270 = vpop.xlane.xlu0 %10269
      %v10271 = vadd.f32 %v9802, %v9803
      %v10272 = vadd.f32 %v10271, %v9804
      %v10273 = vadd.f32 %v10272, %v9805
      %v10274 = vsel %vm10035, %v9806, 0.0
      %v10275 = vadd.f32 %v10273, %v10274
      %10276 = vadd.xlane.f32.xlu0 %v10275
      %v10277 = vpop.xlane.xlu0 %10276
      %v10278 = vadd.f32 %v9807, %v9808
      %v10279 = vadd.f32 %v10278, %v9809
      %v10280 = vadd.f32 %v10279, %v9810
      %v10281 = vsel %vm10035, %v9811, 0.0
      %v10282 = vadd.f32 %v10280, %v10281
      %10283 = vadd.xlane.f32.xlu0 %v10282
      %v10284 = vpop.xlane.xlu0 %10283
      %v10285 = vadd.f32 %v9812, %v9813
      %v10286 = vadd.f32 %v10285, %v9814
      %v10287 = vadd.f32 %v10286, %v9815
      %v10288 = vsel %vm10035, %v9816, 0.0
      %v10289 = vadd.f32 %v10287, %v10288
      %10290 = vadd.xlane.f32.xlu0 %v10289
      %v10291 = vpop.xlane.xlu0 %10290
      %v10292 = vadd.f32 %v9817, %v9818
      %v10293 = vadd.f32 %v10292, %v9819
      %v10294 = vadd.f32 %v10293, %v9820
      %v10295 = vsel %vm10035, %v9821, 0.0
      %v10296 = vadd.f32 %v10294, %v10295
      %10297 = vadd.xlane.f32.xlu0 %v10296
      %v10298 = vpop.xlane.xlu0 %10297
      %v10299 = vadd.f32 %v9822, %v9823
      %v10300 = vadd.f32 %v10299, %v9824
      %v10301 = vadd.f32 %v10300, %v9825
      %v10302 = vsel %vm10035, %v9826, 0.0
      %v10303 = vadd.f32 %v10301, %v10302
      %10304 = vadd.xlane.f32.xlu0 %v10303
      %v10305 = vpop.xlane.xlu0 %10304
      %v10306 = vadd.f32 %v9827, %v9828
      %v10307 = vadd.f32 %v10306, %v9829
      %v10308 = vadd.f32 %v10307, %v9830
      %v10309 = vsel %vm10035, %v9831, 0.0
      %v10310 = vadd.f32 %v10308, %v10309
      %10311 = vadd.xlane.f32.xlu0 %v10310
      %v10312 = vpop.xlane.xlu0 %10311
      %v10313 = vadd.f32 %v9832, %v9833
      %v10314 = vadd.f32 %v10313, %v9834
      %v10315 = vadd.f32 %v10314, %v9835
      %v10316 = vsel %vm10035, %v9836, 0.0
      %v10317 = vadd.f32 %v10315, %v10316
      %10318 = vadd.xlane.f32.xlu0 %v10317
      %v10319 = vpop.xlane.xlu0 %10318
      %v10320 = vadd.f32 %v9837, %v9838
      %v10321 = vadd.f32 %v10320, %v9839
      %v10322 = vadd.f32 %v10321, %v9840
      %v10323 = vsel %vm10035, %v9841, 0.0
      %v10324 = vadd.f32 %v10322, %v10323
      %10325 = vadd.xlane.f32.xlu0 %v10324
      %v10326 = vpop.xlane.xlu0 %10325
      %v10327 = vadd.f32 %v9842, %v9843
      %v10328 = vadd.f32 %v10327, %v9844
      %v10329 = vadd.f32 %v10328, %v9845
      %v10330 = vsel %vm10035, %v9846, 0.0
      %v10331 = vadd.f32 %v10329, %v10330
      %10332 = vadd.xlane.f32.xlu0 %v10331
      %v10333 = vpop.xlane.xlu0 %10332
      %v10334 = vadd.f32 %v9847, %v9848
      %v10335 = vadd.f32 %v10334, %v9849
      %v10336 = vadd.f32 %v10335, %v9850
      %v10337 = vsel %vm10035, %v9851, 0.0
      %v10338 = vadd.f32 %v10336, %v10337
      %10339 = vadd.xlane.f32.xlu0 %v10338
      %v10340 = vpop.xlane.xlu0 %10339
      %v10341 = vadd.f32 %v9852, %v9853
      %v10342 = vadd.f32 %v10341, %v9854
      %v10343 = vadd.f32 %v10342, %v9855
      %v10344 = vsel %vm10035, %v9856, 0.0
      %v10345 = vadd.f32 %v10343, %v10344
      %10346 = vadd.xlane.f32.xlu0 %v10345
      %v10347 = vpop.xlane.xlu0 %10346
      %v10348 = vadd.f32 %v9857, %v9858
      %v10349 = vadd.f32 %v10348, %v9859
      %v10350 = vadd.f32 %v10349, %v9860
      %v10351 = vsel %vm10035, %v9861, 0.0
      %v10352 = vadd.f32 %v10350, %v10351
      %10353 = vadd.xlane.f32.xlu0 %v10352
      %v10354 = vpop.xlane.xlu0 %10353
      %v10355 = vadd.f32 %v9862, %v9863
      %v10356 = vadd.f32 %v10355, %v9864
      %v10357 = vadd.f32 %v10356, %v9865
      %v10358 = vsel %vm10035, %v9866, 0.0
      %v10359 = vadd.f32 %v10357, %v10358
      %10360 = vadd.xlane.f32.xlu0 %v10359
      %v10361 = vpop.xlane.xlu0 %10360
      %v10362 = vadd.f32 %v9867, %v9868
      %v10363 = vadd.f32 %v10362, %v9869
      %v10364 = vadd.f32 %v10363, %v9870
      %v10365 = vsel %vm10035, %v9871, 0.0
      %v10366 = vadd.f32 %v10364, %v10365
      %10367 = vadd.xlane.f32.xlu0 %v10366
      %v10368 = vpop.xlane.xlu0 %10367
      %v10369 = vadd.f32 %v9872, %v9873
      %v10370 = vadd.f32 %v10369, %v9874
      %v10371 = vadd.f32 %v10370, %v9875
      %v10372 = vsel %vm10035, %v9876, 0.0
      %v10373 = vadd.f32 %v10371, %v10372
      %10374 = vadd.xlane.f32.xlu0 %v10373
      %v10375 = vpop.xlane.xlu0 %10374
      %v10376 = vadd.f32 %v9877, %v9878
      %v10377 = vadd.f32 %v10376, %v9879
      %v10378 = vadd.f32 %v10377, %v9880
      %v10379 = vsel %vm10035, %v9881, 0.0
      %v10380 = vadd.f32 %v10378, %v10379
      %10381 = vadd.xlane.f32.xlu0 %v10380
      %v10382 = vpop.xlane.xlu0 %10381
      %v10383 = vadd.f32 %v9882, %v9883
      %v10384 = vadd.f32 %v10383, %v9884
      %v10385 = vadd.f32 %v10384, %v9885
      %v10386 = vsel %vm10035, %v9886, 0.0
      %v10387 = vadd.f32 %v10385, %v10386
      %10388 = vadd.xlane.f32.xlu0 %v10387
      %v10389 = vpop.xlane.xlu0 %10388
      %v10390 = vadd.f32 %v9887, %v9888
      %v10391 = vadd.f32 %v10390, %v9889
      %v10392 = vadd.f32 %v10391, %v9890
      %v10393 = vsel %vm10035, %v9891, 0.0
      %v10394 = vadd.f32 %v10392, %v10393
      %10395 = vadd.xlane.f32.xlu0 %v10394
      %v10396 = vpop.xlane.xlu0 %10395
      %v10397 = vadd.f32 %v9892, %v9893
      %v10398 = vadd.f32 %v10397, %v9894
      %v10399 = vadd.f32 %v10398, %v9895
      %v10400 = vsel %vm10035, %v9896, 0.0
      %v10401 = vadd.f32 %v10399, %v10400
      %10402 = vadd.xlane.f32.xlu0 %v10401
      %v10403 = vpop.xlane.xlu0 %10402
      %v10404 = vadd.f32 %v9897, %v9898
      %v10405 = vadd.f32 %v10404, %v9899
      %v10406 = vadd.f32 %v10405, %v9900
      %v10407 = vsel %vm10035, %v9901, 0.0
      %v10408 = vadd.f32 %v10406, %v10407
      %10409 = vadd.xlane.f32.xlu0 %v10408
      %v10410 = vpop.xlane.xlu0 %10409
      %v10411 = vadd.f32 %v9902, %v9903
      %v10412 = vadd.f32 %v10411, %v9904
      %v10413 = vadd.f32 %v10412, %v9905
      %v10414 = vsel %vm10035, %v9906, 0.0
      %v10415 = vadd.f32 %v10413, %v10414
      %10416 = vadd.xlane.f32.xlu0 %v10415
      %v10417 = vpop.xlane.xlu0 %10416
      %v10418 = vadd.f32 %v9907, %v9908
      %v10419 = vadd.f32 %v10418, %v9909
      %v10420 = vadd.f32 %v10419, %v9910
      %v10421 = vsel %vm10035, %v9911, 0.0
      %v10422 = vadd.f32 %v10420, %v10421
      %10423 = vadd.xlane.f32.xlu0 %v10422
      %v10424 = vpop.xlane.xlu0 %10423
      %v10425 = vadd.f32 %v9912, %v9913
      %v10426 = vadd.f32 %v10425, %v9914
      %v10427 = vadd.f32 %v10426, %v9915
      %v10428 = vsel %vm10035, %v9916, 0.0
      %v10429 = vadd.f32 %v10427, %v10428
      %10430 = vadd.xlane.f32.xlu0 %v10429
      %v10431 = vpop.xlane.xlu0 %10430
      %v10432 = vadd.f32 %v9917, %v9918
      %v10433 = vadd.f32 %v10432, %v9919
      %v10434 = vadd.f32 %v10433, %v9920
      %v10435 = vsel %vm10035, %v9921, 0.0
      %v10436 = vadd.f32 %v10434, %v10435
      %10437 = vadd.xlane.f32.xlu0 %v10436
      %v10438 = vpop.xlane.xlu0 %10437
      %v10439 = vadd.f32 %v9922, %v9923
      %v10440 = vadd.f32 %v10439, %v9924
      %v10441 = vadd.f32 %v10440, %v9925
      %v10442 = vsel %vm10035, %v9926, 0.0
      %v10443 = vadd.f32 %v10441, %v10442
      %10444 = vadd.xlane.f32.xlu0 %v10443
      %v10445 = vpop.xlane.xlu0 %10444
      %v10446 = vadd.f32 %v9927, %v9928
      %v10447 = vadd.f32 %v10446, %v9929
      %v10448 = vadd.f32 %v10447, %v9930
      %v10449 = vsel %vm10035, %v9931, 0.0
      %v10450 = vadd.f32 %v10448, %v10449
      %10451 = vadd.xlane.f32.xlu0 %v10450
      %v10452 = vpop.xlane.xlu0 %10451
      %v10453 = vadd.f32 %v9932, %v9933
      %v10454 = vadd.f32 %v10453, %v9934
      %v10455 = vadd.f32 %v10454, %v9935
      %v10456 = vsel %vm10035, %v9936, 0.0
      %v10457 = vadd.f32 %v10455, %v10456
      %10458 = vadd.xlane.f32.xlu0 %v10457
      %v10459 = vpop.xlane.xlu0 %10458
      %v10460 = vadd.f32 %v9937, %v9938
      %v10461 = vadd.f32 %v10460, %v9939
      %v10462 = vadd.f32 %v10461, %v9940
      %v10463 = vsel %vm10035, %v9941, 0.0
      %v10464 = vadd.f32 %v10462, %v10463
      %10465 = vadd.xlane.f32.xlu0 %v10464
      %v10466 = vpop.xlane.xlu0 %10465
      %v10467 = vadd.f32 %v9942, %v9943
      %v10468 = vadd.f32 %v10467, %v9944
      %v10469 = vadd.f32 %v10468, %v9945
      %v10470 = vsel %vm10035, %v9946, 0.0
      %v10471 = vadd.f32 %v10469, %v10470
      %10472 = vadd.xlane.f32.xlu0 %v10471
      %v10473 = vpop.xlane.xlu0 %10472
      %v10474 = vadd.f32 %v9947, %v9948
      %v10475 = vadd.f32 %v10474, %v9949
      %v10476 = vadd.f32 %v10475, %v9950
      %v10477 = vsel %vm10035, %v9951, 0.0
      %v10478 = vadd.f32 %v10476, %v10477
      %10479 = vadd.xlane.f32.xlu0 %v10478
      %v10480 = vpop.xlane.xlu0 %10479
      %v10481 = vadd.f32 %v9952, %v9953
      %v10482 = vadd.f32 %v10481, %v9954
      %v10483 = vadd.f32 %v10482, %v9955
      %v10484 = vsel %vm10035, %v9956, 0.0
      %v10485 = vadd.f32 %v10483, %v10484
      %10486 = vadd.xlane.f32.xlu0 %v10485
      %v10487 = vpop.xlane.xlu0 %10486
      %v10488 = vadd.f32 %v9957, %v9958
      %v10489 = vadd.f32 %v10488, %v9959
      %v10490 = vadd.f32 %v10489, %v9960
      %v10491 = vsel %vm10035, %v9961, 0.0
      %v10492 = vadd.f32 %v10490, %v10491
      %10493 = vadd.xlane.f32.xlu0 %v10492
      %v10494 = vpop.xlane.xlu0 %10493
      %v10495 = vadd.f32 %v9962, %v9963
      %v10496 = vadd.f32 %v10495, %v9964
      %v10497 = vadd.f32 %v10496, %v9965
      %v10498 = vsel %vm10035, %v9966, 0.0
      %v10499 = vadd.f32 %v10497, %v10498
      %10500 = vadd.xlane.f32.xlu0 %v10499
      %v10501 = vpop.xlane.xlu0 %10500
      %v10502 = vadd.f32 %v9967, %v9968
      %v10503 = vadd.f32 %v10502, %v9969
      %v10504 = vadd.f32 %v10503, %v9970
      %v10505 = vsel %vm10035, %v9971, 0.0
      %v10506 = vadd.f32 %v10504, %v10505
      %10507 = vadd.xlane.f32.xlu0 %v10506
      %v10508 = vpop.xlane.xlu0 %10507
      %v10509 = vadd.f32 %v9972, %v9973
      %v10510 = vadd.f32 %v10509, %v9974
      %v10511 = vadd.f32 %v10510, %v9975
      %v10512 = vsel %vm10035, %v9976, 0.0
      %v10513 = vadd.f32 %v10511, %v10512
      %10514 = vadd.xlane.f32.xlu0 %v10513
      %v10515 = vpop.xlane.xlu0 %10514
      %v10516 = vadd.f32 %v9977, %v9978
      %v10517 = vadd.f32 %v10516, %v9979
      %v10518 = vadd.f32 %v10517, %v9980
      %v10519 = vsel %vm10035, %v9981, 0.0
      %v10520 = vadd.f32 %v10518, %v10519
      %10521 = vadd.xlane.f32.xlu0 %v10520
      %v10522 = vpop.xlane.xlu0 %10521
      %v10523 = vadd.f32 %v9982, %v9983
      %v10524 = vadd.f32 %v10523, %v9984
      %v10525 = vadd.f32 %v10524, %v9985
      %v10526 = vsel %vm10035, %v9986, 0.0
      %v10527 = vadd.f32 %v10525, %v10526
      %10528 = vadd.xlane.f32.xlu0 %v10527
      %v10529 = vpop.xlane.xlu0 %10528
      %v10530 = vadd.f32 %v9987, %v9988
      %v10531 = vadd.f32 %v10530, %v9989
      %v10532 = vadd.f32 %v10531, %v9990
      %v10533 = vsel %vm10035, %v9991, 0.0
      %v10534 = vadd.f32 %v10532, %v10533
      %10535 = vadd.xlane.f32.xlu0 %v10534
      %v10536 = vpop.xlane.xlu0 %10535
      %v10537 = vadd.f32 %v9992, %v9993
      %v10538 = vadd.f32 %v10537, %v9994
      %v10539 = vadd.f32 %v10538, %v9995
      %v10540 = vsel %vm10035, %v9996, 0.0
      %v10541 = vadd.f32 %v10539, %v10540
      %10542 = vadd.xlane.f32.xlu0 %v10541
      %v10543 = vpop.xlane.xlu0 %10542
      %v10544 = vadd.f32 %v9997, %v9998
      %v10545 = vadd.f32 %v10544, %v9999
      %v10546 = vadd.f32 %v10545, %v10000
      %v10547 = vsel %vm10035, %v10001, 0.0
      %v10548 = vadd.f32 %v10546, %v10547
      %10549 = vadd.xlane.f32.xlu0 %v10548
      %v10550 = vpop.xlane.xlu0 %10549
      %v10551 = vadd.f32 %v10002, %v10003
      %v10552 = vadd.f32 %v10551, %v10004
      %v10553 = vadd.f32 %v10552, %v10005
      %v10554 = vsel %vm10035, %v10006, 0.0
      %v10555 = vadd.f32 %v10553, %v10554
      %10556 = vadd.xlane.f32.xlu0 %v10555
      %v10557 = vpop.xlane.xlu0 %10556
      %v10558 = vadd.f32 %v10007, %v10008
      %v10559 = vadd.f32 %v10558, %v10009
      %v10560 = vadd.f32 %v10559, %v10010
      %v10561 = vsel %vm10035, %v10011, 0.0
      %v10562 = vadd.f32 %v10560, %v10561
      %10563 = vadd.xlane.f32.xlu0 %v10562
      %v10564 = vpop.xlane.xlu0 %10563
      %v10565 = vadd.f32 %v10012, %v10013
      %v10566 = vadd.f32 %v10565, %v10014
      %v10567 = vadd.f32 %v10566, %v10015
      %v10568 = vsel %vm10035, %v10016, 0.0
      %v10569 = vadd.f32 %v10567, %v10568
      %10570 = vadd.xlane.f32.xlu0 %v10569
      %v10571 = vpop.xlane.xlu0 %10570
      %v10572 = vadd.f32 %v10017, %v10018
      %v10573 = vadd.f32 %v10572, %v10019
      %v10574 = vadd.f32 %v10573, %v10020
      %v10575 = vsel %vm10035, %v10021, 0.0
      %v10576 = vadd.f32 %v10574, %v10575
      %10577 = vadd.xlane.f32.xlu0 %v10576
      %v10578 = vpop.xlane.xlu0 %10577
      %v10579 = vadd.f32 %v10022, %v10023
      %v10580 = vadd.f32 %v10579, %v10024
      %v10581 = vadd.f32 %v10580, %v10025
      %v10582 = vsel %vm10035, %v10026, 0.0
      %v10583 = vadd.f32 %v10581, %v10582
      %10584 = vadd.xlane.f32.xlu0 %v10583
      %v10585 = vpop.xlane.xlu0 %10584
      %v10586 = vadd.f32 %v10027, %v10028
      %v10587 = vadd.f32 %v10586, %v10029
      %v10588 = vadd.f32 %v10587, %v10030
      %v10589 = vsel %vm10035, %v10031, 0.0
      %v10590 = vadd.f32 %v10588, %v10589
      %10591 = vadd.xlane.f32.xlu0 %v10590
      %v10592 = vpop.xlane.xlu0 %10591
      %v10673 = vlaneseq
      %v10674 = vand.u32 %v10673, 127
      %v10675 = vperm.slane %v10039, %v10674
      %v10676 = vadd.s32 %v10674, 4294967288
      %v10677 = vperm.slane %v10046, %v10676
      %vm10678 = vcmask 130112
      %v10679 = vsel %vm10678, %v10677, %v10675
      %v10680 = vadd.s32 %v10674, 4294967280
      %v10681 = vperm.slane %v10053, %v10680
      %vm10682 = vcmask 195712
      %v10683 = vsel %vm10682, %v10681, %v10679
      %v10684 = vadd.s32 %v10674, 4294967272
      %v10685 = vperm.slane %v10060, %v10684
      %vm10686 = vcmask 261312
      %v10687 = vsel %vm10686, %v10685, %v10683
      %v10688 = vadd.s32 %v10674, 4294967264
      %v10689 = vperm.slane %v10067, %v10688
      %vm10690 = vcmask 326912
      %v10691 = vsel %vm10690, %v10689, %v10687
      %v10692 = vadd.s32 %v10674, 4294967256
      %v10693 = vperm.slane %v10074, %v10692
      %vm10694 = vcmask 392512
      %v10695 = vsel %vm10694, %v10693, %v10691
      %v10696 = vadd.s32 %v10674, 4294967248
      %v10697 = vperm.slane %v10081, %v10696
      %vm10698 = vcmask 458112
      %v10699 = vsel %vm10698, %v10697, %v10695
      %v10700 = vadd.s32 %v10674, 4294967240
      %v10701 = vperm.slane %v10088, %v10700
      %vm10702 = vcmask 523712
      %v10703 = vsel %vm10702, %v10701, %v10699
      %v10704 = vperm.slane %v10095, %v10674
      %v10705 = vperm.slane %v10102, %v10676
      %v10706 = vsel %vm10678, %v10705, %v10704
      %v10707 = vperm.slane %v10109, %v10680
      %v10708 = vsel %vm10682, %v10707, %v10706
      %v10709 = vperm.slane %v10116, %v10684
      %v10710 = vsel %vm10686, %v10709, %v10708
      %v10711 = vperm.slane %v10123, %v10688
      %v10712 = vsel %vm10690, %v10711, %v10710
      %v10713 = vperm.slane %v10130, %v10692
      %v10714 = vsel %vm10694, %v10713, %v10712
      %v10715 = vperm.slane %v10137, %v10696
      %v10716 = vsel %vm10698, %v10715, %v10714
      %v10717 = vperm.slane %v10144, %v10700
      %v10718 = vsel %vm10702, %v10717, %v10716
      %v10719 = vperm.slane %v10151, %v10674
      %v10720 = vperm.slane %v10158, %v10676
      %v10721 = vsel %vm10678, %v10720, %v10719
      %v10722 = vperm.slane %v10165, %v10680
      %v10723 = vsel %vm10682, %v10722, %v10721
      %v10724 = vperm.slane %v10172, %v10684
      %v10725 = vsel %vm10686, %v10724, %v10723
      %v10726 = vperm.slane %v10179, %v10688
      %v10727 = vsel %vm10690, %v10726, %v10725
      %v10728 = vperm.slane %v10186, %v10692
      %v10729 = vsel %vm10694, %v10728, %v10727
      %v10730 = vperm.slane %v10193, %v10696
      %v10731 = vsel %vm10698, %v10730, %v10729
      %v10732 = vperm.slane %v10200, %v10700
      %v10733 = vsel %vm10702, %v10732, %v10731
      %v10734 = vperm.slane %v10207, %v10674
      %v10735 = vperm.slane %v10214, %v10676
      %v10736 = vsel %vm10678, %v10735, %v10734
      %v10737 = vperm.slane %v10221, %v10680
      %v10738 = vsel %vm10682, %v10737, %v10736
      %v10739 = vperm.slane %v10228, %v10684
      %v10740 = vsel %vm10686, %v10739, %v10738
      %v10741 = vperm.slane %v10235, %v10688
      %v10742 = vsel %vm10690, %v10741, %v10740
      %v10743 = vperm.slane %v10242, %v10692
      %v10744 = vsel %vm10694, %v10743, %v10742
      %v10745 = vperm.slane %v10249, %v10696
      %v10746 = vsel %vm10698, %v10745, %v10744
      %v10747 = vperm.slane %v10256, %v10700
      %v10748 = vsel %vm10702, %v10747, %v10746
      %v10749 = vperm.slane %v10263, %v10674
      %v10750 = vperm.slane %v10270, %v10676
      %v10751 = vsel %vm10678, %v10750, %v10749
      %v10752 = vperm.slane %v10277, %v10680
      %v10753 = vsel %vm10682, %v10752, %v10751
      %v10754 = vperm.slane %v10284, %v10684
      %v10755 = vsel %vm10686, %v10754, %v10753
      %v10756 = vperm.slane %v10291, %v10688
      %v10757 = vsel %vm10690, %v10756, %v10755
      %v10758 = vperm.slane %v10298, %v10692
      %v10759 = vsel %vm10694, %v10758, %v10757
      %v10760 = vperm.slane %v10305, %v10696
      %v10761 = vsel %vm10698, %v10760, %v10759
      %v10762 = vperm.slane %v10312, %v10700
      %v10763 = vsel %vm10702, %v10762, %v10761
      %v10764 = vperm.slane %v10319, %v10674
      %v10765 = vperm.slane %v10326, %v10676
      %v10766 = vsel %vm10678, %v10765, %v10764
      %v10767 = vperm.slane %v10333, %v10680
      %v10768 = vsel %vm10682, %v10767, %v10766
      %v10769 = vperm.slane %v10340, %v10684
      %v10770 = vsel %vm10686, %v10769, %v10768
      %v10771 = vperm.slane %v10347, %v10688
      %v10772 = vsel %vm10690, %v10771, %v10770
      %v10773 = vperm.slane %v10354, %v10692
      %v10774 = vsel %vm10694, %v10773, %v10772
      %v10775 = vperm.slane %v10361, %v10696
      %v10776 = vsel %vm10698, %v10775, %v10774
      %v10777 = vperm.slane %v10368, %v10700
      %v10778 = vsel %vm10702, %v10777, %v10776
      %v10779 = vperm.slane %v10375, %v10674
      %v10780 = vperm.slane %v10382, %v10676
      %v10781 = vsel %vm10678, %v10780, %v10779
      %v10782 = vperm.slane %v10389, %v10680
      %v10783 = vsel %vm10682, %v10782, %v10781
      %v10784 = vperm.slane %v10396, %v10684
      %v10785 = vsel %vm10686, %v10784, %v10783
      %v10786 = vperm.slane %v10403, %v10688
      %v10787 = vsel %vm10690, %v10786, %v10785
      %v10788 = vperm.slane %v10410, %v10692
      %v10789 = vsel %vm10694, %v10788, %v10787
      %v10790 = vperm.slane %v10417, %v10696
      %v10791 = vsel %vm10698, %v10790, %v10789
      %v10792 = vperm.slane %v10424, %v10700
      %v10793 = vsel %vm10702, %v10792, %v10791
      %v10794 = vperm.slane %v10431, %v10674
      %v10795 = vperm.slane %v10438, %v10676
      %v10796 = vsel %vm10678, %v10795, %v10794
      %v10797 = vperm.slane %v10445, %v10680
      %v10798 = vsel %vm10682, %v10797, %v10796
      %v10799 = vperm.slane %v10452, %v10684
      %v10800 = vsel %vm10686, %v10799, %v10798
      %v10801 = vperm.slane %v10459, %v10688
      %v10802 = vsel %vm10690, %v10801, %v10800
      %v10803 = vperm.slane %v10466, %v10692
      %v10804 = vsel %vm10694, %v10803, %v10802
      %v10805 = vperm.slane %v10473, %v10696
      %v10806 = vsel %vm10698, %v10805, %v10804
      %v10807 = vperm.slane %v10480, %v10700
      %v10808 = vsel %vm10702, %v10807, %v10806
      %v10809 = vperm.slane %v10487, %v10674
      %v10810 = vperm.slane %v10494, %v10676
      %v10811 = vsel %vm10678, %v10810, %v10809
      %v10812 = vperm.slane %v10501, %v10680
      %v10813 = vsel %vm10682, %v10812, %v10811
      %v10814 = vperm.slane %v10508, %v10684
      %v10815 = vsel %vm10686, %v10814, %v10813
      %v10816 = vperm.slane %v10515, %v10688
      %v10817 = vsel %vm10690, %v10816, %v10815
      %v10818 = vperm.slane %v10522, %v10692
      %v10819 = vsel %vm10694, %v10818, %v10817
      %v10820 = vperm.slane %v10529, %v10696
      %v10821 = vsel %vm10698, %v10820, %v10819
      %v10822 = vperm.slane %v10536, %v10700
      %v10823 = vsel %vm10702, %v10822, %v10821
      %v10824 = vperm.slane %v10543, %v10674
      %v10825 = vperm.slane %v10550, %v10676
      %v10826 = vsel %vm10678, %v10825, %v10824
      %v10827 = vperm.slane %v10557, %v10680
      %v10828 = vsel %vm10682, %v10827, %v10826
      %v10829 = vperm.slane %v10564, %v10684
      %v10830 = vsel %vm10686, %v10829, %v10828
      %v10831 = vperm.slane %v10571, %v10688
      %v10832 = vsel %vm10690, %v10831, %v10830
      %v10833 = vperm.slane %v10578, %v10692
      %v10834 = vsel %vm10694, %v10833, %v10832
      %v10835 = vperm.slane %v10585, %v10696
      %v10836 = vsel %vm10698, %v10835, %v10834
      %v10837 = vperm.slane %v10592, %v10700
      %v10838 = vsel %vm10702, %v10837, %v10836
      %vm10839 = vcmask 1041409
      %v10840 = vsel %vm10839, %v10718, %v10703
      %vm10841 = vcmask 1042434
      %v10842 = vsel %vm10841, %v10733, %v10840
      %vm10843 = vcmask 1043459
      %v10844 = vsel %vm10843, %v10748, %v10842
      %vm10845 = vcmask 1044484
      %v10846 = vsel %vm10845, %v10763, %v10844
      %vm10847 = vcmask 1045509
      %v10848 = vsel %vm10847, %v10778, %v10846
      %vm10849 = vcmask 1046534
      %v10850 = vsel %vm10849, %v10793, %v10848
      %vm10851 = vcmask 1047559
      %v10852 = vsel %vm10851, %v10808, %v10850
      %v10853 = vsel %vm10839, %v10838, %v10823
      %v10856 = vsel %vm8052, %v10852, 0.0
      %10857 = vadd.xlane.f32.xlu0 %v10856
      %v10858 = vpop.xlane.xlu0 %10857
      %vm10859 = vcmask 517120
      %v10860 = vsel %vm10859, %v10853, 0.0
      %10861 = vadd.xlane.f32.xlu0 %v10860
      %v10862 = vpop.xlane.xlu0 %10861
      %v10863 = vld [vmem:[%s8] sm:$0xff]
      %v10864 = vld [vmem:[%s8 + $0x8] sm:$0x3]
      %v10865 = vadd.f32 %v10858, %v10863
      %v10866 = vadd.f32 %v10862, %v10864
      %vm10867 = vcmask 7168
      %10868 = vst.msk [vmem:[%s329] sm:$0xff] %vm10867, %v10865
      %vm10869 = vcmask 1024
      %10870 = vst.msk [vmem:[%s329 + $0x8] sm:$0x3] %vm10869, %v10866
      %p10871 = scmp.lt.s32.totalorder %s20, 1
      %s10872 = scalar_select %p10871, %s20, 1
      %s10873 = smul.addr %s10872, 2
      %s10874 = smul.addr %s10873, 8
      %s10875 = scalar_lea.vmem %s9, %s10874
      // Predicated region
      $region57: #{image_classifier_forward.1} parent=55 // pred_check
        %p10876 = pneg %p232
      $region58: #{image_classifier_forward.1} parent=55 // pred_check_branch
        %10878 = sbr.rel (%p10876) target = $region60
      $region59: #{image_classifier_forward.1} parent=55 // pred_region
        _
      $region60: #{image_classifier_forward.1} parent=55 // pred_fallthru
        _
    $region56: #{image_classifier_forward.1} parent=5 // pred_fallthru
      _
    %p10879 = scmp.le.s32.totalorder 2, %s15
    // Predicated region
    $region61: #{image_classifier_forward.1} parent=5 // pred_check
      %p10880 = pneg %p10879
    $region62: #{image_classifier_forward.1} parent=5 // pred_check_branch
      %10882 = sbr.rel (%p10880) target = $region64
    $region63: #{image_classifier_forward.1} parent=5 // pred_region
      %s10883 = ssub.s32 %s15, 2
      // Predicated region
      $region65: #{image_classifier_forward.1} parent=63 // pred_check
        %p10884 = pneg %p238
      $region66: #{image_classifier_forward.1} parent=63 // pred_check_branch
        %10886 = sbr.rel (%p10884) target = $region68
      $region67: #{image_classifier_forward.1} parent=63 // pred_region
        %p10887 = scmp.lt.s32.totalorder %s21, 1
        %s10888 = scalar_select %p10887, %s21, 1
        %s10889 = smul.addr %s10888, 2
        %s10890 = smul.addr %s10889, 8
        %s10891 = scalar_lea.vmem %s9, %s10890
      $region68: #{image_classifier_forward.1} parent=63 // pred_fallthru
        _
    $region64: #{image_classifier_forward.1} parent=5 // pred_fallthru
      _
  $region6: #{image_classifier_forward.1} parent=0 // loop_footer
    %s19 = sadd.s32 1, %s15
  $region7: #{image_classifier_forward.1} parent=0 // loop_footer_branch
    %14 = sbr.rel target = $region3
  $region8: #{image_classifier_forward.1} parent=0 // loop_exit
    _

</llo_original>
